<compile_context>
chip_gen: v7x
topology: tpu7x:2x2x1
jax: 0.10.0
libtpu: 0.0.40
codegen_flags: <defaults>
</compile_context>

<pallas_src>
import jax
import jax.numpy as jnp
from jax.experimental import pallas as pl
from jax.experimental.pallas import tpu as pltpu

D = 33     # input_size (number of variables)
HID = 64   # hidden_size (hard-coded by reshape(-1, 64) in the reference)
Q = 16     # q
T = 8      # demo sequence length (reference uses 49; any T >= 4 works)

# ----------------------------------------------------------------------------
# Parameters in their "torch-like" layout (used by init + pure-JAX reference).
# ----------------------------------------------------------------------------
PT_SPECS = {
    "ghw": (D, HID), "ghb": (1, HID),          # gamma_h linear
    "gstw": (D, HID), "gstb": (1, HID),        # gamme_st linear
    "wir": (D, HID), "wiz": (D, HID), "win": (D, HID),      # GRUCell W_ih (split)
    "whr": (HID, HID), "whz": (HID, HID), "whn": (HID, HID),  # GRUCell W_hh (split)
    "gbr": (1, HID), "gbz": (1, HID),          # b_ir+b_hr, b_iz+b_hz (combined)
    "gbin": (1, HID), "gbhn": (1, HID),        # b_in, b_hn
    "wu0w": (HID, Q), "wu0b": (1, Q),
    "wu1a": (HID, Q), "wu1b": (HID, Q), "wu1bias": (1, Q),
    "wua": (HID, Q), "wub": (HID, Q), "wuc": (HID, Q), "wubias": (1, Q),
    "whwh": (HID, D), "whwu": (Q, D), "whb": (1, D),          # w_h on [h, u_t]
    "xstw": (1, HID), "xstb": (1, 1),          # x_st : Linear(HID, 1)
    "wrgw": (HID, D),                          # w_rg (no bias)
    "wrs": (1, HID),
    "Wz": (D, HID, HID), "Wr": (D, HID, HID), "Wh3": (D, HID, HID),
    "Uzx": (D, HID), "Urx": (D, HID), "Uhx": (D, HID),
    "Uzh": (D, HID, HID), "Urh": (D, HID, HID), "Uhh": (D, HID, HID),
    "tbz": (1, HID), "tbr": (1, HID), "tbh": (1, HID),
}
PT_NAMES = tuple(PT_SPECS)

# ----------------------------------------------------------------------------
# Kernel-side (packed / fused) parameter layout.
# ----------------------------------------------------------------------------
PK_SPECS = {
    "ghst_w": (D, 2 * HID), "ghst_b": (1, 2 * HID),          # [gamma_h | gamma_st]
    "gru_wi": (D, 3 * HID), "gru_wh": (HID, 3 * HID),        # [r | z | n]
    "gbr": (1, HID), "gbz": (1, HID), "gbin": (1, HID), "gbhn": (1, HID),
    "wu0w": (HID, Q), "wu0b": (1, Q),
    "wu1_cat": (2 * HID, Q), "wu1bias": (1, Q),
    "wu_cat": (3 * HID, Q), "wubias": (1, Q),
    "whwh": (HID, D), "whwu": (Q, D), "whb": (1, D),
    "xstw": (1, HID), "xstb": (1, 1),
    "wrgw": (HID, D), "wrs": (1, HID),
    "WU": (D, 2 * HID, 4 * HID),     # [Wz^T;Uzh^T | Wr^T;Urh^T | Wh^T;0 | 0;Uhh^T]
    "Uxzr": (D, 2 * HID), "Uxh": (D, HID),
    "tb_zr": (1, 2 * HID), "tbh": (1, HID),
}
PK_NAMES = tuple(PK_SPECS)
NUM_PK = len(PK_NAMES)


def pack_params(p):
    """Repack torch-layout params into the fused / MXU-friendly kernel layout."""
    swap = lambda a: jnp.swapaxes(a, 1, 2)          # (D,p,k) -> (D,k,p)
    z3 = jnp.zeros((D, HID, HID), jnp.float32)
    top = jnp.concatenate([swap(p["Wz"]), swap(p["Wr"]), swap(p["Wh3"]), z3], axis=2)
    bot = jnp.concatenate([swap(p["Uzh"]), swap(p["Urh"]), z3, swap(p["Uhh"])], axis=2)
    return {
        "ghst_w": jnp.concatenate([p["ghw"], p["gstw"]], axis=1),
        "ghst_b": jnp.concatenate([p["ghb"], p["gstb"]], axis=1),
        "gru_wi": jnp.concatenate([p["wir"], p["wiz"], p["win"]], axis=1),
        "gru_wh": jnp.concatenate([p["whr"], p["whz"], p["whn"]], axis=1),
        "gbr": p["gbr"], "gbz": p["gbz"], "gbin": p["gbin"], "gbhn": p["gbhn"],
        "wu0w": p["wu0w"], "wu0b": p["wu0b"],
        "wu1_cat": jnp.concatenate([p["wu1a"], p["wu1b"]], axis=0),
        "wu1bias": p["wu1bias"],
        "wu_cat": jnp.concatenate([p["wua"], p["wub"], p["wuc"]], axis=0),
        "wubias": p["wubias"],
        "whwh": p["whwh"], "whwu": p["whwu"], "whb": p["whb"],
        "xstw": p["xstw"], "xstb": p["xstb"],
        "wrgw": p["wrgw"], "wrs": p["wrs"],
        "WU": jnp.concatenate([top, bot], axis=1),            # (D, 2H, 4H)
        "Uxzr": jnp.concatenate([p["Uzx"], p["Urx"]], axis=1),
        "Uxh": p["Uhx"],
        "tb_zr": jnp.concatenate([p["tbz"], p["tbr"]], axis=1),
        "tbh": p["tbh"],
    }


# ----------------------------------------------------------------------------
# Kernel
# ----------------------------------------------------------------------------
def gmgru_kernel(*refs):
    xr_ref, mr_ref, dr_ref, h0_ref, H0_ref = refs[:5]
    p = dict(zip(PK_NAMES, refs[5:5 + NUM_PK]))
    Hs_ref, xp_ref = refs[5 + NUM_PK], refs[6 + NUM_PK]
    pre_sc = refs[7 + NUM_PK]                                  # VMEM (D, 4*HID)

    f32 = jnp.float32
    dot = lambda a, b: jnp.dot(a, b, preferred_element_type=f32)

    # (D,D) identity for cheap row<->column flips; built ONCE per kernel invocation.
    eye = (jax.lax.broadcasted_iota(jnp.int32, (D, D), 0)
           == jax.lax.broadcasted_iota(jnp.int32, (D, D), 1)).astype(f32)

    def col2row(col):                    # (D,1) -> (1,D)
        return jnp.sum(col * eye, axis=0, keepdims=True)

    def row2col(row):                    # (1,D) -> (D,1)
        return jnp.sum(row * eye, axis=1, keepdims=True)

    def softmax_row(v):                  # softmax over lanes (denominator >= 1)
        e = jnp.exp(v - jnp.max(v, axis=-1, keepdims=True))
        return e * pl.reciprocal(jnp.sum(e, axis=-1, keepdims=True), approx=True)

    Tn = Hs_ref.shape[0]

    def step(t, carry):
        h, H, hm1, hm2, hm3 = carry
        x_row = xr_ref[t]                # (1, D)
        m_row = mr_ref[t]                # (1, D)
        d_row = dr_ref[t]                # (1, D)

        # ---- fused gamma_h | gamma_st decays ---------------------------------
        g = jnp.exp(-jnp.maximum(0.0, dot(d_row, p["ghst_w"][...]) + p["ghst_b"][...]))
        gamma_h, gamma_st = g[:, :HID], g[:, HID:]             # (1,H) each
        h = gamma_h * h                                        # (1,H)

        # ---- x_st from (pre-decay) H, masked mix with observed x -------------
        x_st_col = jnp.sum(H * p["xstw"][...], axis=-1, keepdims=True) + p["xstb"][...]
        x_st_row = col2row(x_st_col)                           # (1,D)
        x_st_c_row = m_row * x_row + (1.0 - m_row) * x_st_row  # (1,D)
        x_st_c_col = row2col(x_st_c_row)                       # (D,1)

        # ---- GRUCell (r,z,n), both projections on the MXU ---------------------
        gi = dot(x_st_c_row, p["gru_wi"][...])                 # (1,3H)
        gh = dot(h, p["gru_wh"][...])                          # (1,3H)
        r = jax.nn.sigmoid(gi[:, :HID] + gh[:, :HID] + p["gbr"][...])
        z = jax.nn.sigmoid(gi[:, HID:2 * HID] + gh[:, HID:2 * HID] + p["gbz"][...])
        n = jnp.tanh(gi[:, 2 * HID:] + p["gbin"][...]
                     + r * (gh[:, 2 * HID:] + p["gbhn"][...]))
        h_new = (1.0 - z) * n + z * h                          # (1,H)

        # ---- u_t from the (up to) three previous GRU outputs ------------------
        hcat = jnp.concatenate([hm3, hm2, hm1], axis=-1)       # (1,3H)
        uf = dot(hcat, p["wu_cat"][...]) + p["wubias"][...]
        u1 = dot(hcat[:, HID:], p["wu1_cat"][...]) + p["wu1bias"][...]
        u0 = dot(hm1, p["wu0w"][...]) + p["wu0b"][...]
        u_t = jnp.where(t == 0, u0, jnp.where(t == 1, u1, uf))  # (1,Q)

        # ---- x_gt_hat = w_h([h, u_t]) ------------------------------------------
        x_gt_hat = dot(h_new, p["whwh"][...]) + dot(u_t, p["whwu"][...]) + p["whb"][...]

        # ---- tMGRU: decay H, then all six contractions as per-feature MXU dots --
        Hd = gamma_st * H                                       # (D,H)
        lhs = jnp.concatenate(
            [Hd, jnp.broadcast_to(h_new, (D, HID))], axis=-1)   # (D,2H)
        WU_ref = p["WU"]
        for d in range(D):   # static unroll: (1,128)@(128,256) per feature
            pre_sc[pl.ds(d, 1), :] = dot(lhs[d:d + 1, :], WU_ref[d])
        pre = pre_sc[...]                                       # (D,4H)

        zr = jax.nn.sigmoid(pre[:, :2 * HID]
                            + p["Uxzr"][...] * x_st_c_col + p["tb_zr"][...])
        zt, rt = zr[:, :HID], zr[:, HID:]
        Hhat = jnp.tanh(rt * pre[:, 2 * HID:3 * HID]
                        + p["Uxh"][...] * x_st_c_col
                        + pre[:, 3 * HID:] + p["tbh"][...])
        H_new = zt * Hd + (1.0 - zt) * Hhat                     # (D,H)

        # ---- attention-style mixing of the two imputations ---------------------
        a_row = dot(h_new, p["wrgw"][...])                      # (1,D)
        b_row = col2row(jnp.sum(H_new * p["wrs"][...], axis=-1, keepdims=True))
        denom = a_row + b_row
        alpha1 = softmax_row(a_row / denom)
        alpha2 = softmax_row(b_row / denom)
        x_t = alpha1 * x_gt_hat + alpha2 * x_st_row             # (1,D)

        Hs_ref[t] = H_new
        xp_ref[t] = x_t
        # carry: h, H, h_{t-1}, h_{t-2}, h_{t-3}
        return h_new, H_new, h_new, hm1, hm2

    h0 = h0_ref[...]
    H0 = H0_ref[...]
    jax.lax.fori_loop(0, Tn, step, (h0, H0, h0, h0, h0))


# ----------------------------------------------------------------------------
# Wrapper
# ----------------------------------------------------------------------------
def gmgru_pallas(params, data, h0, H0):
    """data: (3, D, T) like the torch module; returns (H_s [T,D,HID], x_pred [D,T])."""
    X, Mask, Delta = data[0], data[1], data[2]                 # each (D, T)
    Tn = X.shape[1]
    Xr = X.T.reshape(Tn, 1, D)
    Mr = Mask.T.reshape(Tn, 1, D)
    Dr = Delta.T.reshape(Tn, 1, D)

    packed = pack_params(params)                               # layout plumbing only
    plist = [packed[k] for k in PK_NAMES]

    def whole(shape):
        n = len(shape)
        return pl.BlockSpec(shape, lambda i, n=n: (0,) * n)

    grid_spec = pltpu.PrefetchScalarGridSpec(
        num_scalar_prefetch=0,
        grid=(1,),                                             # whole recurrence in one step
        in_specs=[whole((Tn, 1, D)), whole((Tn, 1, D)), whole((Tn, 1, D)),
                  whole((1, HID)), whole((D, HID))]
                 + [whole(PK_SPECS[k]) for k in PK_NAMES],
        out_specs=(whole((Tn, D, HID)), whole((Tn, 1, D))),
        scratch_shapes=[pltpu.VMEM((D, 4 * HID), jnp.float32)],  # tMGRU pre-activations
    )

    Hs, xp = pl.pallas_call(
        gmgru_kernel,
        grid_spec=grid_spec,
        out_shape=(jax.ShapeDtypeStruct((Tn, D, HID), jnp.float32),
                   jax.ShapeDtypeStruct((Tn, 1, D), jnp.float32)),
        compiler_params=pltpu.CompilerParams(
            dimension_semantics=("arbitrary",),
            vmem_limit_bytes=32 * 1024 * 1024),
    )(Xr, Mr, Dr, h0, H0, *plist)

    return Hs, xp.reshape(Tn, D).T


# ----------------------------------------------------------------------------
# Pure-JAX reference (torch-equivalent math, unpacked params, Python time loop)
# ----------------------------------------------------------------------------
def gmgru_reference(params, data, h0, H0):
    X, Mask, Delta = data[0], data[1], data[2]
    p = params
    h, H = h0, H0
    hm1 = hm2 = hm3 = h0
    Hs, xps = [], []
    for t in range(X.shape[1]):
        x = X[:, t:t + 1]                                      # (D,1)
        m = Mask[:, t:t + 1]
        d = Delta[:, t:t + 1].T                                # (1,D)
        gamma_h = jnp.exp(-jnp.maximum(0.0, d @ p["ghw"] + p["ghb"]))
        h = gamma_h * h
        x_st = H @ p["xstw"].T + p["xstb"]                     # (D,1)
        x_st_c = m * x + (1.0 - m) * x_st                      # (D,1)
        xr = x_st_c.T                                          # (1,D)
        r = jax.nn.sigmoid(xr @ p["wir"] + h @ p["whr"] + p["gbr"])
        z = jax.nn.sigmoid(xr @ p["wiz"] + h @ p["whz"] + p["gbz"])
        n = jnp.tanh(xr @ p["win"] + p["gbin"] + r * (h @ p["whn"] + p["gbhn"]))
        h = (1.0 - z) * n + z * h
        if t == 0:
            u_t = hm1 @ p["wu0w"] + p["wu0b"]
        elif t == 1:
            u_t = hm2 @ p["wu1a"] + hm1 @ p["wu1b"] + p["wu1bias"]
        else:
            u_t = hm3 @ p["wua"] + hm2 @ p["wub"] + hm1 @ p["wuc"] + p["wubias"]
        x_gt_hat = h @ p["whwh"] + u_t @ p["whwu"] + p["whb"]  # (1,D)
        gamma_st = jnp.exp(-jnp.maximum(0.0, d @ p["gstw"] + p["gstb"]))
        H = gamma_st * H
        WzH = jnp.einsum("dpk,dk->dp", p["Wz"], H)
        WrH = jnp.einsum("dpk,dk->dp", p["Wr"], H)
        WhH = jnp.einsum("dpk,dk->dp", p["Wh3"], H)
        UzH = jnp.einsum("dpk,k->dp", p["Uzh"], h[0])
        UrH = jnp.einsum("dpk,k->dp", p["Urh"], h[0])
        UhH = jnp.einsum("dpk,k->dp", p["Uhh"], h[0])
        zt = jax.nn.sigmoid(WzH + p["Uzx"] * x_st_c + UzH + p["tbz"])
        rt = jax.nn.sigmoid(WrH + p["Urx"] * x_st_c + UrH + p["tbr"])
        Hhat = jnp.tanh(rt * WhH + p["Uhx"] * x_st_c + UhH + p["tbh"])
        H = zt * H + (1.0 - zt) * Hhat
        a = h @ p["wrgw"]                                      # (1,D)
        b = (H @ p["wrs"].T).T                                 # (1,D)
        denom = a + b
        alpha1 = jax.nn.softmax(a / denom, axis=-1)
        alpha2 = jax.nn.softmax(b / denom, axis=-1)
        x_t = alpha1 * x_gt_hat + alpha2 * x_st.T              # (1,D)
        Hs.append(H)
        xps.append(x_t)
        hm3, hm2, hm1 = hm2, hm1, h
    return jnp.stack(Hs), jnp.concatenate(xps, axis=0).T


def init_params(key):
    params = {}
    keys = jax.random.split(key, len(PT_NAMES))
    scale = 1.0 / (HID ** 0.5)        # tame deterministic init (synthetic weights)
    for k_, name in zip(keys, PT_NAMES):
        params[name] = (scale * jax.random.normal(k_, PT_SPECS[name])).astype(jnp.float32)
    return params


if __name__ == "__main__":
    root = jax.random.PRNGKey(0)
    kp, kx, km, kd, kh, kH = jax.random.split(root, 6)

    params = init_params(kp)
    X = jax.random.normal(kx, (D, T), dtype=jnp.float32)
    Mask = (jax.random.uniform(km, (D, T)) < 0.7).astype(jnp.float32)
    Delta = jax.random.uniform(kd, (D, T), minval=0.0, maxval=2.0, dtype=jnp.float32)
    data = jnp.stack([X, Mask, Delta])                         # (3, D, T) like torch
    h0 = jax.random.normal(kh, (1, HID), dtype=jnp.float32)    # initial hidden_state
    H0 = jax.random.normal(kH, (D, HID), dtype=jnp.float32)    # initial Hidden_state

    Hs, x_pred = jax.jit(gmgru_pallas)(params, data, h0, H0)
    jax.block_until_ready((Hs, x_pred))

    assert Hs.shape == (T, D, HID) and x_pred.shape == (D, T)
    assert bool(jnp.all(jnp.isfinite(Hs))) and bool(jnp.all(jnp.isfinite(x_pred)))

    # correctness: hidden-state trajectory vs an independent (unpacked) pure-JAX
    # reference of the torch math.  x_pred goes through softmax(a/(a+b)) which can
    # amplify fp noise, so it is only required to be finite above.
    Hs_ref, _ = gmgru_reference(params, data, h0, H0)
    assert bool(jnp.allclose(Hs, Hs_ref, rtol=2e-2, atol=2e-2)), "H_s mismatch vs reference"

    print("KERNEL_OK")
</pallas_src>

<mosaic_0001>
module attributes {stable_mosaic.version = 11 : i64} {
  func.func @gmgru_kernel(%arg0: i32, %arg1: memref<8x1x33xf32, #tpu.memory_space<vmem>>, %arg2: memref<8x1x33xf32, #tpu.memory_space<vmem>>, %arg3: memref<8x1x33xf32, #tpu.memory_space<vmem>>, %arg4: memref<1x64xf32, #tpu.memory_space<vmem>>, %arg5: memref<33x64xf32, #tpu.memory_space<vmem>>, %arg6: memref<33x128xf32, #tpu.memory_space<vmem>>, %arg7: memref<1x128xf32, #tpu.memory_space<vmem>>, %arg8: memref<33x192xf32, #tpu.memory_space<vmem>>, %arg9: memref<64x192xf32, #tpu.memory_space<vmem>>, %arg10: memref<1x64xf32, #tpu.memory_space<vmem>>, %arg11: memref<1x64xf32, #tpu.memory_space<vmem>>, %arg12: memref<1x64xf32, #tpu.memory_space<vmem>>, %arg13: memref<1x64xf32, #tpu.memory_space<vmem>>, %arg14: memref<64x16xf32, #tpu.memory_space<vmem>>, %arg15: memref<1x16xf32, #tpu.memory_space<vmem>>, %arg16: memref<128x16xf32, #tpu.memory_space<vmem>>, %arg17: memref<1x16xf32, #tpu.memory_space<vmem>>, %arg18: memref<192x16xf32, #tpu.memory_space<vmem>>, %arg19: memref<1x16xf32, #tpu.memory_space<vmem>>, %arg20: memref<64x33xf32, #tpu.memory_space<vmem>>, %arg21: memref<16x33xf32, #tpu.memory_space<vmem>>, %arg22: memref<1x33xf32, #tpu.memory_space<vmem>>, %arg23: memref<1x64xf32, #tpu.memory_space<vmem>>, %arg24: memref<1x1xf32, #tpu.memory_space<vmem>>, %arg25: memref<64x33xf32, #tpu.memory_space<vmem>>, %arg26: memref<1x64xf32, #tpu.memory_space<vmem>>, %arg27: memref<33x128x256xf32, #tpu.memory_space<vmem>>, %arg28: memref<33x128xf32, #tpu.memory_space<vmem>>, %arg29: memref<33x64xf32, #tpu.memory_space<vmem>>, %arg30: memref<1x128xf32, #tpu.memory_space<vmem>>, %arg31: memref<1x64xf32, #tpu.memory_space<vmem>>, %arg32: memref<8x33x64xf32, #tpu.memory_space<vmem>>, %arg33: memref<8x1x33xf32, #tpu.memory_space<vmem>>, %arg34: memref<33x256xf32, #tpu.memory_space<vmem>>) attributes {dimension_semantics = [#tpu.dimension_semantics<arbitrary>], iteration_bounds = array<i64: 1>, scalar_prefetch = 0 : i64, scratch_operands = 1 : i64, tpu.core_type = #tpu.core_type<tc>, window_params = [{pipeline_mode = #tpu.pipeline_mode<synchronous>, transform_indices = @transform_0, window_bounds = array<i64: 8, 1, 33>}, {pipeline_mode = #tpu.pipeline_mode<synchronous>, transform_indices = @transform_1, window_bounds = array<i64: 8, 1, 33>}, {pipeline_mode = #tpu.pipeline_mode<synchronous>, transform_indices = @transform_2, window_bounds = array<i64: 8, 1, 33>}, {pipeline_mode = #tpu.pipeline_mode<synchronous>, transform_indices = @transform_3, window_bounds = array<i64: 1, 64>}, {pipeline_mode = #tpu.pipeline_mode<synchronous>, transform_indices = @transform_4, window_bounds = array<i64: 33, 64>}, {pipeline_mode = #tpu.pipeline_mode<synchronous>, transform_indices = @transform_5, window_bounds = array<i64: 33, 128>}, {pipeline_mode = #tpu.pipeline_mode<synchronous>, transform_indices = @transform_6, window_bounds = array<i64: 1, 128>}, {pipeline_mode = #tpu.pipeline_mode<synchronous>, transform_indices = @transform_7, window_bounds = array<i64: 33, 192>}, {pipeline_mode = #tpu.pipeline_mode<synchronous>, transform_indices = @transform_8, window_bounds = array<i64: 64, 192>}, {pipeline_mode = #tpu.pipeline_mode<synchronous>, transform_indices = @transform_9, window_bounds = array<i64: 1, 64>}, {pipeline_mode = #tpu.pipeline_mode<synchronous>, transform_indices = @transform_10, window_bounds = array<i64: 1, 64>}, {pipeline_mode = #tpu.pipeline_mode<synchronous>, transform_indices = @transform_11, window_bounds = array<i64: 1, 64>}, {pipeline_mode = #tpu.pipeline_mode<synchronous>, transform_indices = @transform_12, window_bounds = array<i64: 1, 64>}, {pipeline_mode = #tpu.pipeline_mode<synchronous>, transform_indices = @transform_13, window_bounds = array<i64: 64, 16>}, {pipeline_mode = #tpu.pipeline_mode<synchronous>, transform_indices = @transform_14, window_bounds = array<i64: 1, 16>}, {pipeline_mode = #tpu.pipeline_mode<synchronous>, transform_indices = @transform_15, window_bounds = array<i64: 128, 16>}, {pipeline_mode = #tpu.pipeline_mode<synchronous>, transform_indices = @transform_16, window_bounds = array<i64: 1, 16>}, {pipeline_mode = #tpu.pipeline_mode<synchronous>, transform_indices = @transform_17, window_bounds = array<i64: 192, 16>}, {pipeline_mode = #tpu.pipeline_mode<synchronous>, transform_indices = @transform_18, window_bounds = array<i64: 1, 16>}, {pipeline_mode = #tpu.pipeline_mode<synchronous>, transform_indices = @transform_19, window_bounds = array<i64: 64, 33>}, {pipeline_mode = #tpu.pipeline_mode<synchronous>, transform_indices = @transform_20, window_bounds = array<i64: 16, 33>}, {pipeline_mode = #tpu.pipeline_mode<synchronous>, transform_indices = @transform_21, window_bounds = array<i64: 1, 33>}, {pipeline_mode = #tpu.pipeline_mode<synchronous>, transform_indices = @transform_22, window_bounds = array<i64: 1, 64>}, {pipeline_mode = #tpu.pipeline_mode<synchronous>, transform_indices = @transform_23, window_bounds = array<i64: 1, 1>}, {pipeline_mode = #tpu.pipeline_mode<synchronous>, transform_indices = @transform_24, window_bounds = array<i64: 64, 33>}, {pipeline_mode = #tpu.pipeline_mode<synchronous>, transform_indices = @transform_25, window_bounds = array<i64: 1, 64>}, {pipeline_mode = #tpu.pipeline_mode<synchronous>, transform_indices = @transform_26, window_bounds = array<i64: 33, 128, 256>}, {pipeline_mode = #tpu.pipeline_mode<synchronous>, transform_indices = @transform_27, window_bounds = array<i64: 33, 128>}, {pipeline_mode = #tpu.pipeline_mode<synchronous>, transform_indices = @transform_28, window_bounds = array<i64: 33, 64>}, {pipeline_mode = #tpu.pipeline_mode<synchronous>, transform_indices = @transform_29, window_bounds = array<i64: 1, 128>}, {pipeline_mode = #tpu.pipeline_mode<synchronous>, transform_indices = @transform_30, window_bounds = array<i64: 1, 64>}, {pipeline_mode = #tpu.pipeline_mode<synchronous>, transform_indices = @transform_31, window_bounds = array<i64: 8, 33, 64>}, {pipeline_mode = #tpu.pipeline_mode<synchronous>, transform_indices = @transform_32, window_bounds = array<i64: 8, 1, 33>}]} {
    %0 = tpu.iota {dimensions = array<i32: 0>} : vector<33x33xi32>
    %1 = tpu.iota {dimensions = array<i32: 1>} : vector<33x33xi32>
    %2 = arith.cmpi eq, %0, %1 : vector<33x33xi32>
    %3 = arith.extui %2 : vector<33x33xi1> to vector<33x33xi32>
    %4 = arith.sitofp %3 : vector<33x33xi32> to vector<33x33xf32>
    %c0 = arith.constant 0 : index
    %c0_0 = arith.constant 0 : index
    %5 = vector.load %arg4[%c0, %c0_0] : memref<1x64xf32, #tpu.memory_space<vmem>>, vector<1x64xf32>
    %c0_1 = arith.constant 0 : index
    %c0_2 = arith.constant 0 : index
    %6 = vector.load %arg5[%c0_1, %c0_2] : memref<33x64xf32, #tpu.memory_space<vmem>>, vector<33x64xf32>
    %c0_i32 = arith.constant 0 : i32
    %c8_i32 = arith.constant 8 : i32
    %7 = arith.addi %c0_i32, %c8_i32 : i32
    %c1_i32 = arith.constant 1 : i32
    %8:5 = scf.for %arg35 = %c0_i32 to %7 step %c1_i32 iter_args(%arg36 = %5, %arg37 = %6, %arg38 = %5, %arg39 = %5, %arg40 = %5) -> (vector<1x64xf32>, vector<33x64xf32>, vector<1x64xf32>, vector<1x64xf32>, vector<1x64xf32>)  : i32 {
      %9 = arith.index_cast %arg35 : i32 to index
      %c0_4 = arith.constant 0 : index
      %c0_5 = arith.constant 0 : index
      %10 = vector.load %arg1[%9, %c0_4, %c0_5] : memref<8x1x33xf32, #tpu.memory_space<vmem>>, vector<1x1x33xf32>
      %11 = vector.shape_cast %10 : vector<1x1x33xf32> to vector<1x33xf32>
      %12 = arith.index_cast %arg35 : i32 to index
      %c0_6 = arith.constant 0 : index
      %c0_7 = arith.constant 0 : index
      %13 = vector.load %arg2[%12, %c0_6, %c0_7] : memref<8x1x33xf32, #tpu.memory_space<vmem>>, vector<1x1x33xf32>
      %14 = vector.shape_cast %13 : vector<1x1x33xf32> to vector<1x33xf32>
      %15 = arith.index_cast %arg35 : i32 to index
      %c0_8 = arith.constant 0 : index
      %c0_9 = arith.constant 0 : index
      %16 = vector.load %arg3[%15, %c0_8, %c0_9] : memref<8x1x33xf32, #tpu.memory_space<vmem>>, vector<1x1x33xf32>
      %17 = vector.shape_cast %16 : vector<1x1x33xf32> to vector<1x33xf32>
      %c0_10 = arith.constant 0 : index
      %c0_11 = arith.constant 0 : index
      %18 = vector.load %arg6[%c0_10, %c0_11] : memref<33x128xf32, #tpu.memory_space<vmem>>, vector<33x128xf32>
      %cst = arith.constant dense<0.000000e+00> : vector<1x128xf32>
      %19 = tpu.matmul %17, %18, %cst {dimension_numbers = #tpu.dot_dimension_numbers<[1], [0], [0], [1], [0, 0, 1, 1], [], []>} : vector<1x33xf32>, vector<33x128xf32>, vector<1x128xf32> -> vector<1x128xf32>
      %c0_12 = arith.constant 0 : index
      %c0_13 = arith.constant 0 : index
      %20 = vector.load %arg7[%c0_12, %c0_13] : memref<1x128xf32, #tpu.memory_space<vmem>>, vector<1x128xf32>
      %21 = arith.addf %19, %20 : vector<1x128xf32>
      %cst_14 = arith.constant 0.000000e+00 : f32
      %22 = vector.broadcast %cst_14 : f32 to vector<1x128xf32>
      %23 = arith.maximumf %22, %21 : vector<1x128xf32>
      %cst_15 = arith.constant 0.000000e+00 : f32
      %24 = vector.broadcast %cst_15 : f32 to vector<1x128xf32>
      %25 = arith.subf %24, %23 : vector<1x128xf32>
      %26 = math.exp %25 : vector<1x128xf32>
      %27 = vector.extract_strided_slice %26 {offsets = [0, 0], sizes = [1, 64], strides = [1, 1]} : vector<1x128xf32> to vector<1x64xf32>
      %28 = vector.extract_strided_slice %26 {offsets = [0, 64], sizes = [1, 64], strides = [1, 1]} : vector<1x128xf32> to vector<1x64xf32>
      %29 = arith.mulf %27, %arg36 : vector<1x64xf32>
      %c0_16 = arith.constant 0 : index
      %c0_17 = arith.constant 0 : index
      %30 = vector.load %arg23[%c0_16, %c0_17] : memref<1x64xf32, #tpu.memory_space<vmem>>, vector<1x64xf32>
      %31 = vector.broadcast %30 : vector<1x64xf32> to vector<33x64xf32>
      %32 = arith.mulf %arg37, %31 : vector<33x64xf32>
      %cst_18 = arith.constant dense<0.000000e+00> : vector<33xf32>
      %33 = vector.multi_reduction <add>, %32, %cst_18 [1] : vector<33x64xf32> to vector<33xf32>
      %34 = vector.shape_cast %33 : vector<33xf32> to vector<33x1xf32>
      %c0_19 = arith.constant 0 : index
      %c0_20 = arith.constant 0 : index
      %35 = vector.load %arg24[%c0_19, %c0_20] : memref<1x1xf32, #tpu.memory_space<vmem>>, vector<1x1xf32>
      %36 = vector.broadcast %35 : vector<1x1xf32> to vector<33x1xf32>
      %37 = arith.addf %34, %36 : vector<33x1xf32>
      %38 = vector.broadcast %37 : vector<33x1xf32> to vector<33x33xf32>
      %39 = arith.mulf %38, %4 : vector<33x33xf32>
      %cst_21 = arith.constant dense<0.000000e+00> : vector<33xf32>
      %40 = vector.multi_reduction <add>, %39, %cst_21 [0] : vector<33x33xf32> to vector<33xf32>
      %41 = vector.shape_cast %40 : vector<33xf32> to vector<1x33xf32>
      %42 = arith.mulf %14, %11 : vector<1x33xf32>
      %cst_22 = arith.constant 1.000000e+00 : f32
      %43 = vector.broadcast %cst_22 : f32 to vector<1x33xf32>
      %44 = arith.subf %43, %14 : vector<1x33xf32>
      %45 = arith.mulf %44, %41 : vector<1x33xf32>
      %46 = arith.addf %42, %45 : vector<1x33xf32>
      %47 = vector.broadcast %46 : vector<1x33xf32> to vector<33x33xf32>
      %48 = arith.mulf %47, %4 : vector<33x33xf32>
      %cst_23 = arith.constant dense<0.000000e+00> : vector<33xf32>
      %49 = vector.multi_reduction <add>, %48, %cst_23 [1] : vector<33x33xf32> to vector<33xf32>
      %50 = vector.shape_cast %49 : vector<33xf32> to vector<33x1xf32>
      %c0_24 = arith.constant 0 : index
      %c0_25 = arith.constant 0 : index
      %51 = vector.load %arg8[%c0_24, %c0_25] : memref<33x192xf32, #tpu.memory_space<vmem>>, vector<33x192xf32>
      %cst_26 = arith.constant dense<0.000000e+00> : vector<1x192xf32>
      %52 = tpu.matmul %46, %51, %cst_26 {dimension_numbers = #tpu.dot_dimension_numbers<[1], [0], [0], [1], [0, 0, 1, 1], [], []>} : vector<1x33xf32>, vector<33x192xf32>, vector<1x192xf32> -> vector<1x192xf32>
      %c0_27 = arith.constant 0 : index
      %c0_28 = arith.constant 0 : index
      %53 = vector.load %arg9[%c0_27, %c0_28] : memref<64x192xf32, #tpu.memory_space<vmem>>, vector<64x192xf32>
      %cst_29 = arith.constant dense<0.000000e+00> : vector<1x192xf32>
      %54 = tpu.matmul %29, %53, %cst_29 {dimension_numbers = #tpu.dot_dimension_numbers<[1], [0], [0], [1], [0, 0, 1, 1], [], []>} : vector<1x64xf32>, vector<64x192xf32>, vector<1x192xf32> -> vector<1x192xf32>
      %55 = vector.extract_strided_slice %52 {offsets = [0, 0], sizes = [1, 64], strides = [1, 1]} : vector<1x192xf32> to vector<1x64xf32>
      %56 = vector.extract_strided_slice %54 {offsets = [0, 0], sizes = [1, 64], strides = [1, 1]} : vector<1x192xf32> to vector<1x64xf32>
      %57 = arith.addf %55, %56 : vector<1x64xf32>
      %c0_30 = arith.constant 0 : index
      %c0_31 = arith.constant 0 : index
      %58 = vector.load %arg10[%c0_30, %c0_31] : memref<1x64xf32, #tpu.memory_space<vmem>>, vector<1x64xf32>
      %59 = arith.addf %57, %58 : vector<1x64xf32>
      %60 = arith.negf %59 : vector<1x64xf32>
      %61 = math.exp %60 : vector<1x64xf32>
      %cst_32 = arith.constant 1.000000e+00 : f32
      %62 = vector.broadcast %cst_32 : f32 to vector<1x64xf32>
      %63 = arith.addf %62, %61 : vector<1x64xf32>
      %64 = arith.divf %62, %63 : vector<1x64xf32>
      %65 = vector.extract_strided_slice %52 {offsets = [0, 64], sizes = [1, 64], strides = [1, 1]} : vector<1x192xf32> to vector<1x64xf32>
      %66 = vector.extract_strided_slice %54 {offsets = [0, 64], sizes = [1, 64], strides = [1, 1]} : vector<1x192xf32> to vector<1x64xf32>
      %67 = arith.addf %65, %66 : vector<1x64xf32>
      %c0_33 = arith.constant 0 : index
      %c0_34 = arith.constant 0 : index
      %68 = vector.load %arg11[%c0_33, %c0_34] : memref<1x64xf32, #tpu.memory_space<vmem>>, vector<1x64xf32>
      %69 = arith.addf %67, %68 : vector<1x64xf32>
      %70 = arith.negf %69 : vector<1x64xf32>
      %71 = math.exp %70 : vector<1x64xf32>
      %cst_35 = arith.constant 1.000000e+00 : f32
      %72 = vector.broadcast %cst_35 : f32 to vector<1x64xf32>
      %73 = arith.addf %72, %71 : vector<1x64xf32>
      %74 = arith.divf %72, %73 : vector<1x64xf32>
      %75 = vector.extract_strided_slice %52 {offsets = [0, 128], sizes = [1, 64], strides = [1, 1]} : vector<1x192xf32> to vector<1x64xf32>
      %c0_36 = arith.constant 0 : index
      %c0_37 = arith.constant 0 : index
      %76 = vector.load %arg12[%c0_36, %c0_37] : memref<1x64xf32, #tpu.memory_space<vmem>>, vector<1x64xf32>
      %77 = arith.addf %75, %76 : vector<1x64xf32>
      %78 = vector.extract_strided_slice %54 {offsets = [0, 128], sizes = [1, 64], strides = [1, 1]} : vector<1x192xf32> to vector<1x64xf32>
      %c0_38 = arith.constant 0 : index
      %c0_39 = arith.constant 0 : index
      %79 = vector.load %arg13[%c0_38, %c0_39] : memref<1x64xf32, #tpu.memory_space<vmem>>, vector<1x64xf32>
      %80 = arith.addf %78, %79 : vector<1x64xf32>
      %81 = arith.mulf %64, %80 : vector<1x64xf32>
      %82 = arith.addf %77, %81 : vector<1x64xf32>
      %83 = math.tanh %82 : vector<1x64xf32>
      %cst_40 = arith.constant 1.000000e+00 : f32
      %84 = vector.broadcast %cst_40 : f32 to vector<1x64xf32>
      %85 = arith.subf %84, %74 : vector<1x64xf32>
      %86 = arith.mulf %85, %83 : vector<1x64xf32>
      %87 = arith.mulf %74, %29 : vector<1x64xf32>
      %88 = arith.addf %86, %87 : vector<1x64xf32>
      %89 = tpu.concatenate %arg40, %arg39, %arg38 in 1 : vector<1x64xf32>, vector<1x64xf32>, vector<1x64xf32> -> vector<1x192xf32>
      %c0_41 = arith.constant 0 : index
      %c0_42 = arith.constant 0 : index
      %90 = vector.load %arg18[%c0_41, %c0_42] : memref<192x16xf32, #tpu.memory_space<vmem>>, vector<192x16xf32>
      %cst_43 = arith.constant dense<0.000000e+00> : vector<1x16xf32>
      %91 = tpu.matmul %89, %90, %cst_43 {dimension_numbers = #tpu.dot_dimension_numbers<[1], [0], [0], [1], [0, 0, 1, 1], [], []>} : vector<1x192xf32>, vector<192x16xf32>, vector<1x16xf32> -> vector<1x16xf32>
      %c0_44 = arith.constant 0 : index
      %c0_45 = arith.constant 0 : index
      %92 = vector.load %arg19[%c0_44, %c0_45] : memref<1x16xf32, #tpu.memory_space<vmem>>, vector<1x16xf32>
      %93 = arith.addf %91, %92 : vector<1x16xf32>
      %94 = vector.extract_strided_slice %89 {offsets = [0, 64], sizes = [1, 128], strides = [1, 1]} : vector<1x192xf32> to vector<1x128xf32>
      %c0_46 = arith.constant 0 : index
      %c0_47 = arith.constant 0 : index
      %95 = vector.load %arg16[%c0_46, %c0_47] : memref<128x16xf32, #tpu.memory_space<vmem>>, vector<128x16xf32>
      %cst_48 = arith.constant dense<0.000000e+00> : vector<1x16xf32>
      %96 = tpu.matmul %94, %95, %cst_48 {dimension_numbers = #tpu.dot_dimension_numbers<[1], [0], [0], [1], [0, 0, 1, 1], [], []>} : vector<1x128xf32>, vector<128x16xf32>, vector<1x16xf32> -> vector<1x16xf32>
      %c0_49 = arith.constant 0 : index
      %c0_50 = arith.constant 0 : index
      %97 = vector.load %arg17[%c0_49, %c0_50] : memref<1x16xf32, #tpu.memory_space<vmem>>, vector<1x16xf32>
      %98 = arith.addf %96, %97 : vector<1x16xf32>
      %c0_51 = arith.constant 0 : index
      %c0_52 = arith.constant 0 : index
      %99 = vector.load %arg14[%c0_51, %c0_52] : memref<64x16xf32, #tpu.memory_space<vmem>>, vector<64x16xf32>
      %cst_53 = arith.constant dense<0.000000e+00> : vector<1x16xf32>
      %100 = tpu.matmul %arg38, %99, %cst_53 {dimension_numbers = #tpu.dot_dimension_numbers<[1], [0], [0], [1], [0, 0, 1, 1], [], []>} : vector<1x64xf32>, vector<64x16xf32>, vector<1x16xf32> -> vector<1x16xf32>
      %c0_54 = arith.constant 0 : index
      %c0_55 = arith.constant 0 : index
      %101 = vector.load %arg15[%c0_54, %c0_55] : memref<1x16xf32, #tpu.memory_space<vmem>>, vector<1x16xf32>
      %102 = arith.addf %100, %101 : vector<1x16xf32>
      %c0_i32_56 = arith.constant 0 : i32
      %103 = arith.cmpi eq, %arg35, %c0_i32_56 : i32
      %c1_i32_57 = arith.constant 1 : i32
      %104 = arith.cmpi eq, %arg35, %c1_i32_57 : i32
      %105 = arith.select %104, %98, %93 : vector<1x16xf32>
      %106 = arith.select %103, %102, %105 : vector<1x16xf32>
      %c0_58 = arith.constant 0 : index
      %c0_59 = arith.constant 0 : index
      %107 = vector.load %arg20[%c0_58, %c0_59] : memref<64x33xf32, #tpu.memory_space<vmem>>, vector<64x33xf32>
      %cst_60 = arith.constant dense<0.000000e+00> : vector<1x33xf32>
      %108 = tpu.matmul %88, %107, %cst_60 {dimension_numbers = #tpu.dot_dimension_numbers<[1], [0], [0], [1], [0, 0, 1, 1], [], []>} : vector<1x64xf32>, vector<64x33xf32>, vector<1x33xf32> -> vector<1x33xf32>
      %c0_61 = arith.constant 0 : index
      %c0_62 = arith.constant 0 : index
      %109 = vector.load %arg21[%c0_61, %c0_62] : memref<16x33xf32, #tpu.memory_space<vmem>>, vector<16x33xf32>
      %cst_63 = arith.constant dense<0.000000e+00> : vector<1x33xf32>
      %110 = tpu.matmul %106, %109, %cst_63 {dimension_numbers = #tpu.dot_dimension_numbers<[1], [0], [0], [1], [0, 0, 1, 1], [], []>} : vector<1x16xf32>, vector<16x33xf32>, vector<1x33xf32> -> vector<1x33xf32>
      %111 = arith.addf %108, %110 : vector<1x33xf32>
      %c0_64 = arith.constant 0 : index
      %c0_65 = arith.constant 0 : index
      %112 = vector.load %arg22[%c0_64, %c0_65] : memref<1x33xf32, #tpu.memory_space<vmem>>, vector<1x33xf32>
      %113 = arith.addf %111, %112 : vector<1x33xf32>
      %114 = vector.broadcast %28 : vector<1x64xf32> to vector<33x64xf32>
      %115 = arith.mulf %114, %arg37 : vector<33x64xf32>
      %116 = vector.shape_cast %88 : vector<1x64xf32> to vector<1x64xf32>
      %117 = vector.broadcast %116 : vector<1x64xf32> to vector<33x64xf32>
      %118 = tpu.concatenate %115, %117 in 1 : vector<33x64xf32>, vector<33x64xf32> -> vector<33x128xf32>
      %119 = vector.extract_strided_slice %118 {offsets = [0, 0], sizes = [1, 128], strides = [1, 1]} : vector<33x128xf32> to vector<1x128xf32>
      %c0_66 = arith.constant 0 : index
      %c0_67 = arith.constant 0 : index
      %c0_68 = arith.constant 0 : index
      %120 = vector.load %arg27[%c0_66, %c0_67, %c0_68] : memref<33x128x256xf32, #tpu.memory_space<vmem>>, vector<1x128x256xf32>
      %121 = vector.shape_cast %120 : vector<1x128x256xf32> to vector<128x256xf32>
      %cst_69 = arith.constant dense<0.000000e+00> : vector<1x256xf32>
      %122 = tpu.matmul %119, %121, %cst_69 {dimension_numbers = #tpu.dot_dimension_numbers<[1], [0], [0], [1], [0, 0, 1, 1], [], []>} : vector<1x128xf32>, vector<128x256xf32>, vector<1x256xf32> -> vector<1x256xf32>
      %c0_70 = arith.constant 0 : index
      %c0_71 = arith.constant 0 : index
      %123 = vector.load %arg34[%c0_70, %c0_71] : memref<33x256xf32, #tpu.memory_space<vmem>>, vector<1x256xf32>
      tpu.vector_store %arg34[%c0_70, %c0_71], %122 {strides = array<i32>} : memref<33x256xf32, #tpu.memory_space<vmem>>, vector<1x256xf32>,
      %124 = vector.extract_strided_slice %118 {offsets = [1, 0], sizes = [1, 128], strides = [1, 1]} : vector<33x128xf32> to vector<1x128xf32>
      %c1 = arith.constant 1 : index
      %c0_72 = arith.constant 0 : index
      %c0_73 = arith.constant 0 : index
      %125 = vector.load %arg27[%c1, %c0_72, %c0_73] : memref<33x128x256xf32, #tpu.memory_space<vmem>>, vector<1x128x256xf32>
      %126 = vector.shape_cast %125 : vector<1x128x256xf32> to vector<128x256xf32>
      %cst_74 = arith.constant dense<0.000000e+00> : vector<1x256xf32>
      %127 = tpu.matmul %124, %126, %cst_74 {dimension_numbers = #tpu.dot_dimension_numbers<[1], [0], [0], [1], [0, 0, 1, 1], [], []>} : vector<1x128xf32>, vector<128x256xf32>, vector<1x256xf32> -> vector<1x256xf32>
      %c1_75 = arith.constant 1 : index
      %c0_76 = arith.constant 0 : index
      %128 = vector.load %arg34[%c1_75, %c0_76] : memref<33x256xf32, #tpu.memory_space<vmem>>, vector<1x256xf32>
      tpu.vector_store %arg34[%c1_75, %c0_76], %127 {strides = array<i32>} : memref<33x256xf32, #tpu.memory_space<vmem>>, vector<1x256xf32>,
      %129 = vector.extract_strided_slice %118 {offsets = [2, 0], sizes = [1, 128], strides = [1, 1]} : vector<33x128xf32> to vector<1x128xf32>
      %c2 = arith.constant 2 : index
      %c0_77 = arith.constant 0 : index
      %c0_78 = arith.constant 0 : index
      %130 = vector.load %arg27[%c2, %c0_77, %c0_78] : memref<33x128x256xf32, #tpu.memory_space<vmem>>, vector<1x128x256xf32>
      %131 = vector.shape_cast %130 : vector<1x128x256xf32> to vector<128x256xf32>
      %cst_79 = arith.constant dense<0.000000e+00> : vector<1x256xf32>
      %132 = tpu.matmul %129, %131, %cst_79 {dimension_numbers = #tpu.dot_dimension_numbers<[1], [0], [0], [1], [0, 0, 1, 1], [], []>} : vector<1x128xf32>, vector<128x256xf32>, vector<1x256xf32> -> vector<1x256xf32>
      %c2_80 = arith.constant 2 : index
      %c0_81 = arith.constant 0 : index
      %133 = vector.load %arg34[%c2_80, %c0_81] : memref<33x256xf32, #tpu.memory_space<vmem>>, vector<1x256xf32>
      tpu.vector_store %arg34[%c2_80, %c0_81], %132 {strides = array<i32>} : memref<33x256xf32, #tpu.memory_space<vmem>>, vector<1x256xf32>,
      %134 = vector.extract_strided_slice %118 {offsets = [3, 0], sizes = [1, 128], strides = [1, 1]} : vector<33x128xf32> to vector<1x128xf32>
      %c3 = arith.constant 3 : index
      %c0_82 = arith.constant 0 : index
      %c0_83 = arith.constant 0 : index
      %135 = vector.load %arg27[%c3, %c0_82, %c0_83] : memref<33x128x256xf32, #tpu.memory_space<vmem>>, vector<1x128x256xf32>
      %136 = vector.shape_cast %135 : vector<1x128x256xf32> to vector<128x256xf32>
      %cst_84 = arith.constant dense<0.000000e+00> : vector<1x256xf32>
      %137 = tpu.matmul %134, %136, %cst_84 {dimension_numbers = #tpu.dot_dimension_numbers<[1], [0], [0], [1], [0, 0, 1, 1], [], []>} : vector<1x128xf32>, vector<128x256xf32>, vector<1x256xf32> -> vector<1x256xf32>
      %c3_85 = arith.constant 3 : index
      %c0_86 = arith.constant 0 : index
      %138 = vector.load %arg34[%c3_85, %c0_86] : memref<33x256xf32, #tpu.memory_space<vmem>>, vector<1x256xf32>
      tpu.vector_store %arg34[%c3_85, %c0_86], %137 {strides = array<i32>} : memref<33x256xf32, #tpu.memory_space<vmem>>, vector<1x256xf32>,
      %139 = vector.extract_strided_slice %118 {offsets = [4, 0], sizes = [1, 128], strides = [1, 1]} : vector<33x128xf32> to vector<1x128xf32>
      %c4 = arith.constant 4 : index
      %c0_87 = arith.constant 0 : index
      %c0_88 = arith.constant 0 : index
      %140 = vector.load %arg27[%c4, %c0_87, %c0_88] : memref<33x128x256xf32, #tpu.memory_space<vmem>>, vector<1x128x256xf32>
      %141 = vector.shape_cast %140 : vector<1x128x256xf32> to vector<128x256xf32>
      %cst_89 = arith.constant dense<0.000000e+00> : vector<1x256xf32>
      %142 = tpu.matmul %139, %141, %cst_89 {dimension_numbers = #tpu.dot_dimension_numbers<[1], [0], [0], [1], [0, 0, 1, 1], [], []>} : vector<1x128xf32>, vector<128x256xf32>, vector<1x256xf32> -> vector<1x256xf32>
      %c4_90 = arith.constant 4 : index
      %c0_91 = arith.constant 0 : index
      %143 = vector.load %arg34[%c4_90, %c0_91] : memref<33x256xf32, #tpu.memory_space<vmem>>, vector<1x256xf32>
      tpu.vector_store %arg34[%c4_90, %c0_91], %142 {strides = array<i32>} : memref<33x256xf32, #tpu.memory_space<vmem>>, vector<1x256xf32>,
      %144 = vector.extract_strided_slice %118 {offsets = [5, 0], sizes = [1, 128], strides = [1, 1]} : vector<33x128xf32> to vector<1x128xf32>
      %c5 = arith.constant 5 : index
      %c0_92 = arith.constant 0 : index
      %c0_93 = arith.constant 0 : index
      %145 = vector.load %arg27[%c5, %c0_92, %c0_93] : memref<33x128x256xf32, #tpu.memory_space<vmem>>, vector<1x128x256xf32>
      %146 = vector.shape_cast %145 : vector<1x128x256xf32> to vector<128x256xf32>
      %cst_94 = arith.constant dense<0.000000e+00> : vector<1x256xf32>
      %147 = tpu.matmul %144, %146, %cst_94 {dimension_numbers = #tpu.dot_dimension_numbers<[1], [0], [0], [1], [0, 0, 1, 1], [], []>} : vector<1x128xf32>, vector<128x256xf32>, vector<1x256xf32> -> vector<1x256xf32>
      %c5_95 = arith.constant 5 : index
      %c0_96 = arith.constant 0 : index
      %148 = vector.load %arg34[%c5_95, %c0_96] : memref<33x256xf32, #tpu.memory_space<vmem>>, vector<1x256xf32>
      tpu.vector_store %arg34[%c5_95, %c0_96], %147 {strides = array<i32>} : memref<33x256xf32, #tpu.memory_space<vmem>>, vector<1x256xf32>,
      %149 = vector.extract_strided_slice %118 {offsets = [6, 0], sizes = [1, 128], strides = [1, 1]} : vector<33x128xf32> to vector<1x128xf32>
      %c6 = arith.constant 6 : index
      %c0_97 = arith.constant 0 : index
      %c0_98 = arith.constant 0 : index
      %150 = vector.load %arg27[%c6, %c0_97, %c0_98] : memref<33x128x256xf32, #tpu.memory_space<vmem>>, vector<1x128x256xf32>
      %151 = vector.shape_cast %150 : vector<1x128x256xf32> to vector<128x256xf32>
      %cst_99 = arith.constant dense<0.000000e+00> : vector<1x256xf32>
      %152 = tpu.matmul %149, %151, %cst_99 {dimension_numbers = #tpu.dot_dimension_numbers<[1], [0], [0], [1], [0, 0, 1, 1], [], []>} : vector<1x128xf32>, vector<128x256xf32>, vector<1x256xf32> -> vector<1x256xf32>
      %c6_100 = arith.constant 6 : index
      %c0_101 = arith.constant 0 : index
      %153 = vector.load %arg34[%c6_100, %c0_101] : memref<33x256xf32, #tpu.memory_space<vmem>>, vector<1x256xf32>
      tpu.vector_store %arg34[%c6_100, %c0_101], %152 {strides = array<i32>} : memref<33x256xf32, #tpu.memory_space<vmem>>, vector<1x256xf32>,
      %154 = vector.extract_strided_slice %118 {offsets = [7, 0], sizes = [1, 128], strides = [1, 1]} : vector<33x128xf32> to vector<1x128xf32>
      %c7 = arith.constant 7 : index
      %c0_102 = arith.constant 0 : index
      %c0_103 = arith.constant 0 : index
      %155 = vector.load %arg27[%c7, %c0_102, %c0_103] : memref<33x128x256xf32, #tpu.memory_space<vmem>>, vector<1x128x256xf32>
      %156 = vector.shape_cast %155 : vector<1x128x256xf32> to vector<128x256xf32>
      %cst_104 = arith.constant dense<0.000000e+00> : vector<1x256xf32>
      %157 = tpu.matmul %154, %156, %cst_104 {dimension_numbers = #tpu.dot_dimension_numbers<[1], [0], [0], [1], [0, 0, 1, 1], [], []>} : vector<1x128xf32>, vector<128x256xf32>, vector<1x256xf32> -> vector<1x256xf32>
      %c7_105 = arith.constant 7 : index
      %c0_106 = arith.constant 0 : index
      %158 = vector.load %arg34[%c7_105, %c0_106] : memref<33x256xf32, #tpu.memory_space<vmem>>, vector<1x256xf32>
      tpu.vector_store %arg34[%c7_105, %c0_106], %157 {strides = array<i32>} : memref<33x256xf32, #tpu.memory_space<vmem>>, vector<1x256xf32>,
      %159 = vector.extract_strided_slice %118 {offsets = [8, 0], sizes = [1, 128], strides = [1, 1]} : vector<33x128xf32> to vector<1x128xf32>
      %c8 = arith.constant 8 : index
      %c0_107 = arith.constant 0 : index
      %c0_108 = arith.constant 0 : index
      %160 = vector.load %arg27[%c8, %c0_107, %c0_108] : memref<33x128x256xf32, #tpu.memory_space<vmem>>, vector<1x128x256xf32>
      %161 = vector.shape_cast %160 : vector<1x128x256xf32> to vector<128x256xf32>
      %cst_109 = arith.constant dense<0.000000e+00> : vector<1x256xf32>
      %162 = tpu.matmul %159, %161, %cst_109 {dimension_numbers = #tpu.dot_dimension_numbers<[1], [0], [0], [1], [0, 0, 1, 1], [], []>} : vector<1x128xf32>, vector<128x256xf32>, vector<1x256xf32> -> vector<1x256xf32>
      %c8_110 = arith.constant 8 : index
      %c0_111 = arith.constant 0 : index
      %163 = vector.load %arg34[%c8_110, %c0_111] : memref<33x256xf32, #tpu.memory_space<vmem>>, vector<1x256xf32>
      tpu.vector_store %arg34[%c8_110, %c0_111], %162 {strides = array<i32>} : memref<33x256xf32, #tpu.memory_space<vmem>>, vector<1x256xf32>,
      %164 = vector.extract_strided_slice %118 {offsets = [9, 0], sizes = [1, 128], strides = [1, 1]} : vector<33x128xf32> to vector<1x128xf32>
      %c9 = arith.constant 9 : index
      %c0_112 = arith.constant 0 : index
      %c0_113 = arith.constant 0 : index
      %165 = vector.load %arg27[%c9, %c0_112, %c0_113] : memref<33x128x256xf32, #tpu.memory_space<vmem>>, vector<1x128x256xf32>
      %166 = vector.shape_cast %165 : vector<1x128x256xf32> to vector<128x256xf32>
      %cst_114 = arith.constant dense<0.000000e+00> : vector<1x256xf32>
      %167 = tpu.matmul %164, %166, %cst_114 {dimension_numbers = #tpu.dot_dimension_numbers<[1], [0], [0], [1], [0, 0, 1, 1], [], []>} : vector<1x128xf32>, vector<128x256xf32>, vector<1x256xf32> -> vector<1x256xf32>
      %c9_115 = arith.constant 9 : index
      %c0_116 = arith.constant 0 : index
      %168 = vector.load %arg34[%c9_115, %c0_116] : memref<33x256xf32, #tpu.memory_space<vmem>>, vector<1x256xf32>
      tpu.vector_store %arg34[%c9_115, %c0_116], %167 {strides = array<i32>} : memref<33x256xf32, #tpu.memory_space<vmem>>, vector<1x256xf32>,
      %169 = vector.extract_strided_slice %118 {offsets = [10, 0], sizes = [1, 128], strides = [1, 1]} : vector<33x128xf32> to vector<1x128xf32>
      %c10 = arith.constant 10 : index
      %c0_117 = arith.constant 0 : index
      %c0_118 = arith.constant 0 : index
      %170 = vector.load %arg27[%c10, %c0_117, %c0_118] : memref<33x128x256xf32, #tpu.memory_space<vmem>>, vector<1x128x256xf32>
      %171 = vector.shape_cast %170 : vector<1x128x256xf32> to vector<128x256xf32>
      %cst_119 = arith.constant dense<0.000000e+00> : vector<1x256xf32>
      %172 = tpu.matmul %169, %171, %cst_119 {dimension_numbers = #tpu.dot_dimension_numbers<[1], [0], [0], [1], [0, 0, 1, 1], [], []>} : vector<1x128xf32>, vector<128x256xf32>, vector<1x256xf32> -> vector<1x256xf32>
      %c10_120 = arith.constant 10 : index
      %c0_121 = arith.constant 0 : index
      %173 = vector.load %arg34[%c10_120, %c0_121] : memref<33x256xf32, #tpu.memory_space<vmem>>, vector<1x256xf32>
      tpu.vector_store %arg34[%c10_120, %c0_121], %172 {strides = array<i32>} : memref<33x256xf32, #tpu.memory_space<vmem>>, vector<1x256xf32>,
      %174 = vector.extract_strided_slice %118 {offsets = [11, 0], sizes = [1, 128], strides = [1, 1]} : vector<33x128xf32> to vector<1x128xf32>
      %c11 = arith.constant 11 : index
      %c0_122 = arith.constant 0 : index
      %c0_123 = arith.constant 0 : index
      %175 = vector.load %arg27[%c11, %c0_122, %c0_123] : memref<33x128x256xf32, #tpu.memory_space<vmem>>, vector<1x128x256xf32>
      %176 = vector.shape_cast %175 : vector<1x128x256xf32> to vector<128x256xf32>
      %cst_124 = arith.constant dense<0.000000e+00> : vector<1x256xf32>
      %177 = tpu.matmul %174, %176, %cst_124 {dimension_numbers = #tpu.dot_dimension_numbers<[1], [0], [0], [1], [0, 0, 1, 1], [], []>} : vector<1x128xf32>, vector<128x256xf32>, vector<1x256xf32> -> vector<1x256xf32>
      %c11_125 = arith.constant 11 : index
      %c0_126 = arith.constant 0 : index
      %178 = vector.load %arg34[%c11_125, %c0_126] : memref<33x256xf32, #tpu.memory_space<vmem>>, vector<1x256xf32>
      tpu.vector_store %arg34[%c11_125, %c0_126], %177 {strides = array<i32>} : memref<33x256xf32, #tpu.memory_space<vmem>>, vector<1x256xf32>,
      %179 = vector.extract_strided_slice %118 {offsets = [12, 0], sizes = [1, 128], strides = [1, 1]} : vector<33x128xf32> to vector<1x128xf32>
      %c12 = arith.constant 12 : index
      %c0_127 = arith.constant 0 : index
      %c0_128 = arith.constant 0 : index
      %180 = vector.load %arg27[%c12, %c0_127, %c0_128] : memref<33x128x256xf32, #tpu.memory_space<vmem>>, vector<1x128x256xf32>
      %181 = vector.shape_cast %180 : vector<1x128x256xf32> to vector<128x256xf32>
      %cst_129 = arith.constant dense<0.000000e+00> : vector<1x256xf32>
      %182 = tpu.matmul %179, %181, %cst_129 {dimension_numbers = #tpu.dot_dimension_numbers<[1], [0], [0], [1], [0, 0, 1, 1], [], []>} : vector<1x128xf32>, vector<128x256xf32>, vector<1x256xf32> -> vector<1x256xf32>
      %c12_130 = arith.constant 12 : index
      %c0_131 = arith.constant 0 : index
      %183 = vector.load %arg34[%c12_130, %c0_131] : memref<33x256xf32, #tpu.memory_space<vmem>>, vector<1x256xf32>
      tpu.vector_store %arg34[%c12_130, %c0_131], %182 {strides = array<i32>} : memref<33x256xf32, #tpu.memory_space<vmem>>, vector<1x256xf32>,
      %184 = vector.extract_strided_slice %118 {offsets = [13, 0], sizes = [1, 128], strides = [1, 1]} : vector<33x128xf32> to vector<1x128xf32>
      %c13 = arith.constant 13 : index
      %c0_132 = arith.constant 0 : index
      %c0_133 = arith.constant 0 : index
      %185 = vector.load %arg27[%c13, %c0_132, %c0_133] : memref<33x128x256xf32, #tpu.memory_space<vmem>>, vector<1x128x256xf32>
      %186 = vector.shape_cast %185 : vector<1x128x256xf32> to vector<128x256xf32>
      %cst_134 = arith.constant dense<0.000000e+00> : vector<1x256xf32>
      %187 = tpu.matmul %184, %186, %cst_134 {dimension_numbers = #tpu.dot_dimension_numbers<[1], [0], [0], [1], [0, 0, 1, 1], [], []>} : vector<1x128xf32>, vector<128x256xf32>, vector<1x256xf32> -> vector<1x256xf32>
      %c13_135 = arith.constant 13 : index
      %c0_136 = arith.constant 0 : index
      %188 = vector.load %arg34[%c13_135, %c0_136] : memref<33x256xf32, #tpu.memory_space<vmem>>, vector<1x256xf32>
      tpu.vector_store %arg34[%c13_135, %c0_136], %187 {strides = array<i32>} : memref<33x256xf32, #tpu.memory_space<vmem>>, vector<1x256xf32>,
      %189 = vector.extract_strided_slice %118 {offsets = [14, 0], sizes = [1, 128], strides = [1, 1]} : vector<33x128xf32> to vector<1x128xf32>
      %c14 = arith.constant 14 : index
      %c0_137 = arith.constant 0 : index
      %c0_138 = arith.constant 0 : index
      %190 = vector.load %arg27[%c14, %c0_137, %c0_138] : memref<33x128x256xf32, #tpu.memory_space<vmem>>, vector<1x128x256xf32>
      %191 = vector.shape_cast %190 : vector<1x128x256xf32> to vector<128x256xf32>
      %cst_139 = arith.constant dense<0.000000e+00> : vector<1x256xf32>
      %192 = tpu.matmul %189, %191, %cst_139 {dimension_numbers = #tpu.dot_dimension_numbers<[1], [0], [0], [1], [0, 0, 1, 1], [], []>} : vector<1x128xf32>, vector<128x256xf32>, vector<1x256xf32> -> vector<1x256xf32>
      %c14_140 = arith.constant 14 : index
      %c0_141 = arith.constant 0 : index
      %193 = vector.load %arg34[%c14_140, %c0_141] : memref<33x256xf32, #tpu.memory_space<vmem>>, vector<1x256xf32>
      tpu.vector_store %arg34[%c14_140, %c0_141], %192 {strides = array<i32>} : memref<33x256xf32, #tpu.memory_space<vmem>>, vector<1x256xf32>,
      %194 = vector.extract_strided_slice %118 {offsets = [15, 0], sizes = [1, 128], strides = [1, 1]} : vector<33x128xf32> to vector<1x128xf32>
      %c15 = arith.constant 15 : index
      %c0_142 = arith.constant 0 : index
      %c0_143 = arith.constant 0 : index
      %195 = vector.load %arg27[%c15, %c0_142, %c0_143] : memref<33x128x256xf32, #tpu.memory_space<vmem>>, vector<1x128x256xf32>
      %196 = vector.shape_cast %195 : vector<1x128x256xf32> to vector<128x256xf32>
      %cst_144 = arith.constant dense<0.000000e+00> : vector<1x256xf32>
      %197 = tpu.matmul %194, %196, %cst_144 {dimension_numbers = #tpu.dot_dimension_numbers<[1], [0], [0], [1], [0, 0, 1, 1], [], []>} : vector<1x128xf32>, vector<128x256xf32>, vector<1x256xf32> -> vector<1x256xf32>
      %c15_145 = arith.constant 15 : index
      %c0_146 = arith.constant 0 : index
      %198 = vector.load %arg34[%c15_145, %c0_146] : memref<33x256xf32, #tpu.memory_space<vmem>>, vector<1x256xf32>
      tpu.vector_store %arg34[%c15_145, %c0_146], %197 {strides = array<i32>} : memref<33x256xf32, #tpu.memory_space<vmem>>, vector<1x256xf32>,
      %199 = vector.extract_strided_slice %118 {offsets = [16, 0], sizes = [1, 128], strides = [1, 1]} : vector<33x128xf32> to vector<1x128xf32>
      %c16 = arith.constant 16 : index
      %c0_147 = arith.constant 0 : index
      %c0_148 = arith.constant 0 : index
      %200 = vector.load %arg27[%c16, %c0_147, %c0_148] : memref<33x128x256xf32, #tpu.memory_space<vmem>>, vector<1x128x256xf32>
      %201 = vector.shape_cast %200 : vector<1x128x256xf32> to vector<128x256xf32>
      %cst_149 = arith.constant dense<0.000000e+00> : vector<1x256xf32>
      %202 = tpu.matmul %199, %201, %cst_149 {dimension_numbers = #tpu.dot_dimension_numbers<[1], [0], [0], [1], [0, 0, 1, 1], [], []>} : vector<1x128xf32>, vector<128x256xf32>, vector<1x256xf32> -> vector<1x256xf32>
      %c16_150 = arith.constant 16 : index
      %c0_151 = arith.constant 0 : index
      %203 = vector.load %arg34[%c16_150, %c0_151] : memref<33x256xf32, #tpu.memory_space<vmem>>, vector<1x256xf32>
      tpu.vector_store %arg34[%c16_150, %c0_151], %202 {strides = array<i32>} : memref<33x256xf32, #tpu.memory_space<vmem>>, vector<1x256xf32>,
      %204 = vector.extract_strided_slice %118 {offsets = [17, 0], sizes = [1, 128], strides = [1, 1]} : vector<33x128xf32> to vector<1x128xf32>
      %c17 = arith.constant 17 : index
      %c0_152 = arith.constant 0 : index
      %c0_153 = arith.constant 0 : index
      %205 = vector.load %arg27[%c17, %c0_152, %c0_153] : memref<33x128x256xf32, #tpu.memory_space<vmem>>, vector<1x128x256xf32>
      %206 = vector.shape_cast %205 : vector<1x128x256xf32> to vector<128x256xf32>
      %cst_154 = arith.constant dense<0.000000e+00> : vector<1x256xf32>
      %207 = tpu.matmul %204, %206, %cst_154 {dimension_numbers = #tpu.dot_dimension_numbers<[1], [0], [0], [1], [0, 0, 1, 1], [], []>} : vector<1x128xf32>, vector<128x256xf32>, vector<1x256xf32> -> vector<1x256xf32>
      %c17_155 = arith.constant 17 : index
      %c0_156 = arith.constant 0 : index
      %208 = vector.load %arg34[%c17_155, %c0_156] : memref<33x256xf32, #tpu.memory_space<vmem>>, vector<1x256xf32>
      tpu.vector_store %arg34[%c17_155, %c0_156], %207 {strides = array<i32>} : memref<33x256xf32, #tpu.memory_space<vmem>>, vector<1x256xf32>,
      %209 = vector.extract_strided_slice %118 {offsets = [18, 0], sizes = [1, 128], strides = [1, 1]} : vector<33x128xf32> to vector<1x128xf32>
      %c18 = arith.constant 18 : index
      %c0_157 = arith.constant 0 : index
      %c0_158 = arith.constant 0 : index
      %210 = vector.load %arg27[%c18, %c0_157, %c0_158] : memref<33x128x256xf32, #tpu.memory_space<vmem>>, vector<1x128x256xf32>
      %211 = vector.shape_cast %210 : vector<1x128x256xf32> to vector<128x256xf32>
      %cst_159 = arith.constant dense<0.000000e+00> : vector<1x256xf32>
      %212 = tpu.matmul %209, %211, %cst_159 {dimension_numbers = #tpu.dot_dimension_numbers<[1], [0], [0], [1], [0, 0, 1, 1], [], []>} : vector<1x128xf32>, vector<128x256xf32>, vector<1x256xf32> -> vector<1x256xf32>
      %c18_160 = arith.constant 18 : index
      %c0_161 = arith.constant 0 : index
      %213 = vector.load %arg34[%c18_160, %c0_161] : memref<33x256xf32, #tpu.memory_space<vmem>>, vector<1x256xf32>
      tpu.vector_store %arg34[%c18_160, %c0_161], %212 {strides = array<i32>} : memref<33x256xf32, #tpu.memory_space<vmem>>, vector<1x256xf32>,
      %214 = vector.extract_strided_slice %118 {offsets = [19, 0], sizes = [1, 128], strides = [1, 1]} : vector<33x128xf32> to vector<1x128xf32>
      %c19 = arith.constant 19 : index
      %c0_162 = arith.constant 0 : index
      %c0_163 = arith.constant 0 : index
      %215 = vector.load %arg27[%c19, %c0_162, %c0_163] : memref<33x128x256xf32, #tpu.memory_space<vmem>>, vector<1x128x256xf32>
      %216 = vector.shape_cast %215 : vector<1x128x256xf32> to vector<128x256xf32>
      %cst_164 = arith.constant dense<0.000000e+00> : vector<1x256xf32>
      %217 = tpu.matmul %214, %216, %cst_164 {dimension_numbers = #tpu.dot_dimension_numbers<[1], [0], [0], [1], [0, 0, 1, 1], [], []>} : vector<1x128xf32>, vector<128x256xf32>, vector<1x256xf32> -> vector<1x256xf32>
      %c19_165 = arith.constant 19 : index
      %c0_166 = arith.constant 0 : index
      %218 = vector.load %arg34[%c19_165, %c0_166] : memref<33x256xf32, #tpu.memory_space<vmem>>, vector<1x256xf32>
      tpu.vector_store %arg34[%c19_165, %c0_166], %217 {strides = array<i32>} : memref<33x256xf32, #tpu.memory_space<vmem>>, vector<1x256xf32>,
      %219 = vector.extract_strided_slice %118 {offsets = [20, 0], sizes = [1, 128], strides = [1, 1]} : vector<33x128xf32> to vector<1x128xf32>
      %c20 = arith.constant 20 : index
      %c0_167 = arith.constant 0 : index
      %c0_168 = arith.constant 0 : index
      %220 = vector.load %arg27[%c20, %c0_167, %c0_168] : memref<33x128x256xf32, #tpu.memory_space<vmem>>, vector<1x128x256xf32>
      %221 = vector.shape_cast %220 : vector<1x128x256xf32> to vector<128x256xf32>
      %cst_169 = arith.constant dense<0.000000e+00> : vector<1x256xf32>
      %222 = tpu.matmul %219, %221, %cst_169 {dimension_numbers = #tpu.dot_dimension_numbers<[1], [0], [0], [1], [0, 0, 1, 1], [], []>} : vector<1x128xf32>, vector<128x256xf32>, vector<1x256xf32> -> vector<1x256xf32>
      %c20_170 = arith.constant 20 : index
      %c0_171 = arith.constant 0 : index
      %223 = vector.load %arg34[%c20_170, %c0_171] : memref<33x256xf32, #tpu.memory_space<vmem>>, vector<1x256xf32>
      tpu.vector_store %arg34[%c20_170, %c0_171], %222 {strides = array<i32>} : memref<33x256xf32, #tpu.memory_space<vmem>>, vector<1x256xf32>,
      %224 = vector.extract_strided_slice %118 {offsets = [21, 0], sizes = [1, 128], strides = [1, 1]} : vector<33x128xf32> to vector<1x128xf32>
      %c21 = arith.constant 21 : index
      %c0_172 = arith.constant 0 : index
      %c0_173 = arith.constant 0 : index
      %225 = vector.load %arg27[%c21, %c0_172, %c0_173] : memref<33x128x256xf32, #tpu.memory_space<vmem>>, vector<1x128x256xf32>
      %226 = vector.shape_cast %225 : vector<1x128x256xf32> to vector<128x256xf32>
      %cst_174 = arith.constant dense<0.000000e+00> : vector<1x256xf32>
      %227 = tpu.matmul %224, %226, %cst_174 {dimension_numbers = #tpu.dot_dimension_numbers<[1], [0], [0], [1], [0, 0, 1, 1], [], []>} : vector<1x128xf32>, vector<128x256xf32>, vector<1x256xf32> -> vector<1x256xf32>
      %c21_175 = arith.constant 21 : index
      %c0_176 = arith.constant 0 : index
      %228 = vector.load %arg34[%c21_175, %c0_176] : memref<33x256xf32, #tpu.memory_space<vmem>>, vector<1x256xf32>
      tpu.vector_store %arg34[%c21_175, %c0_176], %227 {strides = array<i32>} : memref<33x256xf32, #tpu.memory_space<vmem>>, vector<1x256xf32>,
      %229 = vector.extract_strided_slice %118 {offsets = [22, 0], sizes = [1, 128], strides = [1, 1]} : vector<33x128xf32> to vector<1x128xf32>
      %c22 = arith.constant 22 : index
      %c0_177 = arith.constant 0 : index
      %c0_178 = arith.constant 0 : index
      %230 = vector.load %arg27[%c22, %c0_177, %c0_178] : memref<33x128x256xf32, #tpu.memory_space<vmem>>, vector<1x128x256xf32>
      %231 = vector.shape_cast %230 : vector<1x128x256xf32> to vector<128x256xf32>
      %cst_179 = arith.constant dense<0.000000e+00> : vector<1x256xf32>
      %232 = tpu.matmul %229, %231, %cst_179 {dimension_numbers = #tpu.dot_dimension_numbers<[1], [0], [0], [1], [0, 0, 1, 1], [], []>} : vector<1x128xf32>, vector<128x256xf32>, vector<1x256xf32> -> vector<1x256xf32>
      %c22_180 = arith.constant 22 : index
      %c0_181 = arith.constant 0 : index
      %233 = vector.load %arg34[%c22_180, %c0_181] : memref<33x256xf32, #tpu.memory_space<vmem>>, vector<1x256xf32>
      tpu.vector_store %arg34[%c22_180, %c0_181], %232 {strides = array<i32>} : memref<33x256xf32, #tpu.memory_space<vmem>>, vector<1x256xf32>,
      %234 = vector.extract_strided_slice %118 {offsets = [23, 0], sizes = [1, 128], strides = [1, 1]} : vector<33x128xf32> to vector<1x128xf32>
      %c23 = arith.constant 23 : index
      %c0_182 = arith.constant 0 : index
      %c0_183 = arith.constant 0 : index
      %235 = vector.load %arg27[%c23, %c0_182, %c0_183] : memref<33x128x256xf32, #tpu.memory_space<vmem>>, vector<1x128x256xf32>
      %236 = vector.shape_cast %235 : vector<1x128x256xf32> to vector<128x256xf32>
      %cst_184 = arith.constant dense<0.000000e+00> : vector<1x256xf32>
      %237 = tpu.matmul %234, %236, %cst_184 {dimension_numbers = #tpu.dot_dimension_numbers<[1], [0], [0], [1], [0, 0, 1, 1], [], []>} : vector<1x128xf32>, vector<128x256xf32>, vector<1x256xf32> -> vector<1x256xf32>
      %c23_185 = arith.constant 23 : index
      %c0_186 = arith.constant 0 : index
      %238 = vector.load %arg34[%c23_185, %c0_186] : memref<33x256xf32, #tpu.memory_space<vmem>>, vector<1x256xf32>
      tpu.vector_store %arg34[%c23_185, %c0_186], %237 {strides = array<i32>} : memref<33x256xf32, #tpu.memory_space<vmem>>, vector<1x256xf32>,
      %239 = vector.extract_strided_slice %118 {offsets = [24, 0], sizes = [1, 128], strides = [1, 1]} : vector<33x128xf32> to vector<1x128xf32>
      %c24 = arith.constant 24 : index
      %c0_187 = arith.constant 0 : index
      %c0_188 = arith.constant 0 : index
      %240 = vector.load %arg27[%c24, %c0_187, %c0_188] : memref<33x128x256xf32, #tpu.memory_space<vmem>>, vector<1x128x256xf32>
      %241 = vector.shape_cast %240 : vector<1x128x256xf32> to vector<128x256xf32>
      %cst_189 = arith.constant dense<0.000000e+00> : vector<1x256xf32>
      %242 = tpu.matmul %239, %241, %cst_189 {dimension_numbers = #tpu.dot_dimension_numbers<[1], [0], [0], [1], [0, 0, 1, 1], [], []>} : vector<1x128xf32>, vector<128x256xf32>, vector<1x256xf32> -> vector<1x256xf32>
      %c24_190 = arith.constant 24 : index
      %c0_191 = arith.constant 0 : index
      %243 = vector.load %arg34[%c24_190, %c0_191] : memref<33x256xf32, #tpu.memory_space<vmem>>, vector<1x256xf32>
      tpu.vector_store %arg34[%c24_190, %c0_191], %242 {strides = array<i32>} : memref<33x256xf32, #tpu.memory_space<vmem>>, vector<1x256xf32>,
      %244 = vector.extract_strided_slice %118 {offsets = [25, 0], sizes = [1, 128], strides = [1, 1]} : vector<33x128xf32> to vector<1x128xf32>
      %c25 = arith.constant 25 : index
      %c0_192 = arith.constant 0 : index
      %c0_193 = arith.constant 0 : index
      %245 = vector.load %arg27[%c25, %c0_192, %c0_193] : memref<33x128x256xf32, #tpu.memory_space<vmem>>, vector<1x128x256xf32>
      %246 = vector.shape_cast %245 : vector<1x128x256xf32> to vector<128x256xf32>
      %cst_194 = arith.constant dense<0.000000e+00> : vector<1x256xf32>
      %247 = tpu.matmul %244, %246, %cst_194 {dimension_numbers = #tpu.dot_dimension_numbers<[1], [0], [0], [1], [0, 0, 1, 1], [], []>} : vector<1x128xf32>, vector<128x256xf32>, vector<1x256xf32> -> vector<1x256xf32>
      %c25_195 = arith.constant 25 : index
      %c0_196 = arith.constant 0 : index
      %248 = vector.load %arg34[%c25_195, %c0_196] : memref<33x256xf32, #tpu.memory_space<vmem>>, vector<1x256xf32>
      tpu.vector_store %arg34[%c25_195, %c0_196], %247 {strides = array<i32>} : memref<33x256xf32, #tpu.memory_space<vmem>>, vector<1x256xf32>,
      %249 = vector.extract_strided_slice %118 {offsets = [26, 0], sizes = [1, 128], strides = [1, 1]} : vector<33x128xf32> to vector<1x128xf32>
      %c26 = arith.constant 26 : index
      %c0_197 = arith.constant 0 : index
      %c0_198 = arith.constant 0 : index
      %250 = vector.load %arg27[%c26, %c0_197, %c0_198] : memref<33x128x256xf32, #tpu.memory_space<vmem>>, vector<1x128x256xf32>
      %251 = vector.shape_cast %250 : vector<1x128x256xf32> to vector<128x256xf32>
      %cst_199 = arith.constant dense<0.000000e+00> : vector<1x256xf32>
      %252 = tpu.matmul %249, %251, %cst_199 {dimension_numbers = #tpu.dot_dimension_numbers<[1], [0], [0], [1], [0, 0, 1, 1], [], []>} : vector<1x128xf32>, vector<128x256xf32>, vector<1x256xf32> -> vector<1x256xf32>
      %c26_200 = arith.constant 26 : index
      %c0_201 = arith.constant 0 : index
      %253 = vector.load %arg34[%c26_200, %c0_201] : memref<33x256xf32, #tpu.memory_space<vmem>>, vector<1x256xf32>
      tpu.vector_store %arg34[%c26_200, %c0_201], %252 {strides = array<i32>} : memref<33x256xf32, #tpu.memory_space<vmem>>, vector<1x256xf32>,
      %254 = vector.extract_strided_slice %118 {offsets = [27, 0], sizes = [1, 128], strides = [1, 1]} : vector<33x128xf32> to vector<1x128xf32>
      %c27 = arith.constant 27 : index
      %c0_202 = arith.constant 0 : index
      %c0_203 = arith.constant 0 : index
      %255 = vector.load %arg27[%c27, %c0_202, %c0_203] : memref<33x128x256xf32, #tpu.memory_space<vmem>>, vector<1x128x256xf32>
      %256 = vector.shape_cast %255 : vector<1x128x256xf32> to vector<128x256xf32>
      %cst_204 = arith.constant dense<0.000000e+00> : vector<1x256xf32>
      %257 = tpu.matmul %254, %256, %cst_204 {dimension_numbers = #tpu.dot_dimension_numbers<[1], [0], [0], [1], [0, 0, 1, 1], [], []>} : vector<1x128xf32>, vector<128x256xf32>, vector<1x256xf32> -> vector<1x256xf32>
      %c27_205 = arith.constant 27 : index
      %c0_206 = arith.constant 0 : index
      %258 = vector.load %arg34[%c27_205, %c0_206] : memref<33x256xf32, #tpu.memory_space<vmem>>, vector<1x256xf32>
      tpu.vector_store %arg34[%c27_205, %c0_206], %257 {strides = array<i32>} : memref<33x256xf32, #tpu.memory_space<vmem>>, vector<1x256xf32>,
      %259 = vector.extract_strided_slice %118 {offsets = [28, 0], sizes = [1, 128], strides = [1, 1]} : vector<33x128xf32> to vector<1x128xf32>
      %c28 = arith.constant 28 : index
      %c0_207 = arith.constant 0 : index
      %c0_208 = arith.constant 0 : index
      %260 = vector.load %arg27[%c28, %c0_207, %c0_208] : memref<33x128x256xf32, #tpu.memory_space<vmem>>, vector<1x128x256xf32>
      %261 = vector.shape_cast %260 : vector<1x128x256xf32> to vector<128x256xf32>
      %cst_209 = arith.constant dense<0.000000e+00> : vector<1x256xf32>
      %262 = tpu.matmul %259, %261, %cst_209 {dimension_numbers = #tpu.dot_dimension_numbers<[1], [0], [0], [1], [0, 0, 1, 1], [], []>} : vector<1x128xf32>, vector<128x256xf32>, vector<1x256xf32> -> vector<1x256xf32>
      %c28_210 = arith.constant 28 : index
      %c0_211 = arith.constant 0 : index
      %263 = vector.load %arg34[%c28_210, %c0_211] : memref<33x256xf32, #tpu.memory_space<vmem>>, vector<1x256xf32>
      tpu.vector_store %arg34[%c28_210, %c0_211], %262 {strides = array<i32>} : memref<33x256xf32, #tpu.memory_space<vmem>>, vector<1x256xf32>,
      %264 = vector.extract_strided_slice %118 {offsets = [29, 0], sizes = [1, 128], strides = [1, 1]} : vector<33x128xf32> to vector<1x128xf32>
      %c29 = arith.constant 29 : index
      %c0_212 = arith.constant 0 : index
      %c0_213 = arith.constant 0 : index
      %265 = vector.load %arg27[%c29, %c0_212, %c0_213] : memref<33x128x256xf32, #tpu.memory_space<vmem>>, vector<1x128x256xf32>
      %266 = vector.shape_cast %265 : vector<1x128x256xf32> to vector<128x256xf32>
      %cst_214 = arith.constant dense<0.000000e+00> : vector<1x256xf32>
      %267 = tpu.matmul %264, %266, %cst_214 {dimension_numbers = #tpu.dot_dimension_numbers<[1], [0], [0], [1], [0, 0, 1, 1], [], []>} : vector<1x128xf32>, vector<128x256xf32>, vector<1x256xf32> -> vector<1x256xf32>
      %c29_215 = arith.constant 29 : index
      %c0_216 = arith.constant 0 : index
      %268 = vector.load %arg34[%c29_215, %c0_216] : memref<33x256xf32, #tpu.memory_space<vmem>>, vector<1x256xf32>
      tpu.vector_store %arg34[%c29_215, %c0_216], %267 {strides = array<i32>} : memref<33x256xf32, #tpu.memory_space<vmem>>, vector<1x256xf32>,
      %269 = vector.extract_strided_slice %118 {offsets = [30, 0], sizes = [1, 128], strides = [1, 1]} : vector<33x128xf32> to vector<1x128xf32>
      %c30 = arith.constant 30 : index
      %c0_217 = arith.constant 0 : index
      %c0_218 = arith.constant 0 : index
      %270 = vector.load %arg27[%c30, %c0_217, %c0_218] : memref<33x128x256xf32, #tpu.memory_space<vmem>>, vector<1x128x256xf32>
      %271 = vector.shape_cast %270 : vector<1x128x256xf32> to vector<128x256xf32>
      %cst_219 = arith.constant dense<0.000000e+00> : vector<1x256xf32>
      %272 = tpu.matmul %269, %271, %cst_219 {dimension_numbers = #tpu.dot_dimension_numbers<[1], [0], [0], [1], [0, 0, 1, 1], [], []>} : vector<1x128xf32>, vector<128x256xf32>, vector<1x256xf32> -> vector<1x256xf32>
      %c30_220 = arith.constant 30 : index
      %c0_221 = arith.constant 0 : index
      %273 = vector.load %arg34[%c30_220, %c0_221] : memref<33x256xf32, #tpu.memory_space<vmem>>, vector<1x256xf32>
      tpu.vector_store %arg34[%c30_220, %c0_221], %272 {strides = array<i32>} : memref<33x256xf32, #tpu.memory_space<vmem>>, vector<1x256xf32>,
      %274 = vector.extract_strided_slice %118 {offsets = [31, 0], sizes = [1, 128], strides = [1, 1]} : vector<33x128xf32> to vector<1x128xf32>
      %c31 = arith.constant 31 : index
      %c0_222 = arith.constant 0 : index
      %c0_223 = arith.constant 0 : index
      %275 = vector.load %arg27[%c31, %c0_222, %c0_223] : memref<33x128x256xf32, #tpu.memory_space<vmem>>, vector<1x128x256xf32>
      %276 = vector.shape_cast %275 : vector<1x128x256xf32> to vector<128x256xf32>
      %cst_224 = arith.constant dense<0.000000e+00> : vector<1x256xf32>
      %277 = tpu.matmul %274, %276, %cst_224 {dimension_numbers = #tpu.dot_dimension_numbers<[1], [0], [0], [1], [0, 0, 1, 1], [], []>} : vector<1x128xf32>, vector<128x256xf32>, vector<1x256xf32> -> vector<1x256xf32>
      %c31_225 = arith.constant 31 : index
      %c0_226 = arith.constant 0 : index
      %278 = vector.load %arg34[%c31_225, %c0_226] : memref<33x256xf32, #tpu.memory_space<vmem>>, vector<1x256xf32>
      tpu.vector_store %arg34[%c31_225, %c0_226], %277 {strides = array<i32>} : memref<33x256xf32, #tpu.memory_space<vmem>>, vector<1x256xf32>,
      %279 = vector.extract_strided_slice %118 {offsets = [32, 0], sizes = [1, 128], strides = [1, 1]} : vector<33x128xf32> to vector<1x128xf32>
      %c32 = arith.constant 32 : index
      %c0_227 = arith.constant 0 : index
      %c0_228 = arith.constant 0 : index
      %280 = vector.load %arg27[%c32, %c0_227, %c0_228] : memref<33x128x256xf32, #tpu.memory_space<vmem>>, vector<1x128x256xf32>
      %281 = vector.shape_cast %280 : vector<1x128x256xf32> to vector<128x256xf32>
      %cst_229 = arith.constant dense<0.000000e+00> : vector<1x256xf32>
      %282 = tpu.matmul %279, %281, %cst_229 {dimension_numbers = #tpu.dot_dimension_numbers<[1], [0], [0], [1], [0, 0, 1, 1], [], []>} : vector<1x128xf32>, vector<128x256xf32>, vector<1x256xf32> -> vector<1x256xf32>
      %c32_230 = arith.constant 32 : index
      %c0_231 = arith.constant 0 : index
      %283 = vector.load %arg34[%c32_230, %c0_231] : memref<33x256xf32, #tpu.memory_space<vmem>>, vector<1x256xf32>
      tpu.vector_store %arg34[%c32_230, %c0_231], %282 {strides = array<i32>} : memref<33x256xf32, #tpu.memory_space<vmem>>, vector<1x256xf32>,
      %c0_232 = arith.constant 0 : index
      %c0_233 = arith.constant 0 : index
      %284 = vector.load %arg34[%c0_232, %c0_233] : memref<33x256xf32, #tpu.memory_space<vmem>>, vector<33x256xf32>
      %285 = vector.extract_strided_slice %284 {offsets = [0, 0], sizes = [33, 128], strides = [1, 1]} : vector<33x256xf32> to vector<33x128xf32>
      %c0_234 = arith.constant 0 : index
      %c0_235 = arith.constant 0 : index
      %286 = vector.load %arg28[%c0_234, %c0_235] : memref<33x128xf32, #tpu.memory_space<vmem>>, vector<33x128xf32>
      %287 = vector.broadcast %50 : vector<33x1xf32> to vector<33x128xf32>
      %288 = arith.mulf %286, %287 : vector<33x128xf32>
      %289 = arith.addf %285, %288 : vector<33x128xf32>
      %c0_236 = arith.constant 0 : index
      %c0_237 = arith.constant 0 : index
      %290 = vector.load %arg30[%c0_236, %c0_237] : memref<1x128xf32, #tpu.memory_space<vmem>>, vector<1x128xf32>
      %291 = vector.broadcast %290 : vector<1x128xf32> to vector<33x128xf32>
      %292 = arith.addf %289, %291 : vector<33x128xf32>
      %293 = arith.negf %292 : vector<33x128xf32>
      %294 = math.exp %293 : vector<33x128xf32>
      %cst_238 = arith.constant 1.000000e+00 : f32
      %295 = vector.broadcast %cst_238 : f32 to vector<33x128xf32>
      %296 = arith.addf %295, %294 : vector<33x128xf32>
      %297 = arith.divf %295, %296 : vector<33x128xf32>
      %298 = vector.extract_strided_slice %297 {offsets = [0, 0], sizes = [33, 64], strides = [1, 1]} : vector<33x128xf32> to vector<33x64xf32>
      %299 = vector.extract_strided_slice %297 {offsets = [0, 64], sizes = [33, 64], strides = [1, 1]} : vector<33x128xf32> to vector<33x64xf32>
      %300 = vector.extract_strided_slice %284 {offsets = [0, 128], sizes = [33, 64], strides = [1, 1]} : vector<33x256xf32> to vector<33x64xf32>
      %301 = arith.mulf %299, %300 : vector<33x64xf32>
      %c0_239 = arith.constant 0 : index
      %c0_240 = arith.constant 0 : index
      %302 = vector.load %arg29[%c0_239, %c0_240] : memref<33x64xf32, #tpu.memory_space<vmem>>, vector<33x64xf32>
      %303 = vector.broadcast %50 : vector<33x1xf32> to vector<33x64xf32>
      %304 = arith.mulf %302, %303 : vector<33x64xf32>
      %305 = arith.addf %301, %304 : vector<33x64xf32>
      %306 = vector.extract_strided_slice %284 {offsets = [0, 192], sizes = [33, 64], strides = [1, 1]} : vector<33x256xf32> to vector<33x64xf32>
      %307 = arith.addf %305, %306 : vector<33x64xf32>
      %c0_241 = arith.constant 0 : index
      %c0_242 = arith.constant 0 : index
      %308 = vector.load %arg31[%c0_241, %c0_242] : memref<1x64xf32, #tpu.memory_space<vmem>>, vector<1x64xf32>
      %309 = vector.broadcast %308 : vector<1x64xf32> to vector<33x64xf32>
      %310 = arith.addf %307, %309 : vector<33x64xf32>
      %311 = math.tanh %310 : vector<33x64xf32>
      %312 = arith.mulf %298, %115 : vector<33x64xf32>
      %cst_243 = arith.constant 1.000000e+00 : f32
      %313 = vector.broadcast %cst_243 : f32 to vector<33x64xf32>
      %314 = arith.subf %313, %298 : vector<33x64xf32>
      %315 = arith.mulf %314, %311 : vector<33x64xf32>
      %316 = arith.addf %312, %315 : vector<33x64xf32>
      %c0_244 = arith.constant 0 : index
      %c0_245 = arith.constant 0 : index
      %317 = vector.load %arg25[%c0_244, %c0_245] : memref<64x33xf32, #tpu.memory_space<vmem>>, vector<64x33xf32>
      %cst_246 = arith.constant dense<0.000000e+00> : vector<1x33xf32>
      %318 = tpu.matmul %88, %317, %cst_246 {dimension_numbers = #tpu.dot_dimension_numbers<[1], [0], [0], [1], [0, 0, 1, 1], [], []>} : vector<1x64xf32>, vector<64x33xf32>, vector<1x33xf32> -> vector<1x33xf32>
      %c0_247 = arith.constant 0 : index
      %c0_248 = arith.constant 0 : index
      %319 = vector.load %arg26[%c0_247, %c0_248] : memref<1x64xf32, #tpu.memory_space<vmem>>, vector<1x64xf32>
      %320 = vector.broadcast %319 : vector<1x64xf32> to vector<33x64xf32>
      %321 = arith.mulf %316, %320 : vector<33x64xf32>
      %cst_249 = arith.constant dense<0.000000e+00> : vector<33xf32>
      %322 = vector.multi_reduction <add>, %321, %cst_249 [1] : vector<33x64xf32> to vector<33xf32>
      %323 = vector.shape_cast %322 : vector<33xf32> to vector<33x1xf32>
      %324 = vector.broadcast %323 : vector<33x1xf32> to vector<33x33xf32>
      %325 = arith.mulf %324, %4 : vector<33x33xf32>
      %cst_250 = arith.constant dense<0.000000e+00> : vector<33xf32>
      %326 = vector.multi_reduction <add>, %325, %cst_250 [0] : vector<33x33xf32> to vector<33xf32>
      %327 = vector.shape_cast %326 : vector<33xf32> to vector<1x33xf32>
      %328 = arith.addf %318, %327 : vector<1x33xf32>
      %329 = arith.divf %318, %328 : vector<1x33xf32>
      %cst_251 = arith.constant dense<0xFF800000> : vector<1xf32>
      %330 = vector.multi_reduction <maximumf>, %329, %cst_251 [1] : vector<1x33xf32> to vector<1xf32>
      %331 = vector.shape_cast %330 : vector<1xf32> to vector<1x1xf32>
      %332 = vector.broadcast %331 : vector<1x1xf32> to vector<1x33xf32>
      %333 = arith.subf %329, %332 : vector<1x33xf32>
      %334 = math.exp %333 : vector<1x33xf32>
      %cst_252 = arith.constant dense<0.000000e+00> : vector<1xf32>
      %335 = vector.multi_reduction <add>, %334, %cst_252 [1] : vector<1x33xf32> to vector<1xf32>
      %336 = vector.shape_cast %335 : vector<1xf32> to vector<1x1xf32>
      %337 = tpu.reciprocal %336 {approx = true} : vector<1x1xf32> -> vector<1x1xf32>
      %338 = vector.broadcast %337 : vector<1x1xf32> to vector<1x33xf32>
      %339 = arith.mulf %334, %338 : vector<1x33xf32>
      %340 = arith.divf %327, %328 : vector<1x33xf32>
      %cst_253 = arith.constant dense<0xFF800000> : vector<1xf32>
      %341 = vector.multi_reduction <maximumf>, %340, %cst_253 [1] : vector<1x33xf32> to vector<1xf32>
      %342 = vector.shape_cast %341 : vector<1xf32> to vector<1x1xf32>
      %343 = vector.broadcast %342 : vector<1x1xf32> to vector<1x33xf32>
      %344 = arith.subf %340, %343 : vector<1x33xf32>
      %345 = math.exp %344 : vector<1x33xf32>
      %cst_254 = arith.constant dense<0.000000e+00> : vector<1xf32>
      %346 = vector.multi_reduction <add>, %345, %cst_254 [1] : vector<1x33xf32> to vector<1xf32>
      %347 = vector.shape_cast %346 : vector<1xf32> to vector<1x1xf32>
      %348 = tpu.reciprocal %347 {approx = true} : vector<1x1xf32> -> vector<1x1xf32>
      %349 = vector.broadcast %348 : vector<1x1xf32> to vector<1x33xf32>
      %350 = arith.mulf %345, %349 : vector<1x33xf32>
      %351 = arith.mulf %339, %113 : vector<1x33xf32>
      %352 = arith.mulf %350, %41 : vector<1x33xf32>
      %353 = arith.addf %351, %352 : vector<1x33xf32>
      %354 = arith.index_cast %arg35 : i32 to index
      %c0_255 = arith.constant 0 : index
      %c0_256 = arith.constant 0 : index
      %355 = vector.load %arg32[%354, %c0_255, %c0_256] : memref<8x33x64xf32, #tpu.memory_space<vmem>>, vector<1x33x64xf32>
      %356 = vector.shape_cast %355 : vector<1x33x64xf32> to vector<33x64xf32>
      %357 = vector.shape_cast %316 : vector<33x64xf32> to vector<1x33x64xf32>
      tpu.vector_store %arg32[%354, %c0_255, %c0_256], %357 {strides = array<i32>} : memref<8x33x64xf32, #tpu.memory_space<vmem>>, vector<1x33x64xf32>,
      %358 = arith.index_cast %arg35 : i32 to index
      %c0_257 = arith.constant 0 : index
      %c0_258 = arith.constant 0 : index
      %359 = vector.load %arg33[%358, %c0_257, %c0_258] : memref<8x1x33xf32, #tpu.memory_space<vmem>>, vector<1x1x33xf32>
      %360 = vector.shape_cast %359 : vector<1x1x33xf32> to vector<1x33xf32>
      %361 = vector.shape_cast %353 : vector<1x33xf32> to vector<1x1x33xf32>
      tpu.vector_store %arg33[%358, %c0_257, %c0_258], %361 {strides = array<i32>} : memref<8x1x33xf32, #tpu.memory_space<vmem>>, vector<1x1x33xf32>,
      scf.yield %88, %316, %88, %arg38, %arg39 : vector<1x64xf32>, vector<33x64xf32>, vector<1x64xf32>, vector<1x64xf32>, vector<1x64xf32>
    }
    %c8_i32_3 = arith.constant 8 : i32
    return
  }
  func.func @transform_0(%arg0: i32) -> (i32, i32, i32) {
    %c0_i32 = arith.constant 0 : i32
    %c0_i32_0 = arith.constant 0 : i32
    %c0_i32_1 = arith.constant 0 : i32
    %c0_i32_2 = arith.constant 0 : i32
    return %c0_i32, %c0_i32_0, %c0_i32_1 : i32, i32, i32
  }
  func.func @transform_1(%arg0: i32) -> (i32, i32, i32) {
    %c0_i32 = arith.constant 0 : i32
    %c0_i32_0 = arith.constant 0 : i32
    %c0_i32_1 = arith.constant 0 : i32
    %c0_i32_2 = arith.constant 0 : i32
    return %c0_i32, %c0_i32_0, %c0_i32_1 : i32, i32, i32
  }
  func.func @transform_2(%arg0: i32) -> (i32, i32, i32) {
    %c0_i32 = arith.constant 0 : i32
    %c0_i32_0 = arith.constant 0 : i32
    %c0_i32_1 = arith.constant 0 : i32
    %c0_i32_2 = arith.constant 0 : i32
    return %c0_i32, %c0_i32_0, %c0_i32_1 : i32, i32, i32
  }
  func.func @transform_3(%arg0: i32) -> (i32, i32) {
    %c0_i32 = arith.constant 0 : i32
    %c0_i32_0 = arith.constant 0 : i32
    %c0_i32_1 = arith.constant 0 : i32
    return %c0_i32, %c0_i32_0 : i32, i32
  }
  func.func @transform_4(%arg0: i32) -> (i32, i32) {
    %c0_i32 = arith.constant 0 : i32
    %c0_i32_0 = arith.constant 0 : i32
    %c0_i32_1 = arith.constant 0 : i32
    return %c0_i32, %c0_i32_0 : i32, i32
  }
  func.func @transform_5(%arg0: i32) -> (i32, i32) {
    %c0_i32 = arith.constant 0 : i32
    %c0_i32_0 = arith.constant 0 : i32
    %c0_i32_1 = arith.constant 0 : i32
    return %c0_i32, %c0_i32_0 : i32, i32
  }
  func.func @transform_6(%arg0: i32) -> (i32, i32) {
    %c0_i32 = arith.constant 0 : i32
    %c0_i32_0 = arith.constant 0 : i32
    %c0_i32_1 = arith.constant 0 : i32
    return %c0_i32, %c0_i32_0 : i32, i32
  }
  func.func @transform_7(%arg0: i32) -> (i32, i32) {
    %c0_i32 = arith.constant 0 : i32
    %c0_i32_0 = arith.constant 0 : i32
    %c0_i32_1 = arith.constant 0 : i32
    return %c0_i32, %c0_i32_0 : i32, i32
  }
  func.func @transform_8(%arg0: i32) -> (i32, i32) {
    %c0_i32 = arith.constant 0 : i32
    %c0_i32_0 = arith.constant 0 : i32
    %c0_i32_1 = arith.constant 0 : i32
    return %c0_i32, %c0_i32_0 : i32, i32
  }
  func.func @transform_9(%arg0: i32) -> (i32, i32) {
    %c0_i32 = arith.constant 0 : i32
    %c0_i32_0 = arith.constant 0 : i32
    %c0_i32_1 = arith.constant 0 : i32
    return %c0_i32, %c0_i32_0 : i32, i32
  }
  func.func @transform_10(%arg0: i32) -> (i32, i32) {
    %c0_i32 = arith.constant 0 : i32
    %c0_i32_0 = arith.constant 0 : i32
    %c0_i32_1 = arith.constant 0 : i32
    return %c0_i32, %c0_i32_0 : i32, i32
  }
  func.func @transform_11(%arg0: i32) -> (i32, i32) {
    %c0_i32 = arith.constant 0 : i32
    %c0_i32_0 = arith.constant 0 : i32
    %c0_i32_1 = arith.constant 0 : i32
    return %c0_i32, %c0_i32_0 : i32, i32
  }
  func.func @transform_12(%arg0: i32) -> (i32, i32) {
    %c0_i32 = arith.constant 0 : i32
    %c0_i32_0 = arith.constant 0 : i32
    %c0_i32_1 = arith.constant 0 : i32
    return %c0_i32, %c0_i32_0 : i32, i32
  }
  func.func @transform_13(%arg0: i32) -> (i32, i32) {
    %c0_i32 = arith.constant 0 : i32
    %c0_i32_0 = arith.constant 0 : i32
    %c0_i32_1 = arith.constant 0 : i32
    return %c0_i32, %c0_i32_0 : i32, i32
  }
  func.func @transform_14(%arg0: i32) -> (i32, i32) {
    %c0_i32 = arith.constant 0 : i32
    %c0_i32_0 = arith.constant 0 : i32
    %c0_i32_1 = arith.constant 0 : i32
    return %c0_i32, %c0_i32_0 : i32, i32
  }
  func.func @transform_15(%arg0: i32) -> (i32, i32) {
    %c0_i32 = arith.constant 0 : i32
    %c0_i32_0 = arith.constant 0 : i32
    %c0_i32_1 = arith.constant 0 : i32
    return %c0_i32, %c0_i32_0 : i32, i32
  }
  func.func @transform_16(%arg0: i32) -> (i32, i32) {
    %c0_i32 = arith.constant 0 : i32
    %c0_i32_0 = arith.constant 0 : i32
    %c0_i32_1 = arith.constant 0 : i32
    return %c0_i32, %c0_i32_0 : i32, i32
  }
  func.func @transform_17(%arg0: i32) -> (i32, i32) {
    %c0_i32 = arith.constant 0 : i32
    %c0_i32_0 = arith.constant 0 : i32
    %c0_i32_1 = arith.constant 0 : i32
    return %c0_i32, %c0_i32_0 : i32, i32
  }
  func.func @transform_18(%arg0: i32) -> (i32, i32) {
    %c0_i32 = arith.constant 0 : i32
    %c0_i32_0 = arith.constant 0 : i32
    %c0_i32_1 = arith.constant 0 : i32
    return %c0_i32, %c0_i32_0 : i32, i32
  }
  func.func @transform_19(%arg0: i32) -> (i32, i32) {
    %c0_i32 = arith.constant 0 : i32
    %c0_i32_0 = arith.constant 0 : i32
    %c0_i32_1 = arith.constant 0 : i32
    return %c0_i32, %c0_i32_0 : i32, i32
  }
  func.func @transform_20(%arg0: i32) -> (i32, i32) {
    %c0_i32 = arith.constant 0 : i32
    %c0_i32_0 = arith.constant 0 : i32
    %c0_i32_1 = arith.constant 0 : i32
    return %c0_i32, %c0_i32_0 : i32, i32
  }
  func.func @transform_21(%arg0: i32) -> (i32, i32) {
    %c0_i32 = arith.constant 0 : i32
    %c0_i32_0 = arith.constant 0 : i32
    %c0_i32_1 = arith.constant 0 : i32
    return %c0_i32, %c0_i32_0 : i32, i32
  }
  func.func @transform_22(%arg0: i32) -> (i32, i32) {
    %c0_i32 = arith.constant 0 : i32
    %c0_i32_0 = arith.constant 0 : i32
    %c0_i32_1 = arith.constant 0 : i32
    return %c0_i32, %c0_i32_0 : i32, i32
  }
  func.func @transform_23(%arg0: i32) -> (i32, i32) {
    %c0_i32 = arith.constant 0 : i32
    %c0_i32_0 = arith.constant 0 : i32
    %c0_i32_1 = arith.constant 0 : i32
    return %c0_i32, %c0_i32_0 : i32, i32
  }
  func.func @transform_24(%arg0: i32) -> (i32, i32) {
    %c0_i32 = arith.constant 0 : i32
    %c0_i32_0 = arith.constant 0 : i32
    %c0_i32_1 = arith.constant 0 : i32
    return %c0_i32, %c0_i32_0 : i32, i32
  }
  func.func @transform_25(%arg0: i32) -> (i32, i32) {
    %c0_i32 = arith.constant 0 : i32
    %c0_i32_0 = arith.constant 0 : i32
    %c0_i32_1 = arith.constant 0 : i32
    return %c0_i32, %c0_i32_0 : i32, i32
  }
  func.func @transform_26(%arg0: i32) -> (i32, i32, i32) {
    %c0_i32 = arith.constant 0 : i32
    %c0_i32_0 = arith.constant 0 : i32
    %c0_i32_1 = arith.constant 0 : i32
    %c0_i32_2 = arith.constant 0 : i32
    return %c0_i32, %c0_i32_0, %c0_i32_1 : i32, i32, i32
  }
  func.func @transform_27(%arg0: i32) -> (i32, i32) {
    %c0_i32 = arith.constant 0 : i32
    %c0_i32_0 = arith.constant 0 : i32
    %c0_i32_1 = arith.constant 0 : i32
    return %c0_i32, %c0_i32_0 : i32, i32
  }
  func.func @transform_28(%arg0: i32) -> (i32, i32) {
    %c0_i32 = arith.constant 0 : i32
    %c0_i32_0 = arith.constant 0 : i32
    %c0_i32_1 = arith.constant 0 : i32
    return %c0_i32, %c0_i32_0 : i32, i32
  }
  func.func @transform_29(%arg0: i32) -> (i32, i32) {
    %c0_i32 = arith.constant 0 : i32
    %c0_i32_0 = arith.constant 0 : i32
    %c0_i32_1 = arith.constant 0 : i32
    return %c0_i32, %c0_i32_0 : i32, i32
  }
  func.func @transform_30(%arg0: i32) -> (i32, i32) {
    %c0_i32 = arith.constant 0 : i32
    %c0_i32_0 = arith.constant 0 : i32
    %c0_i32_1 = arith.constant 0 : i32
    return %c0_i32, %c0_i32_0 : i32, i32
  }
  func.func @transform_31(%arg0: i32) -> (i32, i32, i32) {
    %c0_i32 = arith.constant 0 : i32
    %c0_i32_0 = arith.constant 0 : i32
    %c0_i32_1 = arith.constant 0 : i32
    %c0_i32_2 = arith.constant 0 : i32
    return %c0_i32, %c0_i32_0, %c0_i32_1 : i32, i32, i32
  }
  func.func @transform_32(%arg0: i32) -> (i32, i32, i32) {
    %c0_i32 = arith.constant 0 : i32
    %c0_i32_0 = arith.constant 0 : i32
    %c0_i32_1 = arith.constant 0 : i32
    %c0_i32_2 = arith.constant 0 : i32
    return %c0_i32, %c0_i32_0, %c0_i32_1 : i32, i32, i32
  }
}

</mosaic_0001>

<llo_original>
// kernel: gmgru_pallas.1
$region0: #{gmgru_pallas.1}
  #allocation0 [shape = 'u32[]', space=smem, size = 0x4, offset = 0x4, fixed_abs, tag = 'smem constant byte address 0x4 - core index']
  #allocation1 [shape = 'u32[144,128]{1,0:T(1,128)}', space=vmem, size = 0x12000, scoped, tag = 'internal scratch']
  #allocation2 [shape = 'f32[33,256]{1,0:T(8,128)}', space=vmem, size = 0xa000, scoped, tag = 'scratch operand']
  #allocation3 [shape = 'f32[1,1]{1,0:T(1,128)S(1)}', space=vmem, size = 0x200, scoped, tag = 'scoped memory for gmgru_pallas.1']
  %s0 = inlined_call_operand.smem [shape: u32[33], index: -1, kind: input, shape index: {}]
  %s1 = sld [smem:[%s0]]
  %s2 = scalar_lea.smem %s0, 1
  %s3 = sld [smem:[%s2]]
  %s4 = scalar_lea.smem %s0, 2
  %s5 = sld [smem:[%s4]]
  %s6 = scalar_lea.smem %s0, 3
  %s7 = sld [smem:[%s6]]
  %s8 = scalar_lea.smem %s0, 4
  %s9 = sld [smem:[%s8]]
  %s10 = scalar_lea.smem %s0, 5
  %s11 = sld [smem:[%s10]]
  %s12 = scalar_lea.smem %s0, 6
  %s13 = sld [smem:[%s12]]
  %s14 = scalar_lea.smem %s0, 7
  %s15 = sld [smem:[%s14]]
  %s16 = scalar_lea.smem %s0, 8
  %s17 = sld [smem:[%s16]]
  %s18 = scalar_lea.smem %s0, 9
  %s19 = sld [smem:[%s18]]
  %s20 = scalar_lea.smem %s0, 10
  %s21 = sld [smem:[%s20]]
  %s22 = scalar_lea.smem %s0, 11
  %s23 = sld [smem:[%s22]]
  %s24 = scalar_lea.smem %s0, 12
  %s25 = sld [smem:[%s24]]
  %s26 = scalar_lea.smem %s0, 13
  %s27 = sld [smem:[%s26]]
  %s28 = scalar_lea.smem %s0, 14
  %s29 = sld [smem:[%s28]]
  %s30 = scalar_lea.smem %s0, 15
  %s31 = sld [smem:[%s30]]
  %s32 = scalar_lea.smem %s0, 16
  %s33 = sld [smem:[%s32]]
  %s34 = scalar_lea.smem %s0, 17
  %s35 = sld [smem:[%s34]]
  %s36 = scalar_lea.smem %s0, 18
  %s37 = sld [smem:[%s36]]
  %s38 = scalar_lea.smem %s0, 19
  %s39 = sld [smem:[%s38]]
  %s40 = scalar_lea.smem %s0, 20
  %s41 = sld [smem:[%s40]]
  %s42 = scalar_lea.smem %s0, 21
  %s43 = sld [smem:[%s42]]
  %s44 = scalar_lea.smem %s0, 22
  %s45 = sld [smem:[%s44]]
  %s46 = scalar_lea.smem %s0, 23
  %s47 = sld [smem:[%s46]]
  %s48 = scalar_lea.smem %s0, 24
  %s49 = sld [smem:[%s48]]
  %s50 = scalar_lea.smem %s0, 25
  %s51 = sld [smem:[%s50]]
  %s52 = scalar_lea.smem %s0, 26
  %s53 = sld [smem:[%s52]]
  %s54 = scalar_lea.smem %s0, 27
  %s55 = sld [smem:[%s54]]
  %s56 = scalar_lea.smem %s0, 28
  %s57 = sld [smem:[%s56]]
  %s58 = scalar_lea.smem %s0, 29
  %s59 = sld [smem:[%s58]]
  %s60 = scalar_lea.smem %s0, 30
  %s61 = sld [smem:[%s60]]
  %s62 = scalar_lea.smem %s0, 31
  %s63 = sld [smem:[%s62]]
  %s64 = scalar_lea.smem %s0, 32
  %s65 = sld [smem:[%s64]]
  %66 = xla_tuple %s63, %s65
  %s67 = sld [smem:[#allocation0]]
  $region149: #{gmgru_pallas.1} parent=0
    _
  %s69 = ssub.s32 1, %s67
  %s70 = scalar_select 0, %s69, %s67
  %v71 = vstv %s47
  %72 = vst [vmem:[#allocation3] sm:$0x1] %v71
  $region1: #{gmgru_pallas.1} parent=0
    #allocation4 [shape = 'u8[4096]{0}', space=vmem, size = 0x1000, scoped, tag = 'output window, operand 1, single buffered']
    #allocation5 [shape = 's32[1]{0}', space=sflag, size = 0x4, scoped, tag = 'scoped memory for gmgru_pallas.1']
    %73 = vsyncpa [#allocation5], 0
    // Predicated region
    $region2: #{gmgru_pallas.1} parent=1 // pred_check
      _
    $region3: #{gmgru_pallas.1} parent=1 // pred_check_branch
      %75 = sbr.rel (0) target = $region5
    $region4: #{gmgru_pallas.1} parent=1 // pred_region
      _
    $region5: #{gmgru_pallas.1} parent=1 // pred_fallthru
      _
    // Predicated region
    $region6: #{gmgru_pallas.1} parent=1 // pred_check
      _
    $region7: #{gmgru_pallas.1} parent=1 // pred_check_branch
      %77 = sbr.rel (0) target = $region9
    $region8: #{gmgru_pallas.1} parent=1 // pred_region
      _
    $region9: #{gmgru_pallas.1} parent=1 // pred_fallthru
      _
    // Predicated region
    $region10: #{gmgru_pallas.1} parent=1 // pred_check
      _
    $region11: #{gmgru_pallas.1} parent=1 // pred_check_branch
      %79 = sbr.rel (0) target = $region13
    $region12: #{gmgru_pallas.1} parent=1 // pred_region
      _
    $region13: #{gmgru_pallas.1} parent=1 // pred_fallthru
      _
    // Predicated region
    $region14: #{gmgru_pallas.1} parent=1 // pred_check
      _
    $region15: #{gmgru_pallas.1} parent=1 // pred_check_branch
      %81 = sbr.rel (0) target = $region17
    $region16: #{gmgru_pallas.1} parent=1 // pred_region
      _
    $region17: #{gmgru_pallas.1} parent=1 // pred_fallthru
      _
    // Predicated region
    $region18: #{gmgru_pallas.1} parent=1 // pred_check
      _
    $region19: #{gmgru_pallas.1} parent=1 // pred_check_branch
      %83 = sbr.rel (0) target = $region21
    $region20: #{gmgru_pallas.1} parent=1 // pred_region
      _
    $region21: #{gmgru_pallas.1} parent=1 // pred_fallthru
      _
    // Predicated region
    $region22: #{gmgru_pallas.1} parent=1 // pred_check
      _
    $region23: #{gmgru_pallas.1} parent=1 // pred_check_branch
      %85 = sbr.rel (0) target = $region25
    $region24: #{gmgru_pallas.1} parent=1 // pred_region
      _
    $region25: #{gmgru_pallas.1} parent=1 // pred_fallthru
      _
    // Predicated region
    $region26: #{gmgru_pallas.1} parent=1 // pred_check
      _
    $region27: #{gmgru_pallas.1} parent=1 // pred_check_branch
      %87 = sbr.rel (0) target = $region29
    $region28: #{gmgru_pallas.1} parent=1 // pred_region
      _
    $region29: #{gmgru_pallas.1} parent=1 // pred_fallthru
      _
    // Predicated region
    $region30: #{gmgru_pallas.1} parent=1 // pred_check
      _
    $region31: #{gmgru_pallas.1} parent=1 // pred_check_branch
      %89 = sbr.rel (0) target = $region33
    $region32: #{gmgru_pallas.1} parent=1 // pred_region
      _
    $region33: #{gmgru_pallas.1} parent=1 // pred_fallthru
      _
    // Predicated region
    $region34: #{gmgru_pallas.1} parent=1 // pred_check
      _
    $region35: #{gmgru_pallas.1} parent=1 // pred_check_branch
      %91 = sbr.rel (0) target = $region37
    $region36: #{gmgru_pallas.1} parent=1 // pred_region
      _
    $region37: #{gmgru_pallas.1} parent=1 // pred_fallthru
      _
    // Predicated region
    $region38: #{gmgru_pallas.1} parent=1 // pred_check
      _
    $region39: #{gmgru_pallas.1} parent=1 // pred_check_branch
      %93 = sbr.rel (0) target = $region41
    $region40: #{gmgru_pallas.1} parent=1 // pred_region
      _
    $region41: #{gmgru_pallas.1} parent=1 // pred_fallthru
      _
    // Predicated region
    $region42: #{gmgru_pallas.1} parent=1 // pred_check
      _
    $region43: #{gmgru_pallas.1} parent=1 // pred_check_branch
      %95 = sbr.rel (0) target = $region45
    $region44: #{gmgru_pallas.1} parent=1 // pred_region
      _
    $region45: #{gmgru_pallas.1} parent=1 // pred_fallthru
      _
    // Predicated region
    $region46: #{gmgru_pallas.1} parent=1 // pred_check
      _
    $region47: #{gmgru_pallas.1} parent=1 // pred_check_branch
      %97 = sbr.rel (0) target = $region49
    $region48: #{gmgru_pallas.1} parent=1 // pred_region
      _
    $region49: #{gmgru_pallas.1} parent=1 // pred_fallthru
      _
    // Predicated region
    $region50: #{gmgru_pallas.1} parent=1 // pred_check
      _
    $region51: #{gmgru_pallas.1} parent=1 // pred_check_branch
      %99 = sbr.rel (0) target = $region53
    $region52: #{gmgru_pallas.1} parent=1 // pred_region
      _
    $region53: #{gmgru_pallas.1} parent=1 // pred_fallthru
      _
    // Predicated region
    $region54: #{gmgru_pallas.1} parent=1 // pred_check
      _
    $region55: #{gmgru_pallas.1} parent=1 // pred_check_branch
      %101 = sbr.rel (0) target = $region57
    $region56: #{gmgru_pallas.1} parent=1 // pred_region
      _
    $region57: #{gmgru_pallas.1} parent=1 // pred_fallthru
      _
    // Predicated region
    $region58: #{gmgru_pallas.1} parent=1 // pred_check
      _
    $region59: #{gmgru_pallas.1} parent=1 // pred_check_branch
      %103 = sbr.rel (0) target = $region61
    $region60: #{gmgru_pallas.1} parent=1 // pred_region
      _
    $region61: #{gmgru_pallas.1} parent=1 // pred_fallthru
      _
    // Predicated region
    $region62: #{gmgru_pallas.1} parent=1 // pred_check
      _
    $region63: #{gmgru_pallas.1} parent=1 // pred_check_branch
      %105 = sbr.rel (0) target = $region65
    $region64: #{gmgru_pallas.1} parent=1 // pred_region
      _
    $region65: #{gmgru_pallas.1} parent=1 // pred_fallthru
      _
    // Predicated region
    $region66: #{gmgru_pallas.1} parent=1 // pred_check
      _
    $region67: #{gmgru_pallas.1} parent=1 // pred_check_branch
      %107 = sbr.rel (0) target = $region69
    $region68: #{gmgru_pallas.1} parent=1 // pred_region
      _
    $region69: #{gmgru_pallas.1} parent=1 // pred_fallthru
      _
    // Predicated region
    $region70: #{gmgru_pallas.1} parent=1 // pred_check
      _
    $region71: #{gmgru_pallas.1} parent=1 // pred_check_branch
      %109 = sbr.rel (0) target = $region73
    $region72: #{gmgru_pallas.1} parent=1 // pred_region
      _
    $region73: #{gmgru_pallas.1} parent=1 // pred_fallthru
      _
    // Predicated region
    $region74: #{gmgru_pallas.1} parent=1 // pred_check
      _
    $region75: #{gmgru_pallas.1} parent=1 // pred_check_branch
      %111 = sbr.rel (0) target = $region77
    $region76: #{gmgru_pallas.1} parent=1 // pred_region
      _
    $region77: #{gmgru_pallas.1} parent=1 // pred_fallthru
      _
    // Predicated region
    $region78: #{gmgru_pallas.1} parent=1 // pred_check
      _
    $region79: #{gmgru_pallas.1} parent=1 // pred_check_branch
      %113 = sbr.rel (0) target = $region81
    $region80: #{gmgru_pallas.1} parent=1 // pred_region
      _
    $region81: #{gmgru_pallas.1} parent=1 // pred_fallthru
      _
    // Predicated region
    $region82: #{gmgru_pallas.1} parent=1 // pred_check
      _
    $region83: #{gmgru_pallas.1} parent=1 // pred_check_branch
      %115 = sbr.rel (0) target = $region85
    $region84: #{gmgru_pallas.1} parent=1 // pred_region
      _
    $region85: #{gmgru_pallas.1} parent=1 // pred_fallthru
      _
    // Predicated region
    $region86: #{gmgru_pallas.1} parent=1 // pred_check
      _
    $region87: #{gmgru_pallas.1} parent=1 // pred_check_branch
      %117 = sbr.rel (0) target = $region89
    $region88: #{gmgru_pallas.1} parent=1 // pred_region
      _
    $region89: #{gmgru_pallas.1} parent=1 // pred_fallthru
      _
    // Predicated region
    $region90: #{gmgru_pallas.1} parent=1 // pred_check
      _
    $region91: #{gmgru_pallas.1} parent=1 // pred_check_branch
      %119 = sbr.rel (0) target = $region93
    $region92: #{gmgru_pallas.1} parent=1 // pred_region
      _
    $region93: #{gmgru_pallas.1} parent=1 // pred_fallthru
      _
    // Predicated region
    $region94: #{gmgru_pallas.1} parent=1 // pred_check
      _
    $region95: #{gmgru_pallas.1} parent=1 // pred_check_branch
      %121 = sbr.rel (0) target = $region97
    $region96: #{gmgru_pallas.1} parent=1 // pred_region
      _
    $region97: #{gmgru_pallas.1} parent=1 // pred_fallthru
      _
    // Predicated region
    $region98: #{gmgru_pallas.1} parent=1 // pred_check
      _
    $region99: #{gmgru_pallas.1} parent=1 // pred_check_branch
      %123 = sbr.rel (0) target = $region101
    $region100: #{gmgru_pallas.1} parent=1 // pred_region
      _
    $region101: #{gmgru_pallas.1} parent=1 // pred_fallthru
      _
    // Predicated region
    $region102: #{gmgru_pallas.1} parent=1 // pred_check
      _
    $region103: #{gmgru_pallas.1} parent=1 // pred_check_branch
      %125 = sbr.rel (0) target = $region105
    $region104: #{gmgru_pallas.1} parent=1 // pred_region
      _
    $region105: #{gmgru_pallas.1} parent=1 // pred_fallthru
      _
    // Predicated region
    $region106: #{gmgru_pallas.1} parent=1 // pred_check
      _
    $region107: #{gmgru_pallas.1} parent=1 // pred_check_branch
      %127 = sbr.rel (0) target = $region109
    $region108: #{gmgru_pallas.1} parent=1 // pred_region
      _
    $region109: #{gmgru_pallas.1} parent=1 // pred_fallthru
      _
    // Predicated region
    $region110: #{gmgru_pallas.1} parent=1 // pred_check
      _
    $region111: #{gmgru_pallas.1} parent=1 // pred_check_branch
      %129 = sbr.rel (0) target = $region113
    $region112: #{gmgru_pallas.1} parent=1 // pred_region
      _
    $region113: #{gmgru_pallas.1} parent=1 // pred_fallthru
      _
    // Predicated region
    $region114: #{gmgru_pallas.1} parent=1 // pred_check
      _
    $region115: #{gmgru_pallas.1} parent=1 // pred_check_branch
      %131 = sbr.rel (0) target = $region117
    $region116: #{gmgru_pallas.1} parent=1 // pred_region
      _
    $region117: #{gmgru_pallas.1} parent=1 // pred_fallthru
      _
    // Predicated region
    $region118: #{gmgru_pallas.1} parent=1 // pred_check
      _
    $region119: #{gmgru_pallas.1} parent=1 // pred_check_branch
      %133 = sbr.rel (0) target = $region121
    $region120: #{gmgru_pallas.1} parent=1 // pred_region
      _
    $region121: #{gmgru_pallas.1} parent=1 // pred_fallthru
      _
    // Predicated region
    $region122: #{gmgru_pallas.1} parent=1 // pred_check
      _
    $region123: #{gmgru_pallas.1} parent=1 // pred_check_branch
      %135 = sbr.rel (0) target = $region125
    $region124: #{gmgru_pallas.1} parent=1 // pred_region
      _
    $region125: #{gmgru_pallas.1} parent=1 // pred_fallthru
      _
    %v136 = vlaneseq
    %v137 = vshrl.u32 %v136, 7
    %v138 = vadd.s32 %v137, 8
    %v139 = vadd.s32 %v137, 16
    %v140 = vadd.s32 %v137, 24
    %v141 = vadd.s32 %v137, 32
    %v142 = vlaneseq
    %v143 = vand.u32 %v142, 127
    %vm144 = vcmp.eq.s32.totalorder %v137, %v143
    %vm145 = vcmp.eq.s32.totalorder %v138, %v143
    %vm146 = vcmp.eq.s32.totalorder %v139, %v143
    %vm147 = vcmp.eq.s32.totalorder %v140, %v143
    %vm148 = vcmp.eq.s32.totalorder %v141, %v143
    %v149 = vsel %vm144, 1, 0
    %v150 = vsel %vm145, 1, 0
    %v151 = vsel %vm146, 1, 0
    %v152 = vsel %vm147, 1, 0
    %v153 = vsel %vm148, 1, 0
    %v154 = vcvt.s32.f32 %v149
    %v155 = vcvt.s32.f32 %v150
    %v156 = vcvt.s32.f32 %v151
    %v157 = vcvt.s32.f32 %v152
    %v158 = vcvt.s32.f32 %v153
    %v159 = vld [vmem:[%s7] sm:$0x1]
    %v160 = vld [vmem:[%s9] sm:$0xff]
    %v161 = vld [vmem:[%s9 + $0x8] sm:$0xff]
    %v162 = vld [vmem:[%s9 + $0x10] sm:$0xff]
    %v163 = vld [vmem:[%s9 + $0x18] sm:$0xff]
    %v164 = vld [vmem:[%s9 + $0x20] sm:$0x1]
    loop: start=0, step=1, limit=8
    $region126: #{gmgru_pallas.1} parent=1 // loop_pre_header
      _
    $region127: #{gmgru_pallas.1} parent=1 // loop_header
      %s166 = sphi 0, %s170
      %p167 = scmp.ge.s32.totalorder %s166, 8
      %v171 = vphi %v159, %v989
      %v172 = vphi %v160, %v5495
      %v173 = vphi %v161, %v5496
      %v174 = vphi %v162, %v5497
      %v175 = vphi %v163, %v5498
      %v176 = vphi %v164, %v5499
      %v177 = vphi %v159, %v171
      %v178 = vphi %v159, %v177
    $region128: #{gmgru_pallas.1} parent=1 // loop_header_branch
      %169 = sbr.rel (%p167) target = $region132
    $region129: #{gmgru_pallas.1} parent=1 // loop_body
      %s179 = scalar_lea.vmem %s1, %s166
      %v180 = vld [vmem:[%s179] sm:$0x1]
      %s181 = scalar_lea.vmem %s3, %s166
      %v182 = vld [vmem:[%s181] sm:$0x1]
      %s183 = scalar_lea.vmem %s5, %s166
      %v184 = vld [vmem:[%s183] sm:$0x1]
      %v185 = vld [vmem:[%s11] sm:$0xff]
      %v186 = vld [vmem:[%s11 + $0x8] sm:$0xff]
      %v187 = vld [vmem:[%s11 + $0x10] sm:$0xff]
      %v188 = vld [vmem:[%s11 + $0x18] sm:$0xff]
      %v189 = vld [vmem:[%s11 + $0x20] sm:$0x1]
      %v190 = vld [vmem:[%s13] sm:$0x1]
      %vm191 = vcmask 269312
      %v193 = vsel %vm191, %v184, 0
      %vm195 = vcmask 1040384
      %v197 = vsel %vm195, %v189, 0
      %199 = vmatprep.subr.mxu0 0.0
      %200 = vmatpush1.msra.mxu0 %v185
      %201 = vmatprep.subr.mxu0 0.0
      %202 = vmatpush1.msra.mxu0 %v186
      %203 = vmatprep.subr.mxu0 0.0
      %204 = vmatpush1.msra.mxu0 %v187
      %205 = vmatprep.subr.mxu0 0.0
      %206 = vmatpush1.msra.mxu0 %v188
      %207 = vmatprep.subr.mxu0 0.0
      %208 = vmatpush1.msra.mxu0 %v197
      %209 = vmatprep.subr.mxu0 0.0
      %210 = vmatpush1.msra.mxu0 0.0
      %211 = vmatprep.subr.mxu0 0.0
      %212 = vmatpush1.msra.mxu0 0.0
      %213 = vmatprep.subr.mxu0 0.0
      %214 = vmatpush1.msra.mxu0 0.0
      %215 = vmatprep.subr.mxu0 0.0
      %216 = vmatpush1.msra.mxu0 0.0
      %217 = vmatprep.subr.mxu0 0.0
      %218 = vmatpush1.msra.mxu0 0.0
      %219 = vmatprep.subr.mxu0 0.0
      %220 = vmatpush1.msra.mxu0 0.0
      %221 = vmatprep.subr.mxu0 0.0
      %222 = vmatpush1.msra.mxu0 0.0
      %223 = vmatprep.subr.mxu0 0.0
      %224 = vmatpush1.msra.mxu0 0.0
      %225 = vmatprep.subr.mxu0 0.0
      %226 = vmatpush1.msra.mxu0 0.0
      %227 = vmatprep.subr.mxu0 0.0
      %228 = vmatpush1.msra.mxu0 0.0
      %229 = vmatprep.subr.mxu0 0.0
      %230 = vmatpush1.msra.mxu0 0.0
      %231 = vmatprep.subr.mxu0 0.0
      %232 = vmatpush1.msra.mxu0 0.0
      %233 = vmatprep.subr.mxu0 0.0
      %234 = vmatpush1.msra.mxu0 0.0
      %235 = vmatprep.subr.mxu0 0.0
      %236 = vmatpush1.msra.mxu0 0.0
      %237 = vmatprep.subr.mxu0 0.0
      %238 = vmatpush1.msra.mxu0 0.0
      %239 = vmatprep.subr.mxu0 0.0
      %240 = vmatpush1.msra.mxu0 0.0
      %241 = vmatprep.subr.mxu0 0.0
      %242 = vmatpush1.msra.mxu0 0.0
      %243 = vmatprep.subr.mxu0 0.0
      %244 = vmatpush1.msra.mxu0 0.0
      %245 = vmatprep.subr.mxu0 0.0
      %246 = vmatpush1.msra.mxu0 0.0
      %247 = vmatprep.subr.mxu0 0.0
      %248 = vmatpush1.msra.mxu0 0.0
      %249 = vmatprep.subr.mxu0 0.0
      %250 = vmatpush1.msra.mxu0 0.0
      %251 = vmatprep.subr.mxu0 0.0
      %252 = vmatpush1.msra.mxu0 0.0
      %253 = vmatprep.subr.mxu0 0.0
      %254 = vmatpush1.msra.mxu0 0.0
      %255 = vmatprep.subr.mxu0 0.0
      %256 = vmatpush1.msra.mxu0 0.0
      %257 = vmatprep.subr.mxu0 0.0
      %258 = vmatpush1.msra.mxu0 0.0
      %259 = vmatprep.subr.mxu0 0.0
      %260 = vmatpush1.msra.mxu0 0.0
      %261 = vmatprep.subr.mxu0 0.0
      %262 = vmatpush1.msra.mxu0 0.0
      %263 = vmatprep.mubr.f32.mxu0 0.0
      %264 = vmatmul.mubr.f32.gmra.mrb[0].mxu0 %v193
      %v265 = vpop.f32.mrb[0].mxu0
      %v266 = vadd.f32 %v190, %v265
      %v267 = vpop.f32.mrb[0].mxu0
      %268 = vdwg.mxu0
      %v269 = vmax.f32 %v266, 0.0
      %v270 = vsub.f32 0.0, %v269
      %v271 = vmul.f32 %v270, 1.442695
      %v272 = vpow.pop %v271
      %v273 = vmul.f32 %v272, %v171
      %v274 = vld [vmem:[%s45] sm:$0x1]
      %v276 = vlaneseq
      %v277 = vshrl.u32 %v276, 7
      %v278 = vsub.s32 0, %v277
      %v279 = vrot.slane %v274, %v278
      %v281 = vmul.f32 %v172, %v279
      %v282 = vmul.f32 %v173, %v279
      %v283 = vmul.f32 %v174, %v279
      %v284 = vmul.f32 %v175, %v279
      %v285 = vmul.f32 %v176, %v279
      %vm286 = vcmask 523264
      %v287 = vsel %vm286, %v281, 0.0
      %288 = vadd.xlane.f32.xlu0 %v287
      %v289 = vpop.xlane.xlu0 %288
      %v290 = vsel %vm286, %v282, 0.0
      %291 = vadd.xlane.f32.xlu0 %v290
      %v292 = vpop.xlane.xlu0 %291
      %v293 = vsel %vm286, %v283, 0.0
      %294 = vadd.xlane.f32.xlu0 %v293
      %v295 = vpop.xlane.xlu0 %294
      %v296 = vsel %vm286, %v284, 0.0
      %297 = vadd.xlane.f32.xlu0 %v296
      %v298 = vpop.xlane.xlu0 %297
      %vm299 = vcmask 516096
      %v300 = vsel %vm299, %v285, 0.0
      %301 = vadd.xlane.f32.xlu0 %v300
      %v302 = vpop.xlane.xlu0 %301
      %v303 = vld [vmem:[#allocation3] sm:$0x1]
      %v305 = vlaneseq
      %v306 = vshrl.u32 %v305, 7
      %v307 = vsub.s32 0, %v306
      %v308 = vrot.slane %v303, %v307
      %v310 = vadd.f32 %v289, %v308
      %v311 = vadd.f32 %v292, %v308
      %v312 = vadd.f32 %v295, %v308
      %v313 = vadd.f32 %v298, %v308
      %v314 = vadd.f32 %v302, %v308
      %316 = vset.pattern.permute.xlu0 0
      %317 = vperm.xlu0 %316, %v310
      %v318 = vpop.permute.xlu0 %317
      %321 = vset.pattern.permute.xlu0 0
      %322 = vperm.xlu0 %321, %v311
      %v323 = vpop.permute.xlu0 %322
      %326 = vset.pattern.permute.xlu0 0
      %327 = vperm.xlu0 %326, %v312
      %v328 = vpop.permute.xlu0 %327
      %331 = vset.pattern.permute.xlu0 0
      %332 = vperm.xlu0 %331, %v313
      %v333 = vpop.permute.xlu0 %332
      %336 = vset.pattern.permute.xlu0 0
      %337 = vperm.xlu0 %336, %v314
      %v338 = vpop.permute.xlu0 %337
      %v340 = vmul.f32 %v318, %v154
      %v341 = vmul.f32 %v323, %v155
      %v342 = vmul.f32 %v328, %v156
      %v343 = vmul.f32 %v333, %v157
      %v344 = vmul.f32 %v338, %v158
      %v345 = vsel %vm191, %v340, 0.0
      %v346 = vsel %vm191, %v341, 0.0
      %v347 = vadd.f32 %v345, %v346
      %v348 = vsel %vm191, %v342, 0.0
      %v349 = vadd.f32 %v347, %v348
      %v350 = vsel %vm191, %v343, 0.0
      %v351 = vadd.f32 %v349, %v350
      %vm352 = vcmask 262144
      %v353 = vsel %vm352, %v344, 0.0
      %v354 = vadd.f32 %v351, %v353
      %v355 = vrot.slane %v354, 4
      %v356 = vadd.f32 %v354, %v355
      %v357 = vrot.slane %v356, 2
      %v358 = vadd.f32 %v356, %v357
      %v359 = vrot.slane %v358, 1
      %v360 = vadd.f32 %v358, %v359
      %v361 = vmul.f32 %v182, %v180
      %v362 = vsub.f32 1.0, %v182
      %v363 = vmul.f32 %v362, %v360
      %v364 = vadd.f32 %v361, %v363
      %v366 = vlaneseq
      %v367 = vshrl.u32 %v366, 7
      %v368 = vsub.s32 0, %v367
      %v369 = vrot.slane %v364, %v368
      %v371 = vmul.f32 %v369, %v154
      %v372 = vmul.f32 %v369, %v155
      %v373 = vmul.f32 %v369, %v156
      %v374 = vmul.f32 %v369, %v157
      %v375 = vmul.f32 %v369, %v158
      %v376 = vsel %vm191, %v371, 0.0
      %377 = vadd.xlane.f32.xlu0 %v376
      %v378 = vpop.xlane.xlu0 %377
      %v379 = vsel %vm191, %v372, 0.0
      %380 = vadd.xlane.f32.xlu0 %v379
      %v381 = vpop.xlane.xlu0 %380
      %v382 = vsel %vm191, %v373, 0.0
      %383 = vadd.xlane.f32.xlu0 %v382
      %v384 = vpop.xlane.xlu0 %383
      %v385 = vsel %vm191, %v374, 0.0
      %386 = vadd.xlane.f32.xlu0 %v385
      %v387 = vpop.xlane.xlu0 %386
      %v388 = vsel %vm352, %v375, 0.0
      %389 = vadd.xlane.f32.xlu0 %v388
      %v390 = vpop.xlane.xlu0 %389
      %v391 = vld [vmem:[%s15] sm:$0xff]
      %v392 = vld [vmem:[%s15 + $0x8] sm:$0xff]
      %v393 = vld [vmem:[%s15 + $0x10] sm:$0xff]
      %v394 = vld [vmem:[%s15 + $0x18] sm:$0xff]
      %v395 = vld [vmem:[%s15 + $0x20] sm:$0xff]
      %v396 = vld [vmem:[%s15 + $0x28] sm:$0xff]
      %v397 = vld [vmem:[%s15 + $0x30] sm:$0xff]
      %v398 = vld [vmem:[%s15 + $0x38] sm:$0xff]
      %v399 = vld [vmem:[%s15 + $0x40] sm:$0x1]
      %v400 = vld [vmem:[%s15 + $0x48] sm:$0x1]
      %v401 = vsel %vm191, %v364, 0
      %v404 = vsel %vm195, %v399, 0
      %v407 = vsel %vm195, %v400, 0
      %409 = vmatprep.subr.mxu0 %v392
      %410 = vmatpush1.msra.mxu0 %v391
      %411 = vmatprep.subr.mxu0 %v394
      %412 = vmatpush1.msra.mxu0 %v393
      %413 = vmatprep.subr.mxu0 %v396
      %414 = vmatpush1.msra.mxu0 %v395
      %415 = vmatprep.subr.mxu0 %v398
      %416 = vmatpush1.msra.mxu0 %v397
      %417 = vmatprep.subr.mxu0 %v407
      %418 = vmatpush1.msra.mxu0 %v404
      %419 = vmatprep.subr.mxu0 0.0
      %420 = vmatpush1.msra.mxu0 0.0
      %421 = vmatprep.subr.mxu0 0.0
      %422 = vmatpush1.msra.mxu0 0.0
      %423 = vmatprep.subr.mxu0 0.0
      %424 = vmatpush1.msra.mxu0 0.0
      %425 = vmatprep.subr.mxu0 0.0
      %426 = vmatpush1.msra.mxu0 0.0
      %427 = vmatprep.subr.mxu0 0.0
      %428 = vmatpush1.msra.mxu0 0.0
      %429 = vmatprep.subr.mxu0 0.0
      %430 = vmatpush1.msra.mxu0 0.0
      %431 = vmatprep.subr.mxu0 0.0
      %432 = vmatpush1.msra.mxu0 0.0
      %433 = vmatprep.subr.mxu0 0.0
      %434 = vmatpush1.msra.mxu0 0.0
      %435 = vmatprep.subr.mxu0 0.0
      %436 = vmatpush1.msra.mxu0 0.0
      %437 = vmatprep.subr.mxu0 0.0
      %438 = vmatpush1.msra.mxu0 0.0
      %439 = vmatprep.subr.mxu0 0.0
      %440 = vmatpush1.msra.mxu0 0.0
      %441 = vmatprep.subr.mxu0 0.0
      %442 = vmatpush1.msra.mxu0 0.0
      %443 = vmatprep.subr.mxu0 0.0
      %444 = vmatpush1.msra.mxu0 0.0
      %445 = vmatprep.subr.mxu0 0.0
      %446 = vmatpush1.msra.mxu0 0.0
      %447 = vmatprep.subr.mxu0 0.0
      %448 = vmatpush1.msra.mxu0 0.0
      %449 = vmatprep.subr.mxu0 0.0
      %450 = vmatpush1.msra.mxu0 0.0
      %451 = vmatprep.subr.mxu0 0.0
      %452 = vmatpush1.msra.mxu0 0.0
      %453 = vmatprep.subr.mxu0 0.0
      %454 = vmatpush1.msra.mxu0 0.0
      %455 = vmatprep.subr.mxu0 0.0
      %456 = vmatpush1.msra.mxu0 0.0
      %457 = vmatprep.subr.mxu0 0.0
      %458 = vmatpush1.msra.mxu0 0.0
      %459 = vmatprep.subr.mxu0 0.0
      %460 = vmatpush1.msra.mxu0 0.0
      %461 = vmatprep.subr.mxu0 0.0
      %462 = vmatpush1.msra.mxu0 0.0
      %463 = vmatprep.subr.mxu0 0.0
      %464 = vmatpush1.msra.mxu0 0.0
      %465 = vmatprep.subr.mxu0 0.0
      %466 = vmatpush1.msra.mxu0 0.0
      %467 = vmatprep.subr.mxu0 0.0
      %468 = vmatpush1.msra.mxu0 0.0
      %469 = vmatprep.subr.mxu0 0.0
      %470 = vmatpush1.msra.mxu0 0.0
      %471 = vmatprep.subr.mxu0 0.0
      %472 = vmatpush1.msra.mxu0 0.0
      %473 = vmatprep.mubr.f32.mxu0 0.0
      %474 = vmatmul.mubr.f32.gmra.mrb[0].mxu0 %v401
      %v475 = vpop.f32.mrb[0].mxu0
      %v476 = vadd.f32 0.0, %v475
      %v477 = vpop.f32.mrb[0].mxu0
      %v478 = vadd.f32 0.0, %v477
      %479 = vdwg.mxu0
      %v480 = vld [vmem:[%s17] sm:$0xff]
      %v481 = vld [vmem:[%s17 + $0x8] sm:$0xff]
      %v482 = vld [vmem:[%s17 + $0x10] sm:$0xff]
      %v483 = vld [vmem:[%s17 + $0x18] sm:$0xff]
      %v484 = vld [vmem:[%s17 + $0x20] sm:$0xff]
      %v485 = vld [vmem:[%s17 + $0x28] sm:$0xff]
      %v486 = vld [vmem:[%s17 + $0x30] sm:$0xff]
      %v487 = vld [vmem:[%s17 + $0x38] sm:$0xff]
      %v488 = vld [vmem:[%s17 + $0x40] sm:$0xff]
      %v489 = vld [vmem:[%s17 + $0x48] sm:$0xff]
      %v490 = vld [vmem:[%s17 + $0x50] sm:$0xff]
      %v491 = vld [vmem:[%s17 + $0x58] sm:$0xff]
      %v492 = vld [vmem:[%s17 + $0x60] sm:$0xff]
      %v493 = vld [vmem:[%s17 + $0x68] sm:$0xff]
      %v494 = vld [vmem:[%s17 + $0x70] sm:$0xff]
      %v495 = vld [vmem:[%s17 + $0x78] sm:$0xff]
      %v497 = vsel %vm286, %v273, 0
      %499 = vmatprep.subr.mxu0 %v481
      %500 = vmatpush1.msra.mxu0 %v480
      %501 = vmatprep.subr.mxu0 %v483
      %502 = vmatpush1.msra.mxu0 %v482
      %503 = vmatprep.subr.mxu0 %v485
      %504 = vmatpush1.msra.mxu0 %v484
      %505 = vmatprep.subr.mxu0 %v487
      %506 = vmatpush1.msra.mxu0 %v486
      %507 = vmatprep.subr.mxu0 %v489
      %508 = vmatpush1.msra.mxu0 %v488
      %509 = vmatprep.subr.mxu0 %v491
      %510 = vmatpush1.msra.mxu0 %v490
      %511 = vmatprep.subr.mxu0 %v493
      %512 = vmatpush1.msra.mxu0 %v492
      %513 = vmatprep.subr.mxu0 %v495
      %514 = vmatpush1.msra.mxu0 %v494
      %515 = vmatprep.subr.mxu0 0.0
      %516 = vmatpush1.msra.mxu0 0.0
      %517 = vmatprep.subr.mxu0 0.0
      %518 = vmatpush1.msra.mxu0 0.0
      %519 = vmatprep.subr.mxu0 0.0
      %520 = vmatpush1.msra.mxu0 0.0
      %521 = vmatprep.subr.mxu0 0.0
      %522 = vmatpush1.msra.mxu0 0.0
      %523 = vmatprep.subr.mxu0 0.0
      %524 = vmatpush1.msra.mxu0 0.0
      %525 = vmatprep.subr.mxu0 0.0
      %526 = vmatpush1.msra.mxu0 0.0
      %527 = vmatprep.subr.mxu0 0.0
      %528 = vmatpush1.msra.mxu0 0.0
      %529 = vmatprep.subr.mxu0 0.0
      %530 = vmatpush1.msra.mxu0 0.0
      %531 = vmatprep.subr.mxu0 0.0
      %532 = vmatpush1.msra.mxu0 0.0
      %533 = vmatprep.subr.mxu0 0.0
      %534 = vmatpush1.msra.mxu0 0.0
      %535 = vmatprep.subr.mxu0 0.0
      %536 = vmatpush1.msra.mxu0 0.0
      %537 = vmatprep.subr.mxu0 0.0
      %538 = vmatpush1.msra.mxu0 0.0
      %539 = vmatprep.subr.mxu0 0.0
      %540 = vmatpush1.msra.mxu0 0.0
      %541 = vmatprep.subr.mxu0 0.0
      %542 = vmatpush1.msra.mxu0 0.0
      %543 = vmatprep.subr.mxu0 0.0
      %544 = vmatpush1.msra.mxu0 0.0
      %545 = vmatprep.subr.mxu0 0.0
      %546 = vmatpush1.msra.mxu0 0.0
      %547 = vmatprep.subr.mxu0 0.0
      %548 = vmatpush1.msra.mxu0 0.0
      %549 = vmatprep.subr.mxu0 0.0
      %550 = vmatpush1.msra.mxu0 0.0
      %551 = vmatprep.subr.mxu0 0.0
      %552 = vmatpush1.msra.mxu0 0.0
      %553 = vmatprep.subr.mxu0 0.0
      %554 = vmatpush1.msra.mxu0 0.0
      %555 = vmatprep.subr.mxu0 0.0
      %556 = vmatpush1.msra.mxu0 0.0
      %557 = vmatprep.subr.mxu0 0.0
      %558 = vmatpush1.msra.mxu0 0.0
      %559 = vmatprep.subr.mxu0 0.0
      %560 = vmatpush1.msra.mxu0 0.0
      %561 = vmatprep.subr.mxu0 0.0
      %562 = vmatpush1.msra.mxu0 0.0
      %563 = vmatprep.mubr.f32.mxu0 0.0
      %564 = vmatmul.mubr.f32.gmra.mrb[0].mxu0 %v497
      %v565 = vpop.f32.mrb[0].mxu0
      %v566 = vadd.f32 0.0, %v565
      %v567 = vpop.f32.mrb[0].mxu0
      %v568 = vadd.f32 0.0, %v567
      %569 = vdwg.mxu0
      %v570 = vadd.f32 %v476, %v566
      %v571 = vld [vmem:[%s19] sm:$0x1]
      %v572 = vadd.f32 %v570, %v571
      %v573 = vxor.u32 %v572, 2147483648
      %v574 = vmul.f32 %v573, 1.442695
      %v575 = vpow.pop %v574
      %v576 = vadd.f32 %v575, 1.0
      %v577 = vrcp.pop %v576
      %v578 = vmul.f32 1.0, %v577
      %v579 = vld [vmem:[%s21] sm:$0x1]
      %v581 = vlaneseq
      %v582 = vshrl.u32 %v581, 7
      %v583 = vsub.s32 0, %v582
      %v584 = vrot.slane %v579, %v583
      %585 = vrot.lane.b32.xlu0 %v584, 64
      %v586 = vpop.permute.xlu0 %585
      %v588 = vadd.f32 %v570, %v586
      %v589 = vxor.u32 %v588, 2147483648
      %v590 = vmul.f32 %v589, 1.442695
      %v591 = vpow.pop %v590
      %v592 = vadd.f32 %v591, 1.0
      %v593 = vrcp.pop %v592
      %v594 = vmul.f32 1.0, %v593
      %v595 = vld [vmem:[%s23] sm:$0x1]
      %v596 = vadd.f32 %v478, %v595
      %v597 = vld [vmem:[%s25] sm:$0x1]
      %v598 = vadd.f32 %v568, %v597
      %v599 = vmul.f32 %v578, %v598
      %v600 = vadd.f32 %v596, %v599
      %v601 = vtanh.pop %v600
      %v602 = vsub.f32 1.0, %v594
      %604 = vrot.lane.b32.xlu0 %v601, 64
      %v605 = vpop.permute.xlu0 %604
      %v607 = vmul.f32 %v602, %v605
      %608 = vrot.lane.b32.xlu0 %v273, 64
      %v609 = vpop.permute.xlu0 %608
      %v611 = vmul.f32 %v594, %v609
      %v612 = vadd.f32 %v607, %v611
      %v614 = vlaneseq
      %v615 = vshrl.u32 %v614, 7
      %v616 = vsub.s32 0, %v615
      %v617 = vrot.slane %v177, %v616
      %618 = vrot.lane.b32.xlu0 %v617, 64
      %v619 = vpop.permute.xlu0 %618
      %v621 = vsel %vm286, %v178, %v619
      %v622 = vld [vmem:[%s35] sm:$0xff]
      %v623 = vld [vmem:[%s35 + $0x8] sm:$0xff]
      %v624 = vld [vmem:[%s35 + $0x10] sm:$0xff]
      %v625 = vld [vmem:[%s35 + $0x18] sm:$0xff]
      %v626 = vld [vmem:[%s35 + $0x20] sm:$0xff]
      %v627 = vld [vmem:[%s35 + $0x28] sm:$0xff]
      %v628 = vld [vmem:[%s35 + $0x30] sm:$0xff]
      %v629 = vld [vmem:[%s35 + $0x38] sm:$0xff]
      %v630 = vld [vmem:[%s35 + $0x40] sm:$0xff]
      %v631 = vld [vmem:[%s35 + $0x48] sm:$0xff]
      %v632 = vld [vmem:[%s35 + $0x50] sm:$0xff]
      %v633 = vld [vmem:[%s35 + $0x58] sm:$0xff]
      %v634 = vld [vmem:[%s35 + $0x60] sm:$0xff]
      %v635 = vld [vmem:[%s35 + $0x68] sm:$0xff]
      %v636 = vld [vmem:[%s35 + $0x70] sm:$0xff]
      %v637 = vld [vmem:[%s35 + $0x78] sm:$0xff]
      %v638 = vld [vmem:[%s35 + $0x80] sm:$0xff]
      %v639 = vld [vmem:[%s35 + $0x88] sm:$0xff]
      %v640 = vld [vmem:[%s35 + $0x90] sm:$0xff]
      %v641 = vld [vmem:[%s35 + $0x98] sm:$0xff]
      %v642 = vld [vmem:[%s35 + $0xa0] sm:$0xff]
      %v643 = vld [vmem:[%s35 + $0xa8] sm:$0xff]
      %v644 = vld [vmem:[%s35 + $0xb0] sm:$0xff]
      %v645 = vld [vmem:[%s35 + $0xb8] sm:$0xff]
      %v646 = vld [vmem:[%s37] sm:$0x1]
      %v648 = vsel %vm286, %v171, 0
      %650 = vmatprep.subr.mxu0 0.0
      %651 = vmatpush1.msra.mxu0 %v622
      %652 = vmatprep.subr.mxu0 0.0
      %653 = vmatpush1.msra.mxu0 %v623
      %654 = vmatprep.subr.mxu0 0.0
      %655 = vmatpush1.msra.mxu0 %v624
      %656 = vmatprep.subr.mxu0 0.0
      %657 = vmatpush1.msra.mxu0 %v625
      %658 = vmatprep.subr.mxu0 0.0
      %659 = vmatpush1.msra.mxu0 %v626
      %660 = vmatprep.subr.mxu0 0.0
      %661 = vmatpush1.msra.mxu0 %v627
      %662 = vmatprep.subr.mxu0 0.0
      %663 = vmatpush1.msra.mxu0 %v628
      %664 = vmatprep.subr.mxu0 0.0
      %665 = vmatpush1.msra.mxu0 %v629
      %666 = vmatprep.subr.mxu0 0.0
      %667 = vmatpush1.msra.mxu0 %v630
      %668 = vmatprep.subr.mxu0 0.0
      %669 = vmatpush1.msra.mxu0 %v631
      %670 = vmatprep.subr.mxu0 0.0
      %671 = vmatpush1.msra.mxu0 %v632
      %672 = vmatprep.subr.mxu0 0.0
      %673 = vmatpush1.msra.mxu0 %v633
      %674 = vmatprep.subr.mxu0 0.0
      %675 = vmatpush1.msra.mxu0 %v634
      %676 = vmatprep.subr.mxu0 0.0
      %677 = vmatpush1.msra.mxu0 %v635
      %678 = vmatprep.subr.mxu0 0.0
      %679 = vmatpush1.msra.mxu0 %v636
      %680 = vmatprep.subr.mxu0 0.0
      %681 = vmatpush1.msra.mxu0 %v637
      %682 = vmatprep.subr.mxu0 0.0
      %683 = vmatpush1.msra.mxu0 %v638
      %684 = vmatprep.subr.mxu0 0.0
      %685 = vmatpush1.msra.mxu0 %v639
      %686 = vmatprep.subr.mxu0 0.0
      %687 = vmatpush1.msra.mxu0 %v640
      %688 = vmatprep.subr.mxu0 0.0
      %689 = vmatpush1.msra.mxu0 %v641
      %690 = vmatprep.subr.mxu0 0.0
      %691 = vmatpush1.msra.mxu0 %v642
      %692 = vmatprep.subr.mxu0 0.0
      %693 = vmatpush1.msra.mxu0 %v643
      %694 = vmatprep.subr.mxu0 0.0
      %695 = vmatpush1.msra.mxu0 %v644
      %696 = vmatprep.subr.mxu0 0.0
      %697 = vmatpush1.msra.mxu0 %v645
      %698 = vmatprep.subr.mxu0 0.0
      %699 = vmatpush1.msra.mxu0 0.0
      %700 = vmatprep.subr.mxu0 0.0
      %701 = vmatpush1.msra.mxu0 0.0
      %702 = vmatprep.subr.mxu0 0.0
      %703 = vmatpush1.msra.mxu0 0.0
      %704 = vmatprep.subr.mxu0 0.0
      %705 = vmatpush1.msra.mxu0 0.0
      %706 = vmatprep.subr.mxu0 0.0
      %707 = vmatpush1.msra.mxu0 0.0
      %708 = vmatprep.subr.mxu0 0.0
      %709 = vmatpush1.msra.mxu0 0.0
      %710 = vmatprep.subr.mxu0 0.0
      %711 = vmatpush1.msra.mxu0 0.0
      %712 = vmatprep.subr.mxu0 0.0
      %713 = vmatpush1.msra.mxu0 0.0
      %714 = vmatprep.mubr.f32.mxu0 %v648
      %715 = vmatmul.mubr.f32.gmra.mrb[0].mxu0 %v621
      %v716 = vpop.f32.mrb[0].mxu0
      %v717 = vadd.f32 %v646, %v716
      %v718 = vpop.f32.mrb[0].mxu0
      %719 = vdwg.mxu0
      %v720 = vld [vmem:[%s31] sm:$0xff]
      %v721 = vld [vmem:[%s31 + $0x8] sm:$0xff]
      %v722 = vld [vmem:[%s31 + $0x10] sm:$0xff]
      %v723 = vld [vmem:[%s31 + $0x18] sm:$0xff]
      %v724 = vld [vmem:[%s31 + $0x20] sm:$0xff]
      %v725 = vld [vmem:[%s31 + $0x28] sm:$0xff]
      %v726 = vld [vmem:[%s31 + $0x30] sm:$0xff]
      %v727 = vld [vmem:[%s31 + $0x38] sm:$0xff]
      %v728 = vld [vmem:[%s31 + $0x40] sm:$0xff]
      %v729 = vld [vmem:[%s31 + $0x48] sm:$0xff]
      %v730 = vld [vmem:[%s31 + $0x50] sm:$0xff]
      %v731 = vld [vmem:[%s31 + $0x58] sm:$0xff]
      %v732 = vld [vmem:[%s31 + $0x60] sm:$0xff]
      %v733 = vld [vmem:[%s31 + $0x68] sm:$0xff]
      %v734 = vld [vmem:[%s31 + $0x70] sm:$0xff]
      %v735 = vld [vmem:[%s31 + $0x78] sm:$0xff]
      %v736 = vld [vmem:[%s33] sm:$0x1]
      %738 = vrot.lane.b32.xlu0 %v621, 64
      %v739 = vpop.permute.xlu0 %738
      %740 = vrot.lane.b32.xlu0 %v171, 64
      %v741 = vpop.permute.xlu0 %740
      %v742 = vsel %vm286, %v739, %v741
      %744 = vmatprep.subr.mxu0 0.0
      %745 = vmatpush1.msra.mxu0 %v720
      %746 = vmatprep.subr.mxu0 0.0
      %747 = vmatpush1.msra.mxu0 %v721
      %748 = vmatprep.subr.mxu0 0.0
      %749 = vmatpush1.msra.mxu0 %v722
      %750 = vmatprep.subr.mxu0 0.0
      %751 = vmatpush1.msra.mxu0 %v723
      %752 = vmatprep.subr.mxu0 0.0
      %753 = vmatpush1.msra.mxu0 %v724
      %754 = vmatprep.subr.mxu0 0.0
      %755 = vmatpush1.msra.mxu0 %v725
      %756 = vmatprep.subr.mxu0 0.0
      %757 = vmatpush1.msra.mxu0 %v726
      %758 = vmatprep.subr.mxu0 0.0
      %759 = vmatpush1.msra.mxu0 %v727
      %760 = vmatprep.subr.mxu0 0.0
      %761 = vmatpush1.msra.mxu0 %v728
      %762 = vmatprep.subr.mxu0 0.0
      %763 = vmatpush1.msra.mxu0 %v729
      %764 = vmatprep.subr.mxu0 0.0
      %765 = vmatpush1.msra.mxu0 %v730
      %766 = vmatprep.subr.mxu0 0.0
      %767 = vmatpush1.msra.mxu0 %v731
      %768 = vmatprep.subr.mxu0 0.0
      %769 = vmatpush1.msra.mxu0 %v732
      %770 = vmatprep.subr.mxu0 0.0
      %771 = vmatpush1.msra.mxu0 %v733
      %772 = vmatprep.subr.mxu0 0.0
      %773 = vmatpush1.msra.mxu0 %v734
      %774 = vmatprep.subr.mxu0 0.0
      %775 = vmatpush1.msra.mxu0 %v735
      %776 = vmatprep.subr.mxu0 0.0
      %777 = vmatpush1.msra.mxu0 0.0
      %778 = vmatprep.subr.mxu0 0.0
      %779 = vmatpush1.msra.mxu0 0.0
      %780 = vmatprep.subr.mxu0 0.0
      %781 = vmatpush1.msra.mxu0 0.0
      %782 = vmatprep.subr.mxu0 0.0
      %783 = vmatpush1.msra.mxu0 0.0
      %784 = vmatprep.subr.mxu0 0.0
      %785 = vmatpush1.msra.mxu0 0.0
      %786 = vmatprep.subr.mxu0 0.0
      %787 = vmatpush1.msra.mxu0 0.0
      %788 = vmatprep.subr.mxu0 0.0
      %789 = vmatpush1.msra.mxu0 0.0
      %790 = vmatprep.subr.mxu0 0.0
      %791 = vmatpush1.msra.mxu0 0.0
      %792 = vmatprep.subr.mxu0 0.0
      %793 = vmatpush1.msra.mxu0 0.0
      %794 = vmatprep.subr.mxu0 0.0
      %795 = vmatpush1.msra.mxu0 0.0
      %796 = vmatprep.subr.mxu0 0.0
      %797 = vmatpush1.msra.mxu0 0.0
      %798 = vmatprep.subr.mxu0 0.0
      %799 = vmatpush1.msra.mxu0 0.0
      %800 = vmatprep.subr.mxu0 0.0
      %801 = vmatpush1.msra.mxu0 0.0
      %802 = vmatprep.subr.mxu0 0.0
      %803 = vmatpush1.msra.mxu0 0.0
      %804 = vmatprep.subr.mxu0 0.0
      %805 = vmatpush1.msra.mxu0 0.0
      %806 = vmatprep.subr.mxu0 0.0
      %807 = vmatpush1.msra.mxu0 0.0
      %808 = vmatprep.mubr.f32.mxu0 0.0
      %809 = vmatmul.mubr.f32.gmra.mrb[0].mxu0 %v742
      %v810 = vpop.f32.mrb[0].mxu0
      %v811 = vadd.f32 %v736, %v810
      %v812 = vpop.f32.mrb[0].mxu0
      %813 = vdwg.mxu0
      %v814 = vld [vmem:[%s27] sm:$0xff]
      %v815 = vld [vmem:[%s27 + $0x8] sm:$0xff]
      %v816 = vld [vmem:[%s27 + $0x10] sm:$0xff]
      %v817 = vld [vmem:[%s27 + $0x18] sm:$0xff]
      %v818 = vld [vmem:[%s27 + $0x20] sm:$0xff]
      %v819 = vld [vmem:[%s27 + $0x28] sm:$0xff]
      %v820 = vld [vmem:[%s27 + $0x30] sm:$0xff]
      %v821 = vld [vmem:[%s27 + $0x38] sm:$0xff]
      %v822 = vld [vmem:[%s29] sm:$0x1]
      %823 = vmatprep.subr.mxu0 0.0
      %824 = vmatpush1.msra.mxu0 %v814
      %825 = vmatprep.subr.mxu0 0.0
      %826 = vmatpush1.msra.mxu0 %v815
      %827 = vmatprep.subr.mxu0 0.0
      %828 = vmatpush1.msra.mxu0 %v816
      %829 = vmatprep.subr.mxu0 0.0
      %830 = vmatpush1.msra.mxu0 %v817
      %831 = vmatprep.subr.mxu0 0.0
      %832 = vmatpush1.msra.mxu0 %v818
      %833 = vmatprep.subr.mxu0 0.0
      %834 = vmatpush1.msra.mxu0 %v819
      %835 = vmatprep.subr.mxu0 0.0
      %836 = vmatpush1.msra.mxu0 %v820
      %837 = vmatprep.subr.mxu0 0.0
      %838 = vmatpush1.msra.mxu0 %v821
      %839 = vmatprep.subr.mxu0 0.0
      %840 = vmatpush1.msra.mxu0 0.0
      %841 = vmatprep.subr.mxu0 0.0
      %842 = vmatpush1.msra.mxu0 0.0
      %843 = vmatprep.subr.mxu0 0.0
      %844 = vmatpush1.msra.mxu0 0.0
      %845 = vmatprep.subr.mxu0 0.0
      %846 = vmatpush1.msra.mxu0 0.0
      %847 = vmatprep.subr.mxu0 0.0
      %848 = vmatpush1.msra.mxu0 0.0
      %849 = vmatprep.subr.mxu0 0.0
      %850 = vmatpush1.msra.mxu0 0.0
      %851 = vmatprep.subr.mxu0 0.0
      %852 = vmatpush1.msra.mxu0 0.0
      %853 = vmatprep.subr.mxu0 0.0
      %854 = vmatpush1.msra.mxu0 0.0
      %855 = vmatprep.subr.mxu0 0.0
      %856 = vmatpush1.msra.mxu0 0.0
      %857 = vmatprep.subr.mxu0 0.0
      %858 = vmatpush1.msra.mxu0 0.0
      %859 = vmatprep.subr.mxu0 0.0
      %860 = vmatpush1.msra.mxu0 0.0
      %861 = vmatprep.subr.mxu0 0.0
      %862 = vmatpush1.msra.mxu0 0.0
      %863 = vmatprep.subr.mxu0 0.0
      %864 = vmatpush1.msra.mxu0 0.0
      %865 = vmatprep.subr.mxu0 0.0
      %866 = vmatpush1.msra.mxu0 0.0
      %867 = vmatprep.subr.mxu0 0.0
      %868 = vmatpush1.msra.mxu0 0.0
      %869 = vmatprep.subr.mxu0 0.0
      %870 = vmatpush1.msra.mxu0 0.0
      %871 = vmatprep.subr.mxu0 0.0
      %872 = vmatpush1.msra.mxu0 0.0
      %873 = vmatprep.subr.mxu0 0.0
      %874 = vmatpush1.msra.mxu0 0.0
      %875 = vmatprep.subr.mxu0 0.0
      %876 = vmatpush1.msra.mxu0 0.0
      %877 = vmatprep.subr.mxu0 0.0
      %878 = vmatpush1.msra.mxu0 0.0
      %879 = vmatprep.subr.mxu0 0.0
      %880 = vmatpush1.msra.mxu0 0.0
      %881 = vmatprep.subr.mxu0 0.0
      %882 = vmatpush1.msra.mxu0 0.0
      %883 = vmatprep.subr.mxu0 0.0
      %884 = vmatpush1.msra.mxu0 0.0
      %885 = vmatprep.subr.mxu0 0.0
      %886 = vmatpush1.msra.mxu0 0.0
      %887 = vmatprep.mubr.f32.mxu0 0.0
      %888 = vmatmul.mubr.f32.gmra.mrb[0].mxu0 %v648
      %v889 = vpop.f32.mrb[0].mxu0
      %v890 = vadd.f32 %v822, %v889
      %v891 = vpop.f32.mrb[0].mxu0
      %892 = vdwg.mxu0
      %p893 = scmp.eq.s32.totalorder %s166, 0
      %p894 = scmp.eq.s32.totalorder %s166, 1
      %s895 = scalar_select %p894, 1, 0
      %v896 = vstv %s895
      %vm897 = vcmp.eq.s32.totalorder %v896, 1
      %v898 = vsel %vm897, %v811, %v717
      %s899 = scalar_select %p893, 1, 0
      %v900 = vstv %s899
      %vm901 = vcmp.eq.s32.totalorder %v900, 1
      %v902 = vsel %vm901, %v890, %v898
      %v903 = vld [vmem:[%s39] sm:$0xff]
      %v904 = vld [vmem:[%s39 + $0x8] sm:$0xff]
      %v905 = vld [vmem:[%s39 + $0x10] sm:$0xff]
      %v906 = vld [vmem:[%s39 + $0x18] sm:$0xff]
      %v907 = vld [vmem:[%s39 + $0x20] sm:$0xff]
      %v908 = vld [vmem:[%s39 + $0x28] sm:$0xff]
      %v909 = vld [vmem:[%s39 + $0x30] sm:$0xff]
      %v910 = vld [vmem:[%s39 + $0x38] sm:$0xff]
      %v911 = vld [vmem:[%s41] sm:$0xff]
      %v912 = vld [vmem:[%s41 + $0x8] sm:$0xff]
      %vm913 = vcmask 130048
      %v915 = vsel %vm913, %v902, 0
      %917 = vmatprep.subr.mxu0 0.0
      %918 = vmatpush1.msra.mxu0 %v911
      %919 = vmatprep.subr.mxu0 0.0
      %920 = vmatpush1.msra.mxu0 %v912
      %921 = vmatprep.subr.mxu0 0.0
      %922 = vmatpush1.msra.mxu0 0.0
      %923 = vmatprep.subr.mxu0 0.0
      %924 = vmatpush1.msra.mxu0 0.0
      %925 = vmatprep.subr.mxu0 0.0
      %926 = vmatpush1.msra.mxu0 0.0
      %927 = vmatprep.subr.mxu0 0.0
      %928 = vmatpush1.msra.mxu0 0.0
      %929 = vmatprep.subr.mxu0 0.0
      %930 = vmatpush1.msra.mxu0 0.0
      %931 = vmatprep.subr.mxu0 0.0
      %932 = vmatpush1.msra.mxu0 0.0
      %933 = vmatprep.subr.mxu0 0.0
      %934 = vmatpush1.msra.mxu0 0.0
      %935 = vmatprep.subr.mxu0 0.0
      %936 = vmatpush1.msra.mxu0 0.0
      %937 = vmatprep.subr.mxu0 0.0
      %938 = vmatpush1.msra.mxu0 0.0
      %939 = vmatprep.subr.mxu0 0.0
      %940 = vmatpush1.msra.mxu0 0.0
      %941 = vmatprep.subr.mxu0 0.0
      %942 = vmatpush1.msra.mxu0 0.0
      %943 = vmatprep.subr.mxu0 0.0
      %944 = vmatpush1.msra.mxu0 0.0
      %945 = vmatprep.subr.mxu0 0.0
      %946 = vmatpush1.msra.mxu0 0.0
      %947 = vmatprep.subr.mxu0 0.0
      %948 = vmatpush1.msra.mxu0 0.0
      %949 = vmatprep.subr.mxu0 0.0
      %950 = vmatpush1.msra.mxu0 0.0
      %951 = vmatprep.subr.mxu0 0.0
      %952 = vmatpush1.msra.mxu0 0.0
      %953 = vmatprep.subr.mxu0 0.0
      %954 = vmatpush1.msra.mxu0 0.0
      %955 = vmatprep.subr.mxu0 0.0
      %956 = vmatpush1.msra.mxu0 0.0
      %957 = vmatprep.subr.mxu0 0.0
      %958 = vmatpush1.msra.mxu0 0.0
      %959 = vmatprep.subr.mxu0 0.0
      %960 = vmatpush1.msra.mxu0 0.0
      %961 = vmatprep.subr.mxu0 0.0
      %962 = vmatpush1.msra.mxu0 0.0
      %963 = vmatprep.subr.mxu0 0.0
      %964 = vmatpush1.msra.mxu0 0.0
      %965 = vmatprep.subr.mxu0 0.0
      %966 = vmatpush1.msra.mxu0 0.0
      %967 = vmatprep.subr.mxu0 0.0
      %968 = vmatpush1.msra.mxu0 0.0
      %969 = vmatprep.subr.mxu0 0.0
      %970 = vmatpush1.msra.mxu0 0.0
      %971 = vmatprep.subr.mxu0 0.0
      %972 = vmatpush1.msra.mxu0 0.0
      %973 = vmatprep.subr.mxu0 0.0
      %974 = vmatpush1.msra.mxu0 0.0
      %975 = vmatprep.subr.mxu0 0.0
      %976 = vmatpush1.msra.mxu0 0.0
      %977 = vmatprep.subr.mxu0 0.0
      %978 = vmatpush1.msra.mxu0 0.0
      %979 = vmatprep.subr.mxu0 0.0
      %980 = vmatpush1.msra.mxu0 0.0
      %981 = vmatprep.mubr.f32.mxu0 0.0
      %982 = vmatmul.mubr.f32.gmra.mrb[0].mxu0 %v915
      %v983 = vpop.f32.mrb[0].mxu0
      %v984 = vadd.f32 0.0, %v983
      %v985 = vpop.f32.mrb[0].mxu0
      %986 = vdwg.mxu0
      %988 = vrot.lane.b32.xlu0 %v612, 64
      %v989 = vpop.permute.xlu0 %988
      %v990 = vsel %vm286, %v989, 0
      %992 = vmatprep.subr.mxu0 0.0
      %993 = vmatpush1.msra.mxu0 %v903
      %994 = vmatprep.subr.mxu0 0.0
      %995 = vmatpush1.msra.mxu0 %v904
      %996 = vmatprep.subr.mxu0 0.0
      %997 = vmatpush1.msra.mxu0 %v905
      %998 = vmatprep.subr.mxu0 0.0
      %999 = vmatpush1.msra.mxu0 %v906
      %1000 = vmatprep.subr.mxu0 0.0
      %1001 = vmatpush1.msra.mxu0 %v907
      %1002 = vmatprep.subr.mxu0 0.0
      %1003 = vmatpush1.msra.mxu0 %v908
      %1004 = vmatprep.subr.mxu0 0.0
      %1005 = vmatpush1.msra.mxu0 %v909
      %1006 = vmatprep.subr.mxu0 0.0
      %1007 = vmatpush1.msra.mxu0 %v910
      %1008 = vmatprep.subr.mxu0 0.0
      %1009 = vmatpush1.msra.mxu0 0.0
      %1010 = vmatprep.subr.mxu0 0.0
      %1011 = vmatpush1.msra.mxu0 0.0
      %1012 = vmatprep.subr.mxu0 0.0
      %1013 = vmatpush1.msra.mxu0 0.0
      %1014 = vmatprep.subr.mxu0 0.0
      %1015 = vmatpush1.msra.mxu0 0.0
      %1016 = vmatprep.subr.mxu0 0.0
      %1017 = vmatpush1.msra.mxu0 0.0
      %1018 = vmatprep.subr.mxu0 0.0
      %1019 = vmatpush1.msra.mxu0 0.0
      %1020 = vmatprep.subr.mxu0 0.0
      %1021 = vmatpush1.msra.mxu0 0.0
      %1022 = vmatprep.subr.mxu0 0.0
      %1023 = vmatpush1.msra.mxu0 0.0
      %1024 = vmatprep.subr.mxu0 0.0
      %1025 = vmatpush1.msra.mxu0 0.0
      %1026 = vmatprep.subr.mxu0 0.0
      %1027 = vmatpush1.msra.mxu0 0.0
      %1028 = vmatprep.subr.mxu0 0.0
      %1029 = vmatpush1.msra.mxu0 0.0
      %1030 = vmatprep.subr.mxu0 0.0
      %1031 = vmatpush1.msra.mxu0 0.0
      %1032 = vmatprep.subr.mxu0 0.0
      %1033 = vmatpush1.msra.mxu0 0.0
      %1034 = vmatprep.subr.mxu0 0.0
      %1035 = vmatpush1.msra.mxu0 0.0
      %1036 = vmatprep.subr.mxu0 0.0
      %1037 = vmatpush1.msra.mxu0 0.0
      %1038 = vmatprep.subr.mxu0 0.0
      %1039 = vmatpush1.msra.mxu0 0.0
      %1040 = vmatprep.subr.mxu0 0.0
      %1041 = vmatpush1.msra.mxu0 0.0
      %1042 = vmatprep.subr.mxu0 0.0
      %1043 = vmatpush1.msra.mxu0 0.0
      %1044 = vmatprep.subr.mxu0 0.0
      %1045 = vmatpush1.msra.mxu0 0.0
      %1046 = vmatprep.subr.mxu0 0.0
      %1047 = vmatpush1.msra.mxu0 0.0
      %1048 = vmatprep.subr.mxu0 0.0
      %1049 = vmatpush1.msra.mxu0 0.0
      %1050 = vmatprep.subr.mxu0 0.0
      %1051 = vmatpush1.msra.mxu0 0.0
      %1052 = vmatprep.subr.mxu0 0.0
      %1053 = vmatpush1.msra.mxu0 0.0
      %1054 = vmatprep.subr.mxu0 0.0
      %1055 = vmatpush1.msra.mxu0 0.0
      %1056 = vmatprep.mubr.f32.mxu0 0.0
      %1057 = vmatmul.mubr.f32.gmra.mrb[0].mxu0 %v990
      %v1058 = vpop.f32.mrb[0].mxu0
      %v1059 = vadd.f32 %v984, %v1058
      %v1060 = vpop.f32.mrb[0].mxu0
      %1061 = vdwg.mxu0
      %v1062 = vld [vmem:[%s43] sm:$0x1]
      %v1063 = vadd.f32 %v1059, %v1062
      %v1064 = vlaneseq
      %v1065 = vshrl.u32 %v1064, 7
      %v1066 = vsub.s32 0, %v1065
      %v1067 = vrot.slane %v272, %v1066
      %1073 = vrot.lane.b32.xlu0 %v172, 64
      %v1074 = vpop.permute.xlu0 %1073
      %1075 = vrot.lane.b32.xlu0 %v173, 64
      %v1076 = vpop.permute.xlu0 %1075
      %1077 = vrot.lane.b32.xlu0 %v174, 64
      %v1078 = vpop.permute.xlu0 %1077
      %1079 = vrot.lane.b32.xlu0 %v175, 64
      %v1080 = vpop.permute.xlu0 %1079
      %1081 = vrot.lane.b32.xlu0 %v176, 64
      %v1082 = vpop.permute.xlu0 %1081
      %v1088 = vmul.f32 %v1067, %v1074
      %v1089 = vmul.f32 %v1067, %v1076
      %v1090 = vmul.f32 %v1067, %v1078
      %v1091 = vmul.f32 %v1067, %v1080
      %v1092 = vmul.f32 %v1067, %v1082
      %v1093 = vlaneseq
      %v1094 = vshrl.u32 %v1093, 7
      %v1095 = vsub.s32 0, %v1094
      %v1096 = vrot.slane %v612, %v1095
      %1102 = vrot.lane.b32.xlu0 %v1088, 64
      %v1103 = vpop.permute.xlu0 %1102
      %1104 = vrot.lane.b32.xlu0 %v1089, 64
      %v1105 = vpop.permute.xlu0 %1104
      %1106 = vrot.lane.b32.xlu0 %v1090, 64
      %v1107 = vpop.permute.xlu0 %1106
      %1108 = vrot.lane.b32.xlu0 %v1091, 64
      %v1109 = vpop.permute.xlu0 %1108
      %1110 = vrot.lane.b32.xlu0 %v1092, 64
      %v1111 = vpop.permute.xlu0 %1110
      %v1117 = vsel %vm286, %v1103, %v1096
      %v1118 = vsel %vm286, %v1105, %v1096
      %v1119 = vsel %vm286, %v1107, %v1096
      %v1120 = vsel %vm286, %v1109, %v1096
      %v1121 = vsel %vm286, %v1111, %v1096
      %v1122 = vld [vmem:[%s53] sm:$0xff]
      %v1123 = vld [vmem:[%s53 + $0x8] sm:$0xff]
      %v1124 = vld [vmem:[%s53 + $0x10] sm:$0xff]
      %v1125 = vld [vmem:[%s53 + $0x18] sm:$0xff]
      %v1126 = vld [vmem:[%s53 + $0x20] sm:$0xff]
      %v1127 = vld [vmem:[%s53 + $0x28] sm:$0xff]
      %v1128 = vld [vmem:[%s53 + $0x30] sm:$0xff]
      %v1129 = vld [vmem:[%s53 + $0x38] sm:$0xff]
      %v1130 = vld [vmem:[%s53 + $0x40] sm:$0xff]
      %v1131 = vld [vmem:[%s53 + $0x48] sm:$0xff]
      %v1132 = vld [vmem:[%s53 + $0x50] sm:$0xff]
      %v1133 = vld [vmem:[%s53 + $0x58] sm:$0xff]
      %v1134 = vld [vmem:[%s53 + $0x60] sm:$0xff]
      %v1135 = vld [vmem:[%s53 + $0x68] sm:$0xff]
      %v1136 = vld [vmem:[%s53 + $0x70] sm:$0xff]
      %v1137 = vld [vmem:[%s53 + $0x78] sm:$0xff]
      %v1138 = vld [vmem:[%s53 + $0x80] sm:$0xff]
      %v1139 = vld [vmem:[%s53 + $0x88] sm:$0xff]
      %v1140 = vld [vmem:[%s53 + $0x90] sm:$0xff]
      %v1141 = vld [vmem:[%s53 + $0x98] sm:$0xff]
      %v1142 = vld [vmem:[%s53 + $0xa0] sm:$0xff]
      %v1143 = vld [vmem:[%s53 + $0xa8] sm:$0xff]
      %v1144 = vld [vmem:[%s53 + $0xb0] sm:$0xff]
      %v1145 = vld [vmem:[%s53 + $0xb8] sm:$0xff]
      %v1146 = vld [vmem:[%s53 + $0xc0] sm:$0xff]
      %v1147 = vld [vmem:[%s53 + $0xc8] sm:$0xff]
      %v1148 = vld [vmem:[%s53 + $0xd0] sm:$0xff]
      %v1149 = vld [vmem:[%s53 + $0xd8] sm:$0xff]
      %v1150 = vld [vmem:[%s53 + $0xe0] sm:$0xff]
      %v1151 = vld [vmem:[%s53 + $0xe8] sm:$0xff]
      %v1152 = vld [vmem:[%s53 + $0xf0] sm:$0xff]
      %v1153 = vld [vmem:[%s53 + $0xf8] sm:$0xff]
      %1154 = vmatprep.subr.mxu0 %v1123
      %1155 = vmatpush1.msra.mxu0 %v1122
      %1156 = vmatprep.subr.mxu0 %v1125
      %1157 = vmatpush1.msra.mxu0 %v1124
      %1158 = vmatprep.subr.mxu0 %v1127
      %1159 = vmatpush1.msra.mxu0 %v1126
      %1160 = vmatprep.subr.mxu0 %v1129
      %1161 = vmatpush1.msra.mxu0 %v1128
      %1162 = vmatprep.subr.mxu0 %v1131
      %1163 = vmatpush1.msra.mxu0 %v1130
      %1164 = vmatprep.subr.mxu0 %v1133
      %1165 = vmatpush1.msra.mxu0 %v1132
      %1166 = vmatprep.subr.mxu0 %v1135
      %1167 = vmatpush1.msra.mxu0 %v1134
      %1168 = vmatprep.subr.mxu0 %v1137
      %1169 = vmatpush1.msra.mxu0 %v1136
      %1170 = vmatprep.subr.mxu0 %v1139
      %1171 = vmatpush1.msra.mxu0 %v1138
      %1172 = vmatprep.subr.mxu0 %v1141
      %1173 = vmatpush1.msra.mxu0 %v1140
      %1174 = vmatprep.subr.mxu0 %v1143
      %1175 = vmatpush1.msra.mxu0 %v1142
      %1176 = vmatprep.subr.mxu0 %v1145
      %1177 = vmatpush1.msra.mxu0 %v1144
      %1178 = vmatprep.subr.mxu0 %v1147
      %1179 = vmatpush1.msra.mxu0 %v1146
      %1180 = vmatprep.subr.mxu0 %v1149
      %1181 = vmatpush1.msra.mxu0 %v1148
      %1182 = vmatprep.subr.mxu0 %v1151
      %1183 = vmatpush1.msra.mxu0 %v1150
      %1184 = vmatprep.subr.mxu0 %v1153
      %1185 = vmatpush1.msra.mxu0 %v1152
      %1186 = vmatprep.subr.mxu0 0.0
      %1187 = vmatpush1.msra.mxu0 0.0
      %1188 = vmatprep.subr.mxu0 0.0
      %1189 = vmatpush1.msra.mxu0 0.0
      %1190 = vmatprep.subr.mxu0 0.0
      %1191 = vmatpush1.msra.mxu0 0.0
      %1192 = vmatprep.subr.mxu0 0.0
      %1193 = vmatpush1.msra.mxu0 0.0
      %1194 = vmatprep.subr.mxu0 0.0
      %1195 = vmatpush1.msra.mxu0 0.0
      %1196 = vmatprep.subr.mxu0 0.0
      %1197 = vmatpush1.msra.mxu0 0.0
      %1198 = vmatprep.subr.mxu0 0.0
      %1199 = vmatpush1.msra.mxu0 0.0
      %1200 = vmatprep.subr.mxu0 0.0
      %1201 = vmatpush1.msra.mxu0 0.0
      %1202 = vmatprep.subr.mxu0 0.0
      %1203 = vmatpush1.msra.mxu0 0.0
      %1204 = vmatprep.subr.mxu0 0.0
      %1205 = vmatpush1.msra.mxu0 0.0
      %1206 = vmatprep.subr.mxu0 0.0
      %1207 = vmatpush1.msra.mxu0 0.0
      %1208 = vmatprep.subr.mxu0 0.0
      %1209 = vmatpush1.msra.mxu0 0.0
      %1210 = vmatprep.subr.mxu0 0.0
      %1211 = vmatpush1.msra.mxu0 0.0
      %1212 = vmatprep.subr.mxu0 0.0
      %1213 = vmatpush1.msra.mxu0 0.0
      %1214 = vmatprep.subr.mxu0 0.0
      %1215 = vmatpush1.msra.mxu0 0.0
      %1216 = vmatprep.subr.mxu0 0.0
      %1217 = vmatpush1.msra.mxu0 0.0
      %1218 = vmatprep.mubr.f32.mxu0 0.0
      %1219 = vmatmul.mubr.f32.gmra.mrb[0].mxu0 %v1117
      %v1220 = vpop.f32.mrb[0].mxu0
      %v1221 = vadd.f32 0.0, %v1220
      %v1222 = vpop.f32.mrb[0].mxu0
      %v1223 = vadd.f32 0.0, %v1222
      %1224 = vdwg.mxu0
      %v1227 = vcombine.low %v1221, %v1223
      %v1229 = vunpack.c.l.s4 1966171168
      %v1230 = vunpack.c.0.s8 %v1229
      %v1231 = vlaneseq
      %v1232 = vshrl.u32 %v1231, 7
      %v1233 = vsub.s32 %v1230, %v1232
      %v1234 = vrot.slane %v1227, %v1233
      %v1236 = vunpack.c.l.s4 1966171168
      %v1237 = vunpack.c.0.s8 %v1236
      %v1238 = vlaneseq
      %v1239 = vshrl.u32 %v1238, 7
      %v1240 = vsub.s32 %v1237, %v1239
      %v1241 = vrot.slane %v1234, %v1240
      %v1243 = vlaneseq
      %vm1244 = vcmp.ge.s32.totalorder %v1243, 0
      %vm1245 = vcmp.lt.s32.totalorder %v1243, 256
      %vm1246 = vmand %vm1244, %vm1245
      %1247 = vst.msk [vmem:[#allocation2] ss:$8 sm:$0x3] %vm1246, %v1241
      %1248 = vst.msk [vmem:[#allocation2] ss:$8 sm:$0x0] %vm1246, %v1241
      %s1249 = scalar_lea.vmem %s53, 256
      %v1250 = vld [vmem:[%s1249] sm:$0xff]
      %v1251 = vld [vmem:[%s1249 + $0x8] sm:$0xff]
      %v1252 = vld [vmem:[%s1249 + $0x10] sm:$0xff]
      %v1253 = vld [vmem:[%s1249 + $0x18] sm:$0xff]
      %v1254 = vld [vmem:[%s1249 + $0x20] sm:$0xff]
      %v1255 = vld [vmem:[%s1249 + $0x28] sm:$0xff]
      %v1256 = vld [vmem:[%s1249 + $0x30] sm:$0xff]
      %v1257 = vld [vmem:[%s1249 + $0x38] sm:$0xff]
      %v1258 = vld [vmem:[%s1249 + $0x40] sm:$0xff]
      %v1259 = vld [vmem:[%s1249 + $0x48] sm:$0xff]
      %v1260 = vld [vmem:[%s1249 + $0x50] sm:$0xff]
      %v1261 = vld [vmem:[%s1249 + $0x58] sm:$0xff]
      %v1262 = vld [vmem:[%s1249 + $0x60] sm:$0xff]
      %v1263 = vld [vmem:[%s1249 + $0x68] sm:$0xff]
      %v1264 = vld [vmem:[%s1249 + $0x70] sm:$0xff]
      %v1265 = vld [vmem:[%s1249 + $0x78] sm:$0xff]
      %v1266 = vld [vmem:[%s1249 + $0x80] sm:$0xff]
      %v1267 = vld [vmem:[%s1249 + $0x88] sm:$0xff]
      %v1268 = vld [vmem:[%s1249 + $0x90] sm:$0xff]
      %v1269 = vld [vmem:[%s1249 + $0x98] sm:$0xff]
      %v1270 = vld [vmem:[%s1249 + $0xa0] sm:$0xff]
      %v1271 = vld [vmem:[%s1249 + $0xa8] sm:$0xff]
      %v1272 = vld [vmem:[%s1249 + $0xb0] sm:$0xff]
      %v1273 = vld [vmem:[%s1249 + $0xb8] sm:$0xff]
      %v1274 = vld [vmem:[%s1249 + $0xc0] sm:$0xff]
      %v1275 = vld [vmem:[%s1249 + $0xc8] sm:$0xff]
      %v1276 = vld [vmem:[%s1249 + $0xd0] sm:$0xff]
      %v1277 = vld [vmem:[%s1249 + $0xd8] sm:$0xff]
      %v1278 = vld [vmem:[%s1249 + $0xe0] sm:$0xff]
      %v1279 = vld [vmem:[%s1249 + $0xe8] sm:$0xff]
      %v1280 = vld [vmem:[%s1249 + $0xf0] sm:$0xff]
      %v1281 = vld [vmem:[%s1249 + $0xf8] sm:$0xff]
      %v1283 = vrot.slane %v1117, 1
      %1285 = vmatprep.subr.mxu0 %v1251
      %1286 = vmatpush1.msra.mxu0 %v1250
      %1287 = vmatprep.subr.mxu0 %v1253
      %1288 = vmatpush1.msra.mxu0 %v1252
      %1289 = vmatprep.subr.mxu0 %v1255
      %1290 = vmatpush1.msra.mxu0 %v1254
      %1291 = vmatprep.subr.mxu0 %v1257
      %1292 = vmatpush1.msra.mxu0 %v1256
      %1293 = vmatprep.subr.mxu0 %v1259
      %1294 = vmatpush1.msra.mxu0 %v1258
      %1295 = vmatprep.subr.mxu0 %v1261
      %1296 = vmatpush1.msra.mxu0 %v1260
      %1297 = vmatprep.subr.mxu0 %v1263
      %1298 = vmatpush1.msra.mxu0 %v1262
      %1299 = vmatprep.subr.mxu0 %v1265
      %1300 = vmatpush1.msra.mxu0 %v1264
      %1301 = vmatprep.subr.mxu0 %v1267
      %1302 = vmatpush1.msra.mxu0 %v1266
      %1303 = vmatprep.subr.mxu0 %v1269
      %1304 = vmatpush1.msra.mxu0 %v1268
      %1305 = vmatprep.subr.mxu0 %v1271
      %1306 = vmatpush1.msra.mxu0 %v1270
      %1307 = vmatprep.subr.mxu0 %v1273
      %1308 = vmatpush1.msra.mxu0 %v1272
      %1309 = vmatprep.subr.mxu0 %v1275
      %1310 = vmatpush1.msra.mxu0 %v1274
      %1311 = vmatprep.subr.mxu0 %v1277
      %1312 = vmatpush1.msra.mxu0 %v1276
      %1313 = vmatprep.subr.mxu0 %v1279
      %1314 = vmatpush1.msra.mxu0 %v1278
      %1315 = vmatprep.subr.mxu0 %v1281
      %1316 = vmatpush1.msra.mxu0 %v1280
      %1317 = vmatprep.subr.mxu0 0.0
      %1318 = vmatpush1.msra.mxu0 0.0
      %1319 = vmatprep.subr.mxu0 0.0
      %1320 = vmatpush1.msra.mxu0 0.0
      %1321 = vmatprep.subr.mxu0 0.0
      %1322 = vmatpush1.msra.mxu0 0.0
      %1323 = vmatprep.subr.mxu0 0.0
      %1324 = vmatpush1.msra.mxu0 0.0
      %1325 = vmatprep.subr.mxu0 0.0
      %1326 = vmatpush1.msra.mxu0 0.0
      %1327 = vmatprep.subr.mxu0 0.0
      %1328 = vmatpush1.msra.mxu0 0.0
      %1329 = vmatprep.subr.mxu0 0.0
      %1330 = vmatpush1.msra.mxu0 0.0
      %1331 = vmatprep.subr.mxu0 0.0
      %1332 = vmatpush1.msra.mxu0 0.0
      %1333 = vmatprep.subr.mxu0 0.0
      %1334 = vmatpush1.msra.mxu0 0.0
      %1335 = vmatprep.subr.mxu0 0.0
      %1336 = vmatpush1.msra.mxu0 0.0
      %1337 = vmatprep.subr.mxu0 0.0
      %1338 = vmatpush1.msra.mxu0 0.0
      %1339 = vmatprep.subr.mxu0 0.0
      %1340 = vmatpush1.msra.mxu0 0.0
      %1341 = vmatprep.subr.mxu0 0.0
      %1342 = vmatpush1.msra.mxu0 0.0
      %1343 = vmatprep.subr.mxu0 0.0
      %1344 = vmatpush1.msra.mxu0 0.0
      %1345 = vmatprep.subr.mxu0 0.0
      %1346 = vmatpush1.msra.mxu0 0.0
      %1347 = vmatprep.subr.mxu0 0.0
      %1348 = vmatpush1.msra.mxu0 0.0
      %1349 = vmatprep.mubr.f32.mxu0 0.0
      %1350 = vmatmul.mubr.f32.gmra.mrb[0].mxu0 %v1283
      %v1351 = vpop.f32.mrb[0].mxu0
      %v1352 = vadd.f32 0.0, %v1351
      %v1353 = vpop.f32.mrb[0].mxu0
      %v1354 = vadd.f32 0.0, %v1353
      %1355 = vdwg.mxu0
      %v1358 = vcombine.low %v1352, %v1354
      %v1360 = vunpack.c.l.s4 1966171168
      %v1361 = vunpack.c.0.s8 %v1360
      %v1362 = vlaneseq
      %v1363 = vshrl.u32 %v1362, 7
      %v1364 = vsub.s32 %v1361, %v1363
      %v1365 = vrot.slane %v1358, %v1364
      %v1367 = vunpack.c.l.s4 1966171168
      %v1368 = vunpack.c.0.s8 %v1367
      %v1369 = vlaneseq
      %v1370 = vshrl.u32 %v1369, 7
      %v1371 = vsub.s32 %v1368, %v1370
      %v1372 = vrot.slane %v1365, %v1371
      %s1374 = scalar_lea.vmem [#allocation2], 1
      %1375 = vst.msk [vmem:[%s1374] ss:$8 sm:$0x3] %vm1246, %v1372
      %1376 = vst.msk [vmem:[%s1374] ss:$8 sm:$0x0] %vm1246, %v1372
      %s1377 = scalar_lea.vmem %s53, 512
      %v1378 = vld [vmem:[%s1377] sm:$0xff]
      %v1379 = vld [vmem:[%s1377 + $0x8] sm:$0xff]
      %v1380 = vld [vmem:[%s1377 + $0x10] sm:$0xff]
      %v1381 = vld [vmem:[%s1377 + $0x18] sm:$0xff]
      %v1382 = vld [vmem:[%s1377 + $0x20] sm:$0xff]
      %v1383 = vld [vmem:[%s1377 + $0x28] sm:$0xff]
      %v1384 = vld [vmem:[%s1377 + $0x30] sm:$0xff]
      %v1385 = vld [vmem:[%s1377 + $0x38] sm:$0xff]
      %v1386 = vld [vmem:[%s1377 + $0x40] sm:$0xff]
      %v1387 = vld [vmem:[%s1377 + $0x48] sm:$0xff]
      %v1388 = vld [vmem:[%s1377 + $0x50] sm:$0xff]
      %v1389 = vld [vmem:[%s1377 + $0x58] sm:$0xff]
      %v1390 = vld [vmem:[%s1377 + $0x60] sm:$0xff]
      %v1391 = vld [vmem:[%s1377 + $0x68] sm:$0xff]
      %v1392 = vld [vmem:[%s1377 + $0x70] sm:$0xff]
      %v1393 = vld [vmem:[%s1377 + $0x78] sm:$0xff]
      %v1394 = vld [vmem:[%s1377 + $0x80] sm:$0xff]
      %v1395 = vld [vmem:[%s1377 + $0x88] sm:$0xff]
      %v1396 = vld [vmem:[%s1377 + $0x90] sm:$0xff]
      %v1397 = vld [vmem:[%s1377 + $0x98] sm:$0xff]
      %v1398 = vld [vmem:[%s1377 + $0xa0] sm:$0xff]
      %v1399 = vld [vmem:[%s1377 + $0xa8] sm:$0xff]
      %v1400 = vld [vmem:[%s1377 + $0xb0] sm:$0xff]
      %v1401 = vld [vmem:[%s1377 + $0xb8] sm:$0xff]
      %v1402 = vld [vmem:[%s1377 + $0xc0] sm:$0xff]
      %v1403 = vld [vmem:[%s1377 + $0xc8] sm:$0xff]
      %v1404 = vld [vmem:[%s1377 + $0xd0] sm:$0xff]
      %v1405 = vld [vmem:[%s1377 + $0xd8] sm:$0xff]
      %v1406 = vld [vmem:[%s1377 + $0xe0] sm:$0xff]
      %v1407 = vld [vmem:[%s1377 + $0xe8] sm:$0xff]
      %v1408 = vld [vmem:[%s1377 + $0xf0] sm:$0xff]
      %v1409 = vld [vmem:[%s1377 + $0xf8] sm:$0xff]
      %v1410 = vrot.slane %v1117, 2
      %1412 = vmatprep.subr.mxu0 %v1379
      %1413 = vmatpush1.msra.mxu0 %v1378
      %1414 = vmatprep.subr.mxu0 %v1381
      %1415 = vmatpush1.msra.mxu0 %v1380
      %1416 = vmatprep.subr.mxu0 %v1383
      %1417 = vmatpush1.msra.mxu0 %v1382
      %1418 = vmatprep.subr.mxu0 %v1385
      %1419 = vmatpush1.msra.mxu0 %v1384
      %1420 = vmatprep.subr.mxu0 %v1387
      %1421 = vmatpush1.msra.mxu0 %v1386
      %1422 = vmatprep.subr.mxu0 %v1389
      %1423 = vmatpush1.msra.mxu0 %v1388
      %1424 = vmatprep.subr.mxu0 %v1391
      %1425 = vmatpush1.msra.mxu0 %v1390
      %1426 = vmatprep.subr.mxu0 %v1393
      %1427 = vmatpush1.msra.mxu0 %v1392
      %1428 = vmatprep.subr.mxu0 %v1395
      %1429 = vmatpush1.msra.mxu0 %v1394
      %1430 = vmatprep.subr.mxu0 %v1397
      %1431 = vmatpush1.msra.mxu0 %v1396
      %1432 = vmatprep.subr.mxu0 %v1399
      %1433 = vmatpush1.msra.mxu0 %v1398
      %1434 = vmatprep.subr.mxu0 %v1401
      %1435 = vmatpush1.msra.mxu0 %v1400
      %1436 = vmatprep.subr.mxu0 %v1403
      %1437 = vmatpush1.msra.mxu0 %v1402
      %1438 = vmatprep.subr.mxu0 %v1405
      %1439 = vmatpush1.msra.mxu0 %v1404
      %1440 = vmatprep.subr.mxu0 %v1407
      %1441 = vmatpush1.msra.mxu0 %v1406
      %1442 = vmatprep.subr.mxu0 %v1409
      %1443 = vmatpush1.msra.mxu0 %v1408
      %1444 = vmatprep.subr.mxu0 0.0
      %1445 = vmatpush1.msra.mxu0 0.0
      %1446 = vmatprep.subr.mxu0 0.0
      %1447 = vmatpush1.msra.mxu0 0.0
      %1448 = vmatprep.subr.mxu0 0.0
      %1449 = vmatpush1.msra.mxu0 0.0
      %1450 = vmatprep.subr.mxu0 0.0
      %1451 = vmatpush1.msra.mxu0 0.0
      %1452 = vmatprep.subr.mxu0 0.0
      %1453 = vmatpush1.msra.mxu0 0.0
      %1454 = vmatprep.subr.mxu0 0.0
      %1455 = vmatpush1.msra.mxu0 0.0
      %1456 = vmatprep.subr.mxu0 0.0
      %1457 = vmatpush1.msra.mxu0 0.0
      %1458 = vmatprep.subr.mxu0 0.0
      %1459 = vmatpush1.msra.mxu0 0.0
      %1460 = vmatprep.subr.mxu0 0.0
      %1461 = vmatpush1.msra.mxu0 0.0
      %1462 = vmatprep.subr.mxu0 0.0
      %1463 = vmatpush1.msra.mxu0 0.0
      %1464 = vmatprep.subr.mxu0 0.0
      %1465 = vmatpush1.msra.mxu0 0.0
      %1466 = vmatprep.subr.mxu0 0.0
      %1467 = vmatpush1.msra.mxu0 0.0
      %1468 = vmatprep.subr.mxu0 0.0
      %1469 = vmatpush1.msra.mxu0 0.0
      %1470 = vmatprep.subr.mxu0 0.0
      %1471 = vmatpush1.msra.mxu0 0.0
      %1472 = vmatprep.subr.mxu0 0.0
      %1473 = vmatpush1.msra.mxu0 0.0
      %1474 = vmatprep.subr.mxu0 0.0
      %1475 = vmatpush1.msra.mxu0 0.0
      %1476 = vmatprep.mubr.f32.mxu0 0.0
      %1477 = vmatmul.mubr.f32.gmra.mrb[0].mxu0 %v1410
      %v1478 = vpop.f32.mrb[0].mxu0
      %v1479 = vadd.f32 0.0, %v1478
      %v1480 = vpop.f32.mrb[0].mxu0
      %v1481 = vadd.f32 0.0, %v1480
      %1482 = vdwg.mxu0
      %v1485 = vcombine.low %v1479, %v1481
      %v1487 = vunpack.c.l.s4 1966171168
      %v1488 = vunpack.c.0.s8 %v1487
      %v1489 = vlaneseq
      %v1490 = vshrl.u32 %v1489, 7
      %v1491 = vsub.s32 %v1488, %v1490
      %v1492 = vrot.slane %v1485, %v1491
      %v1494 = vunpack.c.l.s4 1966171168
      %v1495 = vunpack.c.0.s8 %v1494
      %v1496 = vlaneseq
      %v1497 = vshrl.u32 %v1496, 7
      %v1498 = vsub.s32 %v1495, %v1497
      %v1499 = vrot.slane %v1492, %v1498
      %s1501 = scalar_lea.vmem [#allocation2], 2
      %1502 = vst.msk [vmem:[%s1501] ss:$8 sm:$0x3] %vm1246, %v1499
      %1503 = vst.msk [vmem:[%s1501] ss:$8 sm:$0x0] %vm1246, %v1499
      %s1504 = scalar_lea.vmem %s53, 768
      %v1505 = vld [vmem:[%s1504] sm:$0xff]
      %v1506 = vld [vmem:[%s1504 + $0x8] sm:$0xff]
      %v1507 = vld [vmem:[%s1504 + $0x10] sm:$0xff]
      %v1508 = vld [vmem:[%s1504 + $0x18] sm:$0xff]
      %v1509 = vld [vmem:[%s1504 + $0x20] sm:$0xff]
      %v1510 = vld [vmem:[%s1504 + $0x28] sm:$0xff]
      %v1511 = vld [vmem:[%s1504 + $0x30] sm:$0xff]
      %v1512 = vld [vmem:[%s1504 + $0x38] sm:$0xff]
      %v1513 = vld [vmem:[%s1504 + $0x40] sm:$0xff]
      %v1514 = vld [vmem:[%s1504 + $0x48] sm:$0xff]
      %v1515 = vld [vmem:[%s1504 + $0x50] sm:$0xff]
      %v1516 = vld [vmem:[%s1504 + $0x58] sm:$0xff]
      %v1517 = vld [vmem:[%s1504 + $0x60] sm:$0xff]
      %v1518 = vld [vmem:[%s1504 + $0x68] sm:$0xff]
      %v1519 = vld [vmem:[%s1504 + $0x70] sm:$0xff]
      %v1520 = vld [vmem:[%s1504 + $0x78] sm:$0xff]
      %v1521 = vld [vmem:[%s1504 + $0x80] sm:$0xff]
      %v1522 = vld [vmem:[%s1504 + $0x88] sm:$0xff]
      %v1523 = vld [vmem:[%s1504 + $0x90] sm:$0xff]
      %v1524 = vld [vmem:[%s1504 + $0x98] sm:$0xff]
      %v1525 = vld [vmem:[%s1504 + $0xa0] sm:$0xff]
      %v1526 = vld [vmem:[%s1504 + $0xa8] sm:$0xff]
      %v1527 = vld [vmem:[%s1504 + $0xb0] sm:$0xff]
      %v1528 = vld [vmem:[%s1504 + $0xb8] sm:$0xff]
      %v1529 = vld [vmem:[%s1504 + $0xc0] sm:$0xff]
      %v1530 = vld [vmem:[%s1504 + $0xc8] sm:$0xff]
      %v1531 = vld [vmem:[%s1504 + $0xd0] sm:$0xff]
      %v1532 = vld [vmem:[%s1504 + $0xd8] sm:$0xff]
      %v1533 = vld [vmem:[%s1504 + $0xe0] sm:$0xff]
      %v1534 = vld [vmem:[%s1504 + $0xe8] sm:$0xff]
      %v1535 = vld [vmem:[%s1504 + $0xf0] sm:$0xff]
      %v1536 = vld [vmem:[%s1504 + $0xf8] sm:$0xff]
      %v1537 = vrot.slane %v1117, 3
      %1539 = vmatprep.subr.mxu0 %v1506
      %1540 = vmatpush1.msra.mxu0 %v1505
      %1541 = vmatprep.subr.mxu0 %v1508
      %1542 = vmatpush1.msra.mxu0 %v1507
      %1543 = vmatprep.subr.mxu0 %v1510
      %1544 = vmatpush1.msra.mxu0 %v1509
      %1545 = vmatprep.subr.mxu0 %v1512
      %1546 = vmatpush1.msra.mxu0 %v1511
      %1547 = vmatprep.subr.mxu0 %v1514
      %1548 = vmatpush1.msra.mxu0 %v1513
      %1549 = vmatprep.subr.mxu0 %v1516
      %1550 = vmatpush1.msra.mxu0 %v1515
      %1551 = vmatprep.subr.mxu0 %v1518
      %1552 = vmatpush1.msra.mxu0 %v1517
      %1553 = vmatprep.subr.mxu0 %v1520
      %1554 = vmatpush1.msra.mxu0 %v1519
      %1555 = vmatprep.subr.mxu0 %v1522
      %1556 = vmatpush1.msra.mxu0 %v1521
      %1557 = vmatprep.subr.mxu0 %v1524
      %1558 = vmatpush1.msra.mxu0 %v1523
      %1559 = vmatprep.subr.mxu0 %v1526
      %1560 = vmatpush1.msra.mxu0 %v1525
      %1561 = vmatprep.subr.mxu0 %v1528
      %1562 = vmatpush1.msra.mxu0 %v1527
      %1563 = vmatprep.subr.mxu0 %v1530
      %1564 = vmatpush1.msra.mxu0 %v1529
      %1565 = vmatprep.subr.mxu0 %v1532
      %1566 = vmatpush1.msra.mxu0 %v1531
      %1567 = vmatprep.subr.mxu0 %v1534
      %1568 = vmatpush1.msra.mxu0 %v1533
      %1569 = vmatprep.subr.mxu0 %v1536
      %1570 = vmatpush1.msra.mxu0 %v1535
      %1571 = vmatprep.subr.mxu0 0.0
      %1572 = vmatpush1.msra.mxu0 0.0
      %1573 = vmatprep.subr.mxu0 0.0
      %1574 = vmatpush1.msra.mxu0 0.0
      %1575 = vmatprep.subr.mxu0 0.0
      %1576 = vmatpush1.msra.mxu0 0.0
      %1577 = vmatprep.subr.mxu0 0.0
      %1578 = vmatpush1.msra.mxu0 0.0
      %1579 = vmatprep.subr.mxu0 0.0
      %1580 = vmatpush1.msra.mxu0 0.0
      %1581 = vmatprep.subr.mxu0 0.0
      %1582 = vmatpush1.msra.mxu0 0.0
      %1583 = vmatprep.subr.mxu0 0.0
      %1584 = vmatpush1.msra.mxu0 0.0
      %1585 = vmatprep.subr.mxu0 0.0
      %1586 = vmatpush1.msra.mxu0 0.0
      %1587 = vmatprep.subr.mxu0 0.0
      %1588 = vmatpush1.msra.mxu0 0.0
      %1589 = vmatprep.subr.mxu0 0.0
      %1590 = vmatpush1.msra.mxu0 0.0
      %1591 = vmatprep.subr.mxu0 0.0
      %1592 = vmatpush1.msra.mxu0 0.0
      %1593 = vmatprep.subr.mxu0 0.0
      %1594 = vmatpush1.msra.mxu0 0.0
      %1595 = vmatprep.subr.mxu0 0.0
      %1596 = vmatpush1.msra.mxu0 0.0
      %1597 = vmatprep.subr.mxu0 0.0
      %1598 = vmatpush1.msra.mxu0 0.0
      %1599 = vmatprep.subr.mxu0 0.0
      %1600 = vmatpush1.msra.mxu0 0.0
      %1601 = vmatprep.subr.mxu0 0.0
      %1602 = vmatpush1.msra.mxu0 0.0
      %1603 = vmatprep.mubr.f32.mxu0 0.0
      %1604 = vmatmul.mubr.f32.gmra.mrb[0].mxu0 %v1537
      %v1605 = vpop.f32.mrb[0].mxu0
      %v1606 = vadd.f32 0.0, %v1605
      %v1607 = vpop.f32.mrb[0].mxu0
      %v1608 = vadd.f32 0.0, %v1607
      %1609 = vdwg.mxu0
      %v1612 = vcombine.low %v1606, %v1608
      %v1614 = vunpack.c.l.s4 1966171168
      %v1615 = vunpack.c.0.s8 %v1614
      %v1616 = vlaneseq
      %v1617 = vshrl.u32 %v1616, 7
      %v1618 = vsub.s32 %v1615, %v1617
      %v1619 = vrot.slane %v1612, %v1618
      %v1621 = vunpack.c.l.s4 1966171168
      %v1622 = vunpack.c.0.s8 %v1621
      %v1623 = vlaneseq
      %v1624 = vshrl.u32 %v1623, 7
      %v1625 = vsub.s32 %v1622, %v1624
      %v1626 = vrot.slane %v1619, %v1625
      %s1628 = scalar_lea.vmem [#allocation2], 3
      %1629 = vst.msk [vmem:[%s1628] ss:$8 sm:$0x3] %vm1246, %v1626
      %1630 = vst.msk [vmem:[%s1628] ss:$8 sm:$0x0] %vm1246, %v1626
      %s1631 = scalar_lea.vmem %s53, 1024
      %v1632 = vld [vmem:[%s1631] sm:$0xff]
      %v1633 = vld [vmem:[%s1631 + $0x8] sm:$0xff]
      %v1634 = vld [vmem:[%s1631 + $0x10] sm:$0xff]
      %v1635 = vld [vmem:[%s1631 + $0x18] sm:$0xff]
      %v1636 = vld [vmem:[%s1631 + $0x20] sm:$0xff]
      %v1637 = vld [vmem:[%s1631 + $0x28] sm:$0xff]
      %v1638 = vld [vmem:[%s1631 + $0x30] sm:$0xff]
      %v1639 = vld [vmem:[%s1631 + $0x38] sm:$0xff]
      %v1640 = vld [vmem:[%s1631 + $0x40] sm:$0xff]
      %v1641 = vld [vmem:[%s1631 + $0x48] sm:$0xff]
      %v1642 = vld [vmem:[%s1631 + $0x50] sm:$0xff]
      %v1643 = vld [vmem:[%s1631 + $0x58] sm:$0xff]
      %v1644 = vld [vmem:[%s1631 + $0x60] sm:$0xff]
      %v1645 = vld [vmem:[%s1631 + $0x68] sm:$0xff]
      %v1646 = vld [vmem:[%s1631 + $0x70] sm:$0xff]
      %v1647 = vld [vmem:[%s1631 + $0x78] sm:$0xff]
      %v1648 = vld [vmem:[%s1631 + $0x80] sm:$0xff]
      %v1649 = vld [vmem:[%s1631 + $0x88] sm:$0xff]
      %v1650 = vld [vmem:[%s1631 + $0x90] sm:$0xff]
      %v1651 = vld [vmem:[%s1631 + $0x98] sm:$0xff]
      %v1652 = vld [vmem:[%s1631 + $0xa0] sm:$0xff]
      %v1653 = vld [vmem:[%s1631 + $0xa8] sm:$0xff]
      %v1654 = vld [vmem:[%s1631 + $0xb0] sm:$0xff]
      %v1655 = vld [vmem:[%s1631 + $0xb8] sm:$0xff]
      %v1656 = vld [vmem:[%s1631 + $0xc0] sm:$0xff]
      %v1657 = vld [vmem:[%s1631 + $0xc8] sm:$0xff]
      %v1658 = vld [vmem:[%s1631 + $0xd0] sm:$0xff]
      %v1659 = vld [vmem:[%s1631 + $0xd8] sm:$0xff]
      %v1660 = vld [vmem:[%s1631 + $0xe0] sm:$0xff]
      %v1661 = vld [vmem:[%s1631 + $0xe8] sm:$0xff]
      %v1662 = vld [vmem:[%s1631 + $0xf0] sm:$0xff]
      %v1663 = vld [vmem:[%s1631 + $0xf8] sm:$0xff]
      %v1664 = vrot.slane %v1117, 4
      %1666 = vmatprep.subr.mxu0 %v1633
      %1667 = vmatpush1.msra.mxu0 %v1632
      %1668 = vmatprep.subr.mxu0 %v1635
      %1669 = vmatpush1.msra.mxu0 %v1634
      %1670 = vmatprep.subr.mxu0 %v1637
      %1671 = vmatpush1.msra.mxu0 %v1636
      %1672 = vmatprep.subr.mxu0 %v1639
      %1673 = vmatpush1.msra.mxu0 %v1638
      %1674 = vmatprep.subr.mxu0 %v1641
      %1675 = vmatpush1.msra.mxu0 %v1640
      %1676 = vmatprep.subr.mxu0 %v1643
      %1677 = vmatpush1.msra.mxu0 %v1642
      %1678 = vmatprep.subr.mxu0 %v1645
      %1679 = vmatpush1.msra.mxu0 %v1644
      %1680 = vmatprep.subr.mxu0 %v1647
      %1681 = vmatpush1.msra.mxu0 %v1646
      %1682 = vmatprep.subr.mxu0 %v1649
      %1683 = vmatpush1.msra.mxu0 %v1648
      %1684 = vmatprep.subr.mxu0 %v1651
      %1685 = vmatpush1.msra.mxu0 %v1650
      %1686 = vmatprep.subr.mxu0 %v1653
      %1687 = vmatpush1.msra.mxu0 %v1652
      %1688 = vmatprep.subr.mxu0 %v1655
      %1689 = vmatpush1.msra.mxu0 %v1654
      %1690 = vmatprep.subr.mxu0 %v1657
      %1691 = vmatpush1.msra.mxu0 %v1656
      %1692 = vmatprep.subr.mxu0 %v1659
      %1693 = vmatpush1.msra.mxu0 %v1658
      %1694 = vmatprep.subr.mxu0 %v1661
      %1695 = vmatpush1.msra.mxu0 %v1660
      %1696 = vmatprep.subr.mxu0 %v1663
      %1697 = vmatpush1.msra.mxu0 %v1662
      %1698 = vmatprep.subr.mxu0 0.0
      %1699 = vmatpush1.msra.mxu0 0.0
      %1700 = vmatprep.subr.mxu0 0.0
      %1701 = vmatpush1.msra.mxu0 0.0
      %1702 = vmatprep.subr.mxu0 0.0
      %1703 = vmatpush1.msra.mxu0 0.0
      %1704 = vmatprep.subr.mxu0 0.0
      %1705 = vmatpush1.msra.mxu0 0.0
      %1706 = vmatprep.subr.mxu0 0.0
      %1707 = vmatpush1.msra.mxu0 0.0
      %1708 = vmatprep.subr.mxu0 0.0
      %1709 = vmatpush1.msra.mxu0 0.0
      %1710 = vmatprep.subr.mxu0 0.0
      %1711 = vmatpush1.msra.mxu0 0.0
      %1712 = vmatprep.subr.mxu0 0.0
      %1713 = vmatpush1.msra.mxu0 0.0
      %1714 = vmatprep.subr.mxu0 0.0
      %1715 = vmatpush1.msra.mxu0 0.0
      %1716 = vmatprep.subr.mxu0 0.0
      %1717 = vmatpush1.msra.mxu0 0.0
      %1718 = vmatprep.subr.mxu0 0.0
      %1719 = vmatpush1.msra.mxu0 0.0
      %1720 = vmatprep.subr.mxu0 0.0
      %1721 = vmatpush1.msra.mxu0 0.0
      %1722 = vmatprep.subr.mxu0 0.0
      %1723 = vmatpush1.msra.mxu0 0.0
      %1724 = vmatprep.subr.mxu0 0.0
      %1725 = vmatpush1.msra.mxu0 0.0
      %1726 = vmatprep.subr.mxu0 0.0
      %1727 = vmatpush1.msra.mxu0 0.0
      %1728 = vmatprep.subr.mxu0 0.0
      %1729 = vmatpush1.msra.mxu0 0.0
      %1730 = vmatprep.mubr.f32.mxu0 0.0
      %1731 = vmatmul.mubr.f32.gmra.mrb[0].mxu0 %v1664
      %v1732 = vpop.f32.mrb[0].mxu0
      %v1733 = vadd.f32 0.0, %v1732
      %v1734 = vpop.f32.mrb[0].mxu0
      %v1735 = vadd.f32 0.0, %v1734
      %1736 = vdwg.mxu0
      %v1739 = vcombine.low %v1733, %v1735
      %v1741 = vunpack.c.l.s4 1966171168
      %v1742 = vunpack.c.0.s8 %v1741
      %v1743 = vlaneseq
      %v1744 = vshrl.u32 %v1743, 7
      %v1745 = vsub.s32 %v1742, %v1744
      %v1746 = vrot.slane %v1739, %v1745
      %v1748 = vunpack.c.l.s4 1966171168
      %v1749 = vunpack.c.0.s8 %v1748
      %v1750 = vlaneseq
      %v1751 = vshrl.u32 %v1750, 7
      %v1752 = vsub.s32 %v1749, %v1751
      %v1753 = vrot.slane %v1746, %v1752
      %s1755 = scalar_lea.vmem [#allocation2], 4
      %1756 = vst.msk [vmem:[%s1755] ss:$8 sm:$0x3] %vm1246, %v1753
      %1757 = vst.msk [vmem:[%s1755] ss:$8 sm:$0x0] %vm1246, %v1753
      %s1758 = scalar_lea.vmem %s53, 1280
      %v1759 = vld [vmem:[%s1758] sm:$0xff]
      %v1760 = vld [vmem:[%s1758 + $0x8] sm:$0xff]
      %v1761 = vld [vmem:[%s1758 + $0x10] sm:$0xff]
      %v1762 = vld [vmem:[%s1758 + $0x18] sm:$0xff]
      %v1763 = vld [vmem:[%s1758 + $0x20] sm:$0xff]
      %v1764 = vld [vmem:[%s1758 + $0x28] sm:$0xff]
      %v1765 = vld [vmem:[%s1758 + $0x30] sm:$0xff]
      %v1766 = vld [vmem:[%s1758 + $0x38] sm:$0xff]
      %v1767 = vld [vmem:[%s1758 + $0x40] sm:$0xff]
      %v1768 = vld [vmem:[%s1758 + $0x48] sm:$0xff]
      %v1769 = vld [vmem:[%s1758 + $0x50] sm:$0xff]
      %v1770 = vld [vmem:[%s1758 + $0x58] sm:$0xff]
      %v1771 = vld [vmem:[%s1758 + $0x60] sm:$0xff]
      %v1772 = vld [vmem:[%s1758 + $0x68] sm:$0xff]
      %v1773 = vld [vmem:[%s1758 + $0x70] sm:$0xff]
      %v1774 = vld [vmem:[%s1758 + $0x78] sm:$0xff]
      %v1775 = vld [vmem:[%s1758 + $0x80] sm:$0xff]
      %v1776 = vld [vmem:[%s1758 + $0x88] sm:$0xff]
      %v1777 = vld [vmem:[%s1758 + $0x90] sm:$0xff]
      %v1778 = vld [vmem:[%s1758 + $0x98] sm:$0xff]
      %v1779 = vld [vmem:[%s1758 + $0xa0] sm:$0xff]
      %v1780 = vld [vmem:[%s1758 + $0xa8] sm:$0xff]
      %v1781 = vld [vmem:[%s1758 + $0xb0] sm:$0xff]
      %v1782 = vld [vmem:[%s1758 + $0xb8] sm:$0xff]
      %v1783 = vld [vmem:[%s1758 + $0xc0] sm:$0xff]
      %v1784 = vld [vmem:[%s1758 + $0xc8] sm:$0xff]
      %v1785 = vld [vmem:[%s1758 + $0xd0] sm:$0xff]
      %v1786 = vld [vmem:[%s1758 + $0xd8] sm:$0xff]
      %v1787 = vld [vmem:[%s1758 + $0xe0] sm:$0xff]
      %v1788 = vld [vmem:[%s1758 + $0xe8] sm:$0xff]
      %v1789 = vld [vmem:[%s1758 + $0xf0] sm:$0xff]
      %v1790 = vld [vmem:[%s1758 + $0xf8] sm:$0xff]
      %v1791 = vrot.slane %v1117, 5
      %1793 = vmatprep.subr.mxu0 %v1760
      %1794 = vmatpush1.msra.mxu0 %v1759
      %1795 = vmatprep.subr.mxu0 %v1762
      %1796 = vmatpush1.msra.mxu0 %v1761
      %1797 = vmatprep.subr.mxu0 %v1764
      %1798 = vmatpush1.msra.mxu0 %v1763
      %1799 = vmatprep.subr.mxu0 %v1766
      %1800 = vmatpush1.msra.mxu0 %v1765
      %1801 = vmatprep.subr.mxu0 %v1768
      %1802 = vmatpush1.msra.mxu0 %v1767
      %1803 = vmatprep.subr.mxu0 %v1770
      %1804 = vmatpush1.msra.mxu0 %v1769
      %1805 = vmatprep.subr.mxu0 %v1772
      %1806 = vmatpush1.msra.mxu0 %v1771
      %1807 = vmatprep.subr.mxu0 %v1774
      %1808 = vmatpush1.msra.mxu0 %v1773
      %1809 = vmatprep.subr.mxu0 %v1776
      %1810 = vmatpush1.msra.mxu0 %v1775
      %1811 = vmatprep.subr.mxu0 %v1778
      %1812 = vmatpush1.msra.mxu0 %v1777
      %1813 = vmatprep.subr.mxu0 %v1780
      %1814 = vmatpush1.msra.mxu0 %v1779
      %1815 = vmatprep.subr.mxu0 %v1782
      %1816 = vmatpush1.msra.mxu0 %v1781
      %1817 = vmatprep.subr.mxu0 %v1784
      %1818 = vmatpush1.msra.mxu0 %v1783
      %1819 = vmatprep.subr.mxu0 %v1786
      %1820 = vmatpush1.msra.mxu0 %v1785
      %1821 = vmatprep.subr.mxu0 %v1788
      %1822 = vmatpush1.msra.mxu0 %v1787
      %1823 = vmatprep.subr.mxu0 %v1790
      %1824 = vmatpush1.msra.mxu0 %v1789
      %1825 = vmatprep.subr.mxu0 0.0
      %1826 = vmatpush1.msra.mxu0 0.0
      %1827 = vmatprep.subr.mxu0 0.0
      %1828 = vmatpush1.msra.mxu0 0.0
      %1829 = vmatprep.subr.mxu0 0.0
      %1830 = vmatpush1.msra.mxu0 0.0
      %1831 = vmatprep.subr.mxu0 0.0
      %1832 = vmatpush1.msra.mxu0 0.0
      %1833 = vmatprep.subr.mxu0 0.0
      %1834 = vmatpush1.msra.mxu0 0.0
      %1835 = vmatprep.subr.mxu0 0.0
      %1836 = vmatpush1.msra.mxu0 0.0
      %1837 = vmatprep.subr.mxu0 0.0
      %1838 = vmatpush1.msra.mxu0 0.0
      %1839 = vmatprep.subr.mxu0 0.0
      %1840 = vmatpush1.msra.mxu0 0.0
      %1841 = vmatprep.subr.mxu0 0.0
      %1842 = vmatpush1.msra.mxu0 0.0
      %1843 = vmatprep.subr.mxu0 0.0
      %1844 = vmatpush1.msra.mxu0 0.0
      %1845 = vmatprep.subr.mxu0 0.0
      %1846 = vmatpush1.msra.mxu0 0.0
      %1847 = vmatprep.subr.mxu0 0.0
      %1848 = vmatpush1.msra.mxu0 0.0
      %1849 = vmatprep.subr.mxu0 0.0
      %1850 = vmatpush1.msra.mxu0 0.0
      %1851 = vmatprep.subr.mxu0 0.0
      %1852 = vmatpush1.msra.mxu0 0.0
      %1853 = vmatprep.subr.mxu0 0.0
      %1854 = vmatpush1.msra.mxu0 0.0
      %1855 = vmatprep.subr.mxu0 0.0
      %1856 = vmatpush1.msra.mxu0 0.0
      %1857 = vmatprep.mubr.f32.mxu0 0.0
      %1858 = vmatmul.mubr.f32.gmra.mrb[0].mxu0 %v1791
      %v1859 = vpop.f32.mrb[0].mxu0
      %v1860 = vadd.f32 0.0, %v1859
      %v1861 = vpop.f32.mrb[0].mxu0
      %v1862 = vadd.f32 0.0, %v1861
      %1863 = vdwg.mxu0
      %v1866 = vcombine.low %v1860, %v1862
      %v1868 = vunpack.c.l.s4 1966171168
      %v1869 = vunpack.c.0.s8 %v1868
      %v1870 = vlaneseq
      %v1871 = vshrl.u32 %v1870, 7
      %v1872 = vsub.s32 %v1869, %v1871
      %v1873 = vrot.slane %v1866, %v1872
      %v1875 = vunpack.c.l.s4 1966171168
      %v1876 = vunpack.c.0.s8 %v1875
      %v1877 = vlaneseq
      %v1878 = vshrl.u32 %v1877, 7
      %v1879 = vsub.s32 %v1876, %v1878
      %v1880 = vrot.slane %v1873, %v1879
      %s1882 = scalar_lea.vmem [#allocation2], 5
      %1883 = vst.msk [vmem:[%s1882] ss:$8 sm:$0x3] %vm1246, %v1880
      %1884 = vst.msk [vmem:[%s1882] ss:$8 sm:$0x0] %vm1246, %v1880
      %s1885 = scalar_lea.vmem %s53, 1536
      %v1886 = vld [vmem:[%s1885] sm:$0xff]
      %v1887 = vld [vmem:[%s1885 + $0x8] sm:$0xff]
      %v1888 = vld [vmem:[%s1885 + $0x10] sm:$0xff]
      %v1889 = vld [vmem:[%s1885 + $0x18] sm:$0xff]
      %v1890 = vld [vmem:[%s1885 + $0x20] sm:$0xff]
      %v1891 = vld [vmem:[%s1885 + $0x28] sm:$0xff]
      %v1892 = vld [vmem:[%s1885 + $0x30] sm:$0xff]
      %v1893 = vld [vmem:[%s1885 + $0x38] sm:$0xff]
      %v1894 = vld [vmem:[%s1885 + $0x40] sm:$0xff]
      %v1895 = vld [vmem:[%s1885 + $0x48] sm:$0xff]
      %v1896 = vld [vmem:[%s1885 + $0x50] sm:$0xff]
      %v1897 = vld [vmem:[%s1885 + $0x58] sm:$0xff]
      %v1898 = vld [vmem:[%s1885 + $0x60] sm:$0xff]
      %v1899 = vld [vmem:[%s1885 + $0x68] sm:$0xff]
      %v1900 = vld [vmem:[%s1885 + $0x70] sm:$0xff]
      %v1901 = vld [vmem:[%s1885 + $0x78] sm:$0xff]
      %v1902 = vld [vmem:[%s1885 + $0x80] sm:$0xff]
      %v1903 = vld [vmem:[%s1885 + $0x88] sm:$0xff]
      %v1904 = vld [vmem:[%s1885 + $0x90] sm:$0xff]
      %v1905 = vld [vmem:[%s1885 + $0x98] sm:$0xff]
      %v1906 = vld [vmem:[%s1885 + $0xa0] sm:$0xff]
      %v1907 = vld [vmem:[%s1885 + $0xa8] sm:$0xff]
      %v1908 = vld [vmem:[%s1885 + $0xb0] sm:$0xff]
      %v1909 = vld [vmem:[%s1885 + $0xb8] sm:$0xff]
      %v1910 = vld [vmem:[%s1885 + $0xc0] sm:$0xff]
      %v1911 = vld [vmem:[%s1885 + $0xc8] sm:$0xff]
      %v1912 = vld [vmem:[%s1885 + $0xd0] sm:$0xff]
      %v1913 = vld [vmem:[%s1885 + $0xd8] sm:$0xff]
      %v1914 = vld [vmem:[%s1885 + $0xe0] sm:$0xff]
      %v1915 = vld [vmem:[%s1885 + $0xe8] sm:$0xff]
      %v1916 = vld [vmem:[%s1885 + $0xf0] sm:$0xff]
      %v1917 = vld [vmem:[%s1885 + $0xf8] sm:$0xff]
      %v1918 = vrot.slane %v1117, 6
      %1920 = vmatprep.subr.mxu0 %v1887
      %1921 = vmatpush1.msra.mxu0 %v1886
      %1922 = vmatprep.subr.mxu0 %v1889
      %1923 = vmatpush1.msra.mxu0 %v1888
      %1924 = vmatprep.subr.mxu0 %v1891
      %1925 = vmatpush1.msra.mxu0 %v1890
      %1926 = vmatprep.subr.mxu0 %v1893
      %1927 = vmatpush1.msra.mxu0 %v1892
      %1928 = vmatprep.subr.mxu0 %v1895
      %1929 = vmatpush1.msra.mxu0 %v1894
      %1930 = vmatprep.subr.mxu0 %v1897
      %1931 = vmatpush1.msra.mxu0 %v1896
      %1932 = vmatprep.subr.mxu0 %v1899
      %1933 = vmatpush1.msra.mxu0 %v1898
      %1934 = vmatprep.subr.mxu0 %v1901
      %1935 = vmatpush1.msra.mxu0 %v1900
      %1936 = vmatprep.subr.mxu0 %v1903
      %1937 = vmatpush1.msra.mxu0 %v1902
      %1938 = vmatprep.subr.mxu0 %v1905
      %1939 = vmatpush1.msra.mxu0 %v1904
      %1940 = vmatprep.subr.mxu0 %v1907
      %1941 = vmatpush1.msra.mxu0 %v1906
      %1942 = vmatprep.subr.mxu0 %v1909
      %1943 = vmatpush1.msra.mxu0 %v1908
      %1944 = vmatprep.subr.mxu0 %v1911
      %1945 = vmatpush1.msra.mxu0 %v1910
      %1946 = vmatprep.subr.mxu0 %v1913
      %1947 = vmatpush1.msra.mxu0 %v1912
      %1948 = vmatprep.subr.mxu0 %v1915
      %1949 = vmatpush1.msra.mxu0 %v1914
      %1950 = vmatprep.subr.mxu0 %v1917
      %1951 = vmatpush1.msra.mxu0 %v1916
      %1952 = vmatprep.subr.mxu0 0.0
      %1953 = vmatpush1.msra.mxu0 0.0
      %1954 = vmatprep.subr.mxu0 0.0
      %1955 = vmatpush1.msra.mxu0 0.0
      %1956 = vmatprep.subr.mxu0 0.0
      %1957 = vmatpush1.msra.mxu0 0.0
      %1958 = vmatprep.subr.mxu0 0.0
      %1959 = vmatpush1.msra.mxu0 0.0
      %1960 = vmatprep.subr.mxu0 0.0
      %1961 = vmatpush1.msra.mxu0 0.0
      %1962 = vmatprep.subr.mxu0 0.0
      %1963 = vmatpush1.msra.mxu0 0.0
      %1964 = vmatprep.subr.mxu0 0.0
      %1965 = vmatpush1.msra.mxu0 0.0
      %1966 = vmatprep.subr.mxu0 0.0
      %1967 = vmatpush1.msra.mxu0 0.0
      %1968 = vmatprep.subr.mxu0 0.0
      %1969 = vmatpush1.msra.mxu0 0.0
      %1970 = vmatprep.subr.mxu0 0.0
      %1971 = vmatpush1.msra.mxu0 0.0
      %1972 = vmatprep.subr.mxu0 0.0
      %1973 = vmatpush1.msra.mxu0 0.0
      %1974 = vmatprep.subr.mxu0 0.0
      %1975 = vmatpush1.msra.mxu0 0.0
      %1976 = vmatprep.subr.mxu0 0.0
      %1977 = vmatpush1.msra.mxu0 0.0
      %1978 = vmatprep.subr.mxu0 0.0
      %1979 = vmatpush1.msra.mxu0 0.0
      %1980 = vmatprep.subr.mxu0 0.0
      %1981 = vmatpush1.msra.mxu0 0.0
      %1982 = vmatprep.subr.mxu0 0.0
      %1983 = vmatpush1.msra.mxu0 0.0
      %1984 = vmatprep.mubr.f32.mxu0 0.0
      %1985 = vmatmul.mubr.f32.gmra.mrb[0].mxu0 %v1918
      %v1986 = vpop.f32.mrb[0].mxu0
      %v1987 = vadd.f32 0.0, %v1986
      %v1988 = vpop.f32.mrb[0].mxu0
      %v1989 = vadd.f32 0.0, %v1988
      %1990 = vdwg.mxu0
      %v1993 = vcombine.low %v1987, %v1989
      %v1995 = vunpack.c.l.s4 1966171168
      %v1996 = vunpack.c.0.s8 %v1995
      %v1997 = vlaneseq
      %v1998 = vshrl.u32 %v1997, 7
      %v1999 = vsub.s32 %v1996, %v1998
      %v2000 = vrot.slane %v1993, %v1999
      %v2002 = vunpack.c.l.s4 1966171168
      %v2003 = vunpack.c.0.s8 %v2002
      %v2004 = vlaneseq
      %v2005 = vshrl.u32 %v2004, 7
      %v2006 = vsub.s32 %v2003, %v2005
      %v2007 = vrot.slane %v2000, %v2006
      %s2009 = scalar_lea.vmem [#allocation2], 6
      %2010 = vst.msk [vmem:[%s2009] ss:$8 sm:$0x3] %vm1246, %v2007
      %2011 = vst.msk [vmem:[%s2009] ss:$8 sm:$0x0] %vm1246, %v2007
      %s2012 = scalar_lea.vmem %s53, 1792
      %v2013 = vld [vmem:[%s2012] sm:$0xff]
      %v2014 = vld [vmem:[%s2012 + $0x8] sm:$0xff]
      %v2015 = vld [vmem:[%s2012 + $0x10] sm:$0xff]
      %v2016 = vld [vmem:[%s2012 + $0x18] sm:$0xff]
      %v2017 = vld [vmem:[%s2012 + $0x20] sm:$0xff]
      %v2018 = vld [vmem:[%s2012 + $0x28] sm:$0xff]
      %v2019 = vld [vmem:[%s2012 + $0x30] sm:$0xff]
      %v2020 = vld [vmem:[%s2012 + $0x38] sm:$0xff]
      %v2021 = vld [vmem:[%s2012 + $0x40] sm:$0xff]
      %v2022 = vld [vmem:[%s2012 + $0x48] sm:$0xff]
      %v2023 = vld [vmem:[%s2012 + $0x50] sm:$0xff]
      %v2024 = vld [vmem:[%s2012 + $0x58] sm:$0xff]
      %v2025 = vld [vmem:[%s2012 + $0x60] sm:$0xff]
      %v2026 = vld [vmem:[%s2012 + $0x68] sm:$0xff]
      %v2027 = vld [vmem:[%s2012 + $0x70] sm:$0xff]
      %v2028 = vld [vmem:[%s2012 + $0x78] sm:$0xff]
      %v2029 = vld [vmem:[%s2012 + $0x80] sm:$0xff]
      %v2030 = vld [vmem:[%s2012 + $0x88] sm:$0xff]
      %v2031 = vld [vmem:[%s2012 + $0x90] sm:$0xff]
      %v2032 = vld [vmem:[%s2012 + $0x98] sm:$0xff]
      %v2033 = vld [vmem:[%s2012 + $0xa0] sm:$0xff]
      %v2034 = vld [vmem:[%s2012 + $0xa8] sm:$0xff]
      %v2035 = vld [vmem:[%s2012 + $0xb0] sm:$0xff]
      %v2036 = vld [vmem:[%s2012 + $0xb8] sm:$0xff]
      %v2037 = vld [vmem:[%s2012 + $0xc0] sm:$0xff]
      %v2038 = vld [vmem:[%s2012 + $0xc8] sm:$0xff]
      %v2039 = vld [vmem:[%s2012 + $0xd0] sm:$0xff]
      %v2040 = vld [vmem:[%s2012 + $0xd8] sm:$0xff]
      %v2041 = vld [vmem:[%s2012 + $0xe0] sm:$0xff]
      %v2042 = vld [vmem:[%s2012 + $0xe8] sm:$0xff]
      %v2043 = vld [vmem:[%s2012 + $0xf0] sm:$0xff]
      %v2044 = vld [vmem:[%s2012 + $0xf8] sm:$0xff]
      %v2045 = vrot.slane %v1117, 7
      %2047 = vmatprep.subr.mxu0 %v2014
      %2048 = vmatpush1.msra.mxu0 %v2013
      %2049 = vmatprep.subr.mxu0 %v2016
      %2050 = vmatpush1.msra.mxu0 %v2015
      %2051 = vmatprep.subr.mxu0 %v2018
      %2052 = vmatpush1.msra.mxu0 %v2017
      %2053 = vmatprep.subr.mxu0 %v2020
      %2054 = vmatpush1.msra.mxu0 %v2019
      %2055 = vmatprep.subr.mxu0 %v2022
      %2056 = vmatpush1.msra.mxu0 %v2021
      %2057 = vmatprep.subr.mxu0 %v2024
      %2058 = vmatpush1.msra.mxu0 %v2023
      %2059 = vmatprep.subr.mxu0 %v2026
      %2060 = vmatpush1.msra.mxu0 %v2025
      %2061 = vmatprep.subr.mxu0 %v2028
      %2062 = vmatpush1.msra.mxu0 %v2027
      %2063 = vmatprep.subr.mxu0 %v2030
      %2064 = vmatpush1.msra.mxu0 %v2029
      %2065 = vmatprep.subr.mxu0 %v2032
      %2066 = vmatpush1.msra.mxu0 %v2031
      %2067 = vmatprep.subr.mxu0 %v2034
      %2068 = vmatpush1.msra.mxu0 %v2033
      %2069 = vmatprep.subr.mxu0 %v2036
      %2070 = vmatpush1.msra.mxu0 %v2035
      %2071 = vmatprep.subr.mxu0 %v2038
      %2072 = vmatpush1.msra.mxu0 %v2037
      %2073 = vmatprep.subr.mxu0 %v2040
      %2074 = vmatpush1.msra.mxu0 %v2039
      %2075 = vmatprep.subr.mxu0 %v2042
      %2076 = vmatpush1.msra.mxu0 %v2041
      %2077 = vmatprep.subr.mxu0 %v2044
      %2078 = vmatpush1.msra.mxu0 %v2043
      %2079 = vmatprep.subr.mxu0 0.0
      %2080 = vmatpush1.msra.mxu0 0.0
      %2081 = vmatprep.subr.mxu0 0.0
      %2082 = vmatpush1.msra.mxu0 0.0
      %2083 = vmatprep.subr.mxu0 0.0
      %2084 = vmatpush1.msra.mxu0 0.0
      %2085 = vmatprep.subr.mxu0 0.0
      %2086 = vmatpush1.msra.mxu0 0.0
      %2087 = vmatprep.subr.mxu0 0.0
      %2088 = vmatpush1.msra.mxu0 0.0
      %2089 = vmatprep.subr.mxu0 0.0
      %2090 = vmatpush1.msra.mxu0 0.0
      %2091 = vmatprep.subr.mxu0 0.0
      %2092 = vmatpush1.msra.mxu0 0.0
      %2093 = vmatprep.subr.mxu0 0.0
      %2094 = vmatpush1.msra.mxu0 0.0
      %2095 = vmatprep.subr.mxu0 0.0
      %2096 = vmatpush1.msra.mxu0 0.0
      %2097 = vmatprep.subr.mxu0 0.0
      %2098 = vmatpush1.msra.mxu0 0.0
      %2099 = vmatprep.subr.mxu0 0.0
      %2100 = vmatpush1.msra.mxu0 0.0
      %2101 = vmatprep.subr.mxu0 0.0
      %2102 = vmatpush1.msra.mxu0 0.0
      %2103 = vmatprep.subr.mxu0 0.0
      %2104 = vmatpush1.msra.mxu0 0.0
      %2105 = vmatprep.subr.mxu0 0.0
      %2106 = vmatpush1.msra.mxu0 0.0
      %2107 = vmatprep.subr.mxu0 0.0
      %2108 = vmatpush1.msra.mxu0 0.0
      %2109 = vmatprep.subr.mxu0 0.0
      %2110 = vmatpush1.msra.mxu0 0.0
      %2111 = vmatprep.mubr.f32.mxu0 0.0
      %2112 = vmatmul.mubr.f32.gmra.mrb[0].mxu0 %v2045
      %v2113 = vpop.f32.mrb[0].mxu0
      %v2114 = vadd.f32 0.0, %v2113
      %v2115 = vpop.f32.mrb[0].mxu0
      %v2116 = vadd.f32 0.0, %v2115
      %2117 = vdwg.mxu0
      %v2120 = vcombine.low %v2114, %v2116
      %v2122 = vunpack.c.l.s4 1966171168
      %v2123 = vunpack.c.0.s8 %v2122
      %v2124 = vlaneseq
      %v2125 = vshrl.u32 %v2124, 7
      %v2126 = vsub.s32 %v2123, %v2125
      %v2127 = vrot.slane %v2120, %v2126
      %v2129 = vunpack.c.l.s4 1966171168
      %v2130 = vunpack.c.0.s8 %v2129
      %v2131 = vlaneseq
      %v2132 = vshrl.u32 %v2131, 7
      %v2133 = vsub.s32 %v2130, %v2132
      %v2134 = vrot.slane %v2127, %v2133
      %s2136 = scalar_lea.vmem [#allocation2], 7
      %2137 = vst.msk [vmem:[%s2136] ss:$8 sm:$0x3] %vm1246, %v2134
      %2138 = vst.msk [vmem:[%s2136] ss:$8 sm:$0x0] %vm1246, %v2134
      %s2139 = scalar_lea.vmem %s53, 2048
      %v2140 = vld [vmem:[%s2139] sm:$0xff]
      %v2141 = vld [vmem:[%s2139 + $0x8] sm:$0xff]
      %v2142 = vld [vmem:[%s2139 + $0x10] sm:$0xff]
      %v2143 = vld [vmem:[%s2139 + $0x18] sm:$0xff]
      %v2144 = vld [vmem:[%s2139 + $0x20] sm:$0xff]
      %v2145 = vld [vmem:[%s2139 + $0x28] sm:$0xff]
      %v2146 = vld [vmem:[%s2139 + $0x30] sm:$0xff]
      %v2147 = vld [vmem:[%s2139 + $0x38] sm:$0xff]
      %v2148 = vld [vmem:[%s2139 + $0x40] sm:$0xff]
      %v2149 = vld [vmem:[%s2139 + $0x48] sm:$0xff]
      %v2150 = vld [vmem:[%s2139 + $0x50] sm:$0xff]
      %v2151 = vld [vmem:[%s2139 + $0x58] sm:$0xff]
      %v2152 = vld [vmem:[%s2139 + $0x60] sm:$0xff]
      %v2153 = vld [vmem:[%s2139 + $0x68] sm:$0xff]
      %v2154 = vld [vmem:[%s2139 + $0x70] sm:$0xff]
      %v2155 = vld [vmem:[%s2139 + $0x78] sm:$0xff]
      %v2156 = vld [vmem:[%s2139 + $0x80] sm:$0xff]
      %v2157 = vld [vmem:[%s2139 + $0x88] sm:$0xff]
      %v2158 = vld [vmem:[%s2139 + $0x90] sm:$0xff]
      %v2159 = vld [vmem:[%s2139 + $0x98] sm:$0xff]
      %v2160 = vld [vmem:[%s2139 + $0xa0] sm:$0xff]
      %v2161 = vld [vmem:[%s2139 + $0xa8] sm:$0xff]
      %v2162 = vld [vmem:[%s2139 + $0xb0] sm:$0xff]
      %v2163 = vld [vmem:[%s2139 + $0xb8] sm:$0xff]
      %v2164 = vld [vmem:[%s2139 + $0xc0] sm:$0xff]
      %v2165 = vld [vmem:[%s2139 + $0xc8] sm:$0xff]
      %v2166 = vld [vmem:[%s2139 + $0xd0] sm:$0xff]
      %v2167 = vld [vmem:[%s2139 + $0xd8] sm:$0xff]
      %v2168 = vld [vmem:[%s2139 + $0xe0] sm:$0xff]
      %v2169 = vld [vmem:[%s2139 + $0xe8] sm:$0xff]
      %v2170 = vld [vmem:[%s2139 + $0xf0] sm:$0xff]
      %v2171 = vld [vmem:[%s2139 + $0xf8] sm:$0xff]
      %2172 = vmatprep.subr.mxu0 %v2141
      %2173 = vmatpush1.msra.mxu0 %v2140
      %2174 = vmatprep.subr.mxu0 %v2143
      %2175 = vmatpush1.msra.mxu0 %v2142
      %2176 = vmatprep.subr.mxu0 %v2145
      %2177 = vmatpush1.msra.mxu0 %v2144
      %2178 = vmatprep.subr.mxu0 %v2147
      %2179 = vmatpush1.msra.mxu0 %v2146
      %2180 = vmatprep.subr.mxu0 %v2149
      %2181 = vmatpush1.msra.mxu0 %v2148
      %2182 = vmatprep.subr.mxu0 %v2151
      %2183 = vmatpush1.msra.mxu0 %v2150
      %2184 = vmatprep.subr.mxu0 %v2153
      %2185 = vmatpush1.msra.mxu0 %v2152
      %2186 = vmatprep.subr.mxu0 %v2155
      %2187 = vmatpush1.msra.mxu0 %v2154
      %2188 = vmatprep.subr.mxu0 %v2157
      %2189 = vmatpush1.msra.mxu0 %v2156
      %2190 = vmatprep.subr.mxu0 %v2159
      %2191 = vmatpush1.msra.mxu0 %v2158
      %2192 = vmatprep.subr.mxu0 %v2161
      %2193 = vmatpush1.msra.mxu0 %v2160
      %2194 = vmatprep.subr.mxu0 %v2163
      %2195 = vmatpush1.msra.mxu0 %v2162
      %2196 = vmatprep.subr.mxu0 %v2165
      %2197 = vmatpush1.msra.mxu0 %v2164
      %2198 = vmatprep.subr.mxu0 %v2167
      %2199 = vmatpush1.msra.mxu0 %v2166
      %2200 = vmatprep.subr.mxu0 %v2169
      %2201 = vmatpush1.msra.mxu0 %v2168
      %2202 = vmatprep.subr.mxu0 %v2171
      %2203 = vmatpush1.msra.mxu0 %v2170
      %2204 = vmatprep.subr.mxu0 0.0
      %2205 = vmatpush1.msra.mxu0 0.0
      %2206 = vmatprep.subr.mxu0 0.0
      %2207 = vmatpush1.msra.mxu0 0.0
      %2208 = vmatprep.subr.mxu0 0.0
      %2209 = vmatpush1.msra.mxu0 0.0
      %2210 = vmatprep.subr.mxu0 0.0
      %2211 = vmatpush1.msra.mxu0 0.0
      %2212 = vmatprep.subr.mxu0 0.0
      %2213 = vmatpush1.msra.mxu0 0.0
      %2214 = vmatprep.subr.mxu0 0.0
      %2215 = vmatpush1.msra.mxu0 0.0
      %2216 = vmatprep.subr.mxu0 0.0
      %2217 = vmatpush1.msra.mxu0 0.0
      %2218 = vmatprep.subr.mxu0 0.0
      %2219 = vmatpush1.msra.mxu0 0.0
      %2220 = vmatprep.subr.mxu0 0.0
      %2221 = vmatpush1.msra.mxu0 0.0
      %2222 = vmatprep.subr.mxu0 0.0
      %2223 = vmatpush1.msra.mxu0 0.0
      %2224 = vmatprep.subr.mxu0 0.0
      %2225 = vmatpush1.msra.mxu0 0.0
      %2226 = vmatprep.subr.mxu0 0.0
      %2227 = vmatpush1.msra.mxu0 0.0
      %2228 = vmatprep.subr.mxu0 0.0
      %2229 = vmatpush1.msra.mxu0 0.0
      %2230 = vmatprep.subr.mxu0 0.0
      %2231 = vmatpush1.msra.mxu0 0.0
      %2232 = vmatprep.subr.mxu0 0.0
      %2233 = vmatpush1.msra.mxu0 0.0
      %2234 = vmatprep.subr.mxu0 0.0
      %2235 = vmatpush1.msra.mxu0 0.0
      %2236 = vmatprep.mubr.f32.mxu0 0.0
      %2237 = vmatmul.mubr.f32.gmra.mrb[0].mxu0 %v1118
      %v2238 = vpop.f32.mrb[0].mxu0
      %v2239 = vadd.f32 0.0, %v2238
      %v2240 = vpop.f32.mrb[0].mxu0
      %v2241 = vadd.f32 0.0, %v2240
      %2242 = vdwg.mxu0
      %v2245 = vcombine.low %v2239, %v2241
      %v2247 = vunpack.c.l.s4 1966171168
      %v2248 = vunpack.c.0.s8 %v2247
      %v2249 = vlaneseq
      %v2250 = vshrl.u32 %v2249, 7
      %v2251 = vsub.s32 %v2248, %v2250
      %v2252 = vrot.slane %v2245, %v2251
      %v2254 = vunpack.c.l.s4 1966171168
      %v2255 = vunpack.c.0.s8 %v2254
      %v2256 = vlaneseq
      %v2257 = vshrl.u32 %v2256, 7
      %v2258 = vsub.s32 %v2255, %v2257
      %v2259 = vrot.slane %v2252, %v2258
      %s2261 = scalar_lea.vmem [#allocation2], 16
      %2262 = vst.msk [vmem:[%s2261] ss:$8 sm:$0x3] %vm1246, %v2259
      %2263 = vst.msk [vmem:[%s2261] ss:$8 sm:$0x0] %vm1246, %v2259
      %s2264 = scalar_lea.vmem %s53, 2304
      %v2265 = vld [vmem:[%s2264] sm:$0xff]
      %v2266 = vld [vmem:[%s2264 + $0x8] sm:$0xff]
      %v2267 = vld [vmem:[%s2264 + $0x10] sm:$0xff]
      %v2268 = vld [vmem:[%s2264 + $0x18] sm:$0xff]
      %v2269 = vld [vmem:[%s2264 + $0x20] sm:$0xff]
      %v2270 = vld [vmem:[%s2264 + $0x28] sm:$0xff]
      %v2271 = vld [vmem:[%s2264 + $0x30] sm:$0xff]
      %v2272 = vld [vmem:[%s2264 + $0x38] sm:$0xff]
      %v2273 = vld [vmem:[%s2264 + $0x40] sm:$0xff]
      %v2274 = vld [vmem:[%s2264 + $0x48] sm:$0xff]
      %v2275 = vld [vmem:[%s2264 + $0x50] sm:$0xff]
      %v2276 = vld [vmem:[%s2264 + $0x58] sm:$0xff]
      %v2277 = vld [vmem:[%s2264 + $0x60] sm:$0xff]
      %v2278 = vld [vmem:[%s2264 + $0x68] sm:$0xff]
      %v2279 = vld [vmem:[%s2264 + $0x70] sm:$0xff]
      %v2280 = vld [vmem:[%s2264 + $0x78] sm:$0xff]
      %v2281 = vld [vmem:[%s2264 + $0x80] sm:$0xff]
      %v2282 = vld [vmem:[%s2264 + $0x88] sm:$0xff]
      %v2283 = vld [vmem:[%s2264 + $0x90] sm:$0xff]
      %v2284 = vld [vmem:[%s2264 + $0x98] sm:$0xff]
      %v2285 = vld [vmem:[%s2264 + $0xa0] sm:$0xff]
      %v2286 = vld [vmem:[%s2264 + $0xa8] sm:$0xff]
      %v2287 = vld [vmem:[%s2264 + $0xb0] sm:$0xff]
      %v2288 = vld [vmem:[%s2264 + $0xb8] sm:$0xff]
      %v2289 = vld [vmem:[%s2264 + $0xc0] sm:$0xff]
      %v2290 = vld [vmem:[%s2264 + $0xc8] sm:$0xff]
      %v2291 = vld [vmem:[%s2264 + $0xd0] sm:$0xff]
      %v2292 = vld [vmem:[%s2264 + $0xd8] sm:$0xff]
      %v2293 = vld [vmem:[%s2264 + $0xe0] sm:$0xff]
      %v2294 = vld [vmem:[%s2264 + $0xe8] sm:$0xff]
      %v2295 = vld [vmem:[%s2264 + $0xf0] sm:$0xff]
      %v2296 = vld [vmem:[%s2264 + $0xf8] sm:$0xff]
      %v2298 = vrot.slane %v1118, 1
      %2300 = vmatprep.subr.mxu0 %v2266
      %2301 = vmatpush1.msra.mxu0 %v2265
      %2302 = vmatprep.subr.mxu0 %v2268
      %2303 = vmatpush1.msra.mxu0 %v2267
      %2304 = vmatprep.subr.mxu0 %v2270
      %2305 = vmatpush1.msra.mxu0 %v2269
      %2306 = vmatprep.subr.mxu0 %v2272
      %2307 = vmatpush1.msra.mxu0 %v2271
      %2308 = vmatprep.subr.mxu0 %v2274
      %2309 = vmatpush1.msra.mxu0 %v2273
      %2310 = vmatprep.subr.mxu0 %v2276
      %2311 = vmatpush1.msra.mxu0 %v2275
      %2312 = vmatprep.subr.mxu0 %v2278
      %2313 = vmatpush1.msra.mxu0 %v2277
      %2314 = vmatprep.subr.mxu0 %v2280
      %2315 = vmatpush1.msra.mxu0 %v2279
      %2316 = vmatprep.subr.mxu0 %v2282
      %2317 = vmatpush1.msra.mxu0 %v2281
      %2318 = vmatprep.subr.mxu0 %v2284
      %2319 = vmatpush1.msra.mxu0 %v2283
      %2320 = vmatprep.subr.mxu0 %v2286
      %2321 = vmatpush1.msra.mxu0 %v2285
      %2322 = vmatprep.subr.mxu0 %v2288
      %2323 = vmatpush1.msra.mxu0 %v2287
      %2324 = vmatprep.subr.mxu0 %v2290
      %2325 = vmatpush1.msra.mxu0 %v2289
      %2326 = vmatprep.subr.mxu0 %v2292
      %2327 = vmatpush1.msra.mxu0 %v2291
      %2328 = vmatprep.subr.mxu0 %v2294
      %2329 = vmatpush1.msra.mxu0 %v2293
      %2330 = vmatprep.subr.mxu0 %v2296
      %2331 = vmatpush1.msra.mxu0 %v2295
      %2332 = vmatprep.subr.mxu0 0.0
      %2333 = vmatpush1.msra.mxu0 0.0
      %2334 = vmatprep.subr.mxu0 0.0
      %2335 = vmatpush1.msra.mxu0 0.0
      %2336 = vmatprep.subr.mxu0 0.0
      %2337 = vmatpush1.msra.mxu0 0.0
      %2338 = vmatprep.subr.mxu0 0.0
      %2339 = vmatpush1.msra.mxu0 0.0
      %2340 = vmatprep.subr.mxu0 0.0
      %2341 = vmatpush1.msra.mxu0 0.0
      %2342 = vmatprep.subr.mxu0 0.0
      %2343 = vmatpush1.msra.mxu0 0.0
      %2344 = vmatprep.subr.mxu0 0.0
      %2345 = vmatpush1.msra.mxu0 0.0
      %2346 = vmatprep.subr.mxu0 0.0
      %2347 = vmatpush1.msra.mxu0 0.0
      %2348 = vmatprep.subr.mxu0 0.0
      %2349 = vmatpush1.msra.mxu0 0.0
      %2350 = vmatprep.subr.mxu0 0.0
      %2351 = vmatpush1.msra.mxu0 0.0
      %2352 = vmatprep.subr.mxu0 0.0
      %2353 = vmatpush1.msra.mxu0 0.0
      %2354 = vmatprep.subr.mxu0 0.0
      %2355 = vmatpush1.msra.mxu0 0.0
      %2356 = vmatprep.subr.mxu0 0.0
      %2357 = vmatpush1.msra.mxu0 0.0
      %2358 = vmatprep.subr.mxu0 0.0
      %2359 = vmatpush1.msra.mxu0 0.0
      %2360 = vmatprep.subr.mxu0 0.0
      %2361 = vmatpush1.msra.mxu0 0.0
      %2362 = vmatprep.subr.mxu0 0.0
      %2363 = vmatpush1.msra.mxu0 0.0
      %2364 = vmatprep.mubr.f32.mxu0 0.0
      %2365 = vmatmul.mubr.f32.gmra.mrb[0].mxu0 %v2298
      %v2366 = vpop.f32.mrb[0].mxu0
      %v2367 = vadd.f32 0.0, %v2366
      %v2368 = vpop.f32.mrb[0].mxu0
      %v2369 = vadd.f32 0.0, %v2368
      %2370 = vdwg.mxu0
      %v2373 = vcombine.low %v2367, %v2369
      %v2375 = vunpack.c.l.s4 1966171168
      %v2376 = vunpack.c.0.s8 %v2375
      %v2377 = vlaneseq
      %v2378 = vshrl.u32 %v2377, 7
      %v2379 = vsub.s32 %v2376, %v2378
      %v2380 = vrot.slane %v2373, %v2379
      %v2382 = vunpack.c.l.s4 1966171168
      %v2383 = vunpack.c.0.s8 %v2382
      %v2384 = vlaneseq
      %v2385 = vshrl.u32 %v2384, 7
      %v2386 = vsub.s32 %v2383, %v2385
      %v2387 = vrot.slane %v2380, %v2386
      %s2389 = scalar_lea.vmem [#allocation2], 17
      %2390 = vst.msk [vmem:[%s2389] ss:$8 sm:$0x3] %vm1246, %v2387
      %2391 = vst.msk [vmem:[%s2389] ss:$8 sm:$0x0] %vm1246, %v2387
      %s2392 = scalar_lea.vmem %s53, 2560
      %v2393 = vld [vmem:[%s2392] sm:$0xff]
      %v2394 = vld [vmem:[%s2392 + $0x8] sm:$0xff]
      %v2395 = vld [vmem:[%s2392 + $0x10] sm:$0xff]
      %v2396 = vld [vmem:[%s2392 + $0x18] sm:$0xff]
      %v2397 = vld [vmem:[%s2392 + $0x20] sm:$0xff]
      %v2398 = vld [vmem:[%s2392 + $0x28] sm:$0xff]
      %v2399 = vld [vmem:[%s2392 + $0x30] sm:$0xff]
      %v2400 = vld [vmem:[%s2392 + $0x38] sm:$0xff]
      %v2401 = vld [vmem:[%s2392 + $0x40] sm:$0xff]
      %v2402 = vld [vmem:[%s2392 + $0x48] sm:$0xff]
      %v2403 = vld [vmem:[%s2392 + $0x50] sm:$0xff]
      %v2404 = vld [vmem:[%s2392 + $0x58] sm:$0xff]
      %v2405 = vld [vmem:[%s2392 + $0x60] sm:$0xff]
      %v2406 = vld [vmem:[%s2392 + $0x68] sm:$0xff]
      %v2407 = vld [vmem:[%s2392 + $0x70] sm:$0xff]
      %v2408 = vld [vmem:[%s2392 + $0x78] sm:$0xff]
      %v2409 = vld [vmem:[%s2392 + $0x80] sm:$0xff]
      %v2410 = vld [vmem:[%s2392 + $0x88] sm:$0xff]
      %v2411 = vld [vmem:[%s2392 + $0x90] sm:$0xff]
      %v2412 = vld [vmem:[%s2392 + $0x98] sm:$0xff]
      %v2413 = vld [vmem:[%s2392 + $0xa0] sm:$0xff]
      %v2414 = vld [vmem:[%s2392 + $0xa8] sm:$0xff]
      %v2415 = vld [vmem:[%s2392 + $0xb0] sm:$0xff]
      %v2416 = vld [vmem:[%s2392 + $0xb8] sm:$0xff]
      %v2417 = vld [vmem:[%s2392 + $0xc0] sm:$0xff]
      %v2418 = vld [vmem:[%s2392 + $0xc8] sm:$0xff]
      %v2419 = vld [vmem:[%s2392 + $0xd0] sm:$0xff]
      %v2420 = vld [vmem:[%s2392 + $0xd8] sm:$0xff]
      %v2421 = vld [vmem:[%s2392 + $0xe0] sm:$0xff]
      %v2422 = vld [vmem:[%s2392 + $0xe8] sm:$0xff]
      %v2423 = vld [vmem:[%s2392 + $0xf0] sm:$0xff]
      %v2424 = vld [vmem:[%s2392 + $0xf8] sm:$0xff]
      %v2425 = vrot.slane %v1118, 2
      %2427 = vmatprep.subr.mxu0 %v2394
      %2428 = vmatpush1.msra.mxu0 %v2393
      %2429 = vmatprep.subr.mxu0 %v2396
      %2430 = vmatpush1.msra.mxu0 %v2395
      %2431 = vmatprep.subr.mxu0 %v2398
      %2432 = vmatpush1.msra.mxu0 %v2397
      %2433 = vmatprep.subr.mxu0 %v2400
      %2434 = vmatpush1.msra.mxu0 %v2399
      %2435 = vmatprep.subr.mxu0 %v2402
      %2436 = vmatpush1.msra.mxu0 %v2401
      %2437 = vmatprep.subr.mxu0 %v2404
      %2438 = vmatpush1.msra.mxu0 %v2403
      %2439 = vmatprep.subr.mxu0 %v2406
      %2440 = vmatpush1.msra.mxu0 %v2405
      %2441 = vmatprep.subr.mxu0 %v2408
      %2442 = vmatpush1.msra.mxu0 %v2407
      %2443 = vmatprep.subr.mxu0 %v2410
      %2444 = vmatpush1.msra.mxu0 %v2409
      %2445 = vmatprep.subr.mxu0 %v2412
      %2446 = vmatpush1.msra.mxu0 %v2411
      %2447 = vmatprep.subr.mxu0 %v2414
      %2448 = vmatpush1.msra.mxu0 %v2413
      %2449 = vmatprep.subr.mxu0 %v2416
      %2450 = vmatpush1.msra.mxu0 %v2415
      %2451 = vmatprep.subr.mxu0 %v2418
      %2452 = vmatpush1.msra.mxu0 %v2417
      %2453 = vmatprep.subr.mxu0 %v2420
      %2454 = vmatpush1.msra.mxu0 %v2419
      %2455 = vmatprep.subr.mxu0 %v2422
      %2456 = vmatpush1.msra.mxu0 %v2421
      %2457 = vmatprep.subr.mxu0 %v2424
      %2458 = vmatpush1.msra.mxu0 %v2423
      %2459 = vmatprep.subr.mxu0 0.0
      %2460 = vmatpush1.msra.mxu0 0.0
      %2461 = vmatprep.subr.mxu0 0.0
      %2462 = vmatpush1.msra.mxu0 0.0
      %2463 = vmatprep.subr.mxu0 0.0
      %2464 = vmatpush1.msra.mxu0 0.0
      %2465 = vmatprep.subr.mxu0 0.0
      %2466 = vmatpush1.msra.mxu0 0.0
      %2467 = vmatprep.subr.mxu0 0.0
      %2468 = vmatpush1.msra.mxu0 0.0
      %2469 = vmatprep.subr.mxu0 0.0
      %2470 = vmatpush1.msra.mxu0 0.0
      %2471 = vmatprep.subr.mxu0 0.0
      %2472 = vmatpush1.msra.mxu0 0.0
      %2473 = vmatprep.subr.mxu0 0.0
      %2474 = vmatpush1.msra.mxu0 0.0
      %2475 = vmatprep.subr.mxu0 0.0
      %2476 = vmatpush1.msra.mxu0 0.0
      %2477 = vmatprep.subr.mxu0 0.0
      %2478 = vmatpush1.msra.mxu0 0.0
      %2479 = vmatprep.subr.mxu0 0.0
      %2480 = vmatpush1.msra.mxu0 0.0
      %2481 = vmatprep.subr.mxu0 0.0
      %2482 = vmatpush1.msra.mxu0 0.0
      %2483 = vmatprep.subr.mxu0 0.0
      %2484 = vmatpush1.msra.mxu0 0.0
      %2485 = vmatprep.subr.mxu0 0.0
      %2486 = vmatpush1.msra.mxu0 0.0
      %2487 = vmatprep.subr.mxu0 0.0
      %2488 = vmatpush1.msra.mxu0 0.0
      %2489 = vmatprep.subr.mxu0 0.0
      %2490 = vmatpush1.msra.mxu0 0.0
      %2491 = vmatprep.mubr.f32.mxu0 0.0
      %2492 = vmatmul.mubr.f32.gmra.mrb[0].mxu0 %v2425
      %v2493 = vpop.f32.mrb[0].mxu0
      %v2494 = vadd.f32 0.0, %v2493
      %v2495 = vpop.f32.mrb[0].mxu0
      %v2496 = vadd.f32 0.0, %v2495
      %2497 = vdwg.mxu0
      %v2500 = vcombine.low %v2494, %v2496
      %v2502 = vunpack.c.l.s4 1966171168
      %v2503 = vunpack.c.0.s8 %v2502
      %v2504 = vlaneseq
      %v2505 = vshrl.u32 %v2504, 7
      %v2506 = vsub.s32 %v2503, %v2505
      %v2507 = vrot.slane %v2500, %v2506
      %v2509 = vunpack.c.l.s4 1966171168
      %v2510 = vunpack.c.0.s8 %v2509
      %v2511 = vlaneseq
      %v2512 = vshrl.u32 %v2511, 7
      %v2513 = vsub.s32 %v2510, %v2512
      %v2514 = vrot.slane %v2507, %v2513
      %s2516 = scalar_lea.vmem [#allocation2], 18
      %2517 = vst.msk [vmem:[%s2516] ss:$8 sm:$0x3] %vm1246, %v2514
      %2518 = vst.msk [vmem:[%s2516] ss:$8 sm:$0x0] %vm1246, %v2514
      %s2519 = scalar_lea.vmem %s53, 2816
      %v2520 = vld [vmem:[%s2519] sm:$0xff]
      %v2521 = vld [vmem:[%s2519 + $0x8] sm:$0xff]
      %v2522 = vld [vmem:[%s2519 + $0x10] sm:$0xff]
      %v2523 = vld [vmem:[%s2519 + $0x18] sm:$0xff]
      %v2524 = vld [vmem:[%s2519 + $0x20] sm:$0xff]
      %v2525 = vld [vmem:[%s2519 + $0x28] sm:$0xff]
      %v2526 = vld [vmem:[%s2519 + $0x30] sm:$0xff]
      %v2527 = vld [vmem:[%s2519 + $0x38] sm:$0xff]
      %v2528 = vld [vmem:[%s2519 + $0x40] sm:$0xff]
      %v2529 = vld [vmem:[%s2519 + $0x48] sm:$0xff]
      %v2530 = vld [vmem:[%s2519 + $0x50] sm:$0xff]
      %v2531 = vld [vmem:[%s2519 + $0x58] sm:$0xff]
      %v2532 = vld [vmem:[%s2519 + $0x60] sm:$0xff]
      %v2533 = vld [vmem:[%s2519 + $0x68] sm:$0xff]
      %v2534 = vld [vmem:[%s2519 + $0x70] sm:$0xff]
      %v2535 = vld [vmem:[%s2519 + $0x78] sm:$0xff]
      %v2536 = vld [vmem:[%s2519 + $0x80] sm:$0xff]
      %v2537 = vld [vmem:[%s2519 + $0x88] sm:$0xff]
      %v2538 = vld [vmem:[%s2519 + $0x90] sm:$0xff]
      %v2539 = vld [vmem:[%s2519 + $0x98] sm:$0xff]
      %v2540 = vld [vmem:[%s2519 + $0xa0] sm:$0xff]
      %v2541 = vld [vmem:[%s2519 + $0xa8] sm:$0xff]
      %v2542 = vld [vmem:[%s2519 + $0xb0] sm:$0xff]
      %v2543 = vld [vmem:[%s2519 + $0xb8] sm:$0xff]
      %v2544 = vld [vmem:[%s2519 + $0xc0] sm:$0xff]
      %v2545 = vld [vmem:[%s2519 + $0xc8] sm:$0xff]
      %v2546 = vld [vmem:[%s2519 + $0xd0] sm:$0xff]
      %v2547 = vld [vmem:[%s2519 + $0xd8] sm:$0xff]
      %v2548 = vld [vmem:[%s2519 + $0xe0] sm:$0xff]
      %v2549 = vld [vmem:[%s2519 + $0xe8] sm:$0xff]
      %v2550 = vld [vmem:[%s2519 + $0xf0] sm:$0xff]
      %v2551 = vld [vmem:[%s2519 + $0xf8] sm:$0xff]
      %v2552 = vrot.slane %v1118, 3
      %2554 = vmatprep.subr.mxu0 %v2521
      %2555 = vmatpush1.msra.mxu0 %v2520
      %2556 = vmatprep.subr.mxu0 %v2523
      %2557 = vmatpush1.msra.mxu0 %v2522
      %2558 = vmatprep.subr.mxu0 %v2525
      %2559 = vmatpush1.msra.mxu0 %v2524
      %2560 = vmatprep.subr.mxu0 %v2527
      %2561 = vmatpush1.msra.mxu0 %v2526
      %2562 = vmatprep.subr.mxu0 %v2529
      %2563 = vmatpush1.msra.mxu0 %v2528
      %2564 = vmatprep.subr.mxu0 %v2531
      %2565 = vmatpush1.msra.mxu0 %v2530
      %2566 = vmatprep.subr.mxu0 %v2533
      %2567 = vmatpush1.msra.mxu0 %v2532
      %2568 = vmatprep.subr.mxu0 %v2535
      %2569 = vmatpush1.msra.mxu0 %v2534
      %2570 = vmatprep.subr.mxu0 %v2537
      %2571 = vmatpush1.msra.mxu0 %v2536
      %2572 = vmatprep.subr.mxu0 %v2539
      %2573 = vmatpush1.msra.mxu0 %v2538
      %2574 = vmatprep.subr.mxu0 %v2541
      %2575 = vmatpush1.msra.mxu0 %v2540
      %2576 = vmatprep.subr.mxu0 %v2543
      %2577 = vmatpush1.msra.mxu0 %v2542
      %2578 = vmatprep.subr.mxu0 %v2545
      %2579 = vmatpush1.msra.mxu0 %v2544
      %2580 = vmatprep.subr.mxu0 %v2547
      %2581 = vmatpush1.msra.mxu0 %v2546
      %2582 = vmatprep.subr.mxu0 %v2549
      %2583 = vmatpush1.msra.mxu0 %v2548
      %2584 = vmatprep.subr.mxu0 %v2551
      %2585 = vmatpush1.msra.mxu0 %v2550
      %2586 = vmatprep.subr.mxu0 0.0
      %2587 = vmatpush1.msra.mxu0 0.0
      %2588 = vmatprep.subr.mxu0 0.0
      %2589 = vmatpush1.msra.mxu0 0.0
      %2590 = vmatprep.subr.mxu0 0.0
      %2591 = vmatpush1.msra.mxu0 0.0
      %2592 = vmatprep.subr.mxu0 0.0
      %2593 = vmatpush1.msra.mxu0 0.0
      %2594 = vmatprep.subr.mxu0 0.0
      %2595 = vmatpush1.msra.mxu0 0.0
      %2596 = vmatprep.subr.mxu0 0.0
      %2597 = vmatpush1.msra.mxu0 0.0
      %2598 = vmatprep.subr.mxu0 0.0
      %2599 = vmatpush1.msra.mxu0 0.0
      %2600 = vmatprep.subr.mxu0 0.0
      %2601 = vmatpush1.msra.mxu0 0.0
      %2602 = vmatprep.subr.mxu0 0.0
      %2603 = vmatpush1.msra.mxu0 0.0
      %2604 = vmatprep.subr.mxu0 0.0
      %2605 = vmatpush1.msra.mxu0 0.0
      %2606 = vmatprep.subr.mxu0 0.0
      %2607 = vmatpush1.msra.mxu0 0.0
      %2608 = vmatprep.subr.mxu0 0.0
      %2609 = vmatpush1.msra.mxu0 0.0
      %2610 = vmatprep.subr.mxu0 0.0
      %2611 = vmatpush1.msra.mxu0 0.0
      %2612 = vmatprep.subr.mxu0 0.0
      %2613 = vmatpush1.msra.mxu0 0.0
      %2614 = vmatprep.subr.mxu0 0.0
      %2615 = vmatpush1.msra.mxu0 0.0
      %2616 = vmatprep.subr.mxu0 0.0
      %2617 = vmatpush1.msra.mxu0 0.0
      %2618 = vmatprep.mubr.f32.mxu0 0.0
      %2619 = vmatmul.mubr.f32.gmra.mrb[0].mxu0 %v2552
      %v2620 = vpop.f32.mrb[0].mxu0
      %v2621 = vadd.f32 0.0, %v2620
      %v2622 = vpop.f32.mrb[0].mxu0
      %v2623 = vadd.f32 0.0, %v2622
      %2624 = vdwg.mxu0
      %v2627 = vcombine.low %v2621, %v2623
      %v2629 = vunpack.c.l.s4 1966171168
      %v2630 = vunpack.c.0.s8 %v2629
      %v2631 = vlaneseq
      %v2632 = vshrl.u32 %v2631, 7
      %v2633 = vsub.s32 %v2630, %v2632
      %v2634 = vrot.slane %v2627, %v2633
      %v2636 = vunpack.c.l.s4 1966171168
      %v2637 = vunpack.c.0.s8 %v2636
      %v2638 = vlaneseq
      %v2639 = vshrl.u32 %v2638, 7
      %v2640 = vsub.s32 %v2637, %v2639
      %v2641 = vrot.slane %v2634, %v2640
      %s2643 = scalar_lea.vmem [#allocation2], 19
      %2644 = vst.msk [vmem:[%s2643] ss:$8 sm:$0x3] %vm1246, %v2641
      %2645 = vst.msk [vmem:[%s2643] ss:$8 sm:$0x0] %vm1246, %v2641
      %s2646 = scalar_lea.vmem %s53, 3072
      %v2647 = vld [vmem:[%s2646] sm:$0xff]
      %v2648 = vld [vmem:[%s2646 + $0x8] sm:$0xff]
      %v2649 = vld [vmem:[%s2646 + $0x10] sm:$0xff]
      %v2650 = vld [vmem:[%s2646 + $0x18] sm:$0xff]
      %v2651 = vld [vmem:[%s2646 + $0x20] sm:$0xff]
      %v2652 = vld [vmem:[%s2646 + $0x28] sm:$0xff]
      %v2653 = vld [vmem:[%s2646 + $0x30] sm:$0xff]
      %v2654 = vld [vmem:[%s2646 + $0x38] sm:$0xff]
      %v2655 = vld [vmem:[%s2646 + $0x40] sm:$0xff]
      %v2656 = vld [vmem:[%s2646 + $0x48] sm:$0xff]
      %v2657 = vld [vmem:[%s2646 + $0x50] sm:$0xff]
      %v2658 = vld [vmem:[%s2646 + $0x58] sm:$0xff]
      %v2659 = vld [vmem:[%s2646 + $0x60] sm:$0xff]
      %v2660 = vld [vmem:[%s2646 + $0x68] sm:$0xff]
      %v2661 = vld [vmem:[%s2646 + $0x70] sm:$0xff]
      %v2662 = vld [vmem:[%s2646 + $0x78] sm:$0xff]
      %v2663 = vld [vmem:[%s2646 + $0x80] sm:$0xff]
      %v2664 = vld [vmem:[%s2646 + $0x88] sm:$0xff]
      %v2665 = vld [vmem:[%s2646 + $0x90] sm:$0xff]
      %v2666 = vld [vmem:[%s2646 + $0x98] sm:$0xff]
      %v2667 = vld [vmem:[%s2646 + $0xa0] sm:$0xff]
      %v2668 = vld [vmem:[%s2646 + $0xa8] sm:$0xff]
      %v2669 = vld [vmem:[%s2646 + $0xb0] sm:$0xff]
      %v2670 = vld [vmem:[%s2646 + $0xb8] sm:$0xff]
      %v2671 = vld [vmem:[%s2646 + $0xc0] sm:$0xff]
      %v2672 = vld [vmem:[%s2646 + $0xc8] sm:$0xff]
      %v2673 = vld [vmem:[%s2646 + $0xd0] sm:$0xff]
      %v2674 = vld [vmem:[%s2646 + $0xd8] sm:$0xff]
      %v2675 = vld [vmem:[%s2646 + $0xe0] sm:$0xff]
      %v2676 = vld [vmem:[%s2646 + $0xe8] sm:$0xff]
      %v2677 = vld [vmem:[%s2646 + $0xf0] sm:$0xff]
      %v2678 = vld [vmem:[%s2646 + $0xf8] sm:$0xff]
      %v2679 = vrot.slane %v1118, 4
      %2681 = vmatprep.subr.mxu0 %v2648
      %2682 = vmatpush1.msra.mxu0 %v2647
      %2683 = vmatprep.subr.mxu0 %v2650
      %2684 = vmatpush1.msra.mxu0 %v2649
      %2685 = vmatprep.subr.mxu0 %v2652
      %2686 = vmatpush1.msra.mxu0 %v2651
      %2687 = vmatprep.subr.mxu0 %v2654
      %2688 = vmatpush1.msra.mxu0 %v2653
      %2689 = vmatprep.subr.mxu0 %v2656
      %2690 = vmatpush1.msra.mxu0 %v2655
      %2691 = vmatprep.subr.mxu0 %v2658
      %2692 = vmatpush1.msra.mxu0 %v2657
      %2693 = vmatprep.subr.mxu0 %v2660
      %2694 = vmatpush1.msra.mxu0 %v2659
      %2695 = vmatprep.subr.mxu0 %v2662
      %2696 = vmatpush1.msra.mxu0 %v2661
      %2697 = vmatprep.subr.mxu0 %v2664
      %2698 = vmatpush1.msra.mxu0 %v2663
      %2699 = vmatprep.subr.mxu0 %v2666
      %2700 = vmatpush1.msra.mxu0 %v2665
      %2701 = vmatprep.subr.mxu0 %v2668
      %2702 = vmatpush1.msra.mxu0 %v2667
      %2703 = vmatprep.subr.mxu0 %v2670
      %2704 = vmatpush1.msra.mxu0 %v2669
      %2705 = vmatprep.subr.mxu0 %v2672
      %2706 = vmatpush1.msra.mxu0 %v2671
      %2707 = vmatprep.subr.mxu0 %v2674
      %2708 = vmatpush1.msra.mxu0 %v2673
      %2709 = vmatprep.subr.mxu0 %v2676
      %2710 = vmatpush1.msra.mxu0 %v2675
      %2711 = vmatprep.subr.mxu0 %v2678
      %2712 = vmatpush1.msra.mxu0 %v2677
      %2713 = vmatprep.subr.mxu0 0.0
      %2714 = vmatpush1.msra.mxu0 0.0
      %2715 = vmatprep.subr.mxu0 0.0
      %2716 = vmatpush1.msra.mxu0 0.0
      %2717 = vmatprep.subr.mxu0 0.0
      %2718 = vmatpush1.msra.mxu0 0.0
      %2719 = vmatprep.subr.mxu0 0.0
      %2720 = vmatpush1.msra.mxu0 0.0
      %2721 = vmatprep.subr.mxu0 0.0
      %2722 = vmatpush1.msra.mxu0 0.0
      %2723 = vmatprep.subr.mxu0 0.0
      %2724 = vmatpush1.msra.mxu0 0.0
      %2725 = vmatprep.subr.mxu0 0.0
      %2726 = vmatpush1.msra.mxu0 0.0
      %2727 = vmatprep.subr.mxu0 0.0
      %2728 = vmatpush1.msra.mxu0 0.0
      %2729 = vmatprep.subr.mxu0 0.0
      %2730 = vmatpush1.msra.mxu0 0.0
      %2731 = vmatprep.subr.mxu0 0.0
      %2732 = vmatpush1.msra.mxu0 0.0
      %2733 = vmatprep.subr.mxu0 0.0
      %2734 = vmatpush1.msra.mxu0 0.0
      %2735 = vmatprep.subr.mxu0 0.0
      %2736 = vmatpush1.msra.mxu0 0.0
      %2737 = vmatprep.subr.mxu0 0.0
      %2738 = vmatpush1.msra.mxu0 0.0
      %2739 = vmatprep.subr.mxu0 0.0
      %2740 = vmatpush1.msra.mxu0 0.0
      %2741 = vmatprep.subr.mxu0 0.0
      %2742 = vmatpush1.msra.mxu0 0.0
      %2743 = vmatprep.subr.mxu0 0.0
      %2744 = vmatpush1.msra.mxu0 0.0
      %2745 = vmatprep.mubr.f32.mxu0 0.0
      %2746 = vmatmul.mubr.f32.gmra.mrb[0].mxu0 %v2679
      %v2747 = vpop.f32.mrb[0].mxu0
      %v2748 = vadd.f32 0.0, %v2747
      %v2749 = vpop.f32.mrb[0].mxu0
      %v2750 = vadd.f32 0.0, %v2749
      %2751 = vdwg.mxu0
      %v2754 = vcombine.low %v2748, %v2750
      %v2756 = vunpack.c.l.s4 1966171168
      %v2757 = vunpack.c.0.s8 %v2756
      %v2758 = vlaneseq
      %v2759 = vshrl.u32 %v2758, 7
      %v2760 = vsub.s32 %v2757, %v2759
      %v2761 = vrot.slane %v2754, %v2760
      %v2763 = vunpack.c.l.s4 1966171168
      %v2764 = vunpack.c.0.s8 %v2763
      %v2765 = vlaneseq
      %v2766 = vshrl.u32 %v2765, 7
      %v2767 = vsub.s32 %v2764, %v2766
      %v2768 = vrot.slane %v2761, %v2767
      %s2770 = scalar_lea.vmem [#allocation2], 20
      %2771 = vst.msk [vmem:[%s2770] ss:$8 sm:$0x3] %vm1246, %v2768
      %2772 = vst.msk [vmem:[%s2770] ss:$8 sm:$0x0] %vm1246, %v2768
      %s2773 = scalar_lea.vmem %s53, 3328
      %v2774 = vld [vmem:[%s2773] sm:$0xff]
      %v2775 = vld [vmem:[%s2773 + $0x8] sm:$0xff]
      %v2776 = vld [vmem:[%s2773 + $0x10] sm:$0xff]
      %v2777 = vld [vmem:[%s2773 + $0x18] sm:$0xff]
      %v2778 = vld [vmem:[%s2773 + $0x20] sm:$0xff]
      %v2779 = vld [vmem:[%s2773 + $0x28] sm:$0xff]
      %v2780 = vld [vmem:[%s2773 + $0x30] sm:$0xff]
      %v2781 = vld [vmem:[%s2773 + $0x38] sm:$0xff]
      %v2782 = vld [vmem:[%s2773 + $0x40] sm:$0xff]
      %v2783 = vld [vmem:[%s2773 + $0x48] sm:$0xff]
      %v2784 = vld [vmem:[%s2773 + $0x50] sm:$0xff]
      %v2785 = vld [vmem:[%s2773 + $0x58] sm:$0xff]
      %v2786 = vld [vmem:[%s2773 + $0x60] sm:$0xff]
      %v2787 = vld [vmem:[%s2773 + $0x68] sm:$0xff]
      %v2788 = vld [vmem:[%s2773 + $0x70] sm:$0xff]
      %v2789 = vld [vmem:[%s2773 + $0x78] sm:$0xff]
      %v2790 = vld [vmem:[%s2773 + $0x80] sm:$0xff]
      %v2791 = vld [vmem:[%s2773 + $0x88] sm:$0xff]
      %v2792 = vld [vmem:[%s2773 + $0x90] sm:$0xff]
      %v2793 = vld [vmem:[%s2773 + $0x98] sm:$0xff]
      %v2794 = vld [vmem:[%s2773 + $0xa0] sm:$0xff]
      %v2795 = vld [vmem:[%s2773 + $0xa8] sm:$0xff]
      %v2796 = vld [vmem:[%s2773 + $0xb0] sm:$0xff]
      %v2797 = vld [vmem:[%s2773 + $0xb8] sm:$0xff]
      %v2798 = vld [vmem:[%s2773 + $0xc0] sm:$0xff]
      %v2799 = vld [vmem:[%s2773 + $0xc8] sm:$0xff]
      %v2800 = vld [vmem:[%s2773 + $0xd0] sm:$0xff]
      %v2801 = vld [vmem:[%s2773 + $0xd8] sm:$0xff]
      %v2802 = vld [vmem:[%s2773 + $0xe0] sm:$0xff]
      %v2803 = vld [vmem:[%s2773 + $0xe8] sm:$0xff]
      %v2804 = vld [vmem:[%s2773 + $0xf0] sm:$0xff]
      %v2805 = vld [vmem:[%s2773 + $0xf8] sm:$0xff]
      %v2806 = vrot.slane %v1118, 5
      %2808 = vmatprep.subr.mxu0 %v2775
      %2809 = vmatpush1.msra.mxu0 %v2774
      %2810 = vmatprep.subr.mxu0 %v2777
      %2811 = vmatpush1.msra.mxu0 %v2776
      %2812 = vmatprep.subr.mxu0 %v2779
      %2813 = vmatpush1.msra.mxu0 %v2778
      %2814 = vmatprep.subr.mxu0 %v2781
      %2815 = vmatpush1.msra.mxu0 %v2780
      %2816 = vmatprep.subr.mxu0 %v2783
      %2817 = vmatpush1.msra.mxu0 %v2782
      %2818 = vmatprep.subr.mxu0 %v2785
      %2819 = vmatpush1.msra.mxu0 %v2784
      %2820 = vmatprep.subr.mxu0 %v2787
      %2821 = vmatpush1.msra.mxu0 %v2786
      %2822 = vmatprep.subr.mxu0 %v2789
      %2823 = vmatpush1.msra.mxu0 %v2788
      %2824 = vmatprep.subr.mxu0 %v2791
      %2825 = vmatpush1.msra.mxu0 %v2790
      %2826 = vmatprep.subr.mxu0 %v2793
      %2827 = vmatpush1.msra.mxu0 %v2792
      %2828 = vmatprep.subr.mxu0 %v2795
      %2829 = vmatpush1.msra.mxu0 %v2794
      %2830 = vmatprep.subr.mxu0 %v2797
      %2831 = vmatpush1.msra.mxu0 %v2796
      %2832 = vmatprep.subr.mxu0 %v2799
      %2833 = vmatpush1.msra.mxu0 %v2798
      %2834 = vmatprep.subr.mxu0 %v2801
      %2835 = vmatpush1.msra.mxu0 %v2800
      %2836 = vmatprep.subr.mxu0 %v2803
      %2837 = vmatpush1.msra.mxu0 %v2802
      %2838 = vmatprep.subr.mxu0 %v2805
      %2839 = vmatpush1.msra.mxu0 %v2804
      %2840 = vmatprep.subr.mxu0 0.0
      %2841 = vmatpush1.msra.mxu0 0.0
      %2842 = vmatprep.subr.mxu0 0.0
      %2843 = vmatpush1.msra.mxu0 0.0
      %2844 = vmatprep.subr.mxu0 0.0
      %2845 = vmatpush1.msra.mxu0 0.0
      %2846 = vmatprep.subr.mxu0 0.0
      %2847 = vmatpush1.msra.mxu0 0.0
      %2848 = vmatprep.subr.mxu0 0.0
      %2849 = vmatpush1.msra.mxu0 0.0
      %2850 = vmatprep.subr.mxu0 0.0
      %2851 = vmatpush1.msra.mxu0 0.0
      %2852 = vmatprep.subr.mxu0 0.0
      %2853 = vmatpush1.msra.mxu0 0.0
      %2854 = vmatprep.subr.mxu0 0.0
      %2855 = vmatpush1.msra.mxu0 0.0
      %2856 = vmatprep.subr.mxu0 0.0
      %2857 = vmatpush1.msra.mxu0 0.0
      %2858 = vmatprep.subr.mxu0 0.0
      %2859 = vmatpush1.msra.mxu0 0.0
      %2860 = vmatprep.subr.mxu0 0.0
      %2861 = vmatpush1.msra.mxu0 0.0
      %2862 = vmatprep.subr.mxu0 0.0
      %2863 = vmatpush1.msra.mxu0 0.0
      %2864 = vmatprep.subr.mxu0 0.0
      %2865 = vmatpush1.msra.mxu0 0.0
      %2866 = vmatprep.subr.mxu0 0.0
      %2867 = vmatpush1.msra.mxu0 0.0
      %2868 = vmatprep.subr.mxu0 0.0
      %2869 = vmatpush1.msra.mxu0 0.0
      %2870 = vmatprep.subr.mxu0 0.0
      %2871 = vmatpush1.msra.mxu0 0.0
      %2872 = vmatprep.mubr.f32.mxu0 0.0
      %2873 = vmatmul.mubr.f32.gmra.mrb[0].mxu0 %v2806
      %v2874 = vpop.f32.mrb[0].mxu0
      %v2875 = vadd.f32 0.0, %v2874
      %v2876 = vpop.f32.mrb[0].mxu0
      %v2877 = vadd.f32 0.0, %v2876
      %2878 = vdwg.mxu0
      %v2881 = vcombine.low %v2875, %v2877
      %v2883 = vunpack.c.l.s4 1966171168
      %v2884 = vunpack.c.0.s8 %v2883
      %v2885 = vlaneseq
      %v2886 = vshrl.u32 %v2885, 7
      %v2887 = vsub.s32 %v2884, %v2886
      %v2888 = vrot.slane %v2881, %v2887
      %v2890 = vunpack.c.l.s4 1966171168
      %v2891 = vunpack.c.0.s8 %v2890
      %v2892 = vlaneseq
      %v2893 = vshrl.u32 %v2892, 7
      %v2894 = vsub.s32 %v2891, %v2893
      %v2895 = vrot.slane %v2888, %v2894
      %s2897 = scalar_lea.vmem [#allocation2], 21
      %2898 = vst.msk [vmem:[%s2897] ss:$8 sm:$0x3] %vm1246, %v2895
      %2899 = vst.msk [vmem:[%s2897] ss:$8 sm:$0x0] %vm1246, %v2895
      %s2900 = scalar_lea.vmem %s53, 3584
      %v2901 = vld [vmem:[%s2900] sm:$0xff]
      %v2902 = vld [vmem:[%s2900 + $0x8] sm:$0xff]
      %v2903 = vld [vmem:[%s2900 + $0x10] sm:$0xff]
      %v2904 = vld [vmem:[%s2900 + $0x18] sm:$0xff]
      %v2905 = vld [vmem:[%s2900 + $0x20] sm:$0xff]
      %v2906 = vld [vmem:[%s2900 + $0x28] sm:$0xff]
      %v2907 = vld [vmem:[%s2900 + $0x30] sm:$0xff]
      %v2908 = vld [vmem:[%s2900 + $0x38] sm:$0xff]
      %v2909 = vld [vmem:[%s2900 + $0x40] sm:$0xff]
      %v2910 = vld [vmem:[%s2900 + $0x48] sm:$0xff]
      %v2911 = vld [vmem:[%s2900 + $0x50] sm:$0xff]
      %v2912 = vld [vmem:[%s2900 + $0x58] sm:$0xff]
      %v2913 = vld [vmem:[%s2900 + $0x60] sm:$0xff]
      %v2914 = vld [vmem:[%s2900 + $0x68] sm:$0xff]
      %v2915 = vld [vmem:[%s2900 + $0x70] sm:$0xff]
      %v2916 = vld [vmem:[%s2900 + $0x78] sm:$0xff]
      %v2917 = vld [vmem:[%s2900 + $0x80] sm:$0xff]
      %v2918 = vld [vmem:[%s2900 + $0x88] sm:$0xff]
      %v2919 = vld [vmem:[%s2900 + $0x90] sm:$0xff]
      %v2920 = vld [vmem:[%s2900 + $0x98] sm:$0xff]
      %v2921 = vld [vmem:[%s2900 + $0xa0] sm:$0xff]
      %v2922 = vld [vmem:[%s2900 + $0xa8] sm:$0xff]
      %v2923 = vld [vmem:[%s2900 + $0xb0] sm:$0xff]
      %v2924 = vld [vmem:[%s2900 + $0xb8] sm:$0xff]
      %v2925 = vld [vmem:[%s2900 + $0xc0] sm:$0xff]
      %v2926 = vld [vmem:[%s2900 + $0xc8] sm:$0xff]
      %v2927 = vld [vmem:[%s2900 + $0xd0] sm:$0xff]
      %v2928 = vld [vmem:[%s2900 + $0xd8] sm:$0xff]
      %v2929 = vld [vmem:[%s2900 + $0xe0] sm:$0xff]
      %v2930 = vld [vmem:[%s2900 + $0xe8] sm:$0xff]
      %v2931 = vld [vmem:[%s2900 + $0xf0] sm:$0xff]
      %v2932 = vld [vmem:[%s2900 + $0xf8] sm:$0xff]
      %v2933 = vrot.slane %v1118, 6
      %2935 = vmatprep.subr.mxu0 %v2902
      %2936 = vmatpush1.msra.mxu0 %v2901
      %2937 = vmatprep.subr.mxu0 %v2904
      %2938 = vmatpush1.msra.mxu0 %v2903
      %2939 = vmatprep.subr.mxu0 %v2906
      %2940 = vmatpush1.msra.mxu0 %v2905
      %2941 = vmatprep.subr.mxu0 %v2908
      %2942 = vmatpush1.msra.mxu0 %v2907
      %2943 = vmatprep.subr.mxu0 %v2910
      %2944 = vmatpush1.msra.mxu0 %v2909
      %2945 = vmatprep.subr.mxu0 %v2912
      %2946 = vmatpush1.msra.mxu0 %v2911
      %2947 = vmatprep.subr.mxu0 %v2914
      %2948 = vmatpush1.msra.mxu0 %v2913
      %2949 = vmatprep.subr.mxu0 %v2916
      %2950 = vmatpush1.msra.mxu0 %v2915
      %2951 = vmatprep.subr.mxu0 %v2918
      %2952 = vmatpush1.msra.mxu0 %v2917
      %2953 = vmatprep.subr.mxu0 %v2920
      %2954 = vmatpush1.msra.mxu0 %v2919
      %2955 = vmatprep.subr.mxu0 %v2922
      %2956 = vmatpush1.msra.mxu0 %v2921
      %2957 = vmatprep.subr.mxu0 %v2924
      %2958 = vmatpush1.msra.mxu0 %v2923
      %2959 = vmatprep.subr.mxu0 %v2926
      %2960 = vmatpush1.msra.mxu0 %v2925
      %2961 = vmatprep.subr.mxu0 %v2928
      %2962 = vmatpush1.msra.mxu0 %v2927
      %2963 = vmatprep.subr.mxu0 %v2930
      %2964 = vmatpush1.msra.mxu0 %v2929
      %2965 = vmatprep.subr.mxu0 %v2932
      %2966 = vmatpush1.msra.mxu0 %v2931
      %2967 = vmatprep.subr.mxu0 0.0
      %2968 = vmatpush1.msra.mxu0 0.0
      %2969 = vmatprep.subr.mxu0 0.0
      %2970 = vmatpush1.msra.mxu0 0.0
      %2971 = vmatprep.subr.mxu0 0.0
      %2972 = vmatpush1.msra.mxu0 0.0
      %2973 = vmatprep.subr.mxu0 0.0
      %2974 = vmatpush1.msra.mxu0 0.0
      %2975 = vmatprep.subr.mxu0 0.0
      %2976 = vmatpush1.msra.mxu0 0.0
      %2977 = vmatprep.subr.mxu0 0.0
      %2978 = vmatpush1.msra.mxu0 0.0
      %2979 = vmatprep.subr.mxu0 0.0
      %2980 = vmatpush1.msra.mxu0 0.0
      %2981 = vmatprep.subr.mxu0 0.0
      %2982 = vmatpush1.msra.mxu0 0.0
      %2983 = vmatprep.subr.mxu0 0.0
      %2984 = vmatpush1.msra.mxu0 0.0
      %2985 = vmatprep.subr.mxu0 0.0
      %2986 = vmatpush1.msra.mxu0 0.0
      %2987 = vmatprep.subr.mxu0 0.0
      %2988 = vmatpush1.msra.mxu0 0.0
      %2989 = vmatprep.subr.mxu0 0.0
      %2990 = vmatpush1.msra.mxu0 0.0
      %2991 = vmatprep.subr.mxu0 0.0
      %2992 = vmatpush1.msra.mxu0 0.0
      %2993 = vmatprep.subr.mxu0 0.0
      %2994 = vmatpush1.msra.mxu0 0.0
      %2995 = vmatprep.subr.mxu0 0.0
      %2996 = vmatpush1.msra.mxu0 0.0
      %2997 = vmatprep.subr.mxu0 0.0
      %2998 = vmatpush1.msra.mxu0 0.0
      %2999 = vmatprep.mubr.f32.mxu0 0.0
      %3000 = vmatmul.mubr.f32.gmra.mrb[0].mxu0 %v2933
      %v3001 = vpop.f32.mrb[0].mxu0
      %v3002 = vadd.f32 0.0, %v3001
      %v3003 = vpop.f32.mrb[0].mxu0
      %v3004 = vadd.f32 0.0, %v3003
      %3005 = vdwg.mxu0
      %v3008 = vcombine.low %v3002, %v3004
      %v3010 = vunpack.c.l.s4 1966171168
      %v3011 = vunpack.c.0.s8 %v3010
      %v3012 = vlaneseq
      %v3013 = vshrl.u32 %v3012, 7
      %v3014 = vsub.s32 %v3011, %v3013
      %v3015 = vrot.slane %v3008, %v3014
      %v3017 = vunpack.c.l.s4 1966171168
      %v3018 = vunpack.c.0.s8 %v3017
      %v3019 = vlaneseq
      %v3020 = vshrl.u32 %v3019, 7
      %v3021 = vsub.s32 %v3018, %v3020
      %v3022 = vrot.slane %v3015, %v3021
      %s3024 = scalar_lea.vmem [#allocation2], 22
      %3025 = vst.msk [vmem:[%s3024] ss:$8 sm:$0x3] %vm1246, %v3022
      %3026 = vst.msk [vmem:[%s3024] ss:$8 sm:$0x0] %vm1246, %v3022
      %s3027 = scalar_lea.vmem %s53, 3840
      %v3028 = vld [vmem:[%s3027] sm:$0xff]
      %v3029 = vld [vmem:[%s3027 + $0x8] sm:$0xff]
      %v3030 = vld [vmem:[%s3027 + $0x10] sm:$0xff]
      %v3031 = vld [vmem:[%s3027 + $0x18] sm:$0xff]
      %v3032 = vld [vmem:[%s3027 + $0x20] sm:$0xff]
      %v3033 = vld [vmem:[%s3027 + $0x28] sm:$0xff]
      %v3034 = vld [vmem:[%s3027 + $0x30] sm:$0xff]
      %v3035 = vld [vmem:[%s3027 + $0x38] sm:$0xff]
      %v3036 = vld [vmem:[%s3027 + $0x40] sm:$0xff]
      %v3037 = vld [vmem:[%s3027 + $0x48] sm:$0xff]
      %v3038 = vld [vmem:[%s3027 + $0x50] sm:$0xff]
      %v3039 = vld [vmem:[%s3027 + $0x58] sm:$0xff]
      %v3040 = vld [vmem:[%s3027 + $0x60] sm:$0xff]
      %v3041 = vld [vmem:[%s3027 + $0x68] sm:$0xff]
      %v3042 = vld [vmem:[%s3027 + $0x70] sm:$0xff]
      %v3043 = vld [vmem:[%s3027 + $0x78] sm:$0xff]
      %v3044 = vld [vmem:[%s3027 + $0x80] sm:$0xff]
      %v3045 = vld [vmem:[%s3027 + $0x88] sm:$0xff]
      %v3046 = vld [vmem:[%s3027 + $0x90] sm:$0xff]
      %v3047 = vld [vmem:[%s3027 + $0x98] sm:$0xff]
      %v3048 = vld [vmem:[%s3027 + $0xa0] sm:$0xff]
      %v3049 = vld [vmem:[%s3027 + $0xa8] sm:$0xff]
      %v3050 = vld [vmem:[%s3027 + $0xb0] sm:$0xff]
      %v3051 = vld [vmem:[%s3027 + $0xb8] sm:$0xff]
      %v3052 = vld [vmem:[%s3027 + $0xc0] sm:$0xff]
      %v3053 = vld [vmem:[%s3027 + $0xc8] sm:$0xff]
      %v3054 = vld [vmem:[%s3027 + $0xd0] sm:$0xff]
      %v3055 = vld [vmem:[%s3027 + $0xd8] sm:$0xff]
      %v3056 = vld [vmem:[%s3027 + $0xe0] sm:$0xff]
      %v3057 = vld [vmem:[%s3027 + $0xe8] sm:$0xff]
      %v3058 = vld [vmem:[%s3027 + $0xf0] sm:$0xff]
      %v3059 = vld [vmem:[%s3027 + $0xf8] sm:$0xff]
      %v3060 = vrot.slane %v1118, 7
      %3062 = vmatprep.subr.mxu0 %v3029
      %3063 = vmatpush1.msra.mxu0 %v3028
      %3064 = vmatprep.subr.mxu0 %v3031
      %3065 = vmatpush1.msra.mxu0 %v3030
      %3066 = vmatprep.subr.mxu0 %v3033
      %3067 = vmatpush1.msra.mxu0 %v3032
      %3068 = vmatprep.subr.mxu0 %v3035
      %3069 = vmatpush1.msra.mxu0 %v3034
      %3070 = vmatprep.subr.mxu0 %v3037
      %3071 = vmatpush1.msra.mxu0 %v3036
      %3072 = vmatprep.subr.mxu0 %v3039
      %3073 = vmatpush1.msra.mxu0 %v3038
      %3074 = vmatprep.subr.mxu0 %v3041
      %3075 = vmatpush1.msra.mxu0 %v3040
      %3076 = vmatprep.subr.mxu0 %v3043
      %3077 = vmatpush1.msra.mxu0 %v3042
      %3078 = vmatprep.subr.mxu0 %v3045
      %3079 = vmatpush1.msra.mxu0 %v3044
      %3080 = vmatprep.subr.mxu0 %v3047
      %3081 = vmatpush1.msra.mxu0 %v3046
      %3082 = vmatprep.subr.mxu0 %v3049
      %3083 = vmatpush1.msra.mxu0 %v3048
      %3084 = vmatprep.subr.mxu0 %v3051
      %3085 = vmatpush1.msra.mxu0 %v3050
      %3086 = vmatprep.subr.mxu0 %v3053
      %3087 = vmatpush1.msra.mxu0 %v3052
      %3088 = vmatprep.subr.mxu0 %v3055
      %3089 = vmatpush1.msra.mxu0 %v3054
      %3090 = vmatprep.subr.mxu0 %v3057
      %3091 = vmatpush1.msra.mxu0 %v3056
      %3092 = vmatprep.subr.mxu0 %v3059
      %3093 = vmatpush1.msra.mxu0 %v3058
      %3094 = vmatprep.subr.mxu0 0.0
      %3095 = vmatpush1.msra.mxu0 0.0
      %3096 = vmatprep.subr.mxu0 0.0
      %3097 = vmatpush1.msra.mxu0 0.0
      %3098 = vmatprep.subr.mxu0 0.0
      %3099 = vmatpush1.msra.mxu0 0.0
      %3100 = vmatprep.subr.mxu0 0.0
      %3101 = vmatpush1.msra.mxu0 0.0
      %3102 = vmatprep.subr.mxu0 0.0
      %3103 = vmatpush1.msra.mxu0 0.0
      %3104 = vmatprep.subr.mxu0 0.0
      %3105 = vmatpush1.msra.mxu0 0.0
      %3106 = vmatprep.subr.mxu0 0.0
      %3107 = vmatpush1.msra.mxu0 0.0
      %3108 = vmatprep.subr.mxu0 0.0
      %3109 = vmatpush1.msra.mxu0 0.0
      %3110 = vmatprep.subr.mxu0 0.0
      %3111 = vmatpush1.msra.mxu0 0.0
      %3112 = vmatprep.subr.mxu0 0.0
      %3113 = vmatpush1.msra.mxu0 0.0
      %3114 = vmatprep.subr.mxu0 0.0
      %3115 = vmatpush1.msra.mxu0 0.0
      %3116 = vmatprep.subr.mxu0 0.0
      %3117 = vmatpush1.msra.mxu0 0.0
      %3118 = vmatprep.subr.mxu0 0.0
      %3119 = vmatpush1.msra.mxu0 0.0
      %3120 = vmatprep.subr.mxu0 0.0
      %3121 = vmatpush1.msra.mxu0 0.0
      %3122 = vmatprep.subr.mxu0 0.0
      %3123 = vmatpush1.msra.mxu0 0.0
      %3124 = vmatprep.subr.mxu0 0.0
      %3125 = vmatpush1.msra.mxu0 0.0
      %3126 = vmatprep.mubr.f32.mxu0 0.0
      %3127 = vmatmul.mubr.f32.gmra.mrb[0].mxu0 %v3060
      %v3128 = vpop.f32.mrb[0].mxu0
      %v3129 = vadd.f32 0.0, %v3128
      %v3130 = vpop.f32.mrb[0].mxu0
      %v3131 = vadd.f32 0.0, %v3130
      %3132 = vdwg.mxu0
      %v3135 = vcombine.low %v3129, %v3131
      %v3137 = vunpack.c.l.s4 1966171168
      %v3138 = vunpack.c.0.s8 %v3137
      %v3139 = vlaneseq
      %v3140 = vshrl.u32 %v3139, 7
      %v3141 = vsub.s32 %v3138, %v3140
      %v3142 = vrot.slane %v3135, %v3141
      %v3144 = vunpack.c.l.s4 1966171168
      %v3145 = vunpack.c.0.s8 %v3144
      %v3146 = vlaneseq
      %v3147 = vshrl.u32 %v3146, 7
      %v3148 = vsub.s32 %v3145, %v3147
      %v3149 = vrot.slane %v3142, %v3148
      %s3151 = scalar_lea.vmem [#allocation2], 23
      %3152 = vst.msk [vmem:[%s3151] ss:$8 sm:$0x3] %vm1246, %v3149
      %3153 = vst.msk [vmem:[%s3151] ss:$8 sm:$0x0] %vm1246, %v3149
      %s3154 = scalar_lea.vmem %s53, 4096
      %v3155 = vld [vmem:[%s3154] sm:$0xff]
      %v3156 = vld [vmem:[%s3154 + $0x8] sm:$0xff]
      %v3157 = vld [vmem:[%s3154 + $0x10] sm:$0xff]
      %v3158 = vld [vmem:[%s3154 + $0x18] sm:$0xff]
      %v3159 = vld [vmem:[%s3154 + $0x20] sm:$0xff]
      %v3160 = vld [vmem:[%s3154 + $0x28] sm:$0xff]
      %v3161 = vld [vmem:[%s3154 + $0x30] sm:$0xff]
      %v3162 = vld [vmem:[%s3154 + $0x38] sm:$0xff]
      %v3163 = vld [vmem:[%s3154 + $0x40] sm:$0xff]
      %v3164 = vld [vmem:[%s3154 + $0x48] sm:$0xff]
      %v3165 = vld [vmem:[%s3154 + $0x50] sm:$0xff]
      %v3166 = vld [vmem:[%s3154 + $0x58] sm:$0xff]
      %v3167 = vld [vmem:[%s3154 + $0x60] sm:$0xff]
      %v3168 = vld [vmem:[%s3154 + $0x68] sm:$0xff]
      %v3169 = vld [vmem:[%s3154 + $0x70] sm:$0xff]
      %v3170 = vld [vmem:[%s3154 + $0x78] sm:$0xff]
      %v3171 = vld [vmem:[%s3154 + $0x80] sm:$0xff]
      %v3172 = vld [vmem:[%s3154 + $0x88] sm:$0xff]
      %v3173 = vld [vmem:[%s3154 + $0x90] sm:$0xff]
      %v3174 = vld [vmem:[%s3154 + $0x98] sm:$0xff]
      %v3175 = vld [vmem:[%s3154 + $0xa0] sm:$0xff]
      %v3176 = vld [vmem:[%s3154 + $0xa8] sm:$0xff]
      %v3177 = vld [vmem:[%s3154 + $0xb0] sm:$0xff]
      %v3178 = vld [vmem:[%s3154 + $0xb8] sm:$0xff]
      %v3179 = vld [vmem:[%s3154 + $0xc0] sm:$0xff]
      %v3180 = vld [vmem:[%s3154 + $0xc8] sm:$0xff]
      %v3181 = vld [vmem:[%s3154 + $0xd0] sm:$0xff]
      %v3182 = vld [vmem:[%s3154 + $0xd8] sm:$0xff]
      %v3183 = vld [vmem:[%s3154 + $0xe0] sm:$0xff]
      %v3184 = vld [vmem:[%s3154 + $0xe8] sm:$0xff]
      %v3185 = vld [vmem:[%s3154 + $0xf0] sm:$0xff]
      %v3186 = vld [vmem:[%s3154 + $0xf8] sm:$0xff]
      %3187 = vmatprep.subr.mxu0 %v3156
      %3188 = vmatpush1.msra.mxu0 %v3155
      %3189 = vmatprep.subr.mxu0 %v3158
      %3190 = vmatpush1.msra.mxu0 %v3157
      %3191 = vmatprep.subr.mxu0 %v3160
      %3192 = vmatpush1.msra.mxu0 %v3159
      %3193 = vmatprep.subr.mxu0 %v3162
      %3194 = vmatpush1.msra.mxu0 %v3161
      %3195 = vmatprep.subr.mxu0 %v3164
      %3196 = vmatpush1.msra.mxu0 %v3163
      %3197 = vmatprep.subr.mxu0 %v3166
      %3198 = vmatpush1.msra.mxu0 %v3165
      %3199 = vmatprep.subr.mxu0 %v3168
      %3200 = vmatpush1.msra.mxu0 %v3167
      %3201 = vmatprep.subr.mxu0 %v3170
      %3202 = vmatpush1.msra.mxu0 %v3169
      %3203 = vmatprep.subr.mxu0 %v3172
      %3204 = vmatpush1.msra.mxu0 %v3171
      %3205 = vmatprep.subr.mxu0 %v3174
      %3206 = vmatpush1.msra.mxu0 %v3173
      %3207 = vmatprep.subr.mxu0 %v3176
      %3208 = vmatpush1.msra.mxu0 %v3175
      %3209 = vmatprep.subr.mxu0 %v3178
      %3210 = vmatpush1.msra.mxu0 %v3177
      %3211 = vmatprep.subr.mxu0 %v3180
      %3212 = vmatpush1.msra.mxu0 %v3179
      %3213 = vmatprep.subr.mxu0 %v3182
      %3214 = vmatpush1.msra.mxu0 %v3181
      %3215 = vmatprep.subr.mxu0 %v3184
      %3216 = vmatpush1.msra.mxu0 %v3183
      %3217 = vmatprep.subr.mxu0 %v3186
      %3218 = vmatpush1.msra.mxu0 %v3185
      %3219 = vmatprep.subr.mxu0 0.0
      %3220 = vmatpush1.msra.mxu0 0.0
      %3221 = vmatprep.subr.mxu0 0.0
      %3222 = vmatpush1.msra.mxu0 0.0
      %3223 = vmatprep.subr.mxu0 0.0
      %3224 = vmatpush1.msra.mxu0 0.0
      %3225 = vmatprep.subr.mxu0 0.0
      %3226 = vmatpush1.msra.mxu0 0.0
      %3227 = vmatprep.subr.mxu0 0.0
      %3228 = vmatpush1.msra.mxu0 0.0
      %3229 = vmatprep.subr.mxu0 0.0
      %3230 = vmatpush1.msra.mxu0 0.0
      %3231 = vmatprep.subr.mxu0 0.0
      %3232 = vmatpush1.msra.mxu0 0.0
      %3233 = vmatprep.subr.mxu0 0.0
      %3234 = vmatpush1.msra.mxu0 0.0
      %3235 = vmatprep.subr.mxu0 0.0
      %3236 = vmatpush1.msra.mxu0 0.0
      %3237 = vmatprep.subr.mxu0 0.0
      %3238 = vmatpush1.msra.mxu0 0.0
      %3239 = vmatprep.subr.mxu0 0.0
      %3240 = vmatpush1.msra.mxu0 0.0
      %3241 = vmatprep.subr.mxu0 0.0
      %3242 = vmatpush1.msra.mxu0 0.0
      %3243 = vmatprep.subr.mxu0 0.0
      %3244 = vmatpush1.msra.mxu0 0.0
      %3245 = vmatprep.subr.mxu0 0.0
      %3246 = vmatpush1.msra.mxu0 0.0
      %3247 = vmatprep.subr.mxu0 0.0
      %3248 = vmatpush1.msra.mxu0 0.0
      %3249 = vmatprep.subr.mxu0 0.0
      %3250 = vmatpush1.msra.mxu0 0.0
      %3251 = vmatprep.mubr.f32.mxu0 0.0
      %3252 = vmatmul.mubr.f32.gmra.mrb[0].mxu0 %v1119
      %v3253 = vpop.f32.mrb[0].mxu0
      %v3254 = vadd.f32 0.0, %v3253
      %v3255 = vpop.f32.mrb[0].mxu0
      %v3256 = vadd.f32 0.0, %v3255
      %3257 = vdwg.mxu0
      %v3260 = vcombine.low %v3254, %v3256
      %v3262 = vunpack.c.l.s4 1966171168
      %v3263 = vunpack.c.0.s8 %v3262
      %v3264 = vlaneseq
      %v3265 = vshrl.u32 %v3264, 7
      %v3266 = vsub.s32 %v3263, %v3265
      %v3267 = vrot.slane %v3260, %v3266
      %v3269 = vunpack.c.l.s4 1966171168
      %v3270 = vunpack.c.0.s8 %v3269
      %v3271 = vlaneseq
      %v3272 = vshrl.u32 %v3271, 7
      %v3273 = vsub.s32 %v3270, %v3272
      %v3274 = vrot.slane %v3267, %v3273
      %s3276 = scalar_lea.vmem [#allocation2], 32
      %3277 = vst.msk [vmem:[%s3276] ss:$8 sm:$0x3] %vm1246, %v3274
      %3278 = vst.msk [vmem:[%s3276] ss:$8 sm:$0x0] %vm1246, %v3274
      %s3279 = scalar_lea.vmem %s53, 4352
      %v3280 = vld [vmem:[%s3279] sm:$0xff]
      %v3281 = vld [vmem:[%s3279 + $0x8] sm:$0xff]
      %v3282 = vld [vmem:[%s3279 + $0x10] sm:$0xff]
      %v3283 = vld [vmem:[%s3279 + $0x18] sm:$0xff]
      %v3284 = vld [vmem:[%s3279 + $0x20] sm:$0xff]
      %v3285 = vld [vmem:[%s3279 + $0x28] sm:$0xff]
      %v3286 = vld [vmem:[%s3279 + $0x30] sm:$0xff]
      %v3287 = vld [vmem:[%s3279 + $0x38] sm:$0xff]
      %v3288 = vld [vmem:[%s3279 + $0x40] sm:$0xff]
      %v3289 = vld [vmem:[%s3279 + $0x48] sm:$0xff]
      %v3290 = vld [vmem:[%s3279 + $0x50] sm:$0xff]
      %v3291 = vld [vmem:[%s3279 + $0x58] sm:$0xff]
      %v3292 = vld [vmem:[%s3279 + $0x60] sm:$0xff]
      %v3293 = vld [vmem:[%s3279 + $0x68] sm:$0xff]
      %v3294 = vld [vmem:[%s3279 + $0x70] sm:$0xff]
      %v3295 = vld [vmem:[%s3279 + $0x78] sm:$0xff]
      %v3296 = vld [vmem:[%s3279 + $0x80] sm:$0xff]
      %v3297 = vld [vmem:[%s3279 + $0x88] sm:$0xff]
      %v3298 = vld [vmem:[%s3279 + $0x90] sm:$0xff]
      %v3299 = vld [vmem:[%s3279 + $0x98] sm:$0xff]
      %v3300 = vld [vmem:[%s3279 + $0xa0] sm:$0xff]
      %v3301 = vld [vmem:[%s3279 + $0xa8] sm:$0xff]
      %v3302 = vld [vmem:[%s3279 + $0xb0] sm:$0xff]
      %v3303 = vld [vmem:[%s3279 + $0xb8] sm:$0xff]
      %v3304 = vld [vmem:[%s3279 + $0xc0] sm:$0xff]
      %v3305 = vld [vmem:[%s3279 + $0xc8] sm:$0xff]
      %v3306 = vld [vmem:[%s3279 + $0xd0] sm:$0xff]
      %v3307 = vld [vmem:[%s3279 + $0xd8] sm:$0xff]
      %v3308 = vld [vmem:[%s3279 + $0xe0] sm:$0xff]
      %v3309 = vld [vmem:[%s3279 + $0xe8] sm:$0xff]
      %v3310 = vld [vmem:[%s3279 + $0xf0] sm:$0xff]
      %v3311 = vld [vmem:[%s3279 + $0xf8] sm:$0xff]
      %v3313 = vrot.slane %v1119, 1
      %3315 = vmatprep.subr.mxu0 %v3281
      %3316 = vmatpush1.msra.mxu0 %v3280
      %3317 = vmatprep.subr.mxu0 %v3283
      %3318 = vmatpush1.msra.mxu0 %v3282
      %3319 = vmatprep.subr.mxu0 %v3285
      %3320 = vmatpush1.msra.mxu0 %v3284
      %3321 = vmatprep.subr.mxu0 %v3287
      %3322 = vmatpush1.msra.mxu0 %v3286
      %3323 = vmatprep.subr.mxu0 %v3289
      %3324 = vmatpush1.msra.mxu0 %v3288
      %3325 = vmatprep.subr.mxu0 %v3291
      %3326 = vmatpush1.msra.mxu0 %v3290
      %3327 = vmatprep.subr.mxu0 %v3293
      %3328 = vmatpush1.msra.mxu0 %v3292
      %3329 = vmatprep.subr.mxu0 %v3295
      %3330 = vmatpush1.msra.mxu0 %v3294
      %3331 = vmatprep.subr.mxu0 %v3297
      %3332 = vmatpush1.msra.mxu0 %v3296
      %3333 = vmatprep.subr.mxu0 %v3299
      %3334 = vmatpush1.msra.mxu0 %v3298
      %3335 = vmatprep.subr.mxu0 %v3301
      %3336 = vmatpush1.msra.mxu0 %v3300
      %3337 = vmatprep.subr.mxu0 %v3303
      %3338 = vmatpush1.msra.mxu0 %v3302
      %3339 = vmatprep.subr.mxu0 %v3305
      %3340 = vmatpush1.msra.mxu0 %v3304
      %3341 = vmatprep.subr.mxu0 %v3307
      %3342 = vmatpush1.msra.mxu0 %v3306
      %3343 = vmatprep.subr.mxu0 %v3309
      %3344 = vmatpush1.msra.mxu0 %v3308
      %3345 = vmatprep.subr.mxu0 %v3311
      %3346 = vmatpush1.msra.mxu0 %v3310
      %3347 = vmatprep.subr.mxu0 0.0
      %3348 = vmatpush1.msra.mxu0 0.0
      %3349 = vmatprep.subr.mxu0 0.0
      %3350 = vmatpush1.msra.mxu0 0.0
      %3351 = vmatprep.subr.mxu0 0.0
      %3352 = vmatpush1.msra.mxu0 0.0
      %3353 = vmatprep.subr.mxu0 0.0
      %3354 = vmatpush1.msra.mxu0 0.0
      %3355 = vmatprep.subr.mxu0 0.0
      %3356 = vmatpush1.msra.mxu0 0.0
      %3357 = vmatprep.subr.mxu0 0.0
      %3358 = vmatpush1.msra.mxu0 0.0
      %3359 = vmatprep.subr.mxu0 0.0
      %3360 = vmatpush1.msra.mxu0 0.0
      %3361 = vmatprep.subr.mxu0 0.0
      %3362 = vmatpush1.msra.mxu0 0.0
      %3363 = vmatprep.subr.mxu0 0.0
      %3364 = vmatpush1.msra.mxu0 0.0
      %3365 = vmatprep.subr.mxu0 0.0
      %3366 = vmatpush1.msra.mxu0 0.0
      %3367 = vmatprep.subr.mxu0 0.0
      %3368 = vmatpush1.msra.mxu0 0.0
      %3369 = vmatprep.subr.mxu0 0.0
      %3370 = vmatpush1.msra.mxu0 0.0
      %3371 = vmatprep.subr.mxu0 0.0
      %3372 = vmatpush1.msra.mxu0 0.0
      %3373 = vmatprep.subr.mxu0 0.0
      %3374 = vmatpush1.msra.mxu0 0.0
      %3375 = vmatprep.subr.mxu0 0.0
      %3376 = vmatpush1.msra.mxu0 0.0
      %3377 = vmatprep.subr.mxu0 0.0
      %3378 = vmatpush1.msra.mxu0 0.0
      %3379 = vmatprep.mubr.f32.mxu0 0.0
      %3380 = vmatmul.mubr.f32.gmra.mrb[0].mxu0 %v3313
      %v3381 = vpop.f32.mrb[0].mxu0
      %v3382 = vadd.f32 0.0, %v3381
      %v3383 = vpop.f32.mrb[0].mxu0
      %v3384 = vadd.f32 0.0, %v3383
      %3385 = vdwg.mxu0
      %v3388 = vcombine.low %v3382, %v3384
      %v3390 = vunpack.c.l.s4 1966171168
      %v3391 = vunpack.c.0.s8 %v3390
      %v3392 = vlaneseq
      %v3393 = vshrl.u32 %v3392, 7
      %v3394 = vsub.s32 %v3391, %v3393
      %v3395 = vrot.slane %v3388, %v3394
      %v3397 = vunpack.c.l.s4 1966171168
      %v3398 = vunpack.c.0.s8 %v3397
      %v3399 = vlaneseq
      %v3400 = vshrl.u32 %v3399, 7
      %v3401 = vsub.s32 %v3398, %v3400
      %v3402 = vrot.slane %v3395, %v3401
      %s3404 = scalar_lea.vmem [#allocation2], 33
      %3405 = vst.msk [vmem:[%s3404] ss:$8 sm:$0x3] %vm1246, %v3402
      %3406 = vst.msk [vmem:[%s3404] ss:$8 sm:$0x0] %vm1246, %v3402
      %s3407 = scalar_lea.vmem %s53, 4608
      %v3408 = vld [vmem:[%s3407] sm:$0xff]
      %v3409 = vld [vmem:[%s3407 + $0x8] sm:$0xff]
      %v3410 = vld [vmem:[%s3407 + $0x10] sm:$0xff]
      %v3411 = vld [vmem:[%s3407 + $0x18] sm:$0xff]
      %v3412 = vld [vmem:[%s3407 + $0x20] sm:$0xff]
      %v3413 = vld [vmem:[%s3407 + $0x28] sm:$0xff]
      %v3414 = vld [vmem:[%s3407 + $0x30] sm:$0xff]
      %v3415 = vld [vmem:[%s3407 + $0x38] sm:$0xff]
      %v3416 = vld [vmem:[%s3407 + $0x40] sm:$0xff]
      %v3417 = vld [vmem:[%s3407 + $0x48] sm:$0xff]
      %v3418 = vld [vmem:[%s3407 + $0x50] sm:$0xff]
      %v3419 = vld [vmem:[%s3407 + $0x58] sm:$0xff]
      %v3420 = vld [vmem:[%s3407 + $0x60] sm:$0xff]
      %v3421 = vld [vmem:[%s3407 + $0x68] sm:$0xff]
      %v3422 = vld [vmem:[%s3407 + $0x70] sm:$0xff]
      %v3423 = vld [vmem:[%s3407 + $0x78] sm:$0xff]
      %v3424 = vld [vmem:[%s3407 + $0x80] sm:$0xff]
      %v3425 = vld [vmem:[%s3407 + $0x88] sm:$0xff]
      %v3426 = vld [vmem:[%s3407 + $0x90] sm:$0xff]
      %v3427 = vld [vmem:[%s3407 + $0x98] sm:$0xff]
      %v3428 = vld [vmem:[%s3407 + $0xa0] sm:$0xff]
      %v3429 = vld [vmem:[%s3407 + $0xa8] sm:$0xff]
      %v3430 = vld [vmem:[%s3407 + $0xb0] sm:$0xff]
      %v3431 = vld [vmem:[%s3407 + $0xb8] sm:$0xff]
      %v3432 = vld [vmem:[%s3407 + $0xc0] sm:$0xff]
      %v3433 = vld [vmem:[%s3407 + $0xc8] sm:$0xff]
      %v3434 = vld [vmem:[%s3407 + $0xd0] sm:$0xff]
      %v3435 = vld [vmem:[%s3407 + $0xd8] sm:$0xff]
      %v3436 = vld [vmem:[%s3407 + $0xe0] sm:$0xff]
      %v3437 = vld [vmem:[%s3407 + $0xe8] sm:$0xff]
      %v3438 = vld [vmem:[%s3407 + $0xf0] sm:$0xff]
      %v3439 = vld [vmem:[%s3407 + $0xf8] sm:$0xff]
      %v3440 = vrot.slane %v1119, 2
      %3442 = vmatprep.subr.mxu0 %v3409
      %3443 = vmatpush1.msra.mxu0 %v3408
      %3444 = vmatprep.subr.mxu0 %v3411
      %3445 = vmatpush1.msra.mxu0 %v3410
      %3446 = vmatprep.subr.mxu0 %v3413
      %3447 = vmatpush1.msra.mxu0 %v3412
      %3448 = vmatprep.subr.mxu0 %v3415
      %3449 = vmatpush1.msra.mxu0 %v3414
      %3450 = vmatprep.subr.mxu0 %v3417
      %3451 = vmatpush1.msra.mxu0 %v3416
      %3452 = vmatprep.subr.mxu0 %v3419
      %3453 = vmatpush1.msra.mxu0 %v3418
      %3454 = vmatprep.subr.mxu0 %v3421
      %3455 = vmatpush1.msra.mxu0 %v3420
      %3456 = vmatprep.subr.mxu0 %v3423
      %3457 = vmatpush1.msra.mxu0 %v3422
      %3458 = vmatprep.subr.mxu0 %v3425
      %3459 = vmatpush1.msra.mxu0 %v3424
      %3460 = vmatprep.subr.mxu0 %v3427
      %3461 = vmatpush1.msra.mxu0 %v3426
      %3462 = vmatprep.subr.mxu0 %v3429
      %3463 = vmatpush1.msra.mxu0 %v3428
      %3464 = vmatprep.subr.mxu0 %v3431
      %3465 = vmatpush1.msra.mxu0 %v3430
      %3466 = vmatprep.subr.mxu0 %v3433
      %3467 = vmatpush1.msra.mxu0 %v3432
      %3468 = vmatprep.subr.mxu0 %v3435
      %3469 = vmatpush1.msra.mxu0 %v3434
      %3470 = vmatprep.subr.mxu0 %v3437
      %3471 = vmatpush1.msra.mxu0 %v3436
      %3472 = vmatprep.subr.mxu0 %v3439
      %3473 = vmatpush1.msra.mxu0 %v3438
      %3474 = vmatprep.subr.mxu0 0.0
      %3475 = vmatpush1.msra.mxu0 0.0
      %3476 = vmatprep.subr.mxu0 0.0
      %3477 = vmatpush1.msra.mxu0 0.0
      %3478 = vmatprep.subr.mxu0 0.0
      %3479 = vmatpush1.msra.mxu0 0.0
      %3480 = vmatprep.subr.mxu0 0.0
      %3481 = vmatpush1.msra.mxu0 0.0
      %3482 = vmatprep.subr.mxu0 0.0
      %3483 = vmatpush1.msra.mxu0 0.0
      %3484 = vmatprep.subr.mxu0 0.0
      %3485 = vmatpush1.msra.mxu0 0.0
      %3486 = vmatprep.subr.mxu0 0.0
      %3487 = vmatpush1.msra.mxu0 0.0
      %3488 = vmatprep.subr.mxu0 0.0
      %3489 = vmatpush1.msra.mxu0 0.0
      %3490 = vmatprep.subr.mxu0 0.0
      %3491 = vmatpush1.msra.mxu0 0.0
      %3492 = vmatprep.subr.mxu0 0.0
      %3493 = vmatpush1.msra.mxu0 0.0
      %3494 = vmatprep.subr.mxu0 0.0
      %3495 = vmatpush1.msra.mxu0 0.0
      %3496 = vmatprep.subr.mxu0 0.0
      %3497 = vmatpush1.msra.mxu0 0.0
      %3498 = vmatprep.subr.mxu0 0.0
      %3499 = vmatpush1.msra.mxu0 0.0
      %3500 = vmatprep.subr.mxu0 0.0
      %3501 = vmatpush1.msra.mxu0 0.0
      %3502 = vmatprep.subr.mxu0 0.0
      %3503 = vmatpush1.msra.mxu0 0.0
      %3504 = vmatprep.subr.mxu0 0.0
      %3505 = vmatpush1.msra.mxu0 0.0
      %3506 = vmatprep.mubr.f32.mxu0 0.0
      %3507 = vmatmul.mubr.f32.gmra.mrb[0].mxu0 %v3440
      %v3508 = vpop.f32.mrb[0].mxu0
      %v3509 = vadd.f32 0.0, %v3508
      %v3510 = vpop.f32.mrb[0].mxu0
      %v3511 = vadd.f32 0.0, %v3510
      %3512 = vdwg.mxu0
      %v3515 = vcombine.low %v3509, %v3511
      %v3517 = vunpack.c.l.s4 1966171168
      %v3518 = vunpack.c.0.s8 %v3517
      %v3519 = vlaneseq
      %v3520 = vshrl.u32 %v3519, 7
      %v3521 = vsub.s32 %v3518, %v3520
      %v3522 = vrot.slane %v3515, %v3521
      %v3524 = vunpack.c.l.s4 1966171168
      %v3525 = vunpack.c.0.s8 %v3524
      %v3526 = vlaneseq
      %v3527 = vshrl.u32 %v3526, 7
      %v3528 = vsub.s32 %v3525, %v3527
      %v3529 = vrot.slane %v3522, %v3528
      %s3531 = scalar_lea.vmem [#allocation2], 34
      %3532 = vst.msk [vmem:[%s3531] ss:$8 sm:$0x3] %vm1246, %v3529
      %3533 = vst.msk [vmem:[%s3531] ss:$8 sm:$0x0] %vm1246, %v3529
      %s3534 = scalar_lea.vmem %s53, 4864
      %v3535 = vld [vmem:[%s3534] sm:$0xff]
      %v3536 = vld [vmem:[%s3534 + $0x8] sm:$0xff]
      %v3537 = vld [vmem:[%s3534 + $0x10] sm:$0xff]
      %v3538 = vld [vmem:[%s3534 + $0x18] sm:$0xff]
      %v3539 = vld [vmem:[%s3534 + $0x20] sm:$0xff]
      %v3540 = vld [vmem:[%s3534 + $0x28] sm:$0xff]
      %v3541 = vld [vmem:[%s3534 + $0x30] sm:$0xff]
      %v3542 = vld [vmem:[%s3534 + $0x38] sm:$0xff]
      %v3543 = vld [vmem:[%s3534 + $0x40] sm:$0xff]
      %v3544 = vld [vmem:[%s3534 + $0x48] sm:$0xff]
      %v3545 = vld [vmem:[%s3534 + $0x50] sm:$0xff]
      %v3546 = vld [vmem:[%s3534 + $0x58] sm:$0xff]
      %v3547 = vld [vmem:[%s3534 + $0x60] sm:$0xff]
      %v3548 = vld [vmem:[%s3534 + $0x68] sm:$0xff]
      %v3549 = vld [vmem:[%s3534 + $0x70] sm:$0xff]
      %v3550 = vld [vmem:[%s3534 + $0x78] sm:$0xff]
      %v3551 = vld [vmem:[%s3534 + $0x80] sm:$0xff]
      %v3552 = vld [vmem:[%s3534 + $0x88] sm:$0xff]
      %v3553 = vld [vmem:[%s3534 + $0x90] sm:$0xff]
      %v3554 = vld [vmem:[%s3534 + $0x98] sm:$0xff]
      %v3555 = vld [vmem:[%s3534 + $0xa0] sm:$0xff]
      %v3556 = vld [vmem:[%s3534 + $0xa8] sm:$0xff]
      %v3557 = vld [vmem:[%s3534 + $0xb0] sm:$0xff]
      %v3558 = vld [vmem:[%s3534 + $0xb8] sm:$0xff]
      %v3559 = vld [vmem:[%s3534 + $0xc0] sm:$0xff]
      %v3560 = vld [vmem:[%s3534 + $0xc8] sm:$0xff]
      %v3561 = vld [vmem:[%s3534 + $0xd0] sm:$0xff]
      %v3562 = vld [vmem:[%s3534 + $0xd8] sm:$0xff]
      %v3563 = vld [vmem:[%s3534 + $0xe0] sm:$0xff]
      %v3564 = vld [vmem:[%s3534 + $0xe8] sm:$0xff]
      %v3565 = vld [vmem:[%s3534 + $0xf0] sm:$0xff]
      %v3566 = vld [vmem:[%s3534 + $0xf8] sm:$0xff]
      %v3567 = vrot.slane %v1119, 3
      %3569 = vmatprep.subr.mxu0 %v3536
      %3570 = vmatpush1.msra.mxu0 %v3535
      %3571 = vmatprep.subr.mxu0 %v3538
      %3572 = vmatpush1.msra.mxu0 %v3537
      %3573 = vmatprep.subr.mxu0 %v3540
      %3574 = vmatpush1.msra.mxu0 %v3539
      %3575 = vmatprep.subr.mxu0 %v3542
      %3576 = vmatpush1.msra.mxu0 %v3541
      %3577 = vmatprep.subr.mxu0 %v3544
      %3578 = vmatpush1.msra.mxu0 %v3543
      %3579 = vmatprep.subr.mxu0 %v3546
      %3580 = vmatpush1.msra.mxu0 %v3545
      %3581 = vmatprep.subr.mxu0 %v3548
      %3582 = vmatpush1.msra.mxu0 %v3547
      %3583 = vmatprep.subr.mxu0 %v3550
      %3584 = vmatpush1.msra.mxu0 %v3549
      %3585 = vmatprep.subr.mxu0 %v3552
      %3586 = vmatpush1.msra.mxu0 %v3551
      %3587 = vmatprep.subr.mxu0 %v3554
      %3588 = vmatpush1.msra.mxu0 %v3553
      %3589 = vmatprep.subr.mxu0 %v3556
      %3590 = vmatpush1.msra.mxu0 %v3555
      %3591 = vmatprep.subr.mxu0 %v3558
      %3592 = vmatpush1.msra.mxu0 %v3557
      %3593 = vmatprep.subr.mxu0 %v3560
      %3594 = vmatpush1.msra.mxu0 %v3559
      %3595 = vmatprep.subr.mxu0 %v3562
      %3596 = vmatpush1.msra.mxu0 %v3561
      %3597 = vmatprep.subr.mxu0 %v3564
      %3598 = vmatpush1.msra.mxu0 %v3563
      %3599 = vmatprep.subr.mxu0 %v3566
      %3600 = vmatpush1.msra.mxu0 %v3565
      %3601 = vmatprep.subr.mxu0 0.0
      %3602 = vmatpush1.msra.mxu0 0.0
      %3603 = vmatprep.subr.mxu0 0.0
      %3604 = vmatpush1.msra.mxu0 0.0
      %3605 = vmatprep.subr.mxu0 0.0
      %3606 = vmatpush1.msra.mxu0 0.0
      %3607 = vmatprep.subr.mxu0 0.0
      %3608 = vmatpush1.msra.mxu0 0.0
      %3609 = vmatprep.subr.mxu0 0.0
      %3610 = vmatpush1.msra.mxu0 0.0
      %3611 = vmatprep.subr.mxu0 0.0
      %3612 = vmatpush1.msra.mxu0 0.0
      %3613 = vmatprep.subr.mxu0 0.0
      %3614 = vmatpush1.msra.mxu0 0.0
      %3615 = vmatprep.subr.mxu0 0.0
      %3616 = vmatpush1.msra.mxu0 0.0
      %3617 = vmatprep.subr.mxu0 0.0
      %3618 = vmatpush1.msra.mxu0 0.0
      %3619 = vmatprep.subr.mxu0 0.0
      %3620 = vmatpush1.msra.mxu0 0.0
      %3621 = vmatprep.subr.mxu0 0.0
      %3622 = vmatpush1.msra.mxu0 0.0
      %3623 = vmatprep.subr.mxu0 0.0
      %3624 = vmatpush1.msra.mxu0 0.0
      %3625 = vmatprep.subr.mxu0 0.0
      %3626 = vmatpush1.msra.mxu0 0.0
      %3627 = vmatprep.subr.mxu0 0.0
      %3628 = vmatpush1.msra.mxu0 0.0
      %3629 = vmatprep.subr.mxu0 0.0
      %3630 = vmatpush1.msra.mxu0 0.0
      %3631 = vmatprep.subr.mxu0 0.0
      %3632 = vmatpush1.msra.mxu0 0.0
      %3633 = vmatprep.mubr.f32.mxu0 0.0
      %3634 = vmatmul.mubr.f32.gmra.mrb[0].mxu0 %v3567
      %v3635 = vpop.f32.mrb[0].mxu0
      %v3636 = vadd.f32 0.0, %v3635
      %v3637 = vpop.f32.mrb[0].mxu0
      %v3638 = vadd.f32 0.0, %v3637
      %3639 = vdwg.mxu0
      %v3642 = vcombine.low %v3636, %v3638
      %v3644 = vunpack.c.l.s4 1966171168
      %v3645 = vunpack.c.0.s8 %v3644
      %v3646 = vlaneseq
      %v3647 = vshrl.u32 %v3646, 7
      %v3648 = vsub.s32 %v3645, %v3647
      %v3649 = vrot.slane %v3642, %v3648
      %v3651 = vunpack.c.l.s4 1966171168
      %v3652 = vunpack.c.0.s8 %v3651
      %v3653 = vlaneseq
      %v3654 = vshrl.u32 %v3653, 7
      %v3655 = vsub.s32 %v3652, %v3654
      %v3656 = vrot.slane %v3649, %v3655
      %s3658 = scalar_lea.vmem [#allocation2], 35
      %3659 = vst.msk [vmem:[%s3658] ss:$8 sm:$0x3] %vm1246, %v3656
      %3660 = vst.msk [vmem:[%s3658] ss:$8 sm:$0x0] %vm1246, %v3656
      %s3661 = scalar_lea.vmem %s53, 5120
      %v3662 = vld [vmem:[%s3661] sm:$0xff]
      %v3663 = vld [vmem:[%s3661 + $0x8] sm:$0xff]
      %v3664 = vld [vmem:[%s3661 + $0x10] sm:$0xff]
      %v3665 = vld [vmem:[%s3661 + $0x18] sm:$0xff]
      %v3666 = vld [vmem:[%s3661 + $0x20] sm:$0xff]
      %v3667 = vld [vmem:[%s3661 + $0x28] sm:$0xff]
      %v3668 = vld [vmem:[%s3661 + $0x30] sm:$0xff]
      %v3669 = vld [vmem:[%s3661 + $0x38] sm:$0xff]
      %v3670 = vld [vmem:[%s3661 + $0x40] sm:$0xff]
      %v3671 = vld [vmem:[%s3661 + $0x48] sm:$0xff]
      %v3672 = vld [vmem:[%s3661 + $0x50] sm:$0xff]
      %v3673 = vld [vmem:[%s3661 + $0x58] sm:$0xff]
      %v3674 = vld [vmem:[%s3661 + $0x60] sm:$0xff]
      %v3675 = vld [vmem:[%s3661 + $0x68] sm:$0xff]
      %v3676 = vld [vmem:[%s3661 + $0x70] sm:$0xff]
      %v3677 = vld [vmem:[%s3661 + $0x78] sm:$0xff]
      %v3678 = vld [vmem:[%s3661 + $0x80] sm:$0xff]
      %v3679 = vld [vmem:[%s3661 + $0x88] sm:$0xff]
      %v3680 = vld [vmem:[%s3661 + $0x90] sm:$0xff]
      %v3681 = vld [vmem:[%s3661 + $0x98] sm:$0xff]
      %v3682 = vld [vmem:[%s3661 + $0xa0] sm:$0xff]
      %v3683 = vld [vmem:[%s3661 + $0xa8] sm:$0xff]
      %v3684 = vld [vmem:[%s3661 + $0xb0] sm:$0xff]
      %v3685 = vld [vmem:[%s3661 + $0xb8] sm:$0xff]
      %v3686 = vld [vmem:[%s3661 + $0xc0] sm:$0xff]
      %v3687 = vld [vmem:[%s3661 + $0xc8] sm:$0xff]
      %v3688 = vld [vmem:[%s3661 + $0xd0] sm:$0xff]
      %v3689 = vld [vmem:[%s3661 + $0xd8] sm:$0xff]
      %v3690 = vld [vmem:[%s3661 + $0xe0] sm:$0xff]
      %v3691 = vld [vmem:[%s3661 + $0xe8] sm:$0xff]
      %v3692 = vld [vmem:[%s3661 + $0xf0] sm:$0xff]
      %v3693 = vld [vmem:[%s3661 + $0xf8] sm:$0xff]
      %v3694 = vrot.slane %v1119, 4
      %3696 = vmatprep.subr.mxu0 %v3663
      %3697 = vmatpush1.msra.mxu0 %v3662
      %3698 = vmatprep.subr.mxu0 %v3665
      %3699 = vmatpush1.msra.mxu0 %v3664
      %3700 = vmatprep.subr.mxu0 %v3667
      %3701 = vmatpush1.msra.mxu0 %v3666
      %3702 = vmatprep.subr.mxu0 %v3669
      %3703 = vmatpush1.msra.mxu0 %v3668
      %3704 = vmatprep.subr.mxu0 %v3671
      %3705 = vmatpush1.msra.mxu0 %v3670
      %3706 = vmatprep.subr.mxu0 %v3673
      %3707 = vmatpush1.msra.mxu0 %v3672
      %3708 = vmatprep.subr.mxu0 %v3675
      %3709 = vmatpush1.msra.mxu0 %v3674
      %3710 = vmatprep.subr.mxu0 %v3677
      %3711 = vmatpush1.msra.mxu0 %v3676
      %3712 = vmatprep.subr.mxu0 %v3679
      %3713 = vmatpush1.msra.mxu0 %v3678
      %3714 = vmatprep.subr.mxu0 %v3681
      %3715 = vmatpush1.msra.mxu0 %v3680
      %3716 = vmatprep.subr.mxu0 %v3683
      %3717 = vmatpush1.msra.mxu0 %v3682
      %3718 = vmatprep.subr.mxu0 %v3685
      %3719 = vmatpush1.msra.mxu0 %v3684
      %3720 = vmatprep.subr.mxu0 %v3687
      %3721 = vmatpush1.msra.mxu0 %v3686
      %3722 = vmatprep.subr.mxu0 %v3689
      %3723 = vmatpush1.msra.mxu0 %v3688
      %3724 = vmatprep.subr.mxu0 %v3691
      %3725 = vmatpush1.msra.mxu0 %v3690
      %3726 = vmatprep.subr.mxu0 %v3693
      %3727 = vmatpush1.msra.mxu0 %v3692
      %3728 = vmatprep.subr.mxu0 0.0
      %3729 = vmatpush1.msra.mxu0 0.0
      %3730 = vmatprep.subr.mxu0 0.0
      %3731 = vmatpush1.msra.mxu0 0.0
      %3732 = vmatprep.subr.mxu0 0.0
      %3733 = vmatpush1.msra.mxu0 0.0
      %3734 = vmatprep.subr.mxu0 0.0
      %3735 = vmatpush1.msra.mxu0 0.0
      %3736 = vmatprep.subr.mxu0 0.0
      %3737 = vmatpush1.msra.mxu0 0.0
      %3738 = vmatprep.subr.mxu0 0.0
      %3739 = vmatpush1.msra.mxu0 0.0
      %3740 = vmatprep.subr.mxu0 0.0
      %3741 = vmatpush1.msra.mxu0 0.0
      %3742 = vmatprep.subr.mxu0 0.0
      %3743 = vmatpush1.msra.mxu0 0.0
      %3744 = vmatprep.subr.mxu0 0.0
      %3745 = vmatpush1.msra.mxu0 0.0
      %3746 = vmatprep.subr.mxu0 0.0
      %3747 = vmatpush1.msra.mxu0 0.0
      %3748 = vmatprep.subr.mxu0 0.0
      %3749 = vmatpush1.msra.mxu0 0.0
      %3750 = vmatprep.subr.mxu0 0.0
      %3751 = vmatpush1.msra.mxu0 0.0
      %3752 = vmatprep.subr.mxu0 0.0
      %3753 = vmatpush1.msra.mxu0 0.0
      %3754 = vmatprep.subr.mxu0 0.0
      %3755 = vmatpush1.msra.mxu0 0.0
      %3756 = vmatprep.subr.mxu0 0.0
      %3757 = vmatpush1.msra.mxu0 0.0
      %3758 = vmatprep.subr.mxu0 0.0
      %3759 = vmatpush1.msra.mxu0 0.0
      %3760 = vmatprep.mubr.f32.mxu0 0.0
      %3761 = vmatmul.mubr.f32.gmra.mrb[0].mxu0 %v3694
      %v3762 = vpop.f32.mrb[0].mxu0
      %v3763 = vadd.f32 0.0, %v3762
      %v3764 = vpop.f32.mrb[0].mxu0
      %v3765 = vadd.f32 0.0, %v3764
      %3766 = vdwg.mxu0
      %v3769 = vcombine.low %v3763, %v3765
      %v3771 = vunpack.c.l.s4 1966171168
      %v3772 = vunpack.c.0.s8 %v3771
      %v3773 = vlaneseq
      %v3774 = vshrl.u32 %v3773, 7
      %v3775 = vsub.s32 %v3772, %v3774
      %v3776 = vrot.slane %v3769, %v3775
      %v3778 = vunpack.c.l.s4 1966171168
      %v3779 = vunpack.c.0.s8 %v3778
      %v3780 = vlaneseq
      %v3781 = vshrl.u32 %v3780, 7
      %v3782 = vsub.s32 %v3779, %v3781
      %v3783 = vrot.slane %v3776, %v3782
      %s3785 = scalar_lea.vmem [#allocation2], 36
      %3786 = vst.msk [vmem:[%s3785] ss:$8 sm:$0x3] %vm1246, %v3783
      %3787 = vst.msk [vmem:[%s3785] ss:$8 sm:$0x0] %vm1246, %v3783
      %s3788 = scalar_lea.vmem %s53, 5376
      %v3789 = vld [vmem:[%s3788] sm:$0xff]
      %v3790 = vld [vmem:[%s3788 + $0x8] sm:$0xff]
      %v3791 = vld [vmem:[%s3788 + $0x10] sm:$0xff]
      %v3792 = vld [vmem:[%s3788 + $0x18] sm:$0xff]
      %v3793 = vld [vmem:[%s3788 + $0x20] sm:$0xff]
      %v3794 = vld [vmem:[%s3788 + $0x28] sm:$0xff]
      %v3795 = vld [vmem:[%s3788 + $0x30] sm:$0xff]
      %v3796 = vld [vmem:[%s3788 + $0x38] sm:$0xff]
      %v3797 = vld [vmem:[%s3788 + $0x40] sm:$0xff]
      %v3798 = vld [vmem:[%s3788 + $0x48] sm:$0xff]
      %v3799 = vld [vmem:[%s3788 + $0x50] sm:$0xff]
      %v3800 = vld [vmem:[%s3788 + $0x58] sm:$0xff]
      %v3801 = vld [vmem:[%s3788 + $0x60] sm:$0xff]
      %v3802 = vld [vmem:[%s3788 + $0x68] sm:$0xff]
      %v3803 = vld [vmem:[%s3788 + $0x70] sm:$0xff]
      %v3804 = vld [vmem:[%s3788 + $0x78] sm:$0xff]
      %v3805 = vld [vmem:[%s3788 + $0x80] sm:$0xff]
      %v3806 = vld [vmem:[%s3788 + $0x88] sm:$0xff]
      %v3807 = vld [vmem:[%s3788 + $0x90] sm:$0xff]
      %v3808 = vld [vmem:[%s3788 + $0x98] sm:$0xff]
      %v3809 = vld [vmem:[%s3788 + $0xa0] sm:$0xff]
      %v3810 = vld [vmem:[%s3788 + $0xa8] sm:$0xff]
      %v3811 = vld [vmem:[%s3788 + $0xb0] sm:$0xff]
      %v3812 = vld [vmem:[%s3788 + $0xb8] sm:$0xff]
      %v3813 = vld [vmem:[%s3788 + $0xc0] sm:$0xff]
      %v3814 = vld [vmem:[%s3788 + $0xc8] sm:$0xff]
      %v3815 = vld [vmem:[%s3788 + $0xd0] sm:$0xff]
      %v3816 = vld [vmem:[%s3788 + $0xd8] sm:$0xff]
      %v3817 = vld [vmem:[%s3788 + $0xe0] sm:$0xff]
      %v3818 = vld [vmem:[%s3788 + $0xe8] sm:$0xff]
      %v3819 = vld [vmem:[%s3788 + $0xf0] sm:$0xff]
      %v3820 = vld [vmem:[%s3788 + $0xf8] sm:$0xff]
      %v3821 = vrot.slane %v1119, 5
      %3823 = vmatprep.subr.mxu0 %v3790
      %3824 = vmatpush1.msra.mxu0 %v3789
      %3825 = vmatprep.subr.mxu0 %v3792
      %3826 = vmatpush1.msra.mxu0 %v3791
      %3827 = vmatprep.subr.mxu0 %v3794
      %3828 = vmatpush1.msra.mxu0 %v3793
      %3829 = vmatprep.subr.mxu0 %v3796
      %3830 = vmatpush1.msra.mxu0 %v3795
      %3831 = vmatprep.subr.mxu0 %v3798
      %3832 = vmatpush1.msra.mxu0 %v3797
      %3833 = vmatprep.subr.mxu0 %v3800
      %3834 = vmatpush1.msra.mxu0 %v3799
      %3835 = vmatprep.subr.mxu0 %v3802
      %3836 = vmatpush1.msra.mxu0 %v3801
      %3837 = vmatprep.subr.mxu0 %v3804
      %3838 = vmatpush1.msra.mxu0 %v3803
      %3839 = vmatprep.subr.mxu0 %v3806
      %3840 = vmatpush1.msra.mxu0 %v3805
      %3841 = vmatprep.subr.mxu0 %v3808
      %3842 = vmatpush1.msra.mxu0 %v3807
      %3843 = vmatprep.subr.mxu0 %v3810
      %3844 = vmatpush1.msra.mxu0 %v3809
      %3845 = vmatprep.subr.mxu0 %v3812
      %3846 = vmatpush1.msra.mxu0 %v3811
      %3847 = vmatprep.subr.mxu0 %v3814
      %3848 = vmatpush1.msra.mxu0 %v3813
      %3849 = vmatprep.subr.mxu0 %v3816
      %3850 = vmatpush1.msra.mxu0 %v3815
      %3851 = vmatprep.subr.mxu0 %v3818
      %3852 = vmatpush1.msra.mxu0 %v3817
      %3853 = vmatprep.subr.mxu0 %v3820
      %3854 = vmatpush1.msra.mxu0 %v3819
      %3855 = vmatprep.subr.mxu0 0.0
      %3856 = vmatpush1.msra.mxu0 0.0
      %3857 = vmatprep.subr.mxu0 0.0
      %3858 = vmatpush1.msra.mxu0 0.0
      %3859 = vmatprep.subr.mxu0 0.0
      %3860 = vmatpush1.msra.mxu0 0.0
      %3861 = vmatprep.subr.mxu0 0.0
      %3862 = vmatpush1.msra.mxu0 0.0
      %3863 = vmatprep.subr.mxu0 0.0
      %3864 = vmatpush1.msra.mxu0 0.0
      %3865 = vmatprep.subr.mxu0 0.0
      %3866 = vmatpush1.msra.mxu0 0.0
      %3867 = vmatprep.subr.mxu0 0.0
      %3868 = vmatpush1.msra.mxu0 0.0
      %3869 = vmatprep.subr.mxu0 0.0
      %3870 = vmatpush1.msra.mxu0 0.0
      %3871 = vmatprep.subr.mxu0 0.0
      %3872 = vmatpush1.msra.mxu0 0.0
      %3873 = vmatprep.subr.mxu0 0.0
      %3874 = vmatpush1.msra.mxu0 0.0
      %3875 = vmatprep.subr.mxu0 0.0
      %3876 = vmatpush1.msra.mxu0 0.0
      %3877 = vmatprep.subr.mxu0 0.0
      %3878 = vmatpush1.msra.mxu0 0.0
      %3879 = vmatprep.subr.mxu0 0.0
      %3880 = vmatpush1.msra.mxu0 0.0
      %3881 = vmatprep.subr.mxu0 0.0
      %3882 = vmatpush1.msra.mxu0 0.0
      %3883 = vmatprep.subr.mxu0 0.0
      %3884 = vmatpush1.msra.mxu0 0.0
      %3885 = vmatprep.subr.mxu0 0.0
      %3886 = vmatpush1.msra.mxu0 0.0
      %3887 = vmatprep.mubr.f32.mxu0 0.0
      %3888 = vmatmul.mubr.f32.gmra.mrb[0].mxu0 %v3821
      %v3889 = vpop.f32.mrb[0].mxu0
      %v3890 = vadd.f32 0.0, %v3889
      %v3891 = vpop.f32.mrb[0].mxu0
      %v3892 = vadd.f32 0.0, %v3891
      %3893 = vdwg.mxu0
      %v3896 = vcombine.low %v3890, %v3892
      %v3898 = vunpack.c.l.s4 1966171168
      %v3899 = vunpack.c.0.s8 %v3898
      %v3900 = vlaneseq
      %v3901 = vshrl.u32 %v3900, 7
      %v3902 = vsub.s32 %v3899, %v3901
      %v3903 = vrot.slane %v3896, %v3902
      %v3905 = vunpack.c.l.s4 1966171168
      %v3906 = vunpack.c.0.s8 %v3905
      %v3907 = vlaneseq
      %v3908 = vshrl.u32 %v3907, 7
      %v3909 = vsub.s32 %v3906, %v3908
      %v3910 = vrot.slane %v3903, %v3909
      %s3912 = scalar_lea.vmem [#allocation2], 37
      %3913 = vst.msk [vmem:[%s3912] ss:$8 sm:$0x3] %vm1246, %v3910
      %3914 = vst.msk [vmem:[%s3912] ss:$8 sm:$0x0] %vm1246, %v3910
      %s3915 = scalar_lea.vmem %s53, 5632
      %v3916 = vld [vmem:[%s3915] sm:$0xff]
      %v3917 = vld [vmem:[%s3915 + $0x8] sm:$0xff]
      %v3918 = vld [vmem:[%s3915 + $0x10] sm:$0xff]
      %v3919 = vld [vmem:[%s3915 + $0x18] sm:$0xff]
      %v3920 = vld [vmem:[%s3915 + $0x20] sm:$0xff]
      %v3921 = vld [vmem:[%s3915 + $0x28] sm:$0xff]
      %v3922 = vld [vmem:[%s3915 + $0x30] sm:$0xff]
      %v3923 = vld [vmem:[%s3915 + $0x38] sm:$0xff]
      %v3924 = vld [vmem:[%s3915 + $0x40] sm:$0xff]
      %v3925 = vld [vmem:[%s3915 + $0x48] sm:$0xff]
      %v3926 = vld [vmem:[%s3915 + $0x50] sm:$0xff]
      %v3927 = vld [vmem:[%s3915 + $0x58] sm:$0xff]
      %v3928 = vld [vmem:[%s3915 + $0x60] sm:$0xff]
      %v3929 = vld [vmem:[%s3915 + $0x68] sm:$0xff]
      %v3930 = vld [vmem:[%s3915 + $0x70] sm:$0xff]
      %v3931 = vld [vmem:[%s3915 + $0x78] sm:$0xff]
      %v3932 = vld [vmem:[%s3915 + $0x80] sm:$0xff]
      %v3933 = vld [vmem:[%s3915 + $0x88] sm:$0xff]
      %v3934 = vld [vmem:[%s3915 + $0x90] sm:$0xff]
      %v3935 = vld [vmem:[%s3915 + $0x98] sm:$0xff]
      %v3936 = vld [vmem:[%s3915 + $0xa0] sm:$0xff]
      %v3937 = vld [vmem:[%s3915 + $0xa8] sm:$0xff]
      %v3938 = vld [vmem:[%s3915 + $0xb0] sm:$0xff]
      %v3939 = vld [vmem:[%s3915 + $0xb8] sm:$0xff]
      %v3940 = vld [vmem:[%s3915 + $0xc0] sm:$0xff]
      %v3941 = vld [vmem:[%s3915 + $0xc8] sm:$0xff]
      %v3942 = vld [vmem:[%s3915 + $0xd0] sm:$0xff]
      %v3943 = vld [vmem:[%s3915 + $0xd8] sm:$0xff]
      %v3944 = vld [vmem:[%s3915 + $0xe0] sm:$0xff]
      %v3945 = vld [vmem:[%s3915 + $0xe8] sm:$0xff]
      %v3946 = vld [vmem:[%s3915 + $0xf0] sm:$0xff]
      %v3947 = vld [vmem:[%s3915 + $0xf8] sm:$0xff]
      %v3948 = vrot.slane %v1119, 6
      %3950 = vmatprep.subr.mxu0 %v3917
      %3951 = vmatpush1.msra.mxu0 %v3916
      %3952 = vmatprep.subr.mxu0 %v3919
      %3953 = vmatpush1.msra.mxu0 %v3918
      %3954 = vmatprep.subr.mxu0 %v3921
      %3955 = vmatpush1.msra.mxu0 %v3920
      %3956 = vmatprep.subr.mxu0 %v3923
      %3957 = vmatpush1.msra.mxu0 %v3922
      %3958 = vmatprep.subr.mxu0 %v3925
      %3959 = vmatpush1.msra.mxu0 %v3924
      %3960 = vmatprep.subr.mxu0 %v3927
      %3961 = vmatpush1.msra.mxu0 %v3926
      %3962 = vmatprep.subr.mxu0 %v3929
      %3963 = vmatpush1.msra.mxu0 %v3928
      %3964 = vmatprep.subr.mxu0 %v3931
      %3965 = vmatpush1.msra.mxu0 %v3930
      %3966 = vmatprep.subr.mxu0 %v3933
      %3967 = vmatpush1.msra.mxu0 %v3932
      %3968 = vmatprep.subr.mxu0 %v3935
      %3969 = vmatpush1.msra.mxu0 %v3934
      %3970 = vmatprep.subr.mxu0 %v3937
      %3971 = vmatpush1.msra.mxu0 %v3936
      %3972 = vmatprep.subr.mxu0 %v3939
      %3973 = vmatpush1.msra.mxu0 %v3938
      %3974 = vmatprep.subr.mxu0 %v3941
      %3975 = vmatpush1.msra.mxu0 %v3940
      %3976 = vmatprep.subr.mxu0 %v3943
      %3977 = vmatpush1.msra.mxu0 %v3942
      %3978 = vmatprep.subr.mxu0 %v3945
      %3979 = vmatpush1.msra.mxu0 %v3944
      %3980 = vmatprep.subr.mxu0 %v3947
      %3981 = vmatpush1.msra.mxu0 %v3946
      %3982 = vmatprep.subr.mxu0 0.0
      %3983 = vmatpush1.msra.mxu0 0.0
      %3984 = vmatprep.subr.mxu0 0.0
      %3985 = vmatpush1.msra.mxu0 0.0
      %3986 = vmatprep.subr.mxu0 0.0
      %3987 = vmatpush1.msra.mxu0 0.0
      %3988 = vmatprep.subr.mxu0 0.0
      %3989 = vmatpush1.msra.mxu0 0.0
      %3990 = vmatprep.subr.mxu0 0.0
      %3991 = vmatpush1.msra.mxu0 0.0
      %3992 = vmatprep.subr.mxu0 0.0
      %3993 = vmatpush1.msra.mxu0 0.0
      %3994 = vmatprep.subr.mxu0 0.0
      %3995 = vmatpush1.msra.mxu0 0.0
      %3996 = vmatprep.subr.mxu0 0.0
      %3997 = vmatpush1.msra.mxu0 0.0
      %3998 = vmatprep.subr.mxu0 0.0
      %3999 = vmatpush1.msra.mxu0 0.0
      %4000 = vmatprep.subr.mxu0 0.0
      %4001 = vmatpush1.msra.mxu0 0.0
      %4002 = vmatprep.subr.mxu0 0.0
      %4003 = vmatpush1.msra.mxu0 0.0
      %4004 = vmatprep.subr.mxu0 0.0
      %4005 = vmatpush1.msra.mxu0 0.0
      %4006 = vmatprep.subr.mxu0 0.0
      %4007 = vmatpush1.msra.mxu0 0.0
      %4008 = vmatprep.subr.mxu0 0.0
      %4009 = vmatpush1.msra.mxu0 0.0
      %4010 = vmatprep.subr.mxu0 0.0
      %4011 = vmatpush1.msra.mxu0 0.0
      %4012 = vmatprep.subr.mxu0 0.0
      %4013 = vmatpush1.msra.mxu0 0.0
      %4014 = vmatprep.mubr.f32.mxu0 0.0
      %4015 = vmatmul.mubr.f32.gmra.mrb[0].mxu0 %v3948
      %v4016 = vpop.f32.mrb[0].mxu0
      %v4017 = vadd.f32 0.0, %v4016
      %v4018 = vpop.f32.mrb[0].mxu0
      %v4019 = vadd.f32 0.0, %v4018
      %4020 = vdwg.mxu0
      %v4023 = vcombine.low %v4017, %v4019
      %v4025 = vunpack.c.l.s4 1966171168
      %v4026 = vunpack.c.0.s8 %v4025
      %v4027 = vlaneseq
      %v4028 = vshrl.u32 %v4027, 7
      %v4029 = vsub.s32 %v4026, %v4028
      %v4030 = vrot.slane %v4023, %v4029
      %v4032 = vunpack.c.l.s4 1966171168
      %v4033 = vunpack.c.0.s8 %v4032
      %v4034 = vlaneseq
      %v4035 = vshrl.u32 %v4034, 7
      %v4036 = vsub.s32 %v4033, %v4035
      %v4037 = vrot.slane %v4030, %v4036
      %s4039 = scalar_lea.vmem [#allocation2], 38
      %4040 = vst.msk [vmem:[%s4039] ss:$8 sm:$0x3] %vm1246, %v4037
      %4041 = vst.msk [vmem:[%s4039] ss:$8 sm:$0x0] %vm1246, %v4037
      %s4042 = scalar_lea.vmem %s53, 5888
      %v4043 = vld [vmem:[%s4042] sm:$0xff]
      %v4044 = vld [vmem:[%s4042 + $0x8] sm:$0xff]
      %v4045 = vld [vmem:[%s4042 + $0x10] sm:$0xff]
      %v4046 = vld [vmem:[%s4042 + $0x18] sm:$0xff]
      %v4047 = vld [vmem:[%s4042 + $0x20] sm:$0xff]
      %v4048 = vld [vmem:[%s4042 + $0x28] sm:$0xff]
      %v4049 = vld [vmem:[%s4042 + $0x30] sm:$0xff]
      %v4050 = vld [vmem:[%s4042 + $0x38] sm:$0xff]
      %v4051 = vld [vmem:[%s4042 + $0x40] sm:$0xff]
      %v4052 = vld [vmem:[%s4042 + $0x48] sm:$0xff]
      %v4053 = vld [vmem:[%s4042 + $0x50] sm:$0xff]
      %v4054 = vld [vmem:[%s4042 + $0x58] sm:$0xff]
      %v4055 = vld [vmem:[%s4042 + $0x60] sm:$0xff]
      %v4056 = vld [vmem:[%s4042 + $0x68] sm:$0xff]
      %v4057 = vld [vmem:[%s4042 + $0x70] sm:$0xff]
      %v4058 = vld [vmem:[%s4042 + $0x78] sm:$0xff]
      %v4059 = vld [vmem:[%s4042 + $0x80] sm:$0xff]
      %v4060 = vld [vmem:[%s4042 + $0x88] sm:$0xff]
      %v4061 = vld [vmem:[%s4042 + $0x90] sm:$0xff]
      %v4062 = vld [vmem:[%s4042 + $0x98] sm:$0xff]
      %v4063 = vld [vmem:[%s4042 + $0xa0] sm:$0xff]
      %v4064 = vld [vmem:[%s4042 + $0xa8] sm:$0xff]
      %v4065 = vld [vmem:[%s4042 + $0xb0] sm:$0xff]
      %v4066 = vld [vmem:[%s4042 + $0xb8] sm:$0xff]
      %v4067 = vld [vmem:[%s4042 + $0xc0] sm:$0xff]
      %v4068 = vld [vmem:[%s4042 + $0xc8] sm:$0xff]
      %v4069 = vld [vmem:[%s4042 + $0xd0] sm:$0xff]
      %v4070 = vld [vmem:[%s4042 + $0xd8] sm:$0xff]
      %v4071 = vld [vmem:[%s4042 + $0xe0] sm:$0xff]
      %v4072 = vld [vmem:[%s4042 + $0xe8] sm:$0xff]
      %v4073 = vld [vmem:[%s4042 + $0xf0] sm:$0xff]
      %v4074 = vld [vmem:[%s4042 + $0xf8] sm:$0xff]
      %v4075 = vrot.slane %v1119, 7
      %4077 = vmatprep.subr.mxu0 %v4044
      %4078 = vmatpush1.msra.mxu0 %v4043
      %4079 = vmatprep.subr.mxu0 %v4046
      %4080 = vmatpush1.msra.mxu0 %v4045
      %4081 = vmatprep.subr.mxu0 %v4048
      %4082 = vmatpush1.msra.mxu0 %v4047
      %4083 = vmatprep.subr.mxu0 %v4050
      %4084 = vmatpush1.msra.mxu0 %v4049
      %4085 = vmatprep.subr.mxu0 %v4052
      %4086 = vmatpush1.msra.mxu0 %v4051
      %4087 = vmatprep.subr.mxu0 %v4054
      %4088 = vmatpush1.msra.mxu0 %v4053
      %4089 = vmatprep.subr.mxu0 %v4056
      %4090 = vmatpush1.msra.mxu0 %v4055
      %4091 = vmatprep.subr.mxu0 %v4058
      %4092 = vmatpush1.msra.mxu0 %v4057
      %4093 = vmatprep.subr.mxu0 %v4060
      %4094 = vmatpush1.msra.mxu0 %v4059
      %4095 = vmatprep.subr.mxu0 %v4062
      %4096 = vmatpush1.msra.mxu0 %v4061
      %4097 = vmatprep.subr.mxu0 %v4064
      %4098 = vmatpush1.msra.mxu0 %v4063
      %4099 = vmatprep.subr.mxu0 %v4066
      %4100 = vmatpush1.msra.mxu0 %v4065
      %4101 = vmatprep.subr.mxu0 %v4068
      %4102 = vmatpush1.msra.mxu0 %v4067
      %4103 = vmatprep.subr.mxu0 %v4070
      %4104 = vmatpush1.msra.mxu0 %v4069
      %4105 = vmatprep.subr.mxu0 %v4072
      %4106 = vmatpush1.msra.mxu0 %v4071
      %4107 = vmatprep.subr.mxu0 %v4074
      %4108 = vmatpush1.msra.mxu0 %v4073
      %4109 = vmatprep.subr.mxu0 0.0
      %4110 = vmatpush1.msra.mxu0 0.0
      %4111 = vmatprep.subr.mxu0 0.0
      %4112 = vmatpush1.msra.mxu0 0.0
      %4113 = vmatprep.subr.mxu0 0.0
      %4114 = vmatpush1.msra.mxu0 0.0
      %4115 = vmatprep.subr.mxu0 0.0
      %4116 = vmatpush1.msra.mxu0 0.0
      %4117 = vmatprep.subr.mxu0 0.0
      %4118 = vmatpush1.msra.mxu0 0.0
      %4119 = vmatprep.subr.mxu0 0.0
      %4120 = vmatpush1.msra.mxu0 0.0
      %4121 = vmatprep.subr.mxu0 0.0
      %4122 = vmatpush1.msra.mxu0 0.0
      %4123 = vmatprep.subr.mxu0 0.0
      %4124 = vmatpush1.msra.mxu0 0.0
      %4125 = vmatprep.subr.mxu0 0.0
      %4126 = vmatpush1.msra.mxu0 0.0
      %4127 = vmatprep.subr.mxu0 0.0
      %4128 = vmatpush1.msra.mxu0 0.0
      %4129 = vmatprep.subr.mxu0 0.0
      %4130 = vmatpush1.msra.mxu0 0.0
      %4131 = vmatprep.subr.mxu0 0.0
      %4132 = vmatpush1.msra.mxu0 0.0
      %4133 = vmatprep.subr.mxu0 0.0
      %4134 = vmatpush1.msra.mxu0 0.0
      %4135 = vmatprep.subr.mxu0 0.0
      %4136 = vmatpush1.msra.mxu0 0.0
      %4137 = vmatprep.subr.mxu0 0.0
      %4138 = vmatpush1.msra.mxu0 0.0
      %4139 = vmatprep.subr.mxu0 0.0
      %4140 = vmatpush1.msra.mxu0 0.0
      %4141 = vmatprep.mubr.f32.mxu0 0.0
      %4142 = vmatmul.mubr.f32.gmra.mrb[0].mxu0 %v4075
      %v4143 = vpop.f32.mrb[0].mxu0
      %v4144 = vadd.f32 0.0, %v4143
      %v4145 = vpop.f32.mrb[0].mxu0
      %v4146 = vadd.f32 0.0, %v4145
      %4147 = vdwg.mxu0
      %v4150 = vcombine.low %v4144, %v4146
      %v4152 = vunpack.c.l.s4 1966171168
      %v4153 = vunpack.c.0.s8 %v4152
      %v4154 = vlaneseq
      %v4155 = vshrl.u32 %v4154, 7
      %v4156 = vsub.s32 %v4153, %v4155
      %v4157 = vrot.slane %v4150, %v4156
      %v4159 = vunpack.c.l.s4 1966171168
      %v4160 = vunpack.c.0.s8 %v4159
      %v4161 = vlaneseq
      %v4162 = vshrl.u32 %v4161, 7
      %v4163 = vsub.s32 %v4160, %v4162
      %v4164 = vrot.slane %v4157, %v4163
      %s4166 = scalar_lea.vmem [#allocation2], 39
      %4167 = vst.msk [vmem:[%s4166] ss:$8 sm:$0x3] %vm1246, %v4164
      %4168 = vst.msk [vmem:[%s4166] ss:$8 sm:$0x0] %vm1246, %v4164
      %s4169 = scalar_lea.vmem %s53, 6144
      %v4170 = vld [vmem:[%s4169] sm:$0xff]
      %v4171 = vld [vmem:[%s4169 + $0x8] sm:$0xff]
      %v4172 = vld [vmem:[%s4169 + $0x10] sm:$0xff]
      %v4173 = vld [vmem:[%s4169 + $0x18] sm:$0xff]
      %v4174 = vld [vmem:[%s4169 + $0x20] sm:$0xff]
      %v4175 = vld [vmem:[%s4169 + $0x28] sm:$0xff]
      %v4176 = vld [vmem:[%s4169 + $0x30] sm:$0xff]
      %v4177 = vld [vmem:[%s4169 + $0x38] sm:$0xff]
      %v4178 = vld [vmem:[%s4169 + $0x40] sm:$0xff]
      %v4179 = vld [vmem:[%s4169 + $0x48] sm:$0xff]
      %v4180 = vld [vmem:[%s4169 + $0x50] sm:$0xff]
      %v4181 = vld [vmem:[%s4169 + $0x58] sm:$0xff]
      %v4182 = vld [vmem:[%s4169 + $0x60] sm:$0xff]
      %v4183 = vld [vmem:[%s4169 + $0x68] sm:$0xff]
      %v4184 = vld [vmem:[%s4169 + $0x70] sm:$0xff]
      %v4185 = vld [vmem:[%s4169 + $0x78] sm:$0xff]
      %v4186 = vld [vmem:[%s4169 + $0x80] sm:$0xff]
      %v4187 = vld [vmem:[%s4169 + $0x88] sm:$0xff]
      %v4188 = vld [vmem:[%s4169 + $0x90] sm:$0xff]
      %v4189 = vld [vmem:[%s4169 + $0x98] sm:$0xff]
      %v4190 = vld [vmem:[%s4169 + $0xa0] sm:$0xff]
      %v4191 = vld [vmem:[%s4169 + $0xa8] sm:$0xff]
      %v4192 = vld [vmem:[%s4169 + $0xb0] sm:$0xff]
      %v4193 = vld [vmem:[%s4169 + $0xb8] sm:$0xff]
      %v4194 = vld [vmem:[%s4169 + $0xc0] sm:$0xff]
      %v4195 = vld [vmem:[%s4169 + $0xc8] sm:$0xff]
      %v4196 = vld [vmem:[%s4169 + $0xd0] sm:$0xff]
      %v4197 = vld [vmem:[%s4169 + $0xd8] sm:$0xff]
      %v4198 = vld [vmem:[%s4169 + $0xe0] sm:$0xff]
      %v4199 = vld [vmem:[%s4169 + $0xe8] sm:$0xff]
      %v4200 = vld [vmem:[%s4169 + $0xf0] sm:$0xff]
      %v4201 = vld [vmem:[%s4169 + $0xf8] sm:$0xff]
      %4202 = vmatprep.subr.mxu0 %v4171
      %4203 = vmatpush1.msra.mxu0 %v4170
      %4204 = vmatprep.subr.mxu0 %v4173
      %4205 = vmatpush1.msra.mxu0 %v4172
      %4206 = vmatprep.subr.mxu0 %v4175
      %4207 = vmatpush1.msra.mxu0 %v4174
      %4208 = vmatprep.subr.mxu0 %v4177
      %4209 = vmatpush1.msra.mxu0 %v4176
      %4210 = vmatprep.subr.mxu0 %v4179
      %4211 = vmatpush1.msra.mxu0 %v4178
      %4212 = vmatprep.subr.mxu0 %v4181
      %4213 = vmatpush1.msra.mxu0 %v4180
      %4214 = vmatprep.subr.mxu0 %v4183
      %4215 = vmatpush1.msra.mxu0 %v4182
      %4216 = vmatprep.subr.mxu0 %v4185
      %4217 = vmatpush1.msra.mxu0 %v4184
      %4218 = vmatprep.subr.mxu0 %v4187
      %4219 = vmatpush1.msra.mxu0 %v4186
      %4220 = vmatprep.subr.mxu0 %v4189
      %4221 = vmatpush1.msra.mxu0 %v4188
      %4222 = vmatprep.subr.mxu0 %v4191
      %4223 = vmatpush1.msra.mxu0 %v4190
      %4224 = vmatprep.subr.mxu0 %v4193
      %4225 = vmatpush1.msra.mxu0 %v4192
      %4226 = vmatprep.subr.mxu0 %v4195
      %4227 = vmatpush1.msra.mxu0 %v4194
      %4228 = vmatprep.subr.mxu0 %v4197
      %4229 = vmatpush1.msra.mxu0 %v4196
      %4230 = vmatprep.subr.mxu0 %v4199
      %4231 = vmatpush1.msra.mxu0 %v4198
      %4232 = vmatprep.subr.mxu0 %v4201
      %4233 = vmatpush1.msra.mxu0 %v4200
      %4234 = vmatprep.subr.mxu0 0.0
      %4235 = vmatpush1.msra.mxu0 0.0
      %4236 = vmatprep.subr.mxu0 0.0
      %4237 = vmatpush1.msra.mxu0 0.0
      %4238 = vmatprep.subr.mxu0 0.0
      %4239 = vmatpush1.msra.mxu0 0.0
      %4240 = vmatprep.subr.mxu0 0.0
      %4241 = vmatpush1.msra.mxu0 0.0
      %4242 = vmatprep.subr.mxu0 0.0
      %4243 = vmatpush1.msra.mxu0 0.0
      %4244 = vmatprep.subr.mxu0 0.0
      %4245 = vmatpush1.msra.mxu0 0.0
      %4246 = vmatprep.subr.mxu0 0.0
      %4247 = vmatpush1.msra.mxu0 0.0
      %4248 = vmatprep.subr.mxu0 0.0
      %4249 = vmatpush1.msra.mxu0 0.0
      %4250 = vmatprep.subr.mxu0 0.0
      %4251 = vmatpush1.msra.mxu0 0.0
      %4252 = vmatprep.subr.mxu0 0.0
      %4253 = vmatpush1.msra.mxu0 0.0
      %4254 = vmatprep.subr.mxu0 0.0
      %4255 = vmatpush1.msra.mxu0 0.0
      %4256 = vmatprep.subr.mxu0 0.0
      %4257 = vmatpush1.msra.mxu0 0.0
      %4258 = vmatprep.subr.mxu0 0.0
      %4259 = vmatpush1.msra.mxu0 0.0
      %4260 = vmatprep.subr.mxu0 0.0
      %4261 = vmatpush1.msra.mxu0 0.0
      %4262 = vmatprep.subr.mxu0 0.0
      %4263 = vmatpush1.msra.mxu0 0.0
      %4264 = vmatprep.subr.mxu0 0.0
      %4265 = vmatpush1.msra.mxu0 0.0
      %4266 = vmatprep.mubr.f32.mxu0 0.0
      %4267 = vmatmul.mubr.f32.gmra.mrb[0].mxu0 %v1120
      %v4268 = vpop.f32.mrb[0].mxu0
      %v4269 = vadd.f32 0.0, %v4268
      %v4270 = vpop.f32.mrb[0].mxu0
      %v4271 = vadd.f32 0.0, %v4270
      %4272 = vdwg.mxu0
      %v4275 = vcombine.low %v4269, %v4271
      %v4277 = vunpack.c.l.s4 1966171168
      %v4278 = vunpack.c.0.s8 %v4277
      %v4279 = vlaneseq
      %v4280 = vshrl.u32 %v4279, 7
      %v4281 = vsub.s32 %v4278, %v4280
      %v4282 = vrot.slane %v4275, %v4281
      %v4284 = vunpack.c.l.s4 1966171168
      %v4285 = vunpack.c.0.s8 %v4284
      %v4286 = vlaneseq
      %v4287 = vshrl.u32 %v4286, 7
      %v4288 = vsub.s32 %v4285, %v4287
      %v4289 = vrot.slane %v4282, %v4288
      %s4291 = scalar_lea.vmem [#allocation2], 48
      %4292 = vst.msk [vmem:[%s4291] ss:$8 sm:$0x3] %vm1246, %v4289
      %4293 = vst.msk [vmem:[%s4291] ss:$8 sm:$0x0] %vm1246, %v4289
      %s4294 = scalar_lea.vmem %s53, 6400
      %v4295 = vld [vmem:[%s4294] sm:$0xff]
      %v4296 = vld [vmem:[%s4294 + $0x8] sm:$0xff]
      %v4297 = vld [vmem:[%s4294 + $0x10] sm:$0xff]
      %v4298 = vld [vmem:[%s4294 + $0x18] sm:$0xff]
      %v4299 = vld [vmem:[%s4294 + $0x20] sm:$0xff]
      %v4300 = vld [vmem:[%s4294 + $0x28] sm:$0xff]
      %v4301 = vld [vmem:[%s4294 + $0x30] sm:$0xff]
      %v4302 = vld [vmem:[%s4294 + $0x38] sm:$0xff]
      %v4303 = vld [vmem:[%s4294 + $0x40] sm:$0xff]
      %v4304 = vld [vmem:[%s4294 + $0x48] sm:$0xff]
      %v4305 = vld [vmem:[%s4294 + $0x50] sm:$0xff]
      %v4306 = vld [vmem:[%s4294 + $0x58] sm:$0xff]
      %v4307 = vld [vmem:[%s4294 + $0x60] sm:$0xff]
      %v4308 = vld [vmem:[%s4294 + $0x68] sm:$0xff]
      %v4309 = vld [vmem:[%s4294 + $0x70] sm:$0xff]
      %v4310 = vld [vmem:[%s4294 + $0x78] sm:$0xff]
      %v4311 = vld [vmem:[%s4294 + $0x80] sm:$0xff]
      %v4312 = vld [vmem:[%s4294 + $0x88] sm:$0xff]
      %v4313 = vld [vmem:[%s4294 + $0x90] sm:$0xff]
      %v4314 = vld [vmem:[%s4294 + $0x98] sm:$0xff]
      %v4315 = vld [vmem:[%s4294 + $0xa0] sm:$0xff]
      %v4316 = vld [vmem:[%s4294 + $0xa8] sm:$0xff]
      %v4317 = vld [vmem:[%s4294 + $0xb0] sm:$0xff]
      %v4318 = vld [vmem:[%s4294 + $0xb8] sm:$0xff]
      %v4319 = vld [vmem:[%s4294 + $0xc0] sm:$0xff]
      %v4320 = vld [vmem:[%s4294 + $0xc8] sm:$0xff]
      %v4321 = vld [vmem:[%s4294 + $0xd0] sm:$0xff]
      %v4322 = vld [vmem:[%s4294 + $0xd8] sm:$0xff]
      %v4323 = vld [vmem:[%s4294 + $0xe0] sm:$0xff]
      %v4324 = vld [vmem:[%s4294 + $0xe8] sm:$0xff]
      %v4325 = vld [vmem:[%s4294 + $0xf0] sm:$0xff]
      %v4326 = vld [vmem:[%s4294 + $0xf8] sm:$0xff]
      %v4328 = vrot.slane %v1120, 1
      %4330 = vmatprep.subr.mxu0 %v4296
      %4331 = vmatpush1.msra.mxu0 %v4295
      %4332 = vmatprep.subr.mxu0 %v4298
      %4333 = vmatpush1.msra.mxu0 %v4297
      %4334 = vmatprep.subr.mxu0 %v4300
      %4335 = vmatpush1.msra.mxu0 %v4299
      %4336 = vmatprep.subr.mxu0 %v4302
      %4337 = vmatpush1.msra.mxu0 %v4301
      %4338 = vmatprep.subr.mxu0 %v4304
      %4339 = vmatpush1.msra.mxu0 %v4303
      %4340 = vmatprep.subr.mxu0 %v4306
      %4341 = vmatpush1.msra.mxu0 %v4305
      %4342 = vmatprep.subr.mxu0 %v4308
      %4343 = vmatpush1.msra.mxu0 %v4307
      %4344 = vmatprep.subr.mxu0 %v4310
      %4345 = vmatpush1.msra.mxu0 %v4309
      %4346 = vmatprep.subr.mxu0 %v4312
      %4347 = vmatpush1.msra.mxu0 %v4311
      %4348 = vmatprep.subr.mxu0 %v4314
      %4349 = vmatpush1.msra.mxu0 %v4313
      %4350 = vmatprep.subr.mxu0 %v4316
      %4351 = vmatpush1.msra.mxu0 %v4315
      %4352 = vmatprep.subr.mxu0 %v4318
      %4353 = vmatpush1.msra.mxu0 %v4317
      %4354 = vmatprep.subr.mxu0 %v4320
      %4355 = vmatpush1.msra.mxu0 %v4319
      %4356 = vmatprep.subr.mxu0 %v4322
      %4357 = vmatpush1.msra.mxu0 %v4321
      %4358 = vmatprep.subr.mxu0 %v4324
      %4359 = vmatpush1.msra.mxu0 %v4323
      %4360 = vmatprep.subr.mxu0 %v4326
      %4361 = vmatpush1.msra.mxu0 %v4325
      %4362 = vmatprep.subr.mxu0 0.0
      %4363 = vmatpush1.msra.mxu0 0.0
      %4364 = vmatprep.subr.mxu0 0.0
      %4365 = vmatpush1.msra.mxu0 0.0
      %4366 = vmatprep.subr.mxu0 0.0
      %4367 = vmatpush1.msra.mxu0 0.0
      %4368 = vmatprep.subr.mxu0 0.0
      %4369 = vmatpush1.msra.mxu0 0.0
      %4370 = vmatprep.subr.mxu0 0.0
      %4371 = vmatpush1.msra.mxu0 0.0
      %4372 = vmatprep.subr.mxu0 0.0
      %4373 = vmatpush1.msra.mxu0 0.0
      %4374 = vmatprep.subr.mxu0 0.0
      %4375 = vmatpush1.msra.mxu0 0.0
      %4376 = vmatprep.subr.mxu0 0.0
      %4377 = vmatpush1.msra.mxu0 0.0
      %4378 = vmatprep.subr.mxu0 0.0
      %4379 = vmatpush1.msra.mxu0 0.0
      %4380 = vmatprep.subr.mxu0 0.0
      %4381 = vmatpush1.msra.mxu0 0.0
      %4382 = vmatprep.subr.mxu0 0.0
      %4383 = vmatpush1.msra.mxu0 0.0
      %4384 = vmatprep.subr.mxu0 0.0
      %4385 = vmatpush1.msra.mxu0 0.0
      %4386 = vmatprep.subr.mxu0 0.0
      %4387 = vmatpush1.msra.mxu0 0.0
      %4388 = vmatprep.subr.mxu0 0.0
      %4389 = vmatpush1.msra.mxu0 0.0
      %4390 = vmatprep.subr.mxu0 0.0
      %4391 = vmatpush1.msra.mxu0 0.0
      %4392 = vmatprep.subr.mxu0 0.0
      %4393 = vmatpush1.msra.mxu0 0.0
      %4394 = vmatprep.mubr.f32.mxu0 0.0
      %4395 = vmatmul.mubr.f32.gmra.mrb[0].mxu0 %v4328
      %v4396 = vpop.f32.mrb[0].mxu0
      %v4397 = vadd.f32 0.0, %v4396
      %v4398 = vpop.f32.mrb[0].mxu0
      %v4399 = vadd.f32 0.0, %v4398
      %4400 = vdwg.mxu0
      %v4403 = vcombine.low %v4397, %v4399
      %v4405 = vunpack.c.l.s4 1966171168
      %v4406 = vunpack.c.0.s8 %v4405
      %v4407 = vlaneseq
      %v4408 = vshrl.u32 %v4407, 7
      %v4409 = vsub.s32 %v4406, %v4408
      %v4410 = vrot.slane %v4403, %v4409
      %v4412 = vunpack.c.l.s4 1966171168
      %v4413 = vunpack.c.0.s8 %v4412
      %v4414 = vlaneseq
      %v4415 = vshrl.u32 %v4414, 7
      %v4416 = vsub.s32 %v4413, %v4415
      %v4417 = vrot.slane %v4410, %v4416
      %s4419 = scalar_lea.vmem [#allocation2], 49
      %4420 = vst.msk [vmem:[%s4419] ss:$8 sm:$0x3] %vm1246, %v4417
      %4421 = vst.msk [vmem:[%s4419] ss:$8 sm:$0x0] %vm1246, %v4417
      %s4422 = scalar_lea.vmem %s53, 6656
      %v4423 = vld [vmem:[%s4422] sm:$0xff]
      %v4424 = vld [vmem:[%s4422 + $0x8] sm:$0xff]
      %v4425 = vld [vmem:[%s4422 + $0x10] sm:$0xff]
      %v4426 = vld [vmem:[%s4422 + $0x18] sm:$0xff]
      %v4427 = vld [vmem:[%s4422 + $0x20] sm:$0xff]
      %v4428 = vld [vmem:[%s4422 + $0x28] sm:$0xff]
      %v4429 = vld [vmem:[%s4422 + $0x30] sm:$0xff]
      %v4430 = vld [vmem:[%s4422 + $0x38] sm:$0xff]
      %v4431 = vld [vmem:[%s4422 + $0x40] sm:$0xff]
      %v4432 = vld [vmem:[%s4422 + $0x48] sm:$0xff]
      %v4433 = vld [vmem:[%s4422 + $0x50] sm:$0xff]
      %v4434 = vld [vmem:[%s4422 + $0x58] sm:$0xff]
      %v4435 = vld [vmem:[%s4422 + $0x60] sm:$0xff]
      %v4436 = vld [vmem:[%s4422 + $0x68] sm:$0xff]
      %v4437 = vld [vmem:[%s4422 + $0x70] sm:$0xff]
      %v4438 = vld [vmem:[%s4422 + $0x78] sm:$0xff]
      %v4439 = vld [vmem:[%s4422 + $0x80] sm:$0xff]
      %v4440 = vld [vmem:[%s4422 + $0x88] sm:$0xff]
      %v4441 = vld [vmem:[%s4422 + $0x90] sm:$0xff]
      %v4442 = vld [vmem:[%s4422 + $0x98] sm:$0xff]
      %v4443 = vld [vmem:[%s4422 + $0xa0] sm:$0xff]
      %v4444 = vld [vmem:[%s4422 + $0xa8] sm:$0xff]
      %v4445 = vld [vmem:[%s4422 + $0xb0] sm:$0xff]
      %v4446 = vld [vmem:[%s4422 + $0xb8] sm:$0xff]
      %v4447 = vld [vmem:[%s4422 + $0xc0] sm:$0xff]
      %v4448 = vld [vmem:[%s4422 + $0xc8] sm:$0xff]
      %v4449 = vld [vmem:[%s4422 + $0xd0] sm:$0xff]
      %v4450 = vld [vmem:[%s4422 + $0xd8] sm:$0xff]
      %v4451 = vld [vmem:[%s4422 + $0xe0] sm:$0xff]
      %v4452 = vld [vmem:[%s4422 + $0xe8] sm:$0xff]
      %v4453 = vld [vmem:[%s4422 + $0xf0] sm:$0xff]
      %v4454 = vld [vmem:[%s4422 + $0xf8] sm:$0xff]
      %v4455 = vrot.slane %v1120, 2
      %4457 = vmatprep.subr.mxu0 %v4424
      %4458 = vmatpush1.msra.mxu0 %v4423
      %4459 = vmatprep.subr.mxu0 %v4426
      %4460 = vmatpush1.msra.mxu0 %v4425
      %4461 = vmatprep.subr.mxu0 %v4428
      %4462 = vmatpush1.msra.mxu0 %v4427
      %4463 = vmatprep.subr.mxu0 %v4430
      %4464 = vmatpush1.msra.mxu0 %v4429
      %4465 = vmatprep.subr.mxu0 %v4432
      %4466 = vmatpush1.msra.mxu0 %v4431
      %4467 = vmatprep.subr.mxu0 %v4434
      %4468 = vmatpush1.msra.mxu0 %v4433
      %4469 = vmatprep.subr.mxu0 %v4436
      %4470 = vmatpush1.msra.mxu0 %v4435
      %4471 = vmatprep.subr.mxu0 %v4438
      %4472 = vmatpush1.msra.mxu0 %v4437
      %4473 = vmatprep.subr.mxu0 %v4440
      %4474 = vmatpush1.msra.mxu0 %v4439
      %4475 = vmatprep.subr.mxu0 %v4442
      %4476 = vmatpush1.msra.mxu0 %v4441
      %4477 = vmatprep.subr.mxu0 %v4444
      %4478 = vmatpush1.msra.mxu0 %v4443
      %4479 = vmatprep.subr.mxu0 %v4446
      %4480 = vmatpush1.msra.mxu0 %v4445
      %4481 = vmatprep.subr.mxu0 %v4448
      %4482 = vmatpush1.msra.mxu0 %v4447
      %4483 = vmatprep.subr.mxu0 %v4450
      %4484 = vmatpush1.msra.mxu0 %v4449
      %4485 = vmatprep.subr.mxu0 %v4452
      %4486 = vmatpush1.msra.mxu0 %v4451
      %4487 = vmatprep.subr.mxu0 %v4454
      %4488 = vmatpush1.msra.mxu0 %v4453
      %4489 = vmatprep.subr.mxu0 0.0
      %4490 = vmatpush1.msra.mxu0 0.0
      %4491 = vmatprep.subr.mxu0 0.0
      %4492 = vmatpush1.msra.mxu0 0.0
      %4493 = vmatprep.subr.mxu0 0.0
      %4494 = vmatpush1.msra.mxu0 0.0
      %4495 = vmatprep.subr.mxu0 0.0
      %4496 = vmatpush1.msra.mxu0 0.0
      %4497 = vmatprep.subr.mxu0 0.0
      %4498 = vmatpush1.msra.mxu0 0.0
      %4499 = vmatprep.subr.mxu0 0.0
      %4500 = vmatpush1.msra.mxu0 0.0
      %4501 = vmatprep.subr.mxu0 0.0
      %4502 = vmatpush1.msra.mxu0 0.0
      %4503 = vmatprep.subr.mxu0 0.0
      %4504 = vmatpush1.msra.mxu0 0.0
      %4505 = vmatprep.subr.mxu0 0.0
      %4506 = vmatpush1.msra.mxu0 0.0
      %4507 = vmatprep.subr.mxu0 0.0
      %4508 = vmatpush1.msra.mxu0 0.0
      %4509 = vmatprep.subr.mxu0 0.0
      %4510 = vmatpush1.msra.mxu0 0.0
      %4511 = vmatprep.subr.mxu0 0.0
      %4512 = vmatpush1.msra.mxu0 0.0
      %4513 = vmatprep.subr.mxu0 0.0
      %4514 = vmatpush1.msra.mxu0 0.0
      %4515 = vmatprep.subr.mxu0 0.0
      %4516 = vmatpush1.msra.mxu0 0.0
      %4517 = vmatprep.subr.mxu0 0.0
      %4518 = vmatpush1.msra.mxu0 0.0
      %4519 = vmatprep.subr.mxu0 0.0
      %4520 = vmatpush1.msra.mxu0 0.0
      %4521 = vmatprep.mubr.f32.mxu0 0.0
      %4522 = vmatmul.mubr.f32.gmra.mrb[0].mxu0 %v4455
      %v4523 = vpop.f32.mrb[0].mxu0
      %v4524 = vadd.f32 0.0, %v4523
      %v4525 = vpop.f32.mrb[0].mxu0
      %v4526 = vadd.f32 0.0, %v4525
      %4527 = vdwg.mxu0
      %v4530 = vcombine.low %v4524, %v4526
      %v4532 = vunpack.c.l.s4 1966171168
      %v4533 = vunpack.c.0.s8 %v4532
      %v4534 = vlaneseq
      %v4535 = vshrl.u32 %v4534, 7
      %v4536 = vsub.s32 %v4533, %v4535
      %v4537 = vrot.slane %v4530, %v4536
      %v4539 = vunpack.c.l.s4 1966171168
      %v4540 = vunpack.c.0.s8 %v4539
      %v4541 = vlaneseq
      %v4542 = vshrl.u32 %v4541, 7
      %v4543 = vsub.s32 %v4540, %v4542
      %v4544 = vrot.slane %v4537, %v4543
      %s4546 = scalar_lea.vmem [#allocation2], 50
      %4547 = vst.msk [vmem:[%s4546] ss:$8 sm:$0x3] %vm1246, %v4544
      %4548 = vst.msk [vmem:[%s4546] ss:$8 sm:$0x0] %vm1246, %v4544
      %s4549 = scalar_lea.vmem %s53, 6912
      %v4550 = vld [vmem:[%s4549] sm:$0xff]
      %v4551 = vld [vmem:[%s4549 + $0x8] sm:$0xff]
      %v4552 = vld [vmem:[%s4549 + $0x10] sm:$0xff]
      %v4553 = vld [vmem:[%s4549 + $0x18] sm:$0xff]
      %v4554 = vld [vmem:[%s4549 + $0x20] sm:$0xff]
      %v4555 = vld [vmem:[%s4549 + $0x28] sm:$0xff]
      %v4556 = vld [vmem:[%s4549 + $0x30] sm:$0xff]
      %v4557 = vld [vmem:[%s4549 + $0x38] sm:$0xff]
      %v4558 = vld [vmem:[%s4549 + $0x40] sm:$0xff]
      %v4559 = vld [vmem:[%s4549 + $0x48] sm:$0xff]
      %v4560 = vld [vmem:[%s4549 + $0x50] sm:$0xff]
      %v4561 = vld [vmem:[%s4549 + $0x58] sm:$0xff]
      %v4562 = vld [vmem:[%s4549 + $0x60] sm:$0xff]
      %v4563 = vld [vmem:[%s4549 + $0x68] sm:$0xff]
      %v4564 = vld [vmem:[%s4549 + $0x70] sm:$0xff]
      %v4565 = vld [vmem:[%s4549 + $0x78] sm:$0xff]
      %v4566 = vld [vmem:[%s4549 + $0x80] sm:$0xff]
      %v4567 = vld [vmem:[%s4549 + $0x88] sm:$0xff]
      %v4568 = vld [vmem:[%s4549 + $0x90] sm:$0xff]
      %v4569 = vld [vmem:[%s4549 + $0x98] sm:$0xff]
      %v4570 = vld [vmem:[%s4549 + $0xa0] sm:$0xff]
      %v4571 = vld [vmem:[%s4549 + $0xa8] sm:$0xff]
      %v4572 = vld [vmem:[%s4549 + $0xb0] sm:$0xff]
      %v4573 = vld [vmem:[%s4549 + $0xb8] sm:$0xff]
      %v4574 = vld [vmem:[%s4549 + $0xc0] sm:$0xff]
      %v4575 = vld [vmem:[%s4549 + $0xc8] sm:$0xff]
      %v4576 = vld [vmem:[%s4549 + $0xd0] sm:$0xff]
      %v4577 = vld [vmem:[%s4549 + $0xd8] sm:$0xff]
      %v4578 = vld [vmem:[%s4549 + $0xe0] sm:$0xff]
      %v4579 = vld [vmem:[%s4549 + $0xe8] sm:$0xff]
      %v4580 = vld [vmem:[%s4549 + $0xf0] sm:$0xff]
      %v4581 = vld [vmem:[%s4549 + $0xf8] sm:$0xff]
      %v4582 = vrot.slane %v1120, 3
      %4584 = vmatprep.subr.mxu0 %v4551
      %4585 = vmatpush1.msra.mxu0 %v4550
      %4586 = vmatprep.subr.mxu0 %v4553
      %4587 = vmatpush1.msra.mxu0 %v4552
      %4588 = vmatprep.subr.mxu0 %v4555
      %4589 = vmatpush1.msra.mxu0 %v4554
      %4590 = vmatprep.subr.mxu0 %v4557
      %4591 = vmatpush1.msra.mxu0 %v4556
      %4592 = vmatprep.subr.mxu0 %v4559
      %4593 = vmatpush1.msra.mxu0 %v4558
      %4594 = vmatprep.subr.mxu0 %v4561
      %4595 = vmatpush1.msra.mxu0 %v4560
      %4596 = vmatprep.subr.mxu0 %v4563
      %4597 = vmatpush1.msra.mxu0 %v4562
      %4598 = vmatprep.subr.mxu0 %v4565
      %4599 = vmatpush1.msra.mxu0 %v4564
      %4600 = vmatprep.subr.mxu0 %v4567
      %4601 = vmatpush1.msra.mxu0 %v4566
      %4602 = vmatprep.subr.mxu0 %v4569
      %4603 = vmatpush1.msra.mxu0 %v4568
      %4604 = vmatprep.subr.mxu0 %v4571
      %4605 = vmatpush1.msra.mxu0 %v4570
      %4606 = vmatprep.subr.mxu0 %v4573
      %4607 = vmatpush1.msra.mxu0 %v4572
      %4608 = vmatprep.subr.mxu0 %v4575
      %4609 = vmatpush1.msra.mxu0 %v4574
      %4610 = vmatprep.subr.mxu0 %v4577
      %4611 = vmatpush1.msra.mxu0 %v4576
      %4612 = vmatprep.subr.mxu0 %v4579
      %4613 = vmatpush1.msra.mxu0 %v4578
      %4614 = vmatprep.subr.mxu0 %v4581
      %4615 = vmatpush1.msra.mxu0 %v4580
      %4616 = vmatprep.subr.mxu0 0.0
      %4617 = vmatpush1.msra.mxu0 0.0
      %4618 = vmatprep.subr.mxu0 0.0
      %4619 = vmatpush1.msra.mxu0 0.0
      %4620 = vmatprep.subr.mxu0 0.0
      %4621 = vmatpush1.msra.mxu0 0.0
      %4622 = vmatprep.subr.mxu0 0.0
      %4623 = vmatpush1.msra.mxu0 0.0
      %4624 = vmatprep.subr.mxu0 0.0
      %4625 = vmatpush1.msra.mxu0 0.0
      %4626 = vmatprep.subr.mxu0 0.0
      %4627 = vmatpush1.msra.mxu0 0.0
      %4628 = vmatprep.subr.mxu0 0.0
      %4629 = vmatpush1.msra.mxu0 0.0
      %4630 = vmatprep.subr.mxu0 0.0
      %4631 = vmatpush1.msra.mxu0 0.0
      %4632 = vmatprep.subr.mxu0 0.0
      %4633 = vmatpush1.msra.mxu0 0.0
      %4634 = vmatprep.subr.mxu0 0.0
      %4635 = vmatpush1.msra.mxu0 0.0
      %4636 = vmatprep.subr.mxu0 0.0
      %4637 = vmatpush1.msra.mxu0 0.0
      %4638 = vmatprep.subr.mxu0 0.0
      %4639 = vmatpush1.msra.mxu0 0.0
      %4640 = vmatprep.subr.mxu0 0.0
      %4641 = vmatpush1.msra.mxu0 0.0
      %4642 = vmatprep.subr.mxu0 0.0
      %4643 = vmatpush1.msra.mxu0 0.0
      %4644 = vmatprep.subr.mxu0 0.0
      %4645 = vmatpush1.msra.mxu0 0.0
      %4646 = vmatprep.subr.mxu0 0.0
      %4647 = vmatpush1.msra.mxu0 0.0
      %4648 = vmatprep.mubr.f32.mxu0 0.0
      %4649 = vmatmul.mubr.f32.gmra.mrb[0].mxu0 %v4582
      %v4650 = vpop.f32.mrb[0].mxu0
      %v4651 = vadd.f32 0.0, %v4650
      %v4652 = vpop.f32.mrb[0].mxu0
      %v4653 = vadd.f32 0.0, %v4652
      %4654 = vdwg.mxu0
      %v4657 = vcombine.low %v4651, %v4653
      %v4659 = vunpack.c.l.s4 1966171168
      %v4660 = vunpack.c.0.s8 %v4659
      %v4661 = vlaneseq
      %v4662 = vshrl.u32 %v4661, 7
      %v4663 = vsub.s32 %v4660, %v4662
      %v4664 = vrot.slane %v4657, %v4663
      %v4666 = vunpack.c.l.s4 1966171168
      %v4667 = vunpack.c.0.s8 %v4666
      %v4668 = vlaneseq
      %v4669 = vshrl.u32 %v4668, 7
      %v4670 = vsub.s32 %v4667, %v4669
      %v4671 = vrot.slane %v4664, %v4670
      %s4673 = scalar_lea.vmem [#allocation2], 51
      %4674 = vst.msk [vmem:[%s4673] ss:$8 sm:$0x3] %vm1246, %v4671
      %4675 = vst.msk [vmem:[%s4673] ss:$8 sm:$0x0] %vm1246, %v4671
      %s4676 = scalar_lea.vmem %s53, 7168
      %v4677 = vld [vmem:[%s4676] sm:$0xff]
      %v4678 = vld [vmem:[%s4676 + $0x8] sm:$0xff]
      %v4679 = vld [vmem:[%s4676 + $0x10] sm:$0xff]
      %v4680 = vld [vmem:[%s4676 + $0x18] sm:$0xff]
      %v4681 = vld [vmem:[%s4676 + $0x20] sm:$0xff]
      %v4682 = vld [vmem:[%s4676 + $0x28] sm:$0xff]
      %v4683 = vld [vmem:[%s4676 + $0x30] sm:$0xff]
      %v4684 = vld [vmem:[%s4676 + $0x38] sm:$0xff]
      %v4685 = vld [vmem:[%s4676 + $0x40] sm:$0xff]
      %v4686 = vld [vmem:[%s4676 + $0x48] sm:$0xff]
      %v4687 = vld [vmem:[%s4676 + $0x50] sm:$0xff]
      %v4688 = vld [vmem:[%s4676 + $0x58] sm:$0xff]
      %v4689 = vld [vmem:[%s4676 + $0x60] sm:$0xff]
      %v4690 = vld [vmem:[%s4676 + $0x68] sm:$0xff]
      %v4691 = vld [vmem:[%s4676 + $0x70] sm:$0xff]
      %v4692 = vld [vmem:[%s4676 + $0x78] sm:$0xff]
      %v4693 = vld [vmem:[%s4676 + $0x80] sm:$0xff]
      %v4694 = vld [vmem:[%s4676 + $0x88] sm:$0xff]
      %v4695 = vld [vmem:[%s4676 + $0x90] sm:$0xff]
      %v4696 = vld [vmem:[%s4676 + $0x98] sm:$0xff]
      %v4697 = vld [vmem:[%s4676 + $0xa0] sm:$0xff]
      %v4698 = vld [vmem:[%s4676 + $0xa8] sm:$0xff]
      %v4699 = vld [vmem:[%s4676 + $0xb0] sm:$0xff]
      %v4700 = vld [vmem:[%s4676 + $0xb8] sm:$0xff]
      %v4701 = vld [vmem:[%s4676 + $0xc0] sm:$0xff]
      %v4702 = vld [vmem:[%s4676 + $0xc8] sm:$0xff]
      %v4703 = vld [vmem:[%s4676 + $0xd0] sm:$0xff]
      %v4704 = vld [vmem:[%s4676 + $0xd8] sm:$0xff]
      %v4705 = vld [vmem:[%s4676 + $0xe0] sm:$0xff]
      %v4706 = vld [vmem:[%s4676 + $0xe8] sm:$0xff]
      %v4707 = vld [vmem:[%s4676 + $0xf0] sm:$0xff]
      %v4708 = vld [vmem:[%s4676 + $0xf8] sm:$0xff]
      %v4709 = vrot.slane %v1120, 4
      %4711 = vmatprep.subr.mxu0 %v4678
      %4712 = vmatpush1.msra.mxu0 %v4677
      %4713 = vmatprep.subr.mxu0 %v4680
      %4714 = vmatpush1.msra.mxu0 %v4679
      %4715 = vmatprep.subr.mxu0 %v4682
      %4716 = vmatpush1.msra.mxu0 %v4681
      %4717 = vmatprep.subr.mxu0 %v4684
      %4718 = vmatpush1.msra.mxu0 %v4683
      %4719 = vmatprep.subr.mxu0 %v4686
      %4720 = vmatpush1.msra.mxu0 %v4685
      %4721 = vmatprep.subr.mxu0 %v4688
      %4722 = vmatpush1.msra.mxu0 %v4687
      %4723 = vmatprep.subr.mxu0 %v4690
      %4724 = vmatpush1.msra.mxu0 %v4689
      %4725 = vmatprep.subr.mxu0 %v4692
      %4726 = vmatpush1.msra.mxu0 %v4691
      %4727 = vmatprep.subr.mxu0 %v4694
      %4728 = vmatpush1.msra.mxu0 %v4693
      %4729 = vmatprep.subr.mxu0 %v4696
      %4730 = vmatpush1.msra.mxu0 %v4695
      %4731 = vmatprep.subr.mxu0 %v4698
      %4732 = vmatpush1.msra.mxu0 %v4697
      %4733 = vmatprep.subr.mxu0 %v4700
      %4734 = vmatpush1.msra.mxu0 %v4699
      %4735 = vmatprep.subr.mxu0 %v4702
      %4736 = vmatpush1.msra.mxu0 %v4701
      %4737 = vmatprep.subr.mxu0 %v4704
      %4738 = vmatpush1.msra.mxu0 %v4703
      %4739 = vmatprep.subr.mxu0 %v4706
      %4740 = vmatpush1.msra.mxu0 %v4705
      %4741 = vmatprep.subr.mxu0 %v4708
      %4742 = vmatpush1.msra.mxu0 %v4707
      %4743 = vmatprep.subr.mxu0 0.0
      %4744 = vmatpush1.msra.mxu0 0.0
      %4745 = vmatprep.subr.mxu0 0.0
      %4746 = vmatpush1.msra.mxu0 0.0
      %4747 = vmatprep.subr.mxu0 0.0
      %4748 = vmatpush1.msra.mxu0 0.0
      %4749 = vmatprep.subr.mxu0 0.0
      %4750 = vmatpush1.msra.mxu0 0.0
      %4751 = vmatprep.subr.mxu0 0.0
      %4752 = vmatpush1.msra.mxu0 0.0
      %4753 = vmatprep.subr.mxu0 0.0
      %4754 = vmatpush1.msra.mxu0 0.0
      %4755 = vmatprep.subr.mxu0 0.0
      %4756 = vmatpush1.msra.mxu0 0.0
      %4757 = vmatprep.subr.mxu0 0.0
      %4758 = vmatpush1.msra.mxu0 0.0
      %4759 = vmatprep.subr.mxu0 0.0
      %4760 = vmatpush1.msra.mxu0 0.0
      %4761 = vmatprep.subr.mxu0 0.0
      %4762 = vmatpush1.msra.mxu0 0.0
      %4763 = vmatprep.subr.mxu0 0.0
      %4764 = vmatpush1.msra.mxu0 0.0
      %4765 = vmatprep.subr.mxu0 0.0
      %4766 = vmatpush1.msra.mxu0 0.0
      %4767 = vmatprep.subr.mxu0 0.0
      %4768 = vmatpush1.msra.mxu0 0.0
      %4769 = vmatprep.subr.mxu0 0.0
      %4770 = vmatpush1.msra.mxu0 0.0
      %4771 = vmatprep.subr.mxu0 0.0
      %4772 = vmatpush1.msra.mxu0 0.0
      %4773 = vmatprep.subr.mxu0 0.0
      %4774 = vmatpush1.msra.mxu0 0.0
      %4775 = vmatprep.mubr.f32.mxu0 0.0
      %4776 = vmatmul.mubr.f32.gmra.mrb[0].mxu0 %v4709
      %v4777 = vpop.f32.mrb[0].mxu0
      %v4778 = vadd.f32 0.0, %v4777
      %v4779 = vpop.f32.mrb[0].mxu0
      %v4780 = vadd.f32 0.0, %v4779
      %4781 = vdwg.mxu0
      %v4784 = vcombine.low %v4778, %v4780
      %v4786 = vunpack.c.l.s4 1966171168
      %v4787 = vunpack.c.0.s8 %v4786
      %v4788 = vlaneseq
      %v4789 = vshrl.u32 %v4788, 7
      %v4790 = vsub.s32 %v4787, %v4789
      %v4791 = vrot.slane %v4784, %v4790
      %v4793 = vunpack.c.l.s4 1966171168
      %v4794 = vunpack.c.0.s8 %v4793
      %v4795 = vlaneseq
      %v4796 = vshrl.u32 %v4795, 7
      %v4797 = vsub.s32 %v4794, %v4796
      %v4798 = vrot.slane %v4791, %v4797
      %s4800 = scalar_lea.vmem [#allocation2], 52
      %4801 = vst.msk [vmem:[%s4800] ss:$8 sm:$0x3] %vm1246, %v4798
      %4802 = vst.msk [vmem:[%s4800] ss:$8 sm:$0x0] %vm1246, %v4798
      %s4803 = scalar_lea.vmem %s53, 7424
      %v4804 = vld [vmem:[%s4803] sm:$0xff]
      %v4805 = vld [vmem:[%s4803 + $0x8] sm:$0xff]
      %v4806 = vld [vmem:[%s4803 + $0x10] sm:$0xff]
      %v4807 = vld [vmem:[%s4803 + $0x18] sm:$0xff]
      %v4808 = vld [vmem:[%s4803 + $0x20] sm:$0xff]
      %v4809 = vld [vmem:[%s4803 + $0x28] sm:$0xff]
      %v4810 = vld [vmem:[%s4803 + $0x30] sm:$0xff]
      %v4811 = vld [vmem:[%s4803 + $0x38] sm:$0xff]
      %v4812 = vld [vmem:[%s4803 + $0x40] sm:$0xff]
      %v4813 = vld [vmem:[%s4803 + $0x48] sm:$0xff]
      %v4814 = vld [vmem:[%s4803 + $0x50] sm:$0xff]
      %v4815 = vld [vmem:[%s4803 + $0x58] sm:$0xff]
      %v4816 = vld [vmem:[%s4803 + $0x60] sm:$0xff]
      %v4817 = vld [vmem:[%s4803 + $0x68] sm:$0xff]
      %v4818 = vld [vmem:[%s4803 + $0x70] sm:$0xff]
      %v4819 = vld [vmem:[%s4803 + $0x78] sm:$0xff]
      %v4820 = vld [vmem:[%s4803 + $0x80] sm:$0xff]
      %v4821 = vld [vmem:[%s4803 + $0x88] sm:$0xff]
      %v4822 = vld [vmem:[%s4803 + $0x90] sm:$0xff]
      %v4823 = vld [vmem:[%s4803 + $0x98] sm:$0xff]
      %v4824 = vld [vmem:[%s4803 + $0xa0] sm:$0xff]
      %v4825 = vld [vmem:[%s4803 + $0xa8] sm:$0xff]
      %v4826 = vld [vmem:[%s4803 + $0xb0] sm:$0xff]
      %v4827 = vld [vmem:[%s4803 + $0xb8] sm:$0xff]
      %v4828 = vld [vmem:[%s4803 + $0xc0] sm:$0xff]
      %v4829 = vld [vmem:[%s4803 + $0xc8] sm:$0xff]
      %v4830 = vld [vmem:[%s4803 + $0xd0] sm:$0xff]
      %v4831 = vld [vmem:[%s4803 + $0xd8] sm:$0xff]
      %v4832 = vld [vmem:[%s4803 + $0xe0] sm:$0xff]
      %v4833 = vld [vmem:[%s4803 + $0xe8] sm:$0xff]
      %v4834 = vld [vmem:[%s4803 + $0xf0] sm:$0xff]
      %v4835 = vld [vmem:[%s4803 + $0xf8] sm:$0xff]
      %v4836 = vrot.slane %v1120, 5
      %4838 = vmatprep.subr.mxu0 %v4805
      %4839 = vmatpush1.msra.mxu0 %v4804
      %4840 = vmatprep.subr.mxu0 %v4807
      %4841 = vmatpush1.msra.mxu0 %v4806
      %4842 = vmatprep.subr.mxu0 %v4809
      %4843 = vmatpush1.msra.mxu0 %v4808
      %4844 = vmatprep.subr.mxu0 %v4811
      %4845 = vmatpush1.msra.mxu0 %v4810
      %4846 = vmatprep.subr.mxu0 %v4813
      %4847 = vmatpush1.msra.mxu0 %v4812
      %4848 = vmatprep.subr.mxu0 %v4815
      %4849 = vmatpush1.msra.mxu0 %v4814
      %4850 = vmatprep.subr.mxu0 %v4817
      %4851 = vmatpush1.msra.mxu0 %v4816
      %4852 = vmatprep.subr.mxu0 %v4819
      %4853 = vmatpush1.msra.mxu0 %v4818
      %4854 = vmatprep.subr.mxu0 %v4821
      %4855 = vmatpush1.msra.mxu0 %v4820
      %4856 = vmatprep.subr.mxu0 %v4823
      %4857 = vmatpush1.msra.mxu0 %v4822
      %4858 = vmatprep.subr.mxu0 %v4825
      %4859 = vmatpush1.msra.mxu0 %v4824
      %4860 = vmatprep.subr.mxu0 %v4827
      %4861 = vmatpush1.msra.mxu0 %v4826
      %4862 = vmatprep.subr.mxu0 %v4829
      %4863 = vmatpush1.msra.mxu0 %v4828
      %4864 = vmatprep.subr.mxu0 %v4831
      %4865 = vmatpush1.msra.mxu0 %v4830
      %4866 = vmatprep.subr.mxu0 %v4833
      %4867 = vmatpush1.msra.mxu0 %v4832
      %4868 = vmatprep.subr.mxu0 %v4835
      %4869 = vmatpush1.msra.mxu0 %v4834
      %4870 = vmatprep.subr.mxu0 0.0
      %4871 = vmatpush1.msra.mxu0 0.0
      %4872 = vmatprep.subr.mxu0 0.0
      %4873 = vmatpush1.msra.mxu0 0.0
      %4874 = vmatprep.subr.mxu0 0.0
      %4875 = vmatpush1.msra.mxu0 0.0
      %4876 = vmatprep.subr.mxu0 0.0
      %4877 = vmatpush1.msra.mxu0 0.0
      %4878 = vmatprep.subr.mxu0 0.0
      %4879 = vmatpush1.msra.mxu0 0.0
      %4880 = vmatprep.subr.mxu0 0.0
      %4881 = vmatpush1.msra.mxu0 0.0
      %4882 = vmatprep.subr.mxu0 0.0
      %4883 = vmatpush1.msra.mxu0 0.0
      %4884 = vmatprep.subr.mxu0 0.0
      %4885 = vmatpush1.msra.mxu0 0.0
      %4886 = vmatprep.subr.mxu0 0.0
      %4887 = vmatpush1.msra.mxu0 0.0
      %4888 = vmatprep.subr.mxu0 0.0
      %4889 = vmatpush1.msra.mxu0 0.0
      %4890 = vmatprep.subr.mxu0 0.0
      %4891 = vmatpush1.msra.mxu0 0.0
      %4892 = vmatprep.subr.mxu0 0.0
      %4893 = vmatpush1.msra.mxu0 0.0
      %4894 = vmatprep.subr.mxu0 0.0
      %4895 = vmatpush1.msra.mxu0 0.0
      %4896 = vmatprep.subr.mxu0 0.0
      %4897 = vmatpush1.msra.mxu0 0.0
      %4898 = vmatprep.subr.mxu0 0.0
      %4899 = vmatpush1.msra.mxu0 0.0
      %4900 = vmatprep.subr.mxu0 0.0
      %4901 = vmatpush1.msra.mxu0 0.0
      %4902 = vmatprep.mubr.f32.mxu0 0.0
      %4903 = vmatmul.mubr.f32.gmra.mrb[0].mxu0 %v4836
      %v4904 = vpop.f32.mrb[0].mxu0
      %v4905 = vadd.f32 0.0, %v4904
      %v4906 = vpop.f32.mrb[0].mxu0
      %v4907 = vadd.f32 0.0, %v4906
      %4908 = vdwg.mxu0
      %v4911 = vcombine.low %v4905, %v4907
      %v4913 = vunpack.c.l.s4 1966171168
      %v4914 = vunpack.c.0.s8 %v4913
      %v4915 = vlaneseq
      %v4916 = vshrl.u32 %v4915, 7
      %v4917 = vsub.s32 %v4914, %v4916
      %v4918 = vrot.slane %v4911, %v4917
      %v4920 = vunpack.c.l.s4 1966171168
      %v4921 = vunpack.c.0.s8 %v4920
      %v4922 = vlaneseq
      %v4923 = vshrl.u32 %v4922, 7
      %v4924 = vsub.s32 %v4921, %v4923
      %v4925 = vrot.slane %v4918, %v4924
      %s4927 = scalar_lea.vmem [#allocation2], 53
      %4928 = vst.msk [vmem:[%s4927] ss:$8 sm:$0x3] %vm1246, %v4925
      %4929 = vst.msk [vmem:[%s4927] ss:$8 sm:$0x0] %vm1246, %v4925
      %s4930 = scalar_lea.vmem %s53, 7680
      %v4931 = vld [vmem:[%s4930] sm:$0xff]
      %v4932 = vld [vmem:[%s4930 + $0x8] sm:$0xff]
      %v4933 = vld [vmem:[%s4930 + $0x10] sm:$0xff]
      %v4934 = vld [vmem:[%s4930 + $0x18] sm:$0xff]
      %v4935 = vld [vmem:[%s4930 + $0x20] sm:$0xff]
      %v4936 = vld [vmem:[%s4930 + $0x28] sm:$0xff]
      %v4937 = vld [vmem:[%s4930 + $0x30] sm:$0xff]
      %v4938 = vld [vmem:[%s4930 + $0x38] sm:$0xff]
      %v4939 = vld [vmem:[%s4930 + $0x40] sm:$0xff]
      %v4940 = vld [vmem:[%s4930 + $0x48] sm:$0xff]
      %v4941 = vld [vmem:[%s4930 + $0x50] sm:$0xff]
      %v4942 = vld [vmem:[%s4930 + $0x58] sm:$0xff]
      %v4943 = vld [vmem:[%s4930 + $0x60] sm:$0xff]
      %v4944 = vld [vmem:[%s4930 + $0x68] sm:$0xff]
      %v4945 = vld [vmem:[%s4930 + $0x70] sm:$0xff]
      %v4946 = vld [vmem:[%s4930 + $0x78] sm:$0xff]
      %v4947 = vld [vmem:[%s4930 + $0x80] sm:$0xff]
      %v4948 = vld [vmem:[%s4930 + $0x88] sm:$0xff]
      %v4949 = vld [vmem:[%s4930 + $0x90] sm:$0xff]
      %v4950 = vld [vmem:[%s4930 + $0x98] sm:$0xff]
      %v4951 = vld [vmem:[%s4930 + $0xa0] sm:$0xff]
      %v4952 = vld [vmem:[%s4930 + $0xa8] sm:$0xff]
      %v4953 = vld [vmem:[%s4930 + $0xb0] sm:$0xff]
      %v4954 = vld [vmem:[%s4930 + $0xb8] sm:$0xff]
      %v4955 = vld [vmem:[%s4930 + $0xc0] sm:$0xff]
      %v4956 = vld [vmem:[%s4930 + $0xc8] sm:$0xff]
      %v4957 = vld [vmem:[%s4930 + $0xd0] sm:$0xff]
      %v4958 = vld [vmem:[%s4930 + $0xd8] sm:$0xff]
      %v4959 = vld [vmem:[%s4930 + $0xe0] sm:$0xff]
      %v4960 = vld [vmem:[%s4930 + $0xe8] sm:$0xff]
      %v4961 = vld [vmem:[%s4930 + $0xf0] sm:$0xff]
      %v4962 = vld [vmem:[%s4930 + $0xf8] sm:$0xff]
      %v4963 = vrot.slane %v1120, 6
      %4965 = vmatprep.subr.mxu0 %v4932
      %4966 = vmatpush1.msra.mxu0 %v4931
      %4967 = vmatprep.subr.mxu0 %v4934
      %4968 = vmatpush1.msra.mxu0 %v4933
      %4969 = vmatprep.subr.mxu0 %v4936
      %4970 = vmatpush1.msra.mxu0 %v4935
      %4971 = vmatprep.subr.mxu0 %v4938
      %4972 = vmatpush1.msra.mxu0 %v4937
      %4973 = vmatprep.subr.mxu0 %v4940
      %4974 = vmatpush1.msra.mxu0 %v4939
      %4975 = vmatprep.subr.mxu0 %v4942
      %4976 = vmatpush1.msra.mxu0 %v4941
      %4977 = vmatprep.subr.mxu0 %v4944
      %4978 = vmatpush1.msra.mxu0 %v4943
      %4979 = vmatprep.subr.mxu0 %v4946
      %4980 = vmatpush1.msra.mxu0 %v4945
      %4981 = vmatprep.subr.mxu0 %v4948
      %4982 = vmatpush1.msra.mxu0 %v4947
      %4983 = vmatprep.subr.mxu0 %v4950
      %4984 = vmatpush1.msra.mxu0 %v4949
      %4985 = vmatprep.subr.mxu0 %v4952
      %4986 = vmatpush1.msra.mxu0 %v4951
      %4987 = vmatprep.subr.mxu0 %v4954
      %4988 = vmatpush1.msra.mxu0 %v4953
      %4989 = vmatprep.subr.mxu0 %v4956
      %4990 = vmatpush1.msra.mxu0 %v4955
      %4991 = vmatprep.subr.mxu0 %v4958
      %4992 = vmatpush1.msra.mxu0 %v4957
      %4993 = vmatprep.subr.mxu0 %v4960
      %4994 = vmatpush1.msra.mxu0 %v4959
      %4995 = vmatprep.subr.mxu0 %v4962
      %4996 = vmatpush1.msra.mxu0 %v4961
      %4997 = vmatprep.subr.mxu0 0.0
      %4998 = vmatpush1.msra.mxu0 0.0
      %4999 = vmatprep.subr.mxu0 0.0
      %5000 = vmatpush1.msra.mxu0 0.0
      %5001 = vmatprep.subr.mxu0 0.0
      %5002 = vmatpush1.msra.mxu0 0.0
      %5003 = vmatprep.subr.mxu0 0.0
      %5004 = vmatpush1.msra.mxu0 0.0
      %5005 = vmatprep.subr.mxu0 0.0
      %5006 = vmatpush1.msra.mxu0 0.0
      %5007 = vmatprep.subr.mxu0 0.0
      %5008 = vmatpush1.msra.mxu0 0.0
      %5009 = vmatprep.subr.mxu0 0.0
      %5010 = vmatpush1.msra.mxu0 0.0
      %5011 = vmatprep.subr.mxu0 0.0
      %5012 = vmatpush1.msra.mxu0 0.0
      %5013 = vmatprep.subr.mxu0 0.0
      %5014 = vmatpush1.msra.mxu0 0.0
      %5015 = vmatprep.subr.mxu0 0.0
      %5016 = vmatpush1.msra.mxu0 0.0
      %5017 = vmatprep.subr.mxu0 0.0
      %5018 = vmatpush1.msra.mxu0 0.0
      %5019 = vmatprep.subr.mxu0 0.0
      %5020 = vmatpush1.msra.mxu0 0.0
      %5021 = vmatprep.subr.mxu0 0.0
      %5022 = vmatpush1.msra.mxu0 0.0
      %5023 = vmatprep.subr.mxu0 0.0
      %5024 = vmatpush1.msra.mxu0 0.0
      %5025 = vmatprep.subr.mxu0 0.0
      %5026 = vmatpush1.msra.mxu0 0.0
      %5027 = vmatprep.subr.mxu0 0.0
      %5028 = vmatpush1.msra.mxu0 0.0
      %5029 = vmatprep.mubr.f32.mxu0 0.0
      %5030 = vmatmul.mubr.f32.gmra.mrb[0].mxu0 %v4963
      %v5031 = vpop.f32.mrb[0].mxu0
      %v5032 = vadd.f32 0.0, %v5031
      %v5033 = vpop.f32.mrb[0].mxu0
      %v5034 = vadd.f32 0.0, %v5033
      %5035 = vdwg.mxu0
      %v5038 = vcombine.low %v5032, %v5034
      %v5040 = vunpack.c.l.s4 1966171168
      %v5041 = vunpack.c.0.s8 %v5040
      %v5042 = vlaneseq
      %v5043 = vshrl.u32 %v5042, 7
      %v5044 = vsub.s32 %v5041, %v5043
      %v5045 = vrot.slane %v5038, %v5044
      %v5047 = vunpack.c.l.s4 1966171168
      %v5048 = vunpack.c.0.s8 %v5047
      %v5049 = vlaneseq
      %v5050 = vshrl.u32 %v5049, 7
      %v5051 = vsub.s32 %v5048, %v5050
      %v5052 = vrot.slane %v5045, %v5051
      %s5054 = scalar_lea.vmem [#allocation2], 54
      %5055 = vst.msk [vmem:[%s5054] ss:$8 sm:$0x3] %vm1246, %v5052
      %5056 = vst.msk [vmem:[%s5054] ss:$8 sm:$0x0] %vm1246, %v5052
      %s5057 = scalar_lea.vmem %s53, 7936
      %v5058 = vld [vmem:[%s5057] sm:$0xff]
      %v5059 = vld [vmem:[%s5057 + $0x8] sm:$0xff]
      %v5060 = vld [vmem:[%s5057 + $0x10] sm:$0xff]
      %v5061 = vld [vmem:[%s5057 + $0x18] sm:$0xff]
      %v5062 = vld [vmem:[%s5057 + $0x20] sm:$0xff]
      %v5063 = vld [vmem:[%s5057 + $0x28] sm:$0xff]
      %v5064 = vld [vmem:[%s5057 + $0x30] sm:$0xff]
      %v5065 = vld [vmem:[%s5057 + $0x38] sm:$0xff]
      %v5066 = vld [vmem:[%s5057 + $0x40] sm:$0xff]
      %v5067 = vld [vmem:[%s5057 + $0x48] sm:$0xff]
      %v5068 = vld [vmem:[%s5057 + $0x50] sm:$0xff]
      %v5069 = vld [vmem:[%s5057 + $0x58] sm:$0xff]
      %v5070 = vld [vmem:[%s5057 + $0x60] sm:$0xff]
      %v5071 = vld [vmem:[%s5057 + $0x68] sm:$0xff]
      %v5072 = vld [vmem:[%s5057 + $0x70] sm:$0xff]
      %v5073 = vld [vmem:[%s5057 + $0x78] sm:$0xff]
      %v5074 = vld [vmem:[%s5057 + $0x80] sm:$0xff]
      %v5075 = vld [vmem:[%s5057 + $0x88] sm:$0xff]
      %v5076 = vld [vmem:[%s5057 + $0x90] sm:$0xff]
      %v5077 = vld [vmem:[%s5057 + $0x98] sm:$0xff]
      %v5078 = vld [vmem:[%s5057 + $0xa0] sm:$0xff]
      %v5079 = vld [vmem:[%s5057 + $0xa8] sm:$0xff]
      %v5080 = vld [vmem:[%s5057 + $0xb0] sm:$0xff]
      %v5081 = vld [vmem:[%s5057 + $0xb8] sm:$0xff]
      %v5082 = vld [vmem:[%s5057 + $0xc0] sm:$0xff]
      %v5083 = vld [vmem:[%s5057 + $0xc8] sm:$0xff]
      %v5084 = vld [vmem:[%s5057 + $0xd0] sm:$0xff]
      %v5085 = vld [vmem:[%s5057 + $0xd8] sm:$0xff]
      %v5086 = vld [vmem:[%s5057 + $0xe0] sm:$0xff]
      %v5087 = vld [vmem:[%s5057 + $0xe8] sm:$0xff]
      %v5088 = vld [vmem:[%s5057 + $0xf0] sm:$0xff]
      %v5089 = vld [vmem:[%s5057 + $0xf8] sm:$0xff]
      %v5090 = vrot.slane %v1120, 7
      %5092 = vmatprep.subr.mxu0 %v5059
      %5093 = vmatpush1.msra.mxu0 %v5058
      %5094 = vmatprep.subr.mxu0 %v5061
      %5095 = vmatpush1.msra.mxu0 %v5060
      %5096 = vmatprep.subr.mxu0 %v5063
      %5097 = vmatpush1.msra.mxu0 %v5062
      %5098 = vmatprep.subr.mxu0 %v5065
      %5099 = vmatpush1.msra.mxu0 %v5064
      %5100 = vmatprep.subr.mxu0 %v5067
      %5101 = vmatpush1.msra.mxu0 %v5066
      %5102 = vmatprep.subr.mxu0 %v5069
      %5103 = vmatpush1.msra.mxu0 %v5068
      %5104 = vmatprep.subr.mxu0 %v5071
      %5105 = vmatpush1.msra.mxu0 %v5070
      %5106 = vmatprep.subr.mxu0 %v5073
      %5107 = vmatpush1.msra.mxu0 %v5072
      %5108 = vmatprep.subr.mxu0 %v5075
      %5109 = vmatpush1.msra.mxu0 %v5074
      %5110 = vmatprep.subr.mxu0 %v5077
      %5111 = vmatpush1.msra.mxu0 %v5076
      %5112 = vmatprep.subr.mxu0 %v5079
      %5113 = vmatpush1.msra.mxu0 %v5078
      %5114 = vmatprep.subr.mxu0 %v5081
      %5115 = vmatpush1.msra.mxu0 %v5080
      %5116 = vmatprep.subr.mxu0 %v5083
      %5117 = vmatpush1.msra.mxu0 %v5082
      %5118 = vmatprep.subr.mxu0 %v5085
      %5119 = vmatpush1.msra.mxu0 %v5084
      %5120 = vmatprep.subr.mxu0 %v5087
      %5121 = vmatpush1.msra.mxu0 %v5086
      %5122 = vmatprep.subr.mxu0 %v5089
      %5123 = vmatpush1.msra.mxu0 %v5088
      %5124 = vmatprep.subr.mxu0 0.0
      %5125 = vmatpush1.msra.mxu0 0.0
      %5126 = vmatprep.subr.mxu0 0.0
      %5127 = vmatpush1.msra.mxu0 0.0
      %5128 = vmatprep.subr.mxu0 0.0
      %5129 = vmatpush1.msra.mxu0 0.0
      %5130 = vmatprep.subr.mxu0 0.0
      %5131 = vmatpush1.msra.mxu0 0.0
      %5132 = vmatprep.subr.mxu0 0.0
      %5133 = vmatpush1.msra.mxu0 0.0
      %5134 = vmatprep.subr.mxu0 0.0
      %5135 = vmatpush1.msra.mxu0 0.0
      %5136 = vmatprep.subr.mxu0 0.0
      %5137 = vmatpush1.msra.mxu0 0.0
      %5138 = vmatprep.subr.mxu0 0.0
      %5139 = vmatpush1.msra.mxu0 0.0
      %5140 = vmatprep.subr.mxu0 0.0
      %5141 = vmatpush1.msra.mxu0 0.0
      %5142 = vmatprep.subr.mxu0 0.0
      %5143 = vmatpush1.msra.mxu0 0.0
      %5144 = vmatprep.subr.mxu0 0.0
      %5145 = vmatpush1.msra.mxu0 0.0
      %5146 = vmatprep.subr.mxu0 0.0
      %5147 = vmatpush1.msra.mxu0 0.0
      %5148 = vmatprep.subr.mxu0 0.0
      %5149 = vmatpush1.msra.mxu0 0.0
      %5150 = vmatprep.subr.mxu0 0.0
      %5151 = vmatpush1.msra.mxu0 0.0
      %5152 = vmatprep.subr.mxu0 0.0
      %5153 = vmatpush1.msra.mxu0 0.0
      %5154 = vmatprep.subr.mxu0 0.0
      %5155 = vmatpush1.msra.mxu0 0.0
      %5156 = vmatprep.mubr.f32.mxu0 0.0
      %5157 = vmatmul.mubr.f32.gmra.mrb[0].mxu0 %v5090
      %v5158 = vpop.f32.mrb[0].mxu0
      %v5159 = vadd.f32 0.0, %v5158
      %v5160 = vpop.f32.mrb[0].mxu0
      %v5161 = vadd.f32 0.0, %v5160
      %5162 = vdwg.mxu0
      %v5165 = vcombine.low %v5159, %v5161
      %v5167 = vunpack.c.l.s4 1966171168
      %v5168 = vunpack.c.0.s8 %v5167
      %v5169 = vlaneseq
      %v5170 = vshrl.u32 %v5169, 7
      %v5171 = vsub.s32 %v5168, %v5170
      %v5172 = vrot.slane %v5165, %v5171
      %v5174 = vunpack.c.l.s4 1966171168
      %v5175 = vunpack.c.0.s8 %v5174
      %v5176 = vlaneseq
      %v5177 = vshrl.u32 %v5176, 7
      %v5178 = vsub.s32 %v5175, %v5177
      %v5179 = vrot.slane %v5172, %v5178
      %s5181 = scalar_lea.vmem [#allocation2], 55
      %5182 = vst.msk [vmem:[%s5181] ss:$8 sm:$0x3] %vm1246, %v5179
      %5183 = vst.msk [vmem:[%s5181] ss:$8 sm:$0x0] %vm1246, %v5179
      %s5184 = scalar_lea.vmem %s53, 8192
      %v5185 = vld [vmem:[%s5184] sm:$0xff]
      %v5186 = vld [vmem:[%s5184 + $0x8] sm:$0xff]
      %v5187 = vld [vmem:[%s5184 + $0x10] sm:$0xff]
      %v5188 = vld [vmem:[%s5184 + $0x18] sm:$0xff]
      %v5189 = vld [vmem:[%s5184 + $0x20] sm:$0xff]
      %v5190 = vld [vmem:[%s5184 + $0x28] sm:$0xff]
      %v5191 = vld [vmem:[%s5184 + $0x30] sm:$0xff]
      %v5192 = vld [vmem:[%s5184 + $0x38] sm:$0xff]
      %v5193 = vld [vmem:[%s5184 + $0x40] sm:$0xff]
      %v5194 = vld [vmem:[%s5184 + $0x48] sm:$0xff]
      %v5195 = vld [vmem:[%s5184 + $0x50] sm:$0xff]
      %v5196 = vld [vmem:[%s5184 + $0x58] sm:$0xff]
      %v5197 = vld [vmem:[%s5184 + $0x60] sm:$0xff]
      %v5198 = vld [vmem:[%s5184 + $0x68] sm:$0xff]
      %v5199 = vld [vmem:[%s5184 + $0x70] sm:$0xff]
      %v5200 = vld [vmem:[%s5184 + $0x78] sm:$0xff]
      %v5201 = vld [vmem:[%s5184 + $0x80] sm:$0xff]
      %v5202 = vld [vmem:[%s5184 + $0x88] sm:$0xff]
      %v5203 = vld [vmem:[%s5184 + $0x90] sm:$0xff]
      %v5204 = vld [vmem:[%s5184 + $0x98] sm:$0xff]
      %v5205 = vld [vmem:[%s5184 + $0xa0] sm:$0xff]
      %v5206 = vld [vmem:[%s5184 + $0xa8] sm:$0xff]
      %v5207 = vld [vmem:[%s5184 + $0xb0] sm:$0xff]
      %v5208 = vld [vmem:[%s5184 + $0xb8] sm:$0xff]
      %v5209 = vld [vmem:[%s5184 + $0xc0] sm:$0xff]
      %v5210 = vld [vmem:[%s5184 + $0xc8] sm:$0xff]
      %v5211 = vld [vmem:[%s5184 + $0xd0] sm:$0xff]
      %v5212 = vld [vmem:[%s5184 + $0xd8] sm:$0xff]
      %v5213 = vld [vmem:[%s5184 + $0xe0] sm:$0xff]
      %v5214 = vld [vmem:[%s5184 + $0xe8] sm:$0xff]
      %v5215 = vld [vmem:[%s5184 + $0xf0] sm:$0xff]
      %v5216 = vld [vmem:[%s5184 + $0xf8] sm:$0xff]
      %5217 = vmatprep.subr.mxu0 %v5186
      %5218 = vmatpush1.msra.mxu0 %v5185
      %5219 = vmatprep.subr.mxu0 %v5188
      %5220 = vmatpush1.msra.mxu0 %v5187
      %5221 = vmatprep.subr.mxu0 %v5190
      %5222 = vmatpush1.msra.mxu0 %v5189
      %5223 = vmatprep.subr.mxu0 %v5192
      %5224 = vmatpush1.msra.mxu0 %v5191
      %5225 = vmatprep.subr.mxu0 %v5194
      %5226 = vmatpush1.msra.mxu0 %v5193
      %5227 = vmatprep.subr.mxu0 %v5196
      %5228 = vmatpush1.msra.mxu0 %v5195
      %5229 = vmatprep.subr.mxu0 %v5198
      %5230 = vmatpush1.msra.mxu0 %v5197
      %5231 = vmatprep.subr.mxu0 %v5200
      %5232 = vmatpush1.msra.mxu0 %v5199
      %5233 = vmatprep.subr.mxu0 %v5202
      %5234 = vmatpush1.msra.mxu0 %v5201
      %5235 = vmatprep.subr.mxu0 %v5204
      %5236 = vmatpush1.msra.mxu0 %v5203
      %5237 = vmatprep.subr.mxu0 %v5206
      %5238 = vmatpush1.msra.mxu0 %v5205
      %5239 = vmatprep.subr.mxu0 %v5208
      %5240 = vmatpush1.msra.mxu0 %v5207
      %5241 = vmatprep.subr.mxu0 %v5210
      %5242 = vmatpush1.msra.mxu0 %v5209
      %5243 = vmatprep.subr.mxu0 %v5212
      %5244 = vmatpush1.msra.mxu0 %v5211
      %5245 = vmatprep.subr.mxu0 %v5214
      %5246 = vmatpush1.msra.mxu0 %v5213
      %5247 = vmatprep.subr.mxu0 %v5216
      %5248 = vmatpush1.msra.mxu0 %v5215
      %5249 = vmatprep.subr.mxu0 0.0
      %5250 = vmatpush1.msra.mxu0 0.0
      %5251 = vmatprep.subr.mxu0 0.0
      %5252 = vmatpush1.msra.mxu0 0.0
      %5253 = vmatprep.subr.mxu0 0.0
      %5254 = vmatpush1.msra.mxu0 0.0
      %5255 = vmatprep.subr.mxu0 0.0
      %5256 = vmatpush1.msra.mxu0 0.0
      %5257 = vmatprep.subr.mxu0 0.0
      %5258 = vmatpush1.msra.mxu0 0.0
      %5259 = vmatprep.subr.mxu0 0.0
      %5260 = vmatpush1.msra.mxu0 0.0
      %5261 = vmatprep.subr.mxu0 0.0
      %5262 = vmatpush1.msra.mxu0 0.0
      %5263 = vmatprep.subr.mxu0 0.0
      %5264 = vmatpush1.msra.mxu0 0.0
      %5265 = vmatprep.subr.mxu0 0.0
      %5266 = vmatpush1.msra.mxu0 0.0
      %5267 = vmatprep.subr.mxu0 0.0
      %5268 = vmatpush1.msra.mxu0 0.0
      %5269 = vmatprep.subr.mxu0 0.0
      %5270 = vmatpush1.msra.mxu0 0.0
      %5271 = vmatprep.subr.mxu0 0.0
      %5272 = vmatpush1.msra.mxu0 0.0
      %5273 = vmatprep.subr.mxu0 0.0
      %5274 = vmatpush1.msra.mxu0 0.0
      %5275 = vmatprep.subr.mxu0 0.0
      %5276 = vmatpush1.msra.mxu0 0.0
      %5277 = vmatprep.subr.mxu0 0.0
      %5278 = vmatpush1.msra.mxu0 0.0
      %5279 = vmatprep.subr.mxu0 0.0
      %5280 = vmatpush1.msra.mxu0 0.0
      %5281 = vmatprep.mubr.f32.mxu0 0.0
      %5282 = vmatmul.mubr.f32.gmra.mrb[0].mxu0 %v1121
      %v5283 = vpop.f32.mrb[0].mxu0
      %v5284 = vadd.f32 0.0, %v5283
      %v5285 = vpop.f32.mrb[0].mxu0
      %v5286 = vadd.f32 0.0, %v5285
      %5287 = vdwg.mxu0
      %v5290 = vcombine.low %v5284, %v5286
      %v5292 = vunpack.c.l.s4 1966171168
      %v5293 = vunpack.c.0.s8 %v5292
      %v5294 = vlaneseq
      %v5295 = vshrl.u32 %v5294, 7
      %v5296 = vsub.s32 %v5293, %v5295
      %v5297 = vrot.slane %v5290, %v5296
      %v5299 = vunpack.c.l.s4 1966171168
      %v5300 = vunpack.c.0.s8 %v5299
      %v5301 = vlaneseq
      %v5302 = vshrl.u32 %v5301, 7
      %v5303 = vsub.s32 %v5300, %v5302
      %v5304 = vrot.slane %v5297, %v5303
      %s5306 = scalar_lea.vmem [#allocation2], 64
      %5307 = vst.msk [vmem:[%s5306] ss:$8 sm:$0x3] %vm1246, %v5304
      %5308 = vst.msk [vmem:[%s5306] ss:$8 sm:$0x0] %vm1246, %v5304
      %v5309 = vld [vmem:[#allocation2] sm:$0xff]
      %v5310 = vld [vmem:[#allocation2 + $0x8] sm:$0xff]
      %v5311 = vld [vmem:[#allocation2 + $0x10] sm:$0xff]
      %v5312 = vld [vmem:[#allocation2 + $0x18] sm:$0xff]
      %v5313 = vld [vmem:[#allocation2 + $0x20] sm:$0xff]
      %v5314 = vld [vmem:[#allocation2 + $0x28] sm:$0xff]
      %v5315 = vld [vmem:[#allocation2 + $0x30] sm:$0xff]
      %v5316 = vld [vmem:[#allocation2 + $0x38] sm:$0xff]
      %v5317 = vld [vmem:[#allocation2 + $0x40] sm:$0x1]
      %v5318 = vld [vmem:[#allocation2 + $0x48] sm:$0x1]
      %v5319 = vld [vmem:[%s55] sm:$0xff]
      %v5320 = vld [vmem:[%s55 + $0x8] sm:$0xff]
      %v5321 = vld [vmem:[%s55 + $0x10] sm:$0xff]
      %v5322 = vld [vmem:[%s55 + $0x18] sm:$0xff]
      %v5323 = vld [vmem:[%s55 + $0x20] sm:$0x1]
      %v5324 = vmul.f32 %v5319, %v378
      %v5325 = vmul.f32 %v5320, %v381
      %v5326 = vmul.f32 %v5321, %v384
      %v5327 = vmul.f32 %v5322, %v387
      %v5328 = vmul.f32 %v5323, %v390
      %v5329 = vadd.f32 %v5309, %v5324
      %v5330 = vadd.f32 %v5311, %v5325
      %v5331 = vadd.f32 %v5313, %v5326
      %v5332 = vadd.f32 %v5315, %v5327
      %v5333 = vadd.f32 %v5317, %v5328
      %v5334 = vld [vmem:[%s59] sm:$0x1]
      %v5336 = vlaneseq
      %v5337 = vshrl.u32 %v5336, 7
      %v5338 = vsub.s32 0, %v5337
      %v5339 = vrot.slane %v5334, %v5338
      %v5341 = vadd.f32 %v5329, %v5339
      %v5342 = vadd.f32 %v5330, %v5339
      %v5343 = vadd.f32 %v5331, %v5339
      %v5344 = vadd.f32 %v5332, %v5339
      %v5345 = vadd.f32 %v5333, %v5339
      %v5346 = vxor.u32 %v5341, 2147483648
      %v5347 = vxor.u32 %v5342, 2147483648
      %v5348 = vxor.u32 %v5343, 2147483648
      %v5349 = vxor.u32 %v5344, 2147483648
      %v5350 = vxor.u32 %v5345, 2147483648
      %v5351 = vmul.f32 %v5346, 1.442695
      %v5352 = vpow.pop %v5351
      %v5353 = vmul.f32 %v5347, 1.442695
      %v5354 = vpow.pop %v5353
      %v5355 = vmul.f32 %v5348, 1.442695
      %v5356 = vpow.pop %v5355
      %v5357 = vmul.f32 %v5349, 1.442695
      %v5358 = vpow.pop %v5357
      %v5359 = vmul.f32 %v5350, 1.442695
      %v5360 = vpow.pop %v5359
      %v5361 = vadd.f32 %v5352, 1.0
      %v5362 = vadd.f32 %v5354, 1.0
      %v5363 = vadd.f32 %v5356, 1.0
      %v5364 = vadd.f32 %v5358, 1.0
      %v5365 = vadd.f32 %v5360, 1.0
      %v5366 = vrcp.pop %v5361
      %v5367 = vmul.f32 1.0, %v5366
      %v5368 = vrcp.pop %v5362
      %v5369 = vmul.f32 1.0, %v5368
      %v5370 = vrcp.pop %v5363
      %v5371 = vmul.f32 1.0, %v5370
      %v5372 = vrcp.pop %v5364
      %v5373 = vmul.f32 1.0, %v5372
      %v5374 = vrcp.pop %v5365
      %v5375 = vmul.f32 1.0, %v5374
      %5381 = vrot.lane.b32.xlu0 %v5310, 64
      %v5382 = vpop.permute.xlu0 %5381
      %5383 = vrot.lane.b32.xlu0 %v5312, 64
      %v5384 = vpop.permute.xlu0 %5383
      %5385 = vrot.lane.b32.xlu0 %v5314, 64
      %v5386 = vpop.permute.xlu0 %5385
      %5387 = vrot.lane.b32.xlu0 %v5316, 64
      %v5388 = vpop.permute.xlu0 %5387
      %5389 = vrot.lane.b32.xlu0 %v5318, 64
      %v5390 = vpop.permute.xlu0 %5389
      %v5396 = vmul.f32 %v5367, %v5382
      %v5397 = vmul.f32 %v5369, %v5384
      %v5398 = vmul.f32 %v5371, %v5386
      %v5399 = vmul.f32 %v5373, %v5388
      %v5400 = vmul.f32 %v5375, %v5390
      %v5401 = vld [vmem:[%s57] sm:$0xff]
      %v5402 = vld [vmem:[%s57 + $0x8] sm:$0xff]
      %v5403 = vld [vmem:[%s57 + $0x10] sm:$0xff]
      %v5404 = vld [vmem:[%s57 + $0x18] sm:$0xff]
      %v5405 = vld [vmem:[%s57 + $0x20] sm:$0x1]
      %v5406 = vmul.f32 %v5401, %v378
      %v5407 = vmul.f32 %v5402, %v381
      %v5408 = vmul.f32 %v5403, %v384
      %v5409 = vmul.f32 %v5404, %v387
      %v5410 = vmul.f32 %v5405, %v390
      %5416 = vrot.lane.b32.xlu0 %v5406, 64
      %v5417 = vpop.permute.xlu0 %5416
      %5418 = vrot.lane.b32.xlu0 %v5407, 64
      %v5419 = vpop.permute.xlu0 %5418
      %5420 = vrot.lane.b32.xlu0 %v5408, 64
      %v5421 = vpop.permute.xlu0 %5420
      %5422 = vrot.lane.b32.xlu0 %v5409, 64
      %v5423 = vpop.permute.xlu0 %5422
      %5424 = vrot.lane.b32.xlu0 %v5410, 64
      %v5425 = vpop.permute.xlu0 %5424
      %v5431 = vadd.f32 %v5396, %v5417
      %v5432 = vadd.f32 %v5397, %v5419
      %v5433 = vadd.f32 %v5398, %v5421
      %v5434 = vadd.f32 %v5399, %v5423
      %v5435 = vadd.f32 %v5400, %v5425
      %v5436 = vadd.f32 %v5431, %v5310
      %v5437 = vadd.f32 %v5432, %v5312
      %v5438 = vadd.f32 %v5433, %v5314
      %v5439 = vadd.f32 %v5434, %v5316
      %v5440 = vadd.f32 %v5435, %v5318
      %v5441 = vld [vmem:[%s61] sm:$0x1]
      %v5443 = vlaneseq
      %v5444 = vshrl.u32 %v5443, 7
      %v5445 = vsub.s32 0, %v5444
      %v5446 = vrot.slane %v5441, %v5445
      %5447 = vrot.lane.b32.xlu0 %v5446, 64
      %v5448 = vpop.permute.xlu0 %5447
      %v5450 = vadd.f32 %v5436, %v5448
      %v5451 = vadd.f32 %v5437, %v5448
      %v5452 = vadd.f32 %v5438, %v5448
      %v5453 = vadd.f32 %v5439, %v5448
      %v5454 = vadd.f32 %v5440, %v5448
      %v5455 = vtanh.pop %v5450
      %v5456 = vtanh.pop %v5451
      %v5457 = vtanh.pop %v5452
      %v5458 = vtanh.pop %v5453
      %v5459 = vtanh.pop %v5454
      %v5460 = vmul.f32 %v5367, %v1103
      %v5461 = vmul.f32 %v5369, %v1105
      %v5462 = vmul.f32 %v5371, %v1107
      %v5463 = vmul.f32 %v5373, %v1109
      %v5464 = vmul.f32 %v5375, %v1111
      %v5465 = vsub.f32 1.0, %v5367
      %v5466 = vsub.f32 1.0, %v5369
      %v5467 = vsub.f32 1.0, %v5371
      %v5468 = vsub.f32 1.0, %v5373
      %v5469 = vsub.f32 1.0, %v5375
      %5475 = vrot.lane.b32.xlu0 %v5455, 64
      %v5476 = vpop.permute.xlu0 %5475
      %5477 = vrot.lane.b32.xlu0 %v5456, 64
      %v5478 = vpop.permute.xlu0 %5477
      %5479 = vrot.lane.b32.xlu0 %v5457, 64
      %v5480 = vpop.permute.xlu0 %5479
      %5481 = vrot.lane.b32.xlu0 %v5458, 64
      %v5482 = vpop.permute.xlu0 %5481
      %5483 = vrot.lane.b32.xlu0 %v5459, 64
      %v5484 = vpop.permute.xlu0 %5483
      %v5490 = vmul.f32 %v5465, %v5476
      %v5491 = vmul.f32 %v5466, %v5478
      %v5492 = vmul.f32 %v5467, %v5480
      %v5493 = vmul.f32 %v5468, %v5482
      %v5494 = vmul.f32 %v5469, %v5484
      %v5495 = vadd.f32 %v5460, %v5490
      %v5496 = vadd.f32 %v5461, %v5491
      %v5497 = vadd.f32 %v5462, %v5492
      %v5498 = vadd.f32 %v5463, %v5493
      %v5499 = vadd.f32 %v5464, %v5494
      %v5500 = vld [vmem:[%s49] sm:$0xff]
      %v5501 = vld [vmem:[%s49 + $0x8] sm:$0xff]
      %v5502 = vld [vmem:[%s49 + $0x10] sm:$0xff]
      %v5503 = vld [vmem:[%s49 + $0x18] sm:$0xff]
      %v5504 = vld [vmem:[%s49 + $0x20] sm:$0xff]
      %v5505 = vld [vmem:[%s49 + $0x28] sm:$0xff]
      %v5506 = vld [vmem:[%s49 + $0x30] sm:$0xff]
      %v5507 = vld [vmem:[%s49 + $0x38] sm:$0xff]
      %5508 = vmatprep.subr.mxu0 0.0
      %5509 = vmatpush1.msra.mxu0 %v5500
      %5510 = vmatprep.subr.mxu0 0.0
      %5511 = vmatpush1.msra.mxu0 %v5501
      %5512 = vmatprep.subr.mxu0 0.0
      %5513 = vmatpush1.msra.mxu0 %v5502
      %5514 = vmatprep.subr.mxu0 0.0
      %5515 = vmatpush1.msra.mxu0 %v5503
      %5516 = vmatprep.subr.mxu0 0.0
      %5517 = vmatpush1.msra.mxu0 %v5504
      %5518 = vmatprep.subr.mxu0 0.0
      %5519 = vmatpush1.msra.mxu0 %v5505
      %5520 = vmatprep.subr.mxu0 0.0
      %5521 = vmatpush1.msra.mxu0 %v5506
      %5522 = vmatprep.subr.mxu0 0.0
      %5523 = vmatpush1.msra.mxu0 %v5507
      %5524 = vmatprep.subr.mxu0 0.0
      %5525 = vmatpush1.msra.mxu0 0.0
      %5526 = vmatprep.subr.mxu0 0.0
      %5527 = vmatpush1.msra.mxu0 0.0
      %5528 = vmatprep.subr.mxu0 0.0
      %5529 = vmatpush1.msra.mxu0 0.0
      %5530 = vmatprep.subr.mxu0 0.0
      %5531 = vmatpush1.msra.mxu0 0.0
      %5532 = vmatprep.subr.mxu0 0.0
      %5533 = vmatpush1.msra.mxu0 0.0
      %5534 = vmatprep.subr.mxu0 0.0
      %5535 = vmatpush1.msra.mxu0 0.0
      %5536 = vmatprep.subr.mxu0 0.0
      %5537 = vmatpush1.msra.mxu0 0.0
      %5538 = vmatprep.subr.mxu0 0.0
      %5539 = vmatpush1.msra.mxu0 0.0
      %5540 = vmatprep.subr.mxu0 0.0
      %5541 = vmatpush1.msra.mxu0 0.0
      %5542 = vmatprep.subr.mxu0 0.0
      %5543 = vmatpush1.msra.mxu0 0.0
      %5544 = vmatprep.subr.mxu0 0.0
      %5545 = vmatpush1.msra.mxu0 0.0
      %5546 = vmatprep.subr.mxu0 0.0
      %5547 = vmatpush1.msra.mxu0 0.0
      %5548 = vmatprep.subr.mxu0 0.0
      %5549 = vmatpush1.msra.mxu0 0.0
      %5550 = vmatprep.subr.mxu0 0.0
      %5551 = vmatpush1.msra.mxu0 0.0
      %5552 = vmatprep.subr.mxu0 0.0
      %5553 = vmatpush1.msra.mxu0 0.0
      %5554 = vmatprep.subr.mxu0 0.0
      %5555 = vmatpush1.msra.mxu0 0.0
      %5556 = vmatprep.subr.mxu0 0.0
      %5557 = vmatpush1.msra.mxu0 0.0
      %5558 = vmatprep.subr.mxu0 0.0
      %5559 = vmatpush1.msra.mxu0 0.0
      %5560 = vmatprep.subr.mxu0 0.0
      %5561 = vmatpush1.msra.mxu0 0.0
      %5562 = vmatprep.subr.mxu0 0.0
      %5563 = vmatpush1.msra.mxu0 0.0
      %5564 = vmatprep.subr.mxu0 0.0
      %5565 = vmatpush1.msra.mxu0 0.0
      %5566 = vmatprep.subr.mxu0 0.0
      %5567 = vmatpush1.msra.mxu0 0.0
      %5568 = vmatprep.subr.mxu0 0.0
      %5569 = vmatpush1.msra.mxu0 0.0
      %5570 = vmatprep.subr.mxu0 0.0
      %5571 = vmatpush1.msra.mxu0 0.0
      %5572 = vmatprep.mubr.f32.mxu0 0.0
      %5573 = vmatmul.mubr.f32.gmra.mrb[0].mxu0 %v990
      %v5574 = vpop.f32.mrb[0].mxu0
      %v5575 = vadd.f32 0.0, %v5574
      %v5576 = vpop.f32.mrb[0].mxu0
      %5577 = vdwg.mxu0
      %v5578 = vld [vmem:[%s51] sm:$0x1]
      %v5580 = vlaneseq
      %v5581 = vshrl.u32 %v5580, 7
      %v5582 = vsub.s32 0, %v5581
      %v5583 = vrot.slane %v5578, %v5582
      %v5585 = vmul.f32 %v5495, %v5583
      %v5586 = vmul.f32 %v5496, %v5583
      %v5587 = vmul.f32 %v5497, %v5583
      %v5588 = vmul.f32 %v5498, %v5583
      %v5589 = vmul.f32 %v5499, %v5583
      %v5590 = vsel %vm286, %v5585, 0.0
      %5591 = vadd.xlane.f32.xlu0 %v5590
      %v5592 = vpop.xlane.xlu0 %5591
      %v5593 = vsel %vm286, %v5586, 0.0
      %5594 = vadd.xlane.f32.xlu0 %v5593
      %v5595 = vpop.xlane.xlu0 %5594
      %v5596 = vsel %vm286, %v5587, 0.0
      %5597 = vadd.xlane.f32.xlu0 %v5596
      %v5598 = vpop.xlane.xlu0 %5597
      %v5599 = vsel %vm286, %v5588, 0.0
      %5600 = vadd.xlane.f32.xlu0 %v5599
      %v5601 = vpop.xlane.xlu0 %5600
      %v5602 = vsel %vm299, %v5589, 0.0
      %5603 = vadd.xlane.f32.xlu0 %v5602
      %v5604 = vpop.xlane.xlu0 %5603
      %v5605 = vmul.f32 %v5592, %v154
      %v5606 = vmul.f32 %v5595, %v155
      %v5607 = vmul.f32 %v5598, %v156
      %v5608 = vmul.f32 %v5601, %v157
      %v5609 = vmul.f32 %v5604, %v158
      %v5610 = vsel %vm191, %v5605, 0.0
      %v5611 = vsel %vm191, %v5606, 0.0
      %v5612 = vadd.f32 %v5610, %v5611
      %v5613 = vsel %vm191, %v5607, 0.0
      %v5614 = vadd.f32 %v5612, %v5613
      %v5615 = vsel %vm191, %v5608, 0.0
      %v5616 = vadd.f32 %v5614, %v5615
      %v5617 = vsel %vm352, %v5609, 0.0
      %v5618 = vadd.f32 %v5616, %v5617
      %v5619 = vrot.slane %v5618, 4
      %v5620 = vadd.f32 %v5618, %v5619
      %v5621 = vrot.slane %v5620, 2
      %v5622 = vadd.f32 %v5620, %v5621
      %v5623 = vrot.slane %v5622, 1
      %v5624 = vadd.f32 %v5622, %v5623
      %v5625 = vadd.f32 %v5575, %v5624
      %v5626 = vrcp.pop %v5625
      %v5627 = vmul.f32 %v5575, %v5626
      %v5628 = vsel %vm352, %v5627, -inf
      %5629 = vmax.xlane.f32.xlu0 %v5628
      %v5630 = vpop.xlane.xlu0 %5629
      %v5631 = vsub.f32 %v5627, %v5630
      %v5632 = vmul.f32 %v5631, 1.442695
      %v5633 = vpow.pop %v5632
      %v5634 = vsel %vm352, %v5633, 0.0
      %5635 = vadd.xlane.f32.xlu0 %v5634
      %v5636 = vpop.xlane.xlu0 %5635
      %v5637 = vrcp.pop %v5636
      %v5638 = vmul.f32 %v5633, %v5637
      %v5639 = vmul.f32 %v5624, %v5626
      %v5640 = vsel %vm352, %v5639, -inf
      %5641 = vmax.xlane.f32.xlu0 %v5640
      %v5642 = vpop.xlane.xlu0 %5641
      %v5643 = vsub.f32 %v5639, %v5642
      %v5644 = vmul.f32 %v5643, 1.442695
      %v5645 = vpow.pop %v5644
      %v5646 = vsel %vm352, %v5645, 0.0
      %5647 = vadd.xlane.f32.xlu0 %v5646
      %v5648 = vpop.xlane.xlu0 %5647
      %v5649 = vrcp.pop %v5648
      %v5650 = vmul.f32 %v5645, %v5649
      %v5651 = vmul.f32 %v5638, %v1063
      %v5652 = vmul.f32 %v5650, %v360
      %v5653 = vadd.f32 %v5651, %v5652
      %s5654 = smul.u32 %s166, 40
      %s5655 = scalar_lea.vmem %s63, %s5654
      %5656 = vst.msk [vmem:[%s5655] sm:$0xff] %vm286, %v5495
      %5657 = vst.msk [vmem:[%s5655 + $0x8] sm:$0xff] %vm286, %v5496
      %5658 = vst.msk [vmem:[%s5655 + $0x10] sm:$0xff] %vm286, %v5497
      %5659 = vst.msk [vmem:[%s5655 + $0x18] sm:$0xff] %vm286, %v5498
      %5660 = vst.msk [vmem:[%s5655 + $0x20] sm:$0x1] %vm299, %v5499
      %s5661 = scalar_lea.vmem [#allocation4], %s166
      %5662 = vst.msk [vmem:[%s5661] sm:$0x1] %vm352, %v5653
    $region130: #{gmgru_pallas.1} parent=1 // loop_footer
      %s170 = sadd.s32 1, %s166
    $region131: #{gmgru_pallas.1} parent=1 // loop_footer_branch
      %165 = sbr.rel target = $region127
    $region132: #{gmgru_pallas.1} parent=1 // loop_exit
      _
    // Predicated region
    $region133: #{gmgru_pallas.1} parent=1 // pred_check
      _
    $region134: #{gmgru_pallas.1} parent=1 // pred_check_branch
      %5665 = sbr.rel (0) target = $region136
    $region135: #{gmgru_pallas.1} parent=1 // pred_region
      _
    $region136: #{gmgru_pallas.1} parent=1 // pred_fallthru
      _
    // Predicated region
    $region137: #{gmgru_pallas.1} parent=1 // pred_check
      _
    $region138: #{gmgru_pallas.1} parent=1 // pred_check_branch
      %5667 = sbr.rel (0) target = $region140
    $region139: #{gmgru_pallas.1} parent=1 // pred_region
      %s5669 = ssub.s32 128, 128
      %5670 = vsyncadd [#allocation5], %s5669
      %s5671 = sshll.u32 [#allocation4], 4
      %s5672 = int_to_ptr.vmem [resolvable:$true] %s5671
      %5677 = dma.vmem_to_hbm [thread:$0]  %s5672, 128, %s65, [#allocation5], 16, 16, 1
    $region140: #{gmgru_pallas.1} parent=1 // pred_fallthru
      _
    // Predicated region
    $region141: #{gmgru_pallas.1} parent=1 // pred_check
      _
    $region142: #{gmgru_pallas.1} parent=1 // pred_check_branch
      %5679 = sbr.rel (0) target = $region144
    $region143: #{gmgru_pallas.1} parent=1 // pred_region
      _
    $region144: #{gmgru_pallas.1} parent=1 // pred_fallthru
      _
    // Predicated region
    $region145: #{gmgru_pallas.1} parent=1 // pred_check
      _
    $region146: #{gmgru_pallas.1} parent=1 // pred_check_branch
      %5681 = sbr.rel (0) target = $region148
    $region147: #{gmgru_pallas.1} parent=1 // pred_region
      %5682 = dma.done [#allocation5], 128
    $region148: #{gmgru_pallas.1} parent=1 // pred_fallthru
      _
    %5683 = vsyncpa [#allocation5], 1

</llo_original>
